<compile_context>
chip_gen: v6e
topology: v6e:2x2x1
jax: 0.10.0
libtpu: 0.0.40
codegen_flags: <defaults>
</compile_context>

<pallas_src>
import math
import functools

import jax
import jax.numpy as jnp
from jax.experimental import pallas as pl
from jax.experimental.pallas import tpu as pltpu

D_MODEL = 32          # "input_dim" (must be divisible by nhead=8)
NUM_HEADS = 8
DIM_FF = 2048         # hardcoded in the PyTorch module
NUM_LAYERS = 4
NUM_CLASSES = 5
LN_EPS = 1e-5
QKV_PAD = 128         # fused QKV output lanes (3*D_MODEL = 96, zero-padded)


def _layer_norm(x, g, b):
    mu = jnp.mean(x, axis=-1, keepdims=True)
    var = jnp.mean((x - mu) ** 2, axis=-1, keepdims=True)
    return (x - mu) * jax.lax.rsqrt(var + LN_EPS) * g + b


# ----------------------------- fused kernel ---------------------------------

def fused_forward_kernel(
        x0_ref, pe_ref, hmask_ref, hmask_t_ref, cls_w_ref, cls_b_ref,
        wqkv_ref, bqkv_ref, wo_ref, vecs_ref, w1_ref, b1_ref, w2_ref,
        out_ref, *, batch, seq, num_layers, num_heads):
    d_model = x0_ref.shape[-1]
    hd = d_model // num_heads
    scale = 1.0 / math.sqrt(hd)

    hmask = hmask_ref[...]       # (D, H)  block-diagonal ones: d -> head(d)
    hmask_t = hmask_t_ref[...]   # (H, D)

    # Positional encoding (pe already tiled so that row b*seq + s gets pe[s]).
    x = x0_ref[...] + pe_ref[...]                    # (B*S, D) f32

    # TODO(synk): dropout (p=0.1) is identity in eval mode and is omitted.
    for l in range(num_layers):                      # static unroll, weights resident
        # ---- per-layer weights: matmul weights bf16, everything else f32 ----
        wqkv = wqkv_ref[l]                           # (D, 128) bf16 [Wq|Wk|Wv|0]
        bqkv = bqkv_ref[l]                           # (1, 128) f32
        wo = wo_ref[l]                               # (D, D)   bf16
        w1 = w1_ref[l]                               # (D, FF)  bf16
        b1 = b1_ref[l]                               # (1, FF)  f32
        w2 = w2_ref[l]                               # (FF, D)  bf16
        vecs = vecs_ref[l]                           # (8, D)   f32 packed vectors
        bo, g1, be1 = vecs[0:1, :], vecs[1:2, :], vecs[2:3, :]
        b2, g2, be2 = vecs[3:4, :], vecs[4:5, :], vecs[5:6, :]

        # ---- fused QKV projection: one lane-dense bf16 matmul, f32 acc ----
        qkv = jnp.dot(x.astype(jnp.bfloat16), wqkv,
                      preferred_element_type=jnp.float32) + bqkv   # (B*S, 128)
        q = qkv[:, 0:d_model]
        k = qkv[:, d_model:2 * d_model]
        v = qkv[:, 2 * d_model:3 * d_model]

        # ---- multi-head self attention (sequence axis == input batch B) ----
        # Rows i*seq .. (i+1)*seq - 1 hold attention position i for every
        # attention-batch element s (contiguous, sublane-aligned slices).
        q_rows = [q[i * seq:(i + 1) * seq, :] * scale for i in range(batch)]
        k_rows = [k[j * seq:(j + 1) * seq, :] for j in range(batch)]
        v_rows = [v[j * seq:(j + 1) * seq, :] for j in range(batch)]

        # Per-head scores via the head-mask matmul trick (kept, per review):
        # scores[i][j][s, h] = scale * <q_i[s], k_j[s]> restricted to head h.
        scores = [[jnp.dot(q_rows[i] * k_rows[j], hmask,
                           preferred_element_type=jnp.float32)
                   for j in range(batch)] for i in range(batch)]

        ctx_rows = []
        for i in range(batch):
            row = scores[i]
            m = row[0]
            for j in range(1, batch):
                m = jnp.maximum(m, row[j])
            exps = [jnp.exp(row[j] - m) for j in range(batch)]
            denom = exps[0]
            for j in range(1, batch):
                denom = denom + exps[j]
            inv = pl.reciprocal(denom, approx=True)             # EUP slot, (S, H)
            ctx = None
            for j in range(batch):
                # Broadcast per-head probability back to model dim, weight V.
                p_b = jnp.dot(exps[j] * inv, hmask_t,
                              preferred_element_type=jnp.float32)   # (S, D)
                term = p_b * v_rows[j]
                ctx = term if ctx is None else ctx + term
            ctx_rows.append(ctx)
        # Aligned (S, D) blocks stacked along sublanes (cheap, once per layer).
        ctx = jnp.concatenate(ctx_rows, axis=0)                  # (B*S, D)

        attn = jnp.dot(ctx.astype(jnp.bfloat16), wo,
                       preferred_element_type=jnp.float32) + bo

        # post-norm: x = LN1(x + attn)
        x = _layer_norm(x + attn, g1, be1)

        # ---- feed forward (relu), bf16 weights / f32 accumulate ----
        h1 = jnp.dot(x.astype(jnp.bfloat16), w1,
                     preferred_element_type=jnp.float32) + b1
        h1 = jnp.maximum(h1, 0.0)
        ff = jnp.dot(h1.astype(jnp.bfloat16), w2,
                     preferred_element_type=jnp.float32) + b2

        # post-norm: x = LN2(x + ff)
        x = _layer_norm(x + ff, g2, be2)

    # ---- classifier on x[:, -1, :] (rows i*seq + seq - 1) ----------------
    # Select the B last-position rows with a tiny selection matmul (MXU),
    # avoiding per-row slices + concatenate relayouts.
    rows = jax.lax.broadcasted_iota(jnp.int32, (batch, batch * seq), 0)
    cols = jax.lax.broadcasted_iota(jnp.int32, (batch, batch * seq), 1)
    sel = (cols == rows * seq + (seq - 1)).astype(jnp.float32)   # (B, B*S)
    last = jnp.dot(sel, x, preferred_element_type=jnp.float32)   # (B, D)
    out_ref[...] = (jnp.dot(last, cls_w_ref[...],
                            preferred_element_type=jnp.float32)
                    + cls_b_ref[...]).astype(out_ref.dtype)


# ----------------------------- wrapper ---------------------------------------

def video_transformer_fused(x0, pe_tiled, hmask, hmask_t, cls_w, cls_b, packed,
                            *, batch, seq):
    kern = functools.partial(fused_forward_kernel, batch=batch, seq=seq,
                             num_layers=NUM_LAYERS, num_heads=NUM_HEADS)
    operands = (x0, pe_tiled, hmask, hmask_t, cls_w, cls_b,
                packed["wqkv"], packed["bqkv"], packed["wo"], packed["vecs"],
                packed["w1"], packed["b1"], packed["w2"])
    # Single grid step: every operand is fully resident in VMEM (total ~1.2 MiB
    # with bf16 weights), so there is nothing to pipeline and no per-step
    # overhead.  Whole-array VMEM BlockSpecs -> one DMA per operand.
    in_specs = [pl.BlockSpec(memory_space=pltpu.MemorySpace.VMEM)
                for _ in operands]
    return pl.pallas_call(
        kern,
        in_specs=in_specs,
        out_specs=pl.BlockSpec(memory_space=pltpu.MemorySpace.VMEM),
        out_shape=jax.ShapeDtypeStruct((batch, NUM_CLASSES), jnp.float32),
    )(*operands)


# ----------------------------- params / glue ---------------------------------

def make_positional_encoding(max_len, d_model):
    position = jnp.arange(max_len, dtype=jnp.float32)[:, None]
    div_term = jnp.exp(jnp.arange(0, d_model, 2, dtype=jnp.float32)
                       * (-math.log(10000.0) / d_model))
    pe = jnp.zeros((max_len, d_model), dtype=jnp.float32)
    pe = pe.at[:, 0::2].set(jnp.sin(position * div_term))
    pe = pe.at[:, 1::2].set(jnp.cos(position * div_term))
    return pe


def init_params(key, d_model, num_classes, num_layers, dim_ff):
    def dense(k, fan_in, shape):
        return jax.random.normal(k, shape, jnp.float32) / jnp.sqrt(
            jnp.float32(fan_in))

    wqkv_s, bqkv_s, wo_s, vecs_s, w1_s, b1_s, w2_s = [], [], [], [], [], [], []
    for i in range(num_layers):
        ks = jax.random.split(jax.random.fold_in(key, i), 6)
        wq = dense(ks[0], d_model, (d_model, d_model))
        wk = dense(ks[1], d_model, (d_model, d_model))
        wv = dense(ks[2], d_model, (d_model, d_model))
        wo = dense(ks[3], d_model, (d_model, d_model))
        w1 = dense(ks[4], d_model, (d_model, dim_ff))
        w2 = dense(ks[5], dim_ff, (dim_ff, d_model))
        bq = jnp.zeros((1, d_model), jnp.float32)
        bk = jnp.zeros((1, d_model), jnp.float32)
        bv = jnp.zeros((1, d_model), jnp.float32)
        bo = jnp.zeros((1, d_model), jnp.float32)
        g1 = jnp.ones((1, d_model), jnp.float32)
        be1 = jnp.zeros((1, d_model), jnp.float32)
        b1 = jnp.zeros((1, dim_ff), jnp.float32)
        b2 = jnp.zeros((1, d_model), jnp.float32)
        g2 = jnp.ones((1, d_model), jnp.float32)
        be2 = jnp.zeros((1, d_model), jnp.float32)

        # Fused QKV weight/bias, zero-padded to 128 lanes.
        wqkv = jnp.pad(jnp.concatenate([wq, wk, wv], axis=1),
                       ((0, 0), (0, QKV_PAD - 3 * d_model)))
        bqkv = jnp.pad(jnp.concatenate([bq, bk, bv], axis=1),
                       ((0, 0), (0, QKV_PAD - 3 * d_model)))
        # Remaining (1, D) per-layer vectors packed into one (8, D) slab.
        vecs = jnp.concatenate(
            [bo, g1, be1, b2, g2, be2,
             jnp.zeros((2, d_model), jnp.float32)], axis=0)

        wqkv_s.append(wqkv); bqkv_s.append(bqkv); wo_s.append(wo)
        vecs_s.append(vecs); w1_s.append(w1); b1_s.append(b1); w2_s.append(w2)

    packed = dict(
        wqkv=jnp.stack(wqkv_s).astype(jnp.bfloat16),   # (NL, D, 128)
        bqkv=jnp.stack(bqkv_s),                        # (NL, 1, 128) f32
        wo=jnp.stack(wo_s).astype(jnp.bfloat16),       # (NL, D, D)
        vecs=jnp.stack(vecs_s),                        # (NL, 8, D)  f32
        w1=jnp.stack(w1_s).astype(jnp.bfloat16),       # (NL, D, FF)
        b1=jnp.stack(b1_s),                            # (NL, 1, FF) f32
        w2=jnp.stack(w2_s).astype(jnp.bfloat16),       # (NL, FF, D)
    )
    kc = jax.random.fold_in(key, 1000)
    return dict(
        packed=packed,
        cls_w=dense(kc, d_model, (d_model, num_classes)),
        cls_b=jnp.zeros((1, num_classes), jnp.float32),
        pe=make_positional_encoding(5000, d_model),
    )


@jax.jit
def video_transformer_forward(params, x):
    # x: (B, S, D) -- the calling convention of the PyTorch module.
    B, S, D = x.shape
    pe = params["pe"][:S]                        # pe[:x.size(1), :]  -> (S, D)
    # Activation layout: (B*S, D), B-major rows (row r = b*S + s).
    x0 = x.reshape(B * S, D)
    pe_tiled = jnp.tile(pe, (B, 1))              # row b*S+s gets pe[s]
    hd = D // NUM_HEADS
    hmask = (jnp.arange(D)[:, None] // hd
             == jnp.arange(NUM_HEADS)[None, :]).astype(jnp.float32)   # (D, H)
    return video_transformer_fused(
        x0, pe_tiled, hmask, hmask.T, params["cls_w"], params["cls_b"],
        params["packed"], batch=B, seq=S)


if __name__ == "__main__":
    B, S = 2, 8
    key = jax.random.PRNGKey(0)
    pkey, xkey = jax.random.split(key)
    params = init_params(pkey, D_MODEL, NUM_CLASSES, NUM_LAYERS, DIM_FF)
    x = jax.random.normal(xkey, (B, S, D_MODEL), jnp.float32)
    out = video_transformer_forward(params, x)
    out = jax.block_until_ready(out)
    assert out.shape == (B, NUM_CLASSES) and out.dtype == jnp.float32
    print("KERNEL_OK")
</pallas_src>

<mosaic_0001>
module attributes {stable_mosaic.version = 11 : i64} {
  func.func @fused_forward_kernel(%arg0: memref<16x32xf32, #tpu.memory_space<vmem>>, %arg1: memref<16x32xf32, #tpu.memory_space<vmem>>, %arg2: memref<32x8xf32, #tpu.memory_space<vmem>>, %arg3: memref<8x32xf32, #tpu.memory_space<vmem>>, %arg4: memref<32x5xf32, #tpu.memory_space<vmem>>, %arg5: memref<1x5xf32, #tpu.memory_space<vmem>>, %arg6: memref<4x32x128xbf16, #tpu.memory_space<vmem>>, %arg7: memref<4x1x128xf32, #tpu.memory_space<vmem>>, %arg8: memref<4x32x32xbf16, #tpu.memory_space<vmem>>, %arg9: memref<4x8x32xf32, #tpu.memory_space<vmem>>, %arg10: memref<4x32x2048xbf16, #tpu.memory_space<vmem>>, %arg11: memref<4x1x2048xf32, #tpu.memory_space<vmem>>, %arg12: memref<4x2048x32xbf16, #tpu.memory_space<vmem>>, %arg13: memref<2x5xf32, #tpu.memory_space<vmem>>) attributes {dimension_semantics = [], scalar_prefetch = 0 : i64, scratch_operands = 0 : i64, tpu.core_type = #tpu.core_type<tc>} {
    %c0 = arith.constant 0 : index
    %c0_0 = arith.constant 0 : index
    %0 = vector.load %arg2[%c0, %c0_0] : memref<32x8xf32, #tpu.memory_space<vmem>>, vector<32x8xf32>
    %c0_1 = arith.constant 0 : index
    %c0_2 = arith.constant 0 : index
    %1 = vector.load %arg3[%c0_1, %c0_2] : memref<8x32xf32, #tpu.memory_space<vmem>>, vector<8x32xf32>
    %c0_3 = arith.constant 0 : index
    %c0_4 = arith.constant 0 : index
    %2 = vector.load %arg0[%c0_3, %c0_4] : memref<16x32xf32, #tpu.memory_space<vmem>>, vector<16x32xf32>
    %c0_5 = arith.constant 0 : index
    %c0_6 = arith.constant 0 : index
    %3 = vector.load %arg1[%c0_5, %c0_6] : memref<16x32xf32, #tpu.memory_space<vmem>>, vector<16x32xf32>
    %4 = arith.addf %2, %3 : vector<16x32xf32>
    %c0_7 = arith.constant 0 : index
    %c0_8 = arith.constant 0 : index
    %c0_9 = arith.constant 0 : index
    %5 = vector.load %arg6[%c0_7, %c0_8, %c0_9] : memref<4x32x128xbf16, #tpu.memory_space<vmem>>, vector<1x32x128xbf16>
    %6 = vector.shape_cast %5 : vector<1x32x128xbf16> to vector<32x128xbf16>
    %c0_10 = arith.constant 0 : index
    %c0_11 = arith.constant 0 : index
    %c0_12 = arith.constant 0 : index
    %7 = vector.load %arg7[%c0_10, %c0_11, %c0_12] : memref<4x1x128xf32, #tpu.memory_space<vmem>>, vector<1x1x128xf32>
    %8 = vector.shape_cast %7 : vector<1x1x128xf32> to vector<1x128xf32>
    %c0_13 = arith.constant 0 : index
    %c0_14 = arith.constant 0 : index
    %c0_15 = arith.constant 0 : index
    %9 = vector.load %arg8[%c0_13, %c0_14, %c0_15] : memref<4x32x32xbf16, #tpu.memory_space<vmem>>, vector<1x32x32xbf16>
    %10 = vector.shape_cast %9 : vector<1x32x32xbf16> to vector<32x32xbf16>
    %c0_16 = arith.constant 0 : index
    %c0_17 = arith.constant 0 : index
    %c0_18 = arith.constant 0 : index
    %11 = vector.load %arg10[%c0_16, %c0_17, %c0_18] : memref<4x32x2048xbf16, #tpu.memory_space<vmem>>, vector<1x32x2048xbf16>
    %12 = vector.shape_cast %11 : vector<1x32x2048xbf16> to vector<32x2048xbf16>
    %c0_19 = arith.constant 0 : index
    %c0_20 = arith.constant 0 : index
    %c0_21 = arith.constant 0 : index
    %13 = vector.load %arg11[%c0_19, %c0_20, %c0_21] : memref<4x1x2048xf32, #tpu.memory_space<vmem>>, vector<1x1x2048xf32>
    %14 = vector.shape_cast %13 : vector<1x1x2048xf32> to vector<1x2048xf32>
    %c0_22 = arith.constant 0 : index
    %c0_23 = arith.constant 0 : index
    %c0_24 = arith.constant 0 : index
    %15 = vector.load %arg12[%c0_22, %c0_23, %c0_24] : memref<4x2048x32xbf16, #tpu.memory_space<vmem>>, vector<1x2048x32xbf16>
    %16 = vector.shape_cast %15 : vector<1x2048x32xbf16> to vector<2048x32xbf16>
    %c0_25 = arith.constant 0 : index
    %c0_26 = arith.constant 0 : index
    %c0_27 = arith.constant 0 : index
    %17 = vector.load %arg9[%c0_25, %c0_26, %c0_27] : memref<4x8x32xf32, #tpu.memory_space<vmem>>, vector<1x8x32xf32>
    %18 = vector.shape_cast %17 : vector<1x8x32xf32> to vector<8x32xf32>
    %19 = vector.extract_strided_slice %18 {offsets = [0, 0], sizes = [1, 32], strides = [1, 1]} : vector<8x32xf32> to vector<1x32xf32>
    %20 = vector.extract_strided_slice %18 {offsets = [1, 0], sizes = [1, 32], strides = [1, 1]} : vector<8x32xf32> to vector<1x32xf32>
    %21 = vector.extract_strided_slice %18 {offsets = [2, 0], sizes = [1, 32], strides = [1, 1]} : vector<8x32xf32> to vector<1x32xf32>
    %22 = vector.extract_strided_slice %18 {offsets = [3, 0], sizes = [1, 32], strides = [1, 1]} : vector<8x32xf32> to vector<1x32xf32>
    %23 = vector.extract_strided_slice %18 {offsets = [4, 0], sizes = [1, 32], strides = [1, 1]} : vector<8x32xf32> to vector<1x32xf32>
    %24 = vector.extract_strided_slice %18 {offsets = [5, 0], sizes = [1, 32], strides = [1, 1]} : vector<8x32xf32> to vector<1x32xf32>
    %25 = arith.truncf %4 : vector<16x32xf32> to vector<16x32xbf16>
    %cst = arith.constant dense<0.000000e+00> : vector<16x128xf32>
    %26 = tpu.matmul %25, %6, %cst {dimension_numbers = #tpu.dot_dimension_numbers<[1], [0], [0], [1], [0, 0, 1, 1], [], []>} : vector<16x32xbf16>, vector<32x128xbf16>, vector<16x128xf32> -> vector<16x128xf32>
    %27 = vector.broadcast %8 : vector<1x128xf32> to vector<16x128xf32>
    %28 = arith.addf %26, %27 : vector<16x128xf32>
    %29 = vector.extract_strided_slice %28 {offsets = [0, 0], sizes = [16, 32], strides = [1, 1]} : vector<16x128xf32> to vector<16x32xf32>
    %30 = vector.extract_strided_slice %28 {offsets = [0, 32], sizes = [16, 32], strides = [1, 1]} : vector<16x128xf32> to vector<16x32xf32>
    %31 = vector.extract_strided_slice %28 {offsets = [0, 64], sizes = [16, 32], strides = [1, 1]} : vector<16x128xf32> to vector<16x32xf32>
    %32 = vector.extract_strided_slice %29 {offsets = [0, 0], sizes = [8, 32], strides = [1, 1]} : vector<16x32xf32> to vector<8x32xf32>
    %cst_28 = arith.constant 5.000000e-01 : f32
    %33 = vector.broadcast %cst_28 : f32 to vector<8x32xf32>
    %34 = arith.mulf %32, %33 : vector<8x32xf32>
    %35 = vector.extract_strided_slice %29 {offsets = [8, 0], sizes = [8, 32], strides = [1, 1]} : vector<16x32xf32> to vector<8x32xf32>
    %cst_29 = arith.constant 5.000000e-01 : f32
    %36 = vector.broadcast %cst_29 : f32 to vector<8x32xf32>
    %37 = arith.mulf %35, %36 : vector<8x32xf32>
    %38 = vector.extract_strided_slice %30 {offsets = [0, 0], sizes = [8, 32], strides = [1, 1]} : vector<16x32xf32> to vector<8x32xf32>
    %39 = vector.extract_strided_slice %30 {offsets = [8, 0], sizes = [8, 32], strides = [1, 1]} : vector<16x32xf32> to vector<8x32xf32>
    %40 = vector.extract_strided_slice %31 {offsets = [0, 0], sizes = [8, 32], strides = [1, 1]} : vector<16x32xf32> to vector<8x32xf32>
    %41 = vector.extract_strided_slice %31 {offsets = [8, 0], sizes = [8, 32], strides = [1, 1]} : vector<16x32xf32> to vector<8x32xf32>
    %42 = arith.mulf %34, %38 : vector<8x32xf32>
    %cst_30 = arith.constant dense<0.000000e+00> : vector<8x8xf32>
    %43 = tpu.matmul %42, %0, %cst_30 {dimension_numbers = #tpu.dot_dimension_numbers<[1], [0], [0], [1], [0, 0, 1, 1], [], []>} : vector<8x32xf32>, vector<32x8xf32>, vector<8x8xf32> -> vector<8x8xf32>
    %44 = arith.mulf %34, %39 : vector<8x32xf32>
    %cst_31 = arith.constant dense<0.000000e+00> : vector<8x8xf32>
    %45 = tpu.matmul %44, %0, %cst_31 {dimension_numbers = #tpu.dot_dimension_numbers<[1], [0], [0], [1], [0, 0, 1, 1], [], []>} : vector<8x32xf32>, vector<32x8xf32>, vector<8x8xf32> -> vector<8x8xf32>
    %46 = arith.mulf %37, %38 : vector<8x32xf32>
    %cst_32 = arith.constant dense<0.000000e+00> : vector<8x8xf32>
    %47 = tpu.matmul %46, %0, %cst_32 {dimension_numbers = #tpu.dot_dimension_numbers<[1], [0], [0], [1], [0, 0, 1, 1], [], []>} : vector<8x32xf32>, vector<32x8xf32>, vector<8x8xf32> -> vector<8x8xf32>
    %48 = arith.mulf %37, %39 : vector<8x32xf32>
    %cst_33 = arith.constant dense<0.000000e+00> : vector<8x8xf32>
    %49 = tpu.matmul %48, %0, %cst_33 {dimension_numbers = #tpu.dot_dimension_numbers<[1], [0], [0], [1], [0, 0, 1, 1], [], []>} : vector<8x32xf32>, vector<32x8xf32>, vector<8x8xf32> -> vector<8x8xf32>
    %50 = arith.maximumf %43, %45 : vector<8x8xf32>
    %51 = arith.subf %43, %50 : vector<8x8xf32>
    %52 = math.exp %51 : vector<8x8xf32>
    %53 = arith.subf %45, %50 : vector<8x8xf32>
    %54 = math.exp %53 : vector<8x8xf32>
    %55 = arith.addf %52, %54 : vector<8x8xf32>
    %56 = tpu.reciprocal %55 {approx = true} : vector<8x8xf32> -> vector<8x8xf32>
    %57 = arith.mulf %52, %56 : vector<8x8xf32>
    %cst_34 = arith.constant dense<0.000000e+00> : vector<8x32xf32>
    %58 = tpu.matmul %57, %1, %cst_34 {dimension_numbers = #tpu.dot_dimension_numbers<[1], [0], [0], [1], [0, 0, 1, 1], [], []>} : vector<8x8xf32>, vector<8x32xf32>, vector<8x32xf32> -> vector<8x32xf32>
    %59 = arith.mulf %58, %40 : vector<8x32xf32>
    %60 = arith.mulf %54, %56 : vector<8x8xf32>
    %cst_35 = arith.constant dense<0.000000e+00> : vector<8x32xf32>
    %61 = tpu.matmul %60, %1, %cst_35 {dimension_numbers = #tpu.dot_dimension_numbers<[1], [0], [0], [1], [0, 0, 1, 1], [], []>} : vector<8x8xf32>, vector<8x32xf32>, vector<8x32xf32> -> vector<8x32xf32>
    %62 = arith.mulf %61, %41 : vector<8x32xf32>
    %63 = arith.addf %59, %62 : vector<8x32xf32>
    %64 = arith.maximumf %47, %49 : vector<8x8xf32>
    %65 = arith.subf %47, %64 : vector<8x8xf32>
    %66 = math.exp %65 : vector<8x8xf32>
    %67 = arith.subf %49, %64 : vector<8x8xf32>
    %68 = math.exp %67 : vector<8x8xf32>
    %69 = arith.addf %66, %68 : vector<8x8xf32>
    %70 = tpu.reciprocal %69 {approx = true} : vector<8x8xf32> -> vector<8x8xf32>
    %71 = arith.mulf %66, %70 : vector<8x8xf32>
    %cst_36 = arith.constant dense<0.000000e+00> : vector<8x32xf32>
    %72 = tpu.matmul %71, %1, %cst_36 {dimension_numbers = #tpu.dot_dimension_numbers<[1], [0], [0], [1], [0, 0, 1, 1], [], []>} : vector<8x8xf32>, vector<8x32xf32>, vector<8x32xf32> -> vector<8x32xf32>
    %73 = arith.mulf %72, %40 : vector<8x32xf32>
    %74 = arith.mulf %68, %70 : vector<8x8xf32>
    %cst_37 = arith.constant dense<0.000000e+00> : vector<8x32xf32>
    %75 = tpu.matmul %74, %1, %cst_37 {dimension_numbers = #tpu.dot_dimension_numbers<[1], [0], [0], [1], [0, 0, 1, 1], [], []>} : vector<8x8xf32>, vector<8x32xf32>, vector<8x32xf32> -> vector<8x32xf32>
    %76 = arith.mulf %75, %41 : vector<8x32xf32>
    %77 = arith.addf %73, %76 : vector<8x32xf32>
    %78 = tpu.concatenate %63, %77 in 0 : vector<8x32xf32>, vector<8x32xf32> -> vector<16x32xf32>
    %79 = arith.truncf %78 : vector<16x32xf32> to vector<16x32xbf16>
    %cst_38 = arith.constant dense<0.000000e+00> : vector<16x32xf32>
    %80 = tpu.matmul %79, %10, %cst_38 {dimension_numbers = #tpu.dot_dimension_numbers<[1], [0], [0], [1], [0, 0, 1, 1], [], []>} : vector<16x32xbf16>, vector<32x32xbf16>, vector<16x32xf32> -> vector<16x32xf32>
    %81 = vector.broadcast %19 : vector<1x32xf32> to vector<16x32xf32>
    %82 = arith.addf %80, %81 : vector<16x32xf32>
    %83 = arith.addf %4, %82 : vector<16x32xf32>
    %cst_39 = arith.constant dense<0.000000e+00> : vector<16xf32>
    %84 = vector.multi_reduction <add>, %83, %cst_39 [1] : vector<16x32xf32> to vector<16xf32>
    %85 = vector.shape_cast %84 : vector<16xf32> to vector<16x1xf32>
    %cst_40 = arith.constant 3.200000e+01 : f32
    %86 = vector.broadcast %cst_40 : f32 to vector<16x1xf32>
    %87 = arith.divf %85, %86 : vector<16x1xf32>
    %88 = vector.broadcast %87 : vector<16x1xf32> to vector<16x32xf32>
    %89 = arith.subf %83, %88 : vector<16x32xf32>
    %90 = arith.mulf %89, %89 : vector<16x32xf32>
    %cst_41 = arith.constant dense<0.000000e+00> : vector<16xf32>
    %91 = vector.multi_reduction <add>, %90, %cst_41 [1] : vector<16x32xf32> to vector<16xf32>
    %92 = vector.shape_cast %91 : vector<16xf32> to vector<16x1xf32>
    %cst_42 = arith.constant 3.200000e+01 : f32
    %93 = vector.broadcast %cst_42 : f32 to vector<16x1xf32>
    %94 = arith.divf %92, %93 : vector<16x1xf32>
    %95 = vector.broadcast %87 : vector<16x1xf32> to vector<16x32xf32>
    %96 = arith.subf %83, %95 : vector<16x32xf32>
    %cst_43 = arith.constant 9.99999974E-6 : f32
    %97 = vector.broadcast %cst_43 : f32 to vector<16x1xf32>
    %98 = arith.addf %94, %97 : vector<16x1xf32>
    %99 = math.rsqrt %98 : vector<16x1xf32>
    %100 = vector.broadcast %99 : vector<16x1xf32> to vector<16x32xf32>
    %101 = arith.mulf %96, %100 : vector<16x32xf32>
    %102 = vector.broadcast %20 : vector<1x32xf32> to vector<16x32xf32>
    %103 = arith.mulf %101, %102 : vector<16x32xf32>
    %104 = vector.broadcast %21 : vector<1x32xf32> to vector<16x32xf32>
    %105 = arith.addf %103, %104 : vector<16x32xf32>
    %106 = arith.truncf %105 : vector<16x32xf32> to vector<16x32xbf16>
    %cst_44 = arith.constant dense<0.000000e+00> : vector<16x2048xf32>
    %107 = tpu.matmul %106, %12, %cst_44 {dimension_numbers = #tpu.dot_dimension_numbers<[1], [0], [0], [1], [0, 0, 1, 1], [], []>} : vector<16x32xbf16>, vector<32x2048xbf16>, vector<16x2048xf32> -> vector<16x2048xf32>
    %108 = vector.broadcast %14 : vector<1x2048xf32> to vector<16x2048xf32>
    %109 = arith.addf %107, %108 : vector<16x2048xf32>
    %cst_45 = arith.constant 0.000000e+00 : f32
    %110 = vector.broadcast %cst_45 : f32 to vector<16x2048xf32>
    %111 = arith.maximumf %109, %110 : vector<16x2048xf32>
    %112 = arith.truncf %111 : vector<16x2048xf32> to vector<16x2048xbf16>
    %cst_46 = arith.constant dense<0.000000e+00> : vector<16x32xf32>
    %113 = tpu.matmul %112, %16, %cst_46 {dimension_numbers = #tpu.dot_dimension_numbers<[1], [0], [0], [1], [0, 0, 1, 1], [], []>} : vector<16x2048xbf16>, vector<2048x32xbf16>, vector<16x32xf32> -> vector<16x32xf32>
    %114 = vector.broadcast %22 : vector<1x32xf32> to vector<16x32xf32>
    %115 = arith.addf %113, %114 : vector<16x32xf32>
    %116 = arith.addf %105, %115 : vector<16x32xf32>
    %cst_47 = arith.constant dense<0.000000e+00> : vector<16xf32>
    %117 = vector.multi_reduction <add>, %116, %cst_47 [1] : vector<16x32xf32> to vector<16xf32>
    %118 = vector.shape_cast %117 : vector<16xf32> to vector<16x1xf32>
    %cst_48 = arith.constant 3.200000e+01 : f32
    %119 = vector.broadcast %cst_48 : f32 to vector<16x1xf32>
    %120 = arith.divf %118, %119 : vector<16x1xf32>
    %121 = vector.broadcast %120 : vector<16x1xf32> to vector<16x32xf32>
    %122 = arith.subf %116, %121 : vector<16x32xf32>
    %123 = arith.mulf %122, %122 : vector<16x32xf32>
    %cst_49 = arith.constant dense<0.000000e+00> : vector<16xf32>
    %124 = vector.multi_reduction <add>, %123, %cst_49 [1] : vector<16x32xf32> to vector<16xf32>
    %125 = vector.shape_cast %124 : vector<16xf32> to vector<16x1xf32>
    %cst_50 = arith.constant 3.200000e+01 : f32
    %126 = vector.broadcast %cst_50 : f32 to vector<16x1xf32>
    %127 = arith.divf %125, %126 : vector<16x1xf32>
    %128 = vector.broadcast %120 : vector<16x1xf32> to vector<16x32xf32>
    %129 = arith.subf %116, %128 : vector<16x32xf32>
    %cst_51 = arith.constant 9.99999974E-6 : f32
    %130 = vector.broadcast %cst_51 : f32 to vector<16x1xf32>
    %131 = arith.addf %127, %130 : vector<16x1xf32>
    %132 = math.rsqrt %131 : vector<16x1xf32>
    %133 = vector.broadcast %132 : vector<16x1xf32> to vector<16x32xf32>
    %134 = arith.mulf %129, %133 : vector<16x32xf32>
    %135 = vector.broadcast %23 : vector<1x32xf32> to vector<16x32xf32>
    %136 = arith.mulf %134, %135 : vector<16x32xf32>
    %137 = vector.broadcast %24 : vector<1x32xf32> to vector<16x32xf32>
    %138 = arith.addf %136, %137 : vector<16x32xf32>
    %c1 = arith.constant 1 : index
    %c0_52 = arith.constant 0 : index
    %c0_53 = arith.constant 0 : index
    %139 = vector.load %arg6[%c1, %c0_52, %c0_53] : memref<4x32x128xbf16, #tpu.memory_space<vmem>>, vector<1x32x128xbf16>
    %140 = vector.shape_cast %139 : vector<1x32x128xbf16> to vector<32x128xbf16>
    %c1_54 = arith.constant 1 : index
    %c0_55 = arith.constant 0 : index
    %c0_56 = arith.constant 0 : index
    %141 = vector.load %arg7[%c1_54, %c0_55, %c0_56] : memref<4x1x128xf32, #tpu.memory_space<vmem>>, vector<1x1x128xf32>
    %142 = vector.shape_cast %141 : vector<1x1x128xf32> to vector<1x128xf32>
    %c1_57 = arith.constant 1 : index
    %c0_58 = arith.constant 0 : index
    %c0_59 = arith.constant 0 : index
    %143 = vector.load %arg8[%c1_57, %c0_58, %c0_59] : memref<4x32x32xbf16, #tpu.memory_space<vmem>>, vector<1x32x32xbf16>
    %144 = vector.shape_cast %143 : vector<1x32x32xbf16> to vector<32x32xbf16>
    %c1_60 = arith.constant 1 : index
    %c0_61 = arith.constant 0 : index
    %c0_62 = arith.constant 0 : index
    %145 = vector.load %arg10[%c1_60, %c0_61, %c0_62] : memref<4x32x2048xbf16, #tpu.memory_space<vmem>>, vector<1x32x2048xbf16>
    %146 = vector.shape_cast %145 : vector<1x32x2048xbf16> to vector<32x2048xbf16>
    %c1_63 = arith.constant 1 : index
    %c0_64 = arith.constant 0 : index
    %c0_65 = arith.constant 0 : index
    %147 = vector.load %arg11[%c1_63, %c0_64, %c0_65] : memref<4x1x2048xf32, #tpu.memory_space<vmem>>, vector<1x1x2048xf32>
    %148 = vector.shape_cast %147 : vector<1x1x2048xf32> to vector<1x2048xf32>
    %c1_66 = arith.constant 1 : index
    %c0_67 = arith.constant 0 : index
    %c0_68 = arith.constant 0 : index
    %149 = vector.load %arg12[%c1_66, %c0_67, %c0_68] : memref<4x2048x32xbf16, #tpu.memory_space<vmem>>, vector<1x2048x32xbf16>
    %150 = vector.shape_cast %149 : vector<1x2048x32xbf16> to vector<2048x32xbf16>
    %c1_69 = arith.constant 1 : index
    %c0_70 = arith.constant 0 : index
    %c0_71 = arith.constant 0 : index
    %151 = vector.load %arg9[%c1_69, %c0_70, %c0_71] : memref<4x8x32xf32, #tpu.memory_space<vmem>>, vector<1x8x32xf32>
    %152 = vector.shape_cast %151 : vector<1x8x32xf32> to vector<8x32xf32>
    %153 = vector.extract_strided_slice %152 {offsets = [0, 0], sizes = [1, 32], strides = [1, 1]} : vector<8x32xf32> to vector<1x32xf32>
    %154 = vector.extract_strided_slice %152 {offsets = [1, 0], sizes = [1, 32], strides = [1, 1]} : vector<8x32xf32> to vector<1x32xf32>
    %155 = vector.extract_strided_slice %152 {offsets = [2, 0], sizes = [1, 32], strides = [1, 1]} : vector<8x32xf32> to vector<1x32xf32>
    %156 = vector.extract_strided_slice %152 {offsets = [3, 0], sizes = [1, 32], strides = [1, 1]} : vector<8x32xf32> to vector<1x32xf32>
    %157 = vector.extract_strided_slice %152 {offsets = [4, 0], sizes = [1, 32], strides = [1, 1]} : vector<8x32xf32> to vector<1x32xf32>
    %158 = vector.extract_strided_slice %152 {offsets = [5, 0], sizes = [1, 32], strides = [1, 1]} : vector<8x32xf32> to vector<1x32xf32>
    %159 = arith.truncf %138 : vector<16x32xf32> to vector<16x32xbf16>
    %cst_72 = arith.constant dense<0.000000e+00> : vector<16x128xf32>
    %160 = tpu.matmul %159, %140, %cst_72 {dimension_numbers = #tpu.dot_dimension_numbers<[1], [0], [0], [1], [0, 0, 1, 1], [], []>} : vector<16x32xbf16>, vector<32x128xbf16>, vector<16x128xf32> -> vector<16x128xf32>
    %161 = vector.broadcast %142 : vector<1x128xf32> to vector<16x128xf32>
    %162 = arith.addf %160, %161 : vector<16x128xf32>
    %163 = vector.extract_strided_slice %162 {offsets = [0, 0], sizes = [16, 32], strides = [1, 1]} : vector<16x128xf32> to vector<16x32xf32>
    %164 = vector.extract_strided_slice %162 {offsets = [0, 32], sizes = [16, 32], strides = [1, 1]} : vector<16x128xf32> to vector<16x32xf32>
    %165 = vector.extract_strided_slice %162 {offsets = [0, 64], sizes = [16, 32], strides = [1, 1]} : vector<16x128xf32> to vector<16x32xf32>
    %166 = vector.extract_strided_slice %163 {offsets = [0, 0], sizes = [8, 32], strides = [1, 1]} : vector<16x32xf32> to vector<8x32xf32>
    %cst_73 = arith.constant 5.000000e-01 : f32
    %167 = vector.broadcast %cst_73 : f32 to vector<8x32xf32>
    %168 = arith.mulf %166, %167 : vector<8x32xf32>
    %169 = vector.extract_strided_slice %163 {offsets = [8, 0], sizes = [8, 32], strides = [1, 1]} : vector<16x32xf32> to vector<8x32xf32>
    %cst_74 = arith.constant 5.000000e-01 : f32
    %170 = vector.broadcast %cst_74 : f32 to vector<8x32xf32>
    %171 = arith.mulf %169, %170 : vector<8x32xf32>
    %172 = vector.extract_strided_slice %164 {offsets = [0, 0], sizes = [8, 32], strides = [1, 1]} : vector<16x32xf32> to vector<8x32xf32>
    %173 = vector.extract_strided_slice %164 {offsets = [8, 0], sizes = [8, 32], strides = [1, 1]} : vector<16x32xf32> to vector<8x32xf32>
    %174 = vector.extract_strided_slice %165 {offsets = [0, 0], sizes = [8, 32], strides = [1, 1]} : vector<16x32xf32> to vector<8x32xf32>
    %175 = vector.extract_strided_slice %165 {offsets = [8, 0], sizes = [8, 32], strides = [1, 1]} : vector<16x32xf32> to vector<8x32xf32>
    %176 = arith.mulf %168, %172 : vector<8x32xf32>
    %cst_75 = arith.constant dense<0.000000e+00> : vector<8x8xf32>
    %177 = tpu.matmul %176, %0, %cst_75 {dimension_numbers = #tpu.dot_dimension_numbers<[1], [0], [0], [1], [0, 0, 1, 1], [], []>} : vector<8x32xf32>, vector<32x8xf32>, vector<8x8xf32> -> vector<8x8xf32>
    %178 = arith.mulf %168, %173 : vector<8x32xf32>
    %cst_76 = arith.constant dense<0.000000e+00> : vector<8x8xf32>
    %179 = tpu.matmul %178, %0, %cst_76 {dimension_numbers = #tpu.dot_dimension_numbers<[1], [0], [0], [1], [0, 0, 1, 1], [], []>} : vector<8x32xf32>, vector<32x8xf32>, vector<8x8xf32> -> vector<8x8xf32>
    %180 = arith.mulf %171, %172 : vector<8x32xf32>
    %cst_77 = arith.constant dense<0.000000e+00> : vector<8x8xf32>
    %181 = tpu.matmul %180, %0, %cst_77 {dimension_numbers = #tpu.dot_dimension_numbers<[1], [0], [0], [1], [0, 0, 1, 1], [], []>} : vector<8x32xf32>, vector<32x8xf32>, vector<8x8xf32> -> vector<8x8xf32>
    %182 = arith.mulf %171, %173 : vector<8x32xf32>
    %cst_78 = arith.constant dense<0.000000e+00> : vector<8x8xf32>
    %183 = tpu.matmul %182, %0, %cst_78 {dimension_numbers = #tpu.dot_dimension_numbers<[1], [0], [0], [1], [0, 0, 1, 1], [], []>} : vector<8x32xf32>, vector<32x8xf32>, vector<8x8xf32> -> vector<8x8xf32>
    %184 = arith.maximumf %177, %179 : vector<8x8xf32>
    %185 = arith.subf %177, %184 : vector<8x8xf32>
    %186 = math.exp %185 : vector<8x8xf32>
    %187 = arith.subf %179, %184 : vector<8x8xf32>
    %188 = math.exp %187 : vector<8x8xf32>
    %189 = arith.addf %186, %188 : vector<8x8xf32>
    %190 = tpu.reciprocal %189 {approx = true} : vector<8x8xf32> -> vector<8x8xf32>
    %191 = arith.mulf %186, %190 : vector<8x8xf32>
    %cst_79 = arith.constant dense<0.000000e+00> : vector<8x32xf32>
    %192 = tpu.matmul %191, %1, %cst_79 {dimension_numbers = #tpu.dot_dimension_numbers<[1], [0], [0], [1], [0, 0, 1, 1], [], []>} : vector<8x8xf32>, vector<8x32xf32>, vector<8x32xf32> -> vector<8x32xf32>
    %193 = arith.mulf %192, %174 : vector<8x32xf32>
    %194 = arith.mulf %188, %190 : vector<8x8xf32>
    %cst_80 = arith.constant dense<0.000000e+00> : vector<8x32xf32>
    %195 = tpu.matmul %194, %1, %cst_80 {dimension_numbers = #tpu.dot_dimension_numbers<[1], [0], [0], [1], [0, 0, 1, 1], [], []>} : vector<8x8xf32>, vector<8x32xf32>, vector<8x32xf32> -> vector<8x32xf32>
    %196 = arith.mulf %195, %175 : vector<8x32xf32>
    %197 = arith.addf %193, %196 : vector<8x32xf32>
    %198 = arith.maximumf %181, %183 : vector<8x8xf32>
    %199 = arith.subf %181, %198 : vector<8x8xf32>
    %200 = math.exp %199 : vector<8x8xf32>
    %201 = arith.subf %183, %198 : vector<8x8xf32>
    %202 = math.exp %201 : vector<8x8xf32>
    %203 = arith.addf %200, %202 : vector<8x8xf32>
    %204 = tpu.reciprocal %203 {approx = true} : vector<8x8xf32> -> vector<8x8xf32>
    %205 = arith.mulf %200, %204 : vector<8x8xf32>
    %cst_81 = arith.constant dense<0.000000e+00> : vector<8x32xf32>
    %206 = tpu.matmul %205, %1, %cst_81 {dimension_numbers = #tpu.dot_dimension_numbers<[1], [0], [0], [1], [0, 0, 1, 1], [], []>} : vector<8x8xf32>, vector<8x32xf32>, vector<8x32xf32> -> vector<8x32xf32>
    %207 = arith.mulf %206, %174 : vector<8x32xf32>
    %208 = arith.mulf %202, %204 : vector<8x8xf32>
    %cst_82 = arith.constant dense<0.000000e+00> : vector<8x32xf32>
    %209 = tpu.matmul %208, %1, %cst_82 {dimension_numbers = #tpu.dot_dimension_numbers<[1], [0], [0], [1], [0, 0, 1, 1], [], []>} : vector<8x8xf32>, vector<8x32xf32>, vector<8x32xf32> -> vector<8x32xf32>
    %210 = arith.mulf %209, %175 : vector<8x32xf32>
    %211 = arith.addf %207, %210 : vector<8x32xf32>
    %212 = tpu.concatenate %197, %211 in 0 : vector<8x32xf32>, vector<8x32xf32> -> vector<16x32xf32>
    %213 = arith.truncf %212 : vector<16x32xf32> to vector<16x32xbf16>
    %cst_83 = arith.constant dense<0.000000e+00> : vector<16x32xf32>
    %214 = tpu.matmul %213, %144, %cst_83 {dimension_numbers = #tpu.dot_dimension_numbers<[1], [0], [0], [1], [0, 0, 1, 1], [], []>} : vector<16x32xbf16>, vector<32x32xbf16>, vector<16x32xf32> -> vector<16x32xf32>
    %215 = vector.broadcast %153 : vector<1x32xf32> to vector<16x32xf32>
    %216 = arith.addf %214, %215 : vector<16x32xf32>
    %217 = arith.addf %138, %216 : vector<16x32xf32>
    %cst_84 = arith.constant dense<0.000000e+00> : vector<16xf32>
    %218 = vector.multi_reduction <add>, %217, %cst_84 [1] : vector<16x32xf32> to vector<16xf32>
    %219 = vector.shape_cast %218 : vector<16xf32> to vector<16x1xf32>
    %cst_85 = arith.constant 3.200000e+01 : f32
    %220 = vector.broadcast %cst_85 : f32 to vector<16x1xf32>
    %221 = arith.divf %219, %220 : vector<16x1xf32>
    %222 = vector.broadcast %221 : vector<16x1xf32> to vector<16x32xf32>
    %223 = arith.subf %217, %222 : vector<16x32xf32>
    %224 = arith.mulf %223, %223 : vector<16x32xf32>
    %cst_86 = arith.constant dense<0.000000e+00> : vector<16xf32>
    %225 = vector.multi_reduction <add>, %224, %cst_86 [1] : vector<16x32xf32> to vector<16xf32>
    %226 = vector.shape_cast %225 : vector<16xf32> to vector<16x1xf32>
    %cst_87 = arith.constant 3.200000e+01 : f32
    %227 = vector.broadcast %cst_87 : f32 to vector<16x1xf32>
    %228 = arith.divf %226, %227 : vector<16x1xf32>
    %229 = vector.broadcast %221 : vector<16x1xf32> to vector<16x32xf32>
    %230 = arith.subf %217, %229 : vector<16x32xf32>
    %cst_88 = arith.constant 9.99999974E-6 : f32
    %231 = vector.broadcast %cst_88 : f32 to vector<16x1xf32>
    %232 = arith.addf %228, %231 : vector<16x1xf32>
    %233 = math.rsqrt %232 : vector<16x1xf32>
    %234 = vector.broadcast %233 : vector<16x1xf32> to vector<16x32xf32>
    %235 = arith.mulf %230, %234 : vector<16x32xf32>
    %236 = vector.broadcast %154 : vector<1x32xf32> to vector<16x32xf32>
    %237 = arith.mulf %235, %236 : vector<16x32xf32>
    %238 = vector.broadcast %155 : vector<1x32xf32> to vector<16x32xf32>
    %239 = arith.addf %237, %238 : vector<16x32xf32>
    %240 = arith.truncf %239 : vector<16x32xf32> to vector<16x32xbf16>
    %cst_89 = arith.constant dense<0.000000e+00> : vector<16x2048xf32>
    %241 = tpu.matmul %240, %146, %cst_89 {dimension_numbers = #tpu.dot_dimension_numbers<[1], [0], [0], [1], [0, 0, 1, 1], [], []>} : vector<16x32xbf16>, vector<32x2048xbf16>, vector<16x2048xf32> -> vector<16x2048xf32>
    %242 = vector.broadcast %148 : vector<1x2048xf32> to vector<16x2048xf32>
    %243 = arith.addf %241, %242 : vector<16x2048xf32>
    %cst_90 = arith.constant 0.000000e+00 : f32
    %244 = vector.broadcast %cst_90 : f32 to vector<16x2048xf32>
    %245 = arith.maximumf %243, %244 : vector<16x2048xf32>
    %246 = arith.truncf %245 : vector<16x2048xf32> to vector<16x2048xbf16>
    %cst_91 = arith.constant dense<0.000000e+00> : vector<16x32xf32>
    %247 = tpu.matmul %246, %150, %cst_91 {dimension_numbers = #tpu.dot_dimension_numbers<[1], [0], [0], [1], [0, 0, 1, 1], [], []>} : vector<16x2048xbf16>, vector<2048x32xbf16>, vector<16x32xf32> -> vector<16x32xf32>
    %248 = vector.broadcast %156 : vector<1x32xf32> to vector<16x32xf32>
    %249 = arith.addf %247, %248 : vector<16x32xf32>
    %250 = arith.addf %239, %249 : vector<16x32xf32>
    %cst_92 = arith.constant dense<0.000000e+00> : vector<16xf32>
    %251 = vector.multi_reduction <add>, %250, %cst_92 [1] : vector<16x32xf32> to vector<16xf32>
    %252 = vector.shape_cast %251 : vector<16xf32> to vector<16x1xf32>
    %cst_93 = arith.constant 3.200000e+01 : f32
    %253 = vector.broadcast %cst_93 : f32 to vector<16x1xf32>
    %254 = arith.divf %252, %253 : vector<16x1xf32>
    %255 = vector.broadcast %254 : vector<16x1xf32> to vector<16x32xf32>
    %256 = arith.subf %250, %255 : vector<16x32xf32>
    %257 = arith.mulf %256, %256 : vector<16x32xf32>
    %cst_94 = arith.constant dense<0.000000e+00> : vector<16xf32>
    %258 = vector.multi_reduction <add>, %257, %cst_94 [1] : vector<16x32xf32> to vector<16xf32>
    %259 = vector.shape_cast %258 : vector<16xf32> to vector<16x1xf32>
    %cst_95 = arith.constant 3.200000e+01 : f32
    %260 = vector.broadcast %cst_95 : f32 to vector<16x1xf32>
    %261 = arith.divf %259, %260 : vector<16x1xf32>
    %262 = vector.broadcast %254 : vector<16x1xf32> to vector<16x32xf32>
    %263 = arith.subf %250, %262 : vector<16x32xf32>
    %cst_96 = arith.constant 9.99999974E-6 : f32
    %264 = vector.broadcast %cst_96 : f32 to vector<16x1xf32>
    %265 = arith.addf %261, %264 : vector<16x1xf32>
    %266 = math.rsqrt %265 : vector<16x1xf32>
    %267 = vector.broadcast %266 : vector<16x1xf32> to vector<16x32xf32>
    %268 = arith.mulf %263, %267 : vector<16x32xf32>
    %269 = vector.broadcast %157 : vector<1x32xf32> to vector<16x32xf32>
    %270 = arith.mulf %268, %269 : vector<16x32xf32>
    %271 = vector.broadcast %158 : vector<1x32xf32> to vector<16x32xf32>
    %272 = arith.addf %270, %271 : vector<16x32xf32>
    %c2 = arith.constant 2 : index
    %c0_97 = arith.constant 0 : index
    %c0_98 = arith.constant 0 : index
    %273 = vector.load %arg6[%c2, %c0_97, %c0_98] : memref<4x32x128xbf16, #tpu.memory_space<vmem>>, vector<1x32x128xbf16>
    %274 = vector.shape_cast %273 : vector<1x32x128xbf16> to vector<32x128xbf16>
    %c2_99 = arith.constant 2 : index
    %c0_100 = arith.constant 0 : index
    %c0_101 = arith.constant 0 : index
    %275 = vector.load %arg7[%c2_99, %c0_100, %c0_101] : memref<4x1x128xf32, #tpu.memory_space<vmem>>, vector<1x1x128xf32>
    %276 = vector.shape_cast %275 : vector<1x1x128xf32> to vector<1x128xf32>
    %c2_102 = arith.constant 2 : index
    %c0_103 = arith.constant 0 : index
    %c0_104 = arith.constant 0 : index
    %277 = vector.load %arg8[%c2_102, %c0_103, %c0_104] : memref<4x32x32xbf16, #tpu.memory_space<vmem>>, vector<1x32x32xbf16>
    %278 = vector.shape_cast %277 : vector<1x32x32xbf16> to vector<32x32xbf16>
    %c2_105 = arith.constant 2 : index
    %c0_106 = arith.constant 0 : index
    %c0_107 = arith.constant 0 : index
    %279 = vector.load %arg10[%c2_105, %c0_106, %c0_107] : memref<4x32x2048xbf16, #tpu.memory_space<vmem>>, vector<1x32x2048xbf16>
    %280 = vector.shape_cast %279 : vector<1x32x2048xbf16> to vector<32x2048xbf16>
    %c2_108 = arith.constant 2 : index
    %c0_109 = arith.constant 0 : index
    %c0_110 = arith.constant 0 : index
    %281 = vector.load %arg11[%c2_108, %c0_109, %c0_110] : memref<4x1x2048xf32, #tpu.memory_space<vmem>>, vector<1x1x2048xf32>
    %282 = vector.shape_cast %281 : vector<1x1x2048xf32> to vector<1x2048xf32>
    %c2_111 = arith.constant 2 : index
    %c0_112 = arith.constant 0 : index
    %c0_113 = arith.constant 0 : index
    %283 = vector.load %arg12[%c2_111, %c0_112, %c0_113] : memref<4x2048x32xbf16, #tpu.memory_space<vmem>>, vector<1x2048x32xbf16>
    %284 = vector.shape_cast %283 : vector<1x2048x32xbf16> to vector<2048x32xbf16>
    %c2_114 = arith.constant 2 : index
    %c0_115 = arith.constant 0 : index
    %c0_116 = arith.constant 0 : index
    %285 = vector.load %arg9[%c2_114, %c0_115, %c0_116] : memref<4x8x32xf32, #tpu.memory_space<vmem>>, vector<1x8x32xf32>
    %286 = vector.shape_cast %285 : vector<1x8x32xf32> to vector<8x32xf32>
    %287 = vector.extract_strided_slice %286 {offsets = [0, 0], sizes = [1, 32], strides = [1, 1]} : vector<8x32xf32> to vector<1x32xf32>
    %288 = vector.extract_strided_slice %286 {offsets = [1, 0], sizes = [1, 32], strides = [1, 1]} : vector<8x32xf32> to vector<1x32xf32>
    %289 = vector.extract_strided_slice %286 {offsets = [2, 0], sizes = [1, 32], strides = [1, 1]} : vector<8x32xf32> to vector<1x32xf32>
    %290 = vector.extract_strided_slice %286 {offsets = [3, 0], sizes = [1, 32], strides = [1, 1]} : vector<8x32xf32> to vector<1x32xf32>
    %291 = vector.extract_strided_slice %286 {offsets = [4, 0], sizes = [1, 32], strides = [1, 1]} : vector<8x32xf32> to vector<1x32xf32>
    %292 = vector.extract_strided_slice %286 {offsets = [5, 0], sizes = [1, 32], strides = [1, 1]} : vector<8x32xf32> to vector<1x32xf32>
    %293 = arith.truncf %272 : vector<16x32xf32> to vector<16x32xbf16>
    %cst_117 = arith.constant dense<0.000000e+00> : vector<16x128xf32>
    %294 = tpu.matmul %293, %274, %cst_117 {dimension_numbers = #tpu.dot_dimension_numbers<[1], [0], [0], [1], [0, 0, 1, 1], [], []>} : vector<16x32xbf16>, vector<32x128xbf16>, vector<16x128xf32> -> vector<16x128xf32>
    %295 = vector.broadcast %276 : vector<1x128xf32> to vector<16x128xf32>
    %296 = arith.addf %294, %295 : vector<16x128xf32>
    %297 = vector.extract_strided_slice %296 {offsets = [0, 0], sizes = [16, 32], strides = [1, 1]} : vector<16x128xf32> to vector<16x32xf32>
    %298 = vector.extract_strided_slice %296 {offsets = [0, 32], sizes = [16, 32], strides = [1, 1]} : vector<16x128xf32> to vector<16x32xf32>
    %299 = vector.extract_strided_slice %296 {offsets = [0, 64], sizes = [16, 32], strides = [1, 1]} : vector<16x128xf32> to vector<16x32xf32>
    %300 = vector.extract_strided_slice %297 {offsets = [0, 0], sizes = [8, 32], strides = [1, 1]} : vector<16x32xf32> to vector<8x32xf32>
    %cst_118 = arith.constant 5.000000e-01 : f32
    %301 = vector.broadcast %cst_118 : f32 to vector<8x32xf32>
    %302 = arith.mulf %300, %301 : vector<8x32xf32>
    %303 = vector.extract_strided_slice %297 {offsets = [8, 0], sizes = [8, 32], strides = [1, 1]} : vector<16x32xf32> to vector<8x32xf32>
    %cst_119 = arith.constant 5.000000e-01 : f32
    %304 = vector.broadcast %cst_119 : f32 to vector<8x32xf32>
    %305 = arith.mulf %303, %304 : vector<8x32xf32>
    %306 = vector.extract_strided_slice %298 {offsets = [0, 0], sizes = [8, 32], strides = [1, 1]} : vector<16x32xf32> to vector<8x32xf32>
    %307 = vector.extract_strided_slice %298 {offsets = [8, 0], sizes = [8, 32], strides = [1, 1]} : vector<16x32xf32> to vector<8x32xf32>
    %308 = vector.extract_strided_slice %299 {offsets = [0, 0], sizes = [8, 32], strides = [1, 1]} : vector<16x32xf32> to vector<8x32xf32>
    %309 = vector.extract_strided_slice %299 {offsets = [8, 0], sizes = [8, 32], strides = [1, 1]} : vector<16x32xf32> to vector<8x32xf32>
    %310 = arith.mulf %302, %306 : vector<8x32xf32>
    %cst_120 = arith.constant dense<0.000000e+00> : vector<8x8xf32>
    %311 = tpu.matmul %310, %0, %cst_120 {dimension_numbers = #tpu.dot_dimension_numbers<[1], [0], [0], [1], [0, 0, 1, 1], [], []>} : vector<8x32xf32>, vector<32x8xf32>, vector<8x8xf32> -> vector<8x8xf32>
    %312 = arith.mulf %302, %307 : vector<8x32xf32>
    %cst_121 = arith.constant dense<0.000000e+00> : vector<8x8xf32>
    %313 = tpu.matmul %312, %0, %cst_121 {dimension_numbers = #tpu.dot_dimension_numbers<[1], [0], [0], [1], [0, 0, 1, 1], [], []>} : vector<8x32xf32>, vector<32x8xf32>, vector<8x8xf32> -> vector<8x8xf32>
    %314 = arith.mulf %305, %306 : vector<8x32xf32>
    %cst_122 = arith.constant dense<0.000000e+00> : vector<8x8xf32>
    %315 = tpu.matmul %314, %0, %cst_122 {dimension_numbers = #tpu.dot_dimension_numbers<[1], [0], [0], [1], [0, 0, 1, 1], [], []>} : vector<8x32xf32>, vector<32x8xf32>, vector<8x8xf32> -> vector<8x8xf32>
    %316 = arith.mulf %305, %307 : vector<8x32xf32>
    %cst_123 = arith.constant dense<0.000000e+00> : vector<8x8xf32>
    %317 = tpu.matmul %316, %0, %cst_123 {dimension_numbers = #tpu.dot_dimension_numbers<[1], [0], [0], [1], [0, 0, 1, 1], [], []>} : vector<8x32xf32>, vector<32x8xf32>, vector<8x8xf32> -> vector<8x8xf32>
    %318 = arith.maximumf %311, %313 : vector<8x8xf32>
    %319 = arith.subf %311, %318 : vector<8x8xf32>
    %320 = math.exp %319 : vector<8x8xf32>
    %321 = arith.subf %313, %318 : vector<8x8xf32>
    %322 = math.exp %321 : vector<8x8xf32>
    %323 = arith.addf %320, %322 : vector<8x8xf32>
    %324 = tpu.reciprocal %323 {approx = true} : vector<8x8xf32> -> vector<8x8xf32>
    %325 = arith.mulf %320, %324 : vector<8x8xf32>
    %cst_124 = arith.constant dense<0.000000e+00> : vector<8x32xf32>
    %326 = tpu.matmul %325, %1, %cst_124 {dimension_numbers = #tpu.dot_dimension_numbers<[1], [0], [0], [1], [0, 0, 1, 1], [], []>} : vector<8x8xf32>, vector<8x32xf32>, vector<8x32xf32> -> vector<8x32xf32>
    %327 = arith.mulf %326, %308 : vector<8x32xf32>
    %328 = arith.mulf %322, %324 : vector<8x8xf32>
    %cst_125 = arith.constant dense<0.000000e+00> : vector<8x32xf32>
    %329 = tpu.matmul %328, %1, %cst_125 {dimension_numbers = #tpu.dot_dimension_numbers<[1], [0], [0], [1], [0, 0, 1, 1], [], []>} : vector<8x8xf32>, vector<8x32xf32>, vector<8x32xf32> -> vector<8x32xf32>
    %330 = arith.mulf %329, %309 : vector<8x32xf32>
    %331 = arith.addf %327, %330 : vector<8x32xf32>
    %332 = arith.maximumf %315, %317 : vector<8x8xf32>
    %333 = arith.subf %315, %332 : vector<8x8xf32>
    %334 = math.exp %333 : vector<8x8xf32>
    %335 = arith.subf %317, %332 : vector<8x8xf32>
    %336 = math.exp %335 : vector<8x8xf32>
    %337 = arith.addf %334, %336 : vector<8x8xf32>
    %338 = tpu.reciprocal %337 {approx = true} : vector<8x8xf32> -> vector<8x8xf32>
    %339 = arith.mulf %334, %338 : vector<8x8xf32>
    %cst_126 = arith.constant dense<0.000000e+00> : vector<8x32xf32>
    %340 = tpu.matmul %339, %1, %cst_126 {dimension_numbers = #tpu.dot_dimension_numbers<[1], [0], [0], [1], [0, 0, 1, 1], [], []>} : vector<8x8xf32>, vector<8x32xf32>, vector<8x32xf32> -> vector<8x32xf32>
    %341 = arith.mulf %340, %308 : vector<8x32xf32>
    %342 = arith.mulf %336, %338 : vector<8x8xf32>
    %cst_127 = arith.constant dense<0.000000e+00> : vector<8x32xf32>
    %343 = tpu.matmul %342, %1, %cst_127 {dimension_numbers = #tpu.dot_dimension_numbers<[1], [0], [0], [1], [0, 0, 1, 1], [], []>} : vector<8x8xf32>, vector<8x32xf32>, vector<8x32xf32> -> vector<8x32xf32>
    %344 = arith.mulf %343, %309 : vector<8x32xf32>
    %345 = arith.addf %341, %344 : vector<8x32xf32>
    %346 = tpu.concatenate %331, %345 in 0 : vector<8x32xf32>, vector<8x32xf32> -> vector<16x32xf32>
    %347 = arith.truncf %346 : vector<16x32xf32> to vector<16x32xbf16>
    %cst_128 = arith.constant dense<0.000000e+00> : vector<16x32xf32>
    %348 = tpu.matmul %347, %278, %cst_128 {dimension_numbers = #tpu.dot_dimension_numbers<[1], [0], [0], [1], [0, 0, 1, 1], [], []>} : vector<16x32xbf16>, vector<32x32xbf16>, vector<16x32xf32> -> vector<16x32xf32>
    %349 = vector.broadcast %287 : vector<1x32xf32> to vector<16x32xf32>
    %350 = arith.addf %348, %349 : vector<16x32xf32>
    %351 = arith.addf %272, %350 : vector<16x32xf32>
    %cst_129 = arith.constant dense<0.000000e+00> : vector<16xf32>
    %352 = vector.multi_reduction <add>, %351, %cst_129 [1] : vector<16x32xf32> to vector<16xf32>
    %353 = vector.shape_cast %352 : vector<16xf32> to vector<16x1xf32>
    %cst_130 = arith.constant 3.200000e+01 : f32
    %354 = vector.broadcast %cst_130 : f32 to vector<16x1xf32>
    %355 = arith.divf %353, %354 : vector<16x1xf32>
    %356 = vector.broadcast %355 : vector<16x1xf32> to vector<16x32xf32>
    %357 = arith.subf %351, %356 : vector<16x32xf32>
    %358 = arith.mulf %357, %357 : vector<16x32xf32>
    %cst_131 = arith.constant dense<0.000000e+00> : vector<16xf32>
    %359 = vector.multi_reduction <add>, %358, %cst_131 [1] : vector<16x32xf32> to vector<16xf32>
    %360 = vector.shape_cast %359 : vector<16xf32> to vector<16x1xf32>
    %cst_132 = arith.constant 3.200000e+01 : f32
    %361 = vector.broadcast %cst_132 : f32 to vector<16x1xf32>
    %362 = arith.divf %360, %361 : vector<16x1xf32>
    %363 = vector.broadcast %355 : vector<16x1xf32> to vector<16x32xf32>
    %364 = arith.subf %351, %363 : vector<16x32xf32>
    %cst_133 = arith.constant 9.99999974E-6 : f32
    %365 = vector.broadcast %cst_133 : f32 to vector<16x1xf32>
    %366 = arith.addf %362, %365 : vector<16x1xf32>
    %367 = math.rsqrt %366 : vector<16x1xf32>
    %368 = vector.broadcast %367 : vector<16x1xf32> to vector<16x32xf32>
    %369 = arith.mulf %364, %368 : vector<16x32xf32>
    %370 = vector.broadcast %288 : vector<1x32xf32> to vector<16x32xf32>
    %371 = arith.mulf %369, %370 : vector<16x32xf32>
    %372 = vector.broadcast %289 : vector<1x32xf32> to vector<16x32xf32>
    %373 = arith.addf %371, %372 : vector<16x32xf32>
    %374 = arith.truncf %373 : vector<16x32xf32> to vector<16x32xbf16>
    %cst_134 = arith.constant dense<0.000000e+00> : vector<16x2048xf32>
    %375 = tpu.matmul %374, %280, %cst_134 {dimension_numbers = #tpu.dot_dimension_numbers<[1], [0], [0], [1], [0, 0, 1, 1], [], []>} : vector<16x32xbf16>, vector<32x2048xbf16>, vector<16x2048xf32> -> vector<16x2048xf32>
    %376 = vector.broadcast %282 : vector<1x2048xf32> to vector<16x2048xf32>
    %377 = arith.addf %375, %376 : vector<16x2048xf32>
    %cst_135 = arith.constant 0.000000e+00 : f32
    %378 = vector.broadcast %cst_135 : f32 to vector<16x2048xf32>
    %379 = arith.maximumf %377, %378 : vector<16x2048xf32>
    %380 = arith.truncf %379 : vector<16x2048xf32> to vector<16x2048xbf16>
    %cst_136 = arith.constant dense<0.000000e+00> : vector<16x32xf32>
    %381 = tpu.matmul %380, %284, %cst_136 {dimension_numbers = #tpu.dot_dimension_numbers<[1], [0], [0], [1], [0, 0, 1, 1], [], []>} : vector<16x2048xbf16>, vector<2048x32xbf16>, vector<16x32xf32> -> vector<16x32xf32>
    %382 = vector.broadcast %290 : vector<1x32xf32> to vector<16x32xf32>
    %383 = arith.addf %381, %382 : vector<16x32xf32>
    %384 = arith.addf %373, %383 : vector<16x32xf32>
    %cst_137 = arith.constant dense<0.000000e+00> : vector<16xf32>
    %385 = vector.multi_reduction <add>, %384, %cst_137 [1] : vector<16x32xf32> to vector<16xf32>
    %386 = vector.shape_cast %385 : vector<16xf32> to vector<16x1xf32>
    %cst_138 = arith.constant 3.200000e+01 : f32
    %387 = vector.broadcast %cst_138 : f32 to vector<16x1xf32>
    %388 = arith.divf %386, %387 : vector<16x1xf32>
    %389 = vector.broadcast %388 : vector<16x1xf32> to vector<16x32xf32>
    %390 = arith.subf %384, %389 : vector<16x32xf32>
    %391 = arith.mulf %390, %390 : vector<16x32xf32>
    %cst_139 = arith.constant dense<0.000000e+00> : vector<16xf32>
    %392 = vector.multi_reduction <add>, %391, %cst_139 [1] : vector<16x32xf32> to vector<16xf32>
    %393 = vector.shape_cast %392 : vector<16xf32> to vector<16x1xf32>
    %cst_140 = arith.constant 3.200000e+01 : f32
    %394 = vector.broadcast %cst_140 : f32 to vector<16x1xf32>
    %395 = arith.divf %393, %394 : vector<16x1xf32>
    %396 = vector.broadcast %388 : vector<16x1xf32> to vector<16x32xf32>
    %397 = arith.subf %384, %396 : vector<16x32xf32>
    %cst_141 = arith.constant 9.99999974E-6 : f32
    %398 = vector.broadcast %cst_141 : f32 to vector<16x1xf32>
    %399 = arith.addf %395, %398 : vector<16x1xf32>
    %400 = math.rsqrt %399 : vector<16x1xf32>
    %401 = vector.broadcast %400 : vector<16x1xf32> to vector<16x32xf32>
    %402 = arith.mulf %397, %401 : vector<16x32xf32>
    %403 = vector.broadcast %291 : vector<1x32xf32> to vector<16x32xf32>
    %404 = arith.mulf %402, %403 : vector<16x32xf32>
    %405 = vector.broadcast %292 : vector<1x32xf32> to vector<16x32xf32>
    %406 = arith.addf %404, %405 : vector<16x32xf32>
    %c3 = arith.constant 3 : index
    %c0_142 = arith.constant 0 : index
    %c0_143 = arith.constant 0 : index
    %407 = vector.load %arg6[%c3, %c0_142, %c0_143] : memref<4x32x128xbf16, #tpu.memory_space<vmem>>, vector<1x32x128xbf16>
    %408 = vector.shape_cast %407 : vector<1x32x128xbf16> to vector<32x128xbf16>
    %c3_144 = arith.constant 3 : index
    %c0_145 = arith.constant 0 : index
    %c0_146 = arith.constant 0 : index
    %409 = vector.load %arg7[%c3_144, %c0_145, %c0_146] : memref<4x1x128xf32, #tpu.memory_space<vmem>>, vector<1x1x128xf32>
    %410 = vector.shape_cast %409 : vector<1x1x128xf32> to vector<1x128xf32>
    %c3_147 = arith.constant 3 : index
    %c0_148 = arith.constant 0 : index
    %c0_149 = arith.constant 0 : index
    %411 = vector.load %arg8[%c3_147, %c0_148, %c0_149] : memref<4x32x32xbf16, #tpu.memory_space<vmem>>, vector<1x32x32xbf16>
    %412 = vector.shape_cast %411 : vector<1x32x32xbf16> to vector<32x32xbf16>
    %c3_150 = arith.constant 3 : index
    %c0_151 = arith.constant 0 : index
    %c0_152 = arith.constant 0 : index
    %413 = vector.load %arg10[%c3_150, %c0_151, %c0_152] : memref<4x32x2048xbf16, #tpu.memory_space<vmem>>, vector<1x32x2048xbf16>
    %414 = vector.shape_cast %413 : vector<1x32x2048xbf16> to vector<32x2048xbf16>
    %c3_153 = arith.constant 3 : index
    %c0_154 = arith.constant 0 : index
    %c0_155 = arith.constant 0 : index
    %415 = vector.load %arg11[%c3_153, %c0_154, %c0_155] : memref<4x1x2048xf32, #tpu.memory_space<vmem>>, vector<1x1x2048xf32>
    %416 = vector.shape_cast %415 : vector<1x1x2048xf32> to vector<1x2048xf32>
    %c3_156 = arith.constant 3 : index
    %c0_157 = arith.constant 0 : index
    %c0_158 = arith.constant 0 : index
    %417 = vector.load %arg12[%c3_156, %c0_157, %c0_158] : memref<4x2048x32xbf16, #tpu.memory_space<vmem>>, vector<1x2048x32xbf16>
    %418 = vector.shape_cast %417 : vector<1x2048x32xbf16> to vector<2048x32xbf16>
    %c3_159 = arith.constant 3 : index
    %c0_160 = arith.constant 0 : index
    %c0_161 = arith.constant 0 : index
    %419 = vector.load %arg9[%c3_159, %c0_160, %c0_161] : memref<4x8x32xf32, #tpu.memory_space<vmem>>, vector<1x8x32xf32>
    %420 = vector.shape_cast %419 : vector<1x8x32xf32> to vector<8x32xf32>
    %421 = vector.extract_strided_slice %420 {offsets = [0, 0], sizes = [1, 32], strides = [1, 1]} : vector<8x32xf32> to vector<1x32xf32>
    %422 = vector.extract_strided_slice %420 {offsets = [1, 0], sizes = [1, 32], strides = [1, 1]} : vector<8x32xf32> to vector<1x32xf32>
    %423 = vector.extract_strided_slice %420 {offsets = [2, 0], sizes = [1, 32], strides = [1, 1]} : vector<8x32xf32> to vector<1x32xf32>
    %424 = vector.extract_strided_slice %420 {offsets = [3, 0], sizes = [1, 32], strides = [1, 1]} : vector<8x32xf32> to vector<1x32xf32>
    %425 = vector.extract_strided_slice %420 {offsets = [4, 0], sizes = [1, 32], strides = [1, 1]} : vector<8x32xf32> to vector<1x32xf32>
    %426 = vector.extract_strided_slice %420 {offsets = [5, 0], sizes = [1, 32], strides = [1, 1]} : vector<8x32xf32> to vector<1x32xf32>
    %427 = arith.truncf %406 : vector<16x32xf32> to vector<16x32xbf16>
    %cst_162 = arith.constant dense<0.000000e+00> : vector<16x128xf32>
    %428 = tpu.matmul %427, %408, %cst_162 {dimension_numbers = #tpu.dot_dimension_numbers<[1], [0], [0], [1], [0, 0, 1, 1], [], []>} : vector<16x32xbf16>, vector<32x128xbf16>, vector<16x128xf32> -> vector<16x128xf32>
    %429 = vector.broadcast %410 : vector<1x128xf32> to vector<16x128xf32>
    %430 = arith.addf %428, %429 : vector<16x128xf32>
    %431 = vector.extract_strided_slice %430 {offsets = [0, 0], sizes = [16, 32], strides = [1, 1]} : vector<16x128xf32> to vector<16x32xf32>
    %432 = vector.extract_strided_slice %430 {offsets = [0, 32], sizes = [16, 32], strides = [1, 1]} : vector<16x128xf32> to vector<16x32xf32>
    %433 = vector.extract_strided_slice %430 {offsets = [0, 64], sizes = [16, 32], strides = [1, 1]} : vector<16x128xf32> to vector<16x32xf32>
    %434 = vector.extract_strided_slice %431 {offsets = [0, 0], sizes = [8, 32], strides = [1, 1]} : vector<16x32xf32> to vector<8x32xf32>
    %cst_163 = arith.constant 5.000000e-01 : f32
    %435 = vector.broadcast %cst_163 : f32 to vector<8x32xf32>
    %436 = arith.mulf %434, %435 : vector<8x32xf32>
    %437 = vector.extract_strided_slice %431 {offsets = [8, 0], sizes = [8, 32], strides = [1, 1]} : vector<16x32xf32> to vector<8x32xf32>
    %cst_164 = arith.constant 5.000000e-01 : f32
    %438 = vector.broadcast %cst_164 : f32 to vector<8x32xf32>
    %439 = arith.mulf %437, %438 : vector<8x32xf32>
    %440 = vector.extract_strided_slice %432 {offsets = [0, 0], sizes = [8, 32], strides = [1, 1]} : vector<16x32xf32> to vector<8x32xf32>
    %441 = vector.extract_strided_slice %432 {offsets = [8, 0], sizes = [8, 32], strides = [1, 1]} : vector<16x32xf32> to vector<8x32xf32>
    %442 = vector.extract_strided_slice %433 {offsets = [0, 0], sizes = [8, 32], strides = [1, 1]} : vector<16x32xf32> to vector<8x32xf32>
    %443 = vector.extract_strided_slice %433 {offsets = [8, 0], sizes = [8, 32], strides = [1, 1]} : vector<16x32xf32> to vector<8x32xf32>
    %444 = arith.mulf %436, %440 : vector<8x32xf32>
    %cst_165 = arith.constant dense<0.000000e+00> : vector<8x8xf32>
    %445 = tpu.matmul %444, %0, %cst_165 {dimension_numbers = #tpu.dot_dimension_numbers<[1], [0], [0], [1], [0, 0, 1, 1], [], []>} : vector<8x32xf32>, vector<32x8xf32>, vector<8x8xf32> -> vector<8x8xf32>
    %446 = arith.mulf %436, %441 : vector<8x32xf32>
    %cst_166 = arith.constant dense<0.000000e+00> : vector<8x8xf32>
    %447 = tpu.matmul %446, %0, %cst_166 {dimension_numbers = #tpu.dot_dimension_numbers<[1], [0], [0], [1], [0, 0, 1, 1], [], []>} : vector<8x32xf32>, vector<32x8xf32>, vector<8x8xf32> -> vector<8x8xf32>
    %448 = arith.mulf %439, %440 : vector<8x32xf32>
    %cst_167 = arith.constant dense<0.000000e+00> : vector<8x8xf32>
    %449 = tpu.matmul %448, %0, %cst_167 {dimension_numbers = #tpu.dot_dimension_numbers<[1], [0], [0], [1], [0, 0, 1, 1], [], []>} : vector<8x32xf32>, vector<32x8xf32>, vector<8x8xf32> -> vector<8x8xf32>
    %450 = arith.mulf %439, %441 : vector<8x32xf32>
    %cst_168 = arith.constant dense<0.000000e+00> : vector<8x8xf32>
    %451 = tpu.matmul %450, %0, %cst_168 {dimension_numbers = #tpu.dot_dimension_numbers<[1], [0], [0], [1], [0, 0, 1, 1], [], []>} : vector<8x32xf32>, vector<32x8xf32>, vector<8x8xf32> -> vector<8x8xf32>
    %452 = arith.maximumf %445, %447 : vector<8x8xf32>
    %453 = arith.subf %445, %452 : vector<8x8xf32>
    %454 = math.exp %453 : vector<8x8xf32>
    %455 = arith.subf %447, %452 : vector<8x8xf32>
    %456 = math.exp %455 : vector<8x8xf32>
    %457 = arith.addf %454, %456 : vector<8x8xf32>
    %458 = tpu.reciprocal %457 {approx = true} : vector<8x8xf32> -> vector<8x8xf32>
    %459 = arith.mulf %454, %458 : vector<8x8xf32>
    %cst_169 = arith.constant dense<0.000000e+00> : vector<8x32xf32>
    %460 = tpu.matmul %459, %1, %cst_169 {dimension_numbers = #tpu.dot_dimension_numbers<[1], [0], [0], [1], [0, 0, 1, 1], [], []>} : vector<8x8xf32>, vector<8x32xf32>, vector<8x32xf32> -> vector<8x32xf32>
    %461 = arith.mulf %460, %442 : vector<8x32xf32>
    %462 = arith.mulf %456, %458 : vector<8x8xf32>
    %cst_170 = arith.constant dense<0.000000e+00> : vector<8x32xf32>
    %463 = tpu.matmul %462, %1, %cst_170 {dimension_numbers = #tpu.dot_dimension_numbers<[1], [0], [0], [1], [0, 0, 1, 1], [], []>} : vector<8x8xf32>, vector<8x32xf32>, vector<8x32xf32> -> vector<8x32xf32>
    %464 = arith.mulf %463, %443 : vector<8x32xf32>
    %465 = arith.addf %461, %464 : vector<8x32xf32>
    %466 = arith.maximumf %449, %451 : vector<8x8xf32>
    %467 = arith.subf %449, %466 : vector<8x8xf32>
    %468 = math.exp %467 : vector<8x8xf32>
    %469 = arith.subf %451, %466 : vector<8x8xf32>
    %470 = math.exp %469 : vector<8x8xf32>
    %471 = arith.addf %468, %470 : vector<8x8xf32>
    %472 = tpu.reciprocal %471 {approx = true} : vector<8x8xf32> -> vector<8x8xf32>
    %473 = arith.mulf %468, %472 : vector<8x8xf32>
    %cst_171 = arith.constant dense<0.000000e+00> : vector<8x32xf32>
    %474 = tpu.matmul %473, %1, %cst_171 {dimension_numbers = #tpu.dot_dimension_numbers<[1], [0], [0], [1], [0, 0, 1, 1], [], []>} : vector<8x8xf32>, vector<8x32xf32>, vector<8x32xf32> -> vector<8x32xf32>
    %475 = arith.mulf %474, %442 : vector<8x32xf32>
    %476 = arith.mulf %470, %472 : vector<8x8xf32>
    %cst_172 = arith.constant dense<0.000000e+00> : vector<8x32xf32>
    %477 = tpu.matmul %476, %1, %cst_172 {dimension_numbers = #tpu.dot_dimension_numbers<[1], [0], [0], [1], [0, 0, 1, 1], [], []>} : vector<8x8xf32>, vector<8x32xf32>, vector<8x32xf32> -> vector<8x32xf32>
    %478 = arith.mulf %477, %443 : vector<8x32xf32>
    %479 = arith.addf %475, %478 : vector<8x32xf32>
    %480 = tpu.concatenate %465, %479 in 0 : vector<8x32xf32>, vector<8x32xf32> -> vector<16x32xf32>
    %481 = arith.truncf %480 : vector<16x32xf32> to vector<16x32xbf16>
    %cst_173 = arith.constant dense<0.000000e+00> : vector<16x32xf32>
    %482 = tpu.matmul %481, %412, %cst_173 {dimension_numbers = #tpu.dot_dimension_numbers<[1], [0], [0], [1], [0, 0, 1, 1], [], []>} : vector<16x32xbf16>, vector<32x32xbf16>, vector<16x32xf32> -> vector<16x32xf32>
    %483 = vector.broadcast %421 : vector<1x32xf32> to vector<16x32xf32>
    %484 = arith.addf %482, %483 : vector<16x32xf32>
    %485 = arith.addf %406, %484 : vector<16x32xf32>
    %cst_174 = arith.constant dense<0.000000e+00> : vector<16xf32>
    %486 = vector.multi_reduction <add>, %485, %cst_174 [1] : vector<16x32xf32> to vector<16xf32>
    %487 = vector.shape_cast %486 : vector<16xf32> to vector<16x1xf32>
    %cst_175 = arith.constant 3.200000e+01 : f32
    %488 = vector.broadcast %cst_175 : f32 to vector<16x1xf32>
    %489 = arith.divf %487, %488 : vector<16x1xf32>
    %490 = vector.broadcast %489 : vector<16x1xf32> to vector<16x32xf32>
    %491 = arith.subf %485, %490 : vector<16x32xf32>
    %492 = arith.mulf %491, %491 : vector<16x32xf32>
    %cst_176 = arith.constant dense<0.000000e+00> : vector<16xf32>
    %493 = vector.multi_reduction <add>, %492, %cst_176 [1] : vector<16x32xf32> to vector<16xf32>
    %494 = vector.shape_cast %493 : vector<16xf32> to vector<16x1xf32>
    %cst_177 = arith.constant 3.200000e+01 : f32
    %495 = vector.broadcast %cst_177 : f32 to vector<16x1xf32>
    %496 = arith.divf %494, %495 : vector<16x1xf32>
    %497 = vector.broadcast %489 : vector<16x1xf32> to vector<16x32xf32>
    %498 = arith.subf %485, %497 : vector<16x32xf32>
    %cst_178 = arith.constant 9.99999974E-6 : f32
    %499 = vector.broadcast %cst_178 : f32 to vector<16x1xf32>
    %500 = arith.addf %496, %499 : vector<16x1xf32>
    %501 = math.rsqrt %500 : vector<16x1xf32>
    %502 = vector.broadcast %501 : vector<16x1xf32> to vector<16x32xf32>
    %503 = arith.mulf %498, %502 : vector<16x32xf32>
    %504 = vector.broadcast %422 : vector<1x32xf32> to vector<16x32xf32>
    %505 = arith.mulf %503, %504 : vector<16x32xf32>
    %506 = vector.broadcast %423 : vector<1x32xf32> to vector<16x32xf32>
    %507 = arith.addf %505, %506 : vector<16x32xf32>
    %508 = arith.truncf %507 : vector<16x32xf32> to vector<16x32xbf16>
    %cst_179 = arith.constant dense<0.000000e+00> : vector<16x2048xf32>
    %509 = tpu.matmul %508, %414, %cst_179 {dimension_numbers = #tpu.dot_dimension_numbers<[1], [0], [0], [1], [0, 0, 1, 1], [], []>} : vector<16x32xbf16>, vector<32x2048xbf16>, vector<16x2048xf32> -> vector<16x2048xf32>
    %510 = vector.broadcast %416 : vector<1x2048xf32> to vector<16x2048xf32>
    %511 = arith.addf %509, %510 : vector<16x2048xf32>
    %cst_180 = arith.constant 0.000000e+00 : f32
    %512 = vector.broadcast %cst_180 : f32 to vector<16x2048xf32>
    %513 = arith.maximumf %511, %512 : vector<16x2048xf32>
    %514 = arith.truncf %513 : vector<16x2048xf32> to vector<16x2048xbf16>
    %cst_181 = arith.constant dense<0.000000e+00> : vector<16x32xf32>
    %515 = tpu.matmul %514, %418, %cst_181 {dimension_numbers = #tpu.dot_dimension_numbers<[1], [0], [0], [1], [0, 0, 1, 1], [], []>} : vector<16x2048xbf16>, vector<2048x32xbf16>, vector<16x32xf32> -> vector<16x32xf32>
    %516 = vector.broadcast %424 : vector<1x32xf32> to vector<16x32xf32>
    %517 = arith.addf %515, %516 : vector<16x32xf32>
    %518 = arith.addf %507, %517 : vector<16x32xf32>
    %cst_182 = arith.constant dense<0.000000e+00> : vector<16xf32>
    %519 = vector.multi_reduction <add>, %518, %cst_182 [1] : vector<16x32xf32> to vector<16xf32>
    %520 = vector.shape_cast %519 : vector<16xf32> to vector<16x1xf32>
    %cst_183 = arith.constant 3.200000e+01 : f32
    %521 = vector.broadcast %cst_183 : f32 to vector<16x1xf32>
    %522 = arith.divf %520, %521 : vector<16x1xf32>
    %523 = vector.broadcast %522 : vector<16x1xf32> to vector<16x32xf32>
    %524 = arith.subf %518, %523 : vector<16x32xf32>
    %525 = arith.mulf %524, %524 : vector<16x32xf32>
    %cst_184 = arith.constant dense<0.000000e+00> : vector<16xf32>
    %526 = vector.multi_reduction <add>, %525, %cst_184 [1] : vector<16x32xf32> to vector<16xf32>
    %527 = vector.shape_cast %526 : vector<16xf32> to vector<16x1xf32>
    %cst_185 = arith.constant 3.200000e+01 : f32
    %528 = vector.broadcast %cst_185 : f32 to vector<16x1xf32>
    %529 = arith.divf %527, %528 : vector<16x1xf32>
    %530 = vector.broadcast %522 : vector<16x1xf32> to vector<16x32xf32>
    %531 = arith.subf %518, %530 : vector<16x32xf32>
    %cst_186 = arith.constant 9.99999974E-6 : f32
    %532 = vector.broadcast %cst_186 : f32 to vector<16x1xf32>
    %533 = arith.addf %529, %532 : vector<16x1xf32>
    %534 = math.rsqrt %533 : vector<16x1xf32>
    %535 = vector.broadcast %534 : vector<16x1xf32> to vector<16x32xf32>
    %536 = arith.mulf %531, %535 : vector<16x32xf32>
    %537 = vector.broadcast %425 : vector<1x32xf32> to vector<16x32xf32>
    %538 = arith.mulf %536, %537 : vector<16x32xf32>
    %539 = vector.broadcast %426 : vector<1x32xf32> to vector<16x32xf32>
    %540 = arith.addf %538, %539 : vector<16x32xf32>
    %541 = tpu.iota {dimensions = array<i32: 0>} : vector<2x16xi32>
    %542 = tpu.iota {dimensions = array<i32: 1>} : vector<2x16xi32>
    %c8_i32 = arith.constant 8 : i32
    %543 = vector.broadcast %c8_i32 : i32 to vector<2x16xi32>
    %544 = arith.muli %541, %543 : vector<2x16xi32>
    %c7_i32 = arith.constant 7 : i32
    %545 = vector.broadcast %c7_i32 : i32 to vector<2x16xi32>
    %546 = arith.addi %544, %545 : vector<2x16xi32>
    %547 = arith.cmpi eq, %542, %546 : vector<2x16xi32>
    %548 = arith.extui %547 : vector<2x16xi1> to vector<2x16xi32>
    %549 = arith.sitofp %548 : vector<2x16xi32> to vector<2x16xf32>
    %cst_187 = arith.constant dense<0.000000e+00> : vector<2x32xf32>
    %550 = tpu.matmul %549, %540, %cst_187 {dimension_numbers = #tpu.dot_dimension_numbers<[1], [0], [0], [1], [0, 0, 1, 1], [], []>} : vector<2x16xf32>, vector<16x32xf32>, vector<2x32xf32> -> vector<2x32xf32>
    %c0_188 = arith.constant 0 : index
    %c0_189 = arith.constant 0 : index
    %551 = vector.load %arg4[%c0_188, %c0_189] : memref<32x5xf32, #tpu.memory_space<vmem>>, vector<32x5xf32>
    %cst_190 = arith.constant dense<0.000000e+00> : vector<2x5xf32>
    %552 = tpu.matmul %550, %551, %cst_190 {dimension_numbers = #tpu.dot_dimension_numbers<[1], [0], [0], [1], [0, 0, 1, 1], [], []>} : vector<2x32xf32>, vector<32x5xf32>, vector<2x5xf32> -> vector<2x5xf32>
    %c0_191 = arith.constant 0 : index
    %c0_192 = arith.constant 0 : index
    %553 = vector.load %arg5[%c0_191, %c0_192] : memref<1x5xf32, #tpu.memory_space<vmem>>, vector<1x5xf32>
    %554 = vector.broadcast %553 : vector<1x5xf32> to vector<2x5xf32>
    %555 = arith.addf %552, %554 : vector<2x5xf32>
    %c0_193 = arith.constant 0 : index
    %c0_194 = arith.constant 0 : index
    %556 = vector.load %arg13[%c0_193, %c0_194] : memref<2x5xf32, #tpu.memory_space<vmem>>, vector<2x5xf32>
    tpu.vector_store %arg13[%c0_193, %c0_194], %555 {strides = array<i32>} : memref<2x5xf32, #tpu.memory_space<vmem>>, vector<2x5xf32>,
    return
  }
}

</mosaic_0001>

<llo_original>
// kernel: video_transformer_forward.1
$region0: #{video_transformer_forward.1}
  #allocation0 [shape = 'u32[]', space=smem, size = 0x4, offset = 0x4, fixed_abs, tag = 'smem constant byte address 0x4 - core index']
  #allocation1 [shape = 'u32[144,128]{1,0:T(1,128)}', space=vmem, size = 0x12000, scoped, tag = 'internal scratch']
  %s0 = inlined_call_operand.vmem [shape: f32[16,32], index: 0, kind: input, shape index: {}]
  %s1 = inlined_call_operand.vmem [shape: f32[16,32], index: 1, kind: input, shape index: {}]
  %s2 = inlined_call_operand.vmem [shape: f32[32,8], index: 2, kind: input, shape index: {}]
  %s3 = inlined_call_operand.vmem [shape: f32[8,32], index: 3, kind: input, shape index: {}]
  %s4 = inlined_call_operand.vmem [shape: f32[32,5], index: 4, kind: input, shape index: {}]
  %s5 = inlined_call_operand.vmem [shape: f32[1,5], index: 5, kind: input, shape index: {}]
  %s6 = inlined_call_operand.vmem [shape: bf16[4,32,128], index: 6, kind: input, shape index: {}]
  %s7 = inlined_call_operand.vmem [shape: f32[4,1,128], index: 7, kind: input, shape index: {}]
  %s8 = inlined_call_operand.vmem [shape: bf16[4,32,32], index: 8, kind: input, shape index: {}]
  %s9 = inlined_call_operand.vmem [shape: f32[4,8,32], index: 9, kind: input, shape index: {}]
  %s10 = inlined_call_operand.vmem [shape: bf16[4,32,2048], index: 10, kind: input, shape index: {}]
  %s11 = inlined_call_operand.vmem [shape: f32[4,1,2048], index: 11, kind: input, shape index: {}]
  %s12 = inlined_call_operand.vmem [shape: bf16[4,2048,32], index: 12, kind: input, shape index: {}]
  %s13 = inlined_call_operand.hbm [shape: f32[2,5], index: 13, kind: output, shape index: {}]
  %s14 = sld [smem:[#allocation0]]
  $region62: #{video_transformer_forward.1} parent=0
    _
  %s16 = ssub.s32 1, %s14
  %s17 = scalar_select 0, %s16, %s14
  $region1: #{video_transformer_forward.1} parent=0
    #allocation2 [shape = 'u8[1024]{0}', space=vmem, size = 0x400, scoped, tag = 'output window, operand 0, single buffered']
    #allocation3 [shape = 's32[1]{0}', space=sflag, size = 0x4, scoped, tag = 'scoped memory for video_transformer_forward.1']
    %18 = vsyncpa [#allocation3], 0
    // Predicated region
    $region2: #{video_transformer_forward.1} parent=1 // pred_check
      _
    $region3: #{video_transformer_forward.1} parent=1 // pred_check_branch
      %20 = sbr.rel (0) target = $region5
    $region4: #{video_transformer_forward.1} parent=1 // pred_region
      _
    $region5: #{video_transformer_forward.1} parent=1 // pred_fallthru
      _
    // Predicated region
    $region6: #{video_transformer_forward.1} parent=1 // pred_check
      _
    $region7: #{video_transformer_forward.1} parent=1 // pred_check_branch
      %22 = sbr.rel (0) target = $region9
    $region8: #{video_transformer_forward.1} parent=1 // pred_region
      _
    $region9: #{video_transformer_forward.1} parent=1 // pred_fallthru
      _
    // Predicated region
    $region10: #{video_transformer_forward.1} parent=1 // pred_check
      _
    $region11: #{video_transformer_forward.1} parent=1 // pred_check_branch
      %24 = sbr.rel (0) target = $region13
    $region12: #{video_transformer_forward.1} parent=1 // pred_region
      _
    $region13: #{video_transformer_forward.1} parent=1 // pred_fallthru
      _
    // Predicated region
    $region14: #{video_transformer_forward.1} parent=1 // pred_check
      _
    $region15: #{video_transformer_forward.1} parent=1 // pred_check_branch
      %26 = sbr.rel (0) target = $region17
    $region16: #{video_transformer_forward.1} parent=1 // pred_region
      _
    $region17: #{video_transformer_forward.1} parent=1 // pred_fallthru
      _
    // Predicated region
    $region18: #{video_transformer_forward.1} parent=1 // pred_check
      _
    $region19: #{video_transformer_forward.1} parent=1 // pred_check_branch
      %28 = sbr.rel (0) target = $region21
    $region20: #{video_transformer_forward.1} parent=1 // pred_region
      _
    $region21: #{video_transformer_forward.1} parent=1 // pred_fallthru
      _
    // Predicated region
    $region22: #{video_transformer_forward.1} parent=1 // pred_check
      _
    $region23: #{video_transformer_forward.1} parent=1 // pred_check_branch
      %30 = sbr.rel (0) target = $region25
    $region24: #{video_transformer_forward.1} parent=1 // pred_region
      _
    $region25: #{video_transformer_forward.1} parent=1 // pred_fallthru
      _
    // Predicated region
    $region26: #{video_transformer_forward.1} parent=1 // pred_check
      _
    $region27: #{video_transformer_forward.1} parent=1 // pred_check_branch
      %32 = sbr.rel (0) target = $region29
    $region28: #{video_transformer_forward.1} parent=1 // pred_region
      _
    $region29: #{video_transformer_forward.1} parent=1 // pred_fallthru
      _
    // Predicated region
    $region30: #{video_transformer_forward.1} parent=1 // pred_check
      _
    $region31: #{video_transformer_forward.1} parent=1 // pred_check_branch
      %34 = sbr.rel (0) target = $region33
    $region32: #{video_transformer_forward.1} parent=1 // pred_region
      _
    $region33: #{video_transformer_forward.1} parent=1 // pred_fallthru
      _
    // Predicated region
    $region34: #{video_transformer_forward.1} parent=1 // pred_check
      _
    $region35: #{video_transformer_forward.1} parent=1 // pred_check_branch
      %36 = sbr.rel (0) target = $region37
    $region36: #{video_transformer_forward.1} parent=1 // pred_region
      _
    $region37: #{video_transformer_forward.1} parent=1 // pred_fallthru
      _
    // Predicated region
    $region38: #{video_transformer_forward.1} parent=1 // pred_check
      _
    $region39: #{video_transformer_forward.1} parent=1 // pred_check_branch
      %38 = sbr.rel (0) target = $region41
    $region40: #{video_transformer_forward.1} parent=1 // pred_region
      _
    $region41: #{video_transformer_forward.1} parent=1 // pred_fallthru
      _
    // Predicated region
    $region42: #{video_transformer_forward.1} parent=1 // pred_check
      _
    $region43: #{video_transformer_forward.1} parent=1 // pred_check_branch
      %40 = sbr.rel (0) target = $region45
    $region44: #{video_transformer_forward.1} parent=1 // pred_region
      _
    $region45: #{video_transformer_forward.1} parent=1 // pred_fallthru
      _
    // Predicated region
    $region46: #{video_transformer_forward.1} parent=1 // pred_check
      _
    $region47: #{video_transformer_forward.1} parent=1 // pred_check_branch
      %42 = sbr.rel (0) target = $region49
    $region48: #{video_transformer_forward.1} parent=1 // pred_region
      _
    $region49: #{video_transformer_forward.1} parent=1 // pred_fallthru
      _
    // Predicated region
    $region50: #{video_transformer_forward.1} parent=1 // pred_check
      _
    $region51: #{video_transformer_forward.1} parent=1 // pred_check_branch
      %44 = sbr.rel (0) target = $region53
    $region52: #{video_transformer_forward.1} parent=1 // pred_region
      _
    $region53: #{video_transformer_forward.1} parent=1 // pred_fallthru
      _
    %v46 = vld [vmem:[%s2] sm:$0xff]
    %v47 = vld [vmem:[%s2 + $0x8] sm:$0xff]
    %v48 = vld [vmem:[%s2 + $0x10] sm:$0xff]
    %v49 = vld [vmem:[%s2 + $0x18] sm:$0xff]
    %v50 = vld [vmem:[%s3] sm:$0xff]
    %v51 = vld [vmem:[%s0] sm:$0xff]
    %v52 = vld [vmem:[%s0 + $0x8] sm:$0xff]
    %v53 = vld [vmem:[%s1] sm:$0xff]
    %v54 = vld [vmem:[%s1 + $0x8] sm:$0xff]
    %v55 = vadd.f32 %v51, %v53
    %v56 = vadd.f32 %v52, %v54
    %v57 = vld [vmem:[%s6] sm:$0xf]
    %v58 = vld [vmem:[%s6 + $0x4] sm:$0xf]
    %v59 = vld [vmem:[%s6 + $0x8] sm:$0xf]
    %v60 = vld [vmem:[%s6 + $0xc] sm:$0xf]
    %v61 = vld [vmem:[%s7] sm:$0x1]
    %v62 = vld [vmem:[%s8] sm:$0xf]
    %v63 = vld [vmem:[%s8 + $0x4] sm:$0xf]
    %v64 = vld [vmem:[%s8 + $0x8] sm:$0xf]
    %v65 = vld [vmem:[%s8 + $0xc] sm:$0xf]
    %v66 = vld [vmem:[%s10] sm:$0xff]
    %v67 = vld [vmem:[%s10 + $0x8] sm:$0xff]
    %v68 = vld [vmem:[%s10 + $0x10] sm:$0xff]
    %v69 = vld [vmem:[%s10 + $0x18] sm:$0xff]
    %v70 = vld [vmem:[%s10 + $0x20] sm:$0xff]
    %v71 = vld [vmem:[%s10 + $0x28] sm:$0xff]
    %v72 = vld [vmem:[%s10 + $0x30] sm:$0xff]
    %v73 = vld [vmem:[%s10 + $0x38] sm:$0xff]
    %v74 = vld [vmem:[%s10 + $0x40] sm:$0xff]
    %v75 = vld [vmem:[%s10 + $0x48] sm:$0xff]
    %v76 = vld [vmem:[%s10 + $0x50] sm:$0xff]
    %v77 = vld [vmem:[%s10 + $0x58] sm:$0xff]
    %v78 = vld [vmem:[%s10 + $0x60] sm:$0xff]
    %v79 = vld [vmem:[%s10 + $0x68] sm:$0xff]
    %v80 = vld [vmem:[%s10 + $0x70] sm:$0xff]
    %v81 = vld [vmem:[%s10 + $0x78] sm:$0xff]
    %v82 = vld [vmem:[%s10 + $0x80] sm:$0xff]
    %v83 = vld [vmem:[%s10 + $0x88] sm:$0xff]
    %v84 = vld [vmem:[%s10 + $0x90] sm:$0xff]
    %v85 = vld [vmem:[%s10 + $0x98] sm:$0xff]
    %v86 = vld [vmem:[%s10 + $0xa0] sm:$0xff]
    %v87 = vld [vmem:[%s10 + $0xa8] sm:$0xff]
    %v88 = vld [vmem:[%s10 + $0xb0] sm:$0xff]
    %v89 = vld [vmem:[%s10 + $0xb8] sm:$0xff]
    %v90 = vld [vmem:[%s10 + $0xc0] sm:$0xff]
    %v91 = vld [vmem:[%s10 + $0xc8] sm:$0xff]
    %v92 = vld [vmem:[%s10 + $0xd0] sm:$0xff]
    %v93 = vld [vmem:[%s10 + $0xd8] sm:$0xff]
    %v94 = vld [vmem:[%s10 + $0xe0] sm:$0xff]
    %v95 = vld [vmem:[%s10 + $0xe8] sm:$0xff]
    %v96 = vld [vmem:[%s10 + $0xf0] sm:$0xff]
    %v97 = vld [vmem:[%s10 + $0xf8] sm:$0xff]
    %v98 = vld [vmem:[%s11] sm:$0xff]
    %v99 = vld [vmem:[%s11 + $0x8] sm:$0xff]
    %v100 = vld [vmem:[%s12] sm:$0xf]
    %v101 = vld [vmem:[%s12 + $0x4] sm:$0xf]
    %v102 = vld [vmem:[%s12 + $0x8] sm:$0xf]
    %v103 = vld [vmem:[%s12 + $0xc] sm:$0xf]
    %v104 = vld [vmem:[%s12 + $0x10] sm:$0xf]
    %v105 = vld [vmem:[%s12 + $0x14] sm:$0xf]
    %v106 = vld [vmem:[%s12 + $0x18] sm:$0xf]
    %v107 = vld [vmem:[%s12 + $0x1c] sm:$0xf]
    %v108 = vld [vmem:[%s12 + $0x20] sm:$0xf]
    %v109 = vld [vmem:[%s12 + $0x24] sm:$0xf]
    %v110 = vld [vmem:[%s12 + $0x28] sm:$0xf]
    %v111 = vld [vmem:[%s12 + $0x2c] sm:$0xf]
    %v112 = vld [vmem:[%s12 + $0x30] sm:$0xf]
    %v113 = vld [vmem:[%s12 + $0x34] sm:$0xf]
    %v114 = vld [vmem:[%s12 + $0x38] sm:$0xf]
    %v115 = vld [vmem:[%s12 + $0x3c] sm:$0xf]
    %v116 = vld [vmem:[%s12 + $0x40] sm:$0xf]
    %v117 = vld [vmem:[%s12 + $0x44] sm:$0xf]
    %v118 = vld [vmem:[%s12 + $0x48] sm:$0xf]
    %v119 = vld [vmem:[%s12 + $0x4c] sm:$0xf]
    %v120 = vld [vmem:[%s12 + $0x50] sm:$0xf]
    %v121 = vld [vmem:[%s12 + $0x54] sm:$0xf]
    %v122 = vld [vmem:[%s12 + $0x58] sm:$0xf]
    %v123 = vld [vmem:[%s12 + $0x5c] sm:$0xf]
    %v124 = vld [vmem:[%s12 + $0x60] sm:$0xf]
    %v125 = vld [vmem:[%s12 + $0x64] sm:$0xf]
    %v126 = vld [vmem:[%s12 + $0x68] sm:$0xf]
    %v127 = vld [vmem:[%s12 + $0x6c] sm:$0xf]
    %v128 = vld [vmem:[%s12 + $0x70] sm:$0xf]
    %v129 = vld [vmem:[%s12 + $0x74] sm:$0xf]
    %v130 = vld [vmem:[%s12 + $0x78] sm:$0xf]
    %v131 = vld [vmem:[%s12 + $0x7c] sm:$0xf]
    %v132 = vld [vmem:[%s12 + $0x80] sm:$0xf]
    %v133 = vld [vmem:[%s12 + $0x84] sm:$0xf]
    %v134 = vld [vmem:[%s12 + $0x88] sm:$0xf]
    %v135 = vld [vmem:[%s12 + $0x8c] sm:$0xf]
    %v136 = vld [vmem:[%s12 + $0x90] sm:$0xf]
    %v137 = vld [vmem:[%s12 + $0x94] sm:$0xf]
    %v138 = vld [vmem:[%s12 + $0x98] sm:$0xf]
    %v139 = vld [vmem:[%s12 + $0x9c] sm:$0xf]
    %v140 = vld [vmem:[%s12 + $0xa0] sm:$0xf]
    %v141 = vld [vmem:[%s12 + $0xa4] sm:$0xf]
    %v142 = vld [vmem:[%s12 + $0xa8] sm:$0xf]
    %v143 = vld [vmem:[%s12 + $0xac] sm:$0xf]
    %v144 = vld [vmem:[%s12 + $0xb0] sm:$0xf]
    %v145 = vld [vmem:[%s12 + $0xb4] sm:$0xf]
    %v146 = vld [vmem:[%s12 + $0xb8] sm:$0xf]
    %v147 = vld [vmem:[%s12 + $0xbc] sm:$0xf]
    %v148 = vld [vmem:[%s12 + $0xc0] sm:$0xf]
    %v149 = vld [vmem:[%s12 + $0xc4] sm:$0xf]
    %v150 = vld [vmem:[%s12 + $0xc8] sm:$0xf]
    %v151 = vld [vmem:[%s12 + $0xcc] sm:$0xf]
    %v152 = vld [vmem:[%s12 + $0xd0] sm:$0xf]
    %v153 = vld [vmem:[%s12 + $0xd4] sm:$0xf]
    %v154 = vld [vmem:[%s12 + $0xd8] sm:$0xf]
    %v155 = vld [vmem:[%s12 + $0xdc] sm:$0xf]
    %v156 = vld [vmem:[%s12 + $0xe0] sm:$0xf]
    %v157 = vld [vmem:[%s12 + $0xe4] sm:$0xf]
    %v158 = vld [vmem:[%s12 + $0xe8] sm:$0xf]
    %v159 = vld [vmem:[%s12 + $0xec] sm:$0xf]
    %v160 = vld [vmem:[%s12 + $0xf0] sm:$0xf]
    %v161 = vld [vmem:[%s12 + $0xf4] sm:$0xf]
    %v162 = vld [vmem:[%s12 + $0xf8] sm:$0xf]
    %v163 = vld [vmem:[%s12 + $0xfc] sm:$0xf]
    %v164 = vld [vmem:[%s12 + $0x100] sm:$0xf]
    %v165 = vld [vmem:[%s12 + $0x104] sm:$0xf]
    %v166 = vld [vmem:[%s12 + $0x108] sm:$0xf]
    %v167 = vld [vmem:[%s12 + $0x10c] sm:$0xf]
    %v168 = vld [vmem:[%s12 + $0x110] sm:$0xf]
    %v169 = vld [vmem:[%s12 + $0x114] sm:$0xf]
    %v170 = vld [vmem:[%s12 + $0x118] sm:$0xf]
    %v171 = vld [vmem:[%s12 + $0x11c] sm:$0xf]
    %v172 = vld [vmem:[%s12 + $0x120] sm:$0xf]
    %v173 = vld [vmem:[%s12 + $0x124] sm:$0xf]
    %v174 = vld [vmem:[%s12 + $0x128] sm:$0xf]
    %v175 = vld [vmem:[%s12 + $0x12c] sm:$0xf]
    %v176 = vld [vmem:[%s12 + $0x130] sm:$0xf]
    %v177 = vld [vmem:[%s12 + $0x134] sm:$0xf]
    %v178 = vld [vmem:[%s12 + $0x138] sm:$0xf]
    %v179 = vld [vmem:[%s12 + $0x13c] sm:$0xf]
    %v180 = vld [vmem:[%s12 + $0x140] sm:$0xf]
    %v181 = vld [vmem:[%s12 + $0x144] sm:$0xf]
    %v182 = vld [vmem:[%s12 + $0x148] sm:$0xf]
    %v183 = vld [vmem:[%s12 + $0x14c] sm:$0xf]
    %v184 = vld [vmem:[%s12 + $0x150] sm:$0xf]
    %v185 = vld [vmem:[%s12 + $0x154] sm:$0xf]
    %v186 = vld [vmem:[%s12 + $0x158] sm:$0xf]
    %v187 = vld [vmem:[%s12 + $0x15c] sm:$0xf]
    %v188 = vld [vmem:[%s12 + $0x160] sm:$0xf]
    %v189 = vld [vmem:[%s12 + $0x164] sm:$0xf]
    %v190 = vld [vmem:[%s12 + $0x168] sm:$0xf]
    %v191 = vld [vmem:[%s12 + $0x16c] sm:$0xf]
    %v192 = vld [vmem:[%s12 + $0x170] sm:$0xf]
    %v193 = vld [vmem:[%s12 + $0x174] sm:$0xf]
    %v194 = vld [vmem:[%s12 + $0x178] sm:$0xf]
    %v195 = vld [vmem:[%s12 + $0x17c] sm:$0xf]
    %v196 = vld [vmem:[%s12 + $0x180] sm:$0xf]
    %v197 = vld [vmem:[%s12 + $0x184] sm:$0xf]
    %v198 = vld [vmem:[%s12 + $0x188] sm:$0xf]
    %v199 = vld [vmem:[%s12 + $0x18c] sm:$0xf]
    %v200 = vld [vmem:[%s12 + $0x190] sm:$0xf]
    %v201 = vld [vmem:[%s12 + $0x194] sm:$0xf]
    %v202 = vld [vmem:[%s12 + $0x198] sm:$0xf]
    %v203 = vld [vmem:[%s12 + $0x19c] sm:$0xf]
    %v204 = vld [vmem:[%s12 + $0x1a0] sm:$0xf]
    %v205 = vld [vmem:[%s12 + $0x1a4] sm:$0xf]
    %v206 = vld [vmem:[%s12 + $0x1a8] sm:$0xf]
    %v207 = vld [vmem:[%s12 + $0x1ac] sm:$0xf]
    %v208 = vld [vmem:[%s12 + $0x1b0] sm:$0xf]
    %v209 = vld [vmem:[%s12 + $0x1b4] sm:$0xf]
    %v210 = vld [vmem:[%s12 + $0x1b8] sm:$0xf]
    %v211 = vld [vmem:[%s12 + $0x1bc] sm:$0xf]
    %v212 = vld [vmem:[%s12 + $0x1c0] sm:$0xf]
    %v213 = vld [vmem:[%s12 + $0x1c4] sm:$0xf]
    %v214 = vld [vmem:[%s12 + $0x1c8] sm:$0xf]
    %v215 = vld [vmem:[%s12 + $0x1cc] sm:$0xf]
    %v216 = vld [vmem:[%s12 + $0x1d0] sm:$0xf]
    %v217 = vld [vmem:[%s12 + $0x1d4] sm:$0xf]
    %v218 = vld [vmem:[%s12 + $0x1d8] sm:$0xf]
    %v219 = vld [vmem:[%s12 + $0x1dc] sm:$0xf]
    %v220 = vld [vmem:[%s12 + $0x1e0] sm:$0xf]
    %v221 = vld [vmem:[%s12 + $0x1e4] sm:$0xf]
    %v222 = vld [vmem:[%s12 + $0x1e8] sm:$0xf]
    %v223 = vld [vmem:[%s12 + $0x1ec] sm:$0xf]
    %v224 = vld [vmem:[%s12 + $0x1f0] sm:$0xf]
    %v225 = vld [vmem:[%s12 + $0x1f4] sm:$0xf]
    %v226 = vld [vmem:[%s12 + $0x1f8] sm:$0xf]
    %v227 = vld [vmem:[%s12 + $0x1fc] sm:$0xf]
    %v228 = vld [vmem:[%s12 + $0x200] sm:$0xf]
    %v229 = vld [vmem:[%s12 + $0x204] sm:$0xf]
    %v230 = vld [vmem:[%s12 + $0x208] sm:$0xf]
    %v231 = vld [vmem:[%s12 + $0x20c] sm:$0xf]
    %v232 = vld [vmem:[%s12 + $0x210] sm:$0xf]
    %v233 = vld [vmem:[%s12 + $0x214] sm:$0xf]
    %v234 = vld [vmem:[%s12 + $0x218] sm:$0xf]
    %v235 = vld [vmem:[%s12 + $0x21c] sm:$0xf]
    %v236 = vld [vmem:[%s12 + $0x220] sm:$0xf]
    %v237 = vld [vmem:[%s12 + $0x224] sm:$0xf]
    %v238 = vld [vmem:[%s12 + $0x228] sm:$0xf]
    %v239 = vld [vmem:[%s12 + $0x22c] sm:$0xf]
    %v240 = vld [vmem:[%s12 + $0x230] sm:$0xf]
    %v241 = vld [vmem:[%s12 + $0x234] sm:$0xf]
    %v242 = vld [vmem:[%s12 + $0x238] sm:$0xf]
    %v243 = vld [vmem:[%s12 + $0x23c] sm:$0xf]
    %v244 = vld [vmem:[%s12 + $0x240] sm:$0xf]
    %v245 = vld [vmem:[%s12 + $0x244] sm:$0xf]
    %v246 = vld [vmem:[%s12 + $0x248] sm:$0xf]
    %v247 = vld [vmem:[%s12 + $0x24c] sm:$0xf]
    %v248 = vld [vmem:[%s12 + $0x250] sm:$0xf]
    %v249 = vld [vmem:[%s12 + $0x254] sm:$0xf]
    %v250 = vld [vmem:[%s12 + $0x258] sm:$0xf]
    %v251 = vld [vmem:[%s12 + $0x25c] sm:$0xf]
    %v252 = vld [vmem:[%s12 + $0x260] sm:$0xf]
    %v253 = vld [vmem:[%s12 + $0x264] sm:$0xf]
    %v254 = vld [vmem:[%s12 + $0x268] sm:$0xf]
    %v255 = vld [vmem:[%s12 + $0x26c] sm:$0xf]
    %v256 = vld [vmem:[%s12 + $0x270] sm:$0xf]
    %v257 = vld [vmem:[%s12 + $0x274] sm:$0xf]
    %v258 = vld [vmem:[%s12 + $0x278] sm:$0xf]
    %v259 = vld [vmem:[%s12 + $0x27c] sm:$0xf]
    %v260 = vld [vmem:[%s12 + $0x280] sm:$0xf]
    %v261 = vld [vmem:[%s12 + $0x284] sm:$0xf]
    %v262 = vld [vmem:[%s12 + $0x288] sm:$0xf]
    %v263 = vld [vmem:[%s12 + $0x28c] sm:$0xf]
    %v264 = vld [vmem:[%s12 + $0x290] sm:$0xf]
    %v265 = vld [vmem:[%s12 + $0x294] sm:$0xf]
    %v266 = vld [vmem:[%s12 + $0x298] sm:$0xf]
    %v267 = vld [vmem:[%s12 + $0x29c] sm:$0xf]
    %v268 = vld [vmem:[%s12 + $0x2a0] sm:$0xf]
    %v269 = vld [vmem:[%s12 + $0x2a4] sm:$0xf]
    %v270 = vld [vmem:[%s12 + $0x2a8] sm:$0xf]
    %v271 = vld [vmem:[%s12 + $0x2ac] sm:$0xf]
    %v272 = vld [vmem:[%s12 + $0x2b0] sm:$0xf]
    %v273 = vld [vmem:[%s12 + $0x2b4] sm:$0xf]
    %v274 = vld [vmem:[%s12 + $0x2b8] sm:$0xf]
    %v275 = vld [vmem:[%s12 + $0x2bc] sm:$0xf]
    %v276 = vld [vmem:[%s12 + $0x2c0] sm:$0xf]
    %v277 = vld [vmem:[%s12 + $0x2c4] sm:$0xf]
    %v278 = vld [vmem:[%s12 + $0x2c8] sm:$0xf]
    %v279 = vld [vmem:[%s12 + $0x2cc] sm:$0xf]
    %v280 = vld [vmem:[%s12 + $0x2d0] sm:$0xf]
    %v281 = vld [vmem:[%s12 + $0x2d4] sm:$0xf]
    %v282 = vld [vmem:[%s12 + $0x2d8] sm:$0xf]
    %v283 = vld [vmem:[%s12 + $0x2dc] sm:$0xf]
    %v284 = vld [vmem:[%s12 + $0x2e0] sm:$0xf]
    %v285 = vld [vmem:[%s12 + $0x2e4] sm:$0xf]
    %v286 = vld [vmem:[%s12 + $0x2e8] sm:$0xf]
    %v287 = vld [vmem:[%s12 + $0x2ec] sm:$0xf]
    %v288 = vld [vmem:[%s12 + $0x2f0] sm:$0xf]
    %v289 = vld [vmem:[%s12 + $0x2f4] sm:$0xf]
    %v290 = vld [vmem:[%s12 + $0x2f8] sm:$0xf]
    %v291 = vld [vmem:[%s12 + $0x2fc] sm:$0xf]
    %v292 = vld [vmem:[%s12 + $0x300] sm:$0xf]
    %v293 = vld [vmem:[%s12 + $0x304] sm:$0xf]
    %v294 = vld [vmem:[%s12 + $0x308] sm:$0xf]
    %v295 = vld [vmem:[%s12 + $0x30c] sm:$0xf]
    %v296 = vld [vmem:[%s12 + $0x310] sm:$0xf]
    %v297 = vld [vmem:[%s12 + $0x314] sm:$0xf]
    %v298 = vld [vmem:[%s12 + $0x318] sm:$0xf]
    %v299 = vld [vmem:[%s12 + $0x31c] sm:$0xf]
    %v300 = vld [vmem:[%s12 + $0x320] sm:$0xf]
    %v301 = vld [vmem:[%s12 + $0x324] sm:$0xf]
    %v302 = vld [vmem:[%s12 + $0x328] sm:$0xf]
    %v303 = vld [vmem:[%s12 + $0x32c] sm:$0xf]
    %v304 = vld [vmem:[%s12 + $0x330] sm:$0xf]
    %v305 = vld [vmem:[%s12 + $0x334] sm:$0xf]
    %v306 = vld [vmem:[%s12 + $0x338] sm:$0xf]
    %v307 = vld [vmem:[%s12 + $0x33c] sm:$0xf]
    %v308 = vld [vmem:[%s12 + $0x340] sm:$0xf]
    %v309 = vld [vmem:[%s12 + $0x344] sm:$0xf]
    %v310 = vld [vmem:[%s12 + $0x348] sm:$0xf]
    %v311 = vld [vmem:[%s12 + $0x34c] sm:$0xf]
    %v312 = vld [vmem:[%s12 + $0x350] sm:$0xf]
    %v313 = vld [vmem:[%s12 + $0x354] sm:$0xf]
    %v314 = vld [vmem:[%s12 + $0x358] sm:$0xf]
    %v315 = vld [vmem:[%s12 + $0x35c] sm:$0xf]
    %v316 = vld [vmem:[%s12 + $0x360] sm:$0xf]
    %v317 = vld [vmem:[%s12 + $0x364] sm:$0xf]
    %v318 = vld [vmem:[%s12 + $0x368] sm:$0xf]
    %v319 = vld [vmem:[%s12 + $0x36c] sm:$0xf]
    %v320 = vld [vmem:[%s12 + $0x370] sm:$0xf]
    %v321 = vld [vmem:[%s12 + $0x374] sm:$0xf]
    %v322 = vld [vmem:[%s12 + $0x378] sm:$0xf]
    %v323 = vld [vmem:[%s12 + $0x37c] sm:$0xf]
    %v324 = vld [vmem:[%s12 + $0x380] sm:$0xf]
    %v325 = vld [vmem:[%s12 + $0x384] sm:$0xf]
    %v326 = vld [vmem:[%s12 + $0x388] sm:$0xf]
    %v327 = vld [vmem:[%s12 + $0x38c] sm:$0xf]
    %v328 = vld [vmem:[%s12 + $0x390] sm:$0xf]
    %v329 = vld [vmem:[%s12 + $0x394] sm:$0xf]
    %v330 = vld [vmem:[%s12 + $0x398] sm:$0xf]
    %v331 = vld [vmem:[%s12 + $0x39c] sm:$0xf]
    %v332 = vld [vmem:[%s12 + $0x3a0] sm:$0xf]
    %v333 = vld [vmem:[%s12 + $0x3a4] sm:$0xf]
    %v334 = vld [vmem:[%s12 + $0x3a8] sm:$0xf]
    %v335 = vld [vmem:[%s12 + $0x3ac] sm:$0xf]
    %v336 = vld [vmem:[%s12 + $0x3b0] sm:$0xf]
    %v337 = vld [vmem:[%s12 + $0x3b4] sm:$0xf]
    %v338 = vld [vmem:[%s12 + $0x3b8] sm:$0xf]
    %v339 = vld [vmem:[%s12 + $0x3bc] sm:$0xf]
    %v340 = vld [vmem:[%s12 + $0x3c0] sm:$0xf]
    %v341 = vld [vmem:[%s12 + $0x3c4] sm:$0xf]
    %v342 = vld [vmem:[%s12 + $0x3c8] sm:$0xf]
    %v343 = vld [vmem:[%s12 + $0x3cc] sm:$0xf]
    %v344 = vld [vmem:[%s12 + $0x3d0] sm:$0xf]
    %v345 = vld [vmem:[%s12 + $0x3d4] sm:$0xf]
    %v346 = vld [vmem:[%s12 + $0x3d8] sm:$0xf]
    %v347 = vld [vmem:[%s12 + $0x3dc] sm:$0xf]
    %v348 = vld [vmem:[%s12 + $0x3e0] sm:$0xf]
    %v349 = vld [vmem:[%s12 + $0x3e4] sm:$0xf]
    %v350 = vld [vmem:[%s12 + $0x3e8] sm:$0xf]
    %v351 = vld [vmem:[%s12 + $0x3ec] sm:$0xf]
    %v352 = vld [vmem:[%s12 + $0x3f0] sm:$0xf]
    %v353 = vld [vmem:[%s12 + $0x3f4] sm:$0xf]
    %v354 = vld [vmem:[%s12 + $0x3f8] sm:$0xf]
    %v355 = vld [vmem:[%s12 + $0x3fc] sm:$0xf]
    %v356 = vld [vmem:[%s9] sm:$0xff]
    %v357 = vpack.c.bf16 %v56, %v55
    %v359 = vlaneseq
    %v360 = vshrl.u32 %v359, 7
    %v361 = vsub.s32 0, %v360
    %v362 = vrot.slane %v61, %v361
    %v368 = vunpack.c.l.b16 %v57
    %v369 = vunpack.c.l.b16 %v58
    %v370 = vunpack.c.l.b16 %v59
    %v371 = vunpack.c.l.b16 %v60
    %v372 = vpack.c.b16 %v369, %v368
    %v373 = vpack.c.b16 %v371, %v370
    %vm376 = vcmask 261120
    %v378 = vsel %vm376, %v357, 0
    %380 = vmatprep.subr.bf16.mxu0 0
    %381 = vmatpush1.bf16.msra.mxu0 0
    %382 = vmatprep.subr.bf16.mxu0 0
    %383 = vmatpush1.bf16.msra.mxu0 0
    %384 = vmatprep.subr.bf16.mxu0 0
    %385 = vmatpush1.bf16.msra.mxu0 0
    %386 = vmatprep.subr.bf16.mxu0 0
    %387 = vmatpush1.bf16.msra.mxu0 0
    %388 = vmatprep.subr.bf16.mxu0 0
    %389 = vmatpush1.bf16.msra.mxu0 0
    %390 = vmatprep.subr.bf16.mxu0 0
    %391 = vmatpush1.bf16.msra.mxu0 0
    %392 = vmatprep.subr.bf16.mxu0 0
    %393 = vmatpush1.bf16.msra.mxu0 %v373
    %394 = vmatprep.subr.bf16.mxu0 0
    %395 = vmatpush1.bf16.msra.mxu0 %v372
    %396 = vmatprep.subr.bf16.mxu0 0
    %397 = vmatpush2.bf16.msra.mxu0 0
    %398 = vmatprep.subr.bf16.mxu0 0
    %399 = vmatpush2.bf16.msra.mxu0 0
    %400 = vmatprep.subr.bf16.mxu0 0
    %401 = vmatpush2.bf16.msra.mxu0 0
    %402 = vmatprep.subr.bf16.mxu0 0
    %403 = vmatpush2.bf16.msra.mxu0 0
    %404 = vmatprep.subr.bf16.mxu0 0
    %405 = vmatpush2.bf16.msra.mxu0 0
    %406 = vmatprep.subr.bf16.mxu0 0
    %407 = vmatpush2.bf16.msra.mxu0 0
    %408 = vmatprep.subr.bf16.mxu0 0
    %409 = vmatpush2.bf16.msra.mxu0 0
    %410 = vmatprep.subr.bf16.mxu0 0
    %411 = vmatpush2.bf16.msra.mxu0 0
    %412 = vmatprep.mubr.bf16.mxu0 0
    %413 = vmatmul.mubr.bf16.gmra.mxu0 %v378
    %v414 = vpop.f32.mrf.mxu0
    %v415 = vadd.f32 %v362, %v414
    %v416 = vpop.f32.mrf.mxu0
    %v417 = vpop.f32.mrf.mxu0
    %v418 = vadd.f32 %v362, %v417
    %v419 = vpop.f32.mrf.mxu0
    %420 = vdwg.mxu0
    %v421 = vmul.f32 %v415, 0.5
    %v422 = vmul.f32 %v418, 0.5
    %424 = vrot.lane.b32.xlu0 %v415, 96
    %v425 = vpop.permute.xlu0 %424
    %v427 = vmul.f32 %v421, %v425
    %v429 = vsel %vm376, %v427, 0
    %431 = vmatprep.subr.mxu0 0.0
    %432 = vmatpush1.msra.mxu0 0.0
    %433 = vmatprep.subr.mxu0 0.0
    %434 = vmatpush1.msra.mxu0 0.0
    %435 = vmatprep.subr.mxu0 0.0
    %436 = vmatpush1.msra.mxu0 0.0
    %437 = vmatprep.subr.mxu0 0.0
    %438 = vmatpush1.msra.mxu0 0.0
    %439 = vmatprep.subr.mxu0 0.0
    %440 = vmatpush1.msra.mxu0 0.0
    %441 = vmatprep.subr.mxu0 0.0
    %442 = vmatpush1.msra.mxu0 0.0
    %443 = vmatprep.subr.mxu0 0.0
    %444 = vmatpush1.msra.mxu0 0.0
    %445 = vmatprep.subr.mxu0 0.0
    %446 = vmatpush1.msra.mxu0 0.0
    %447 = vmatprep.subr.mxu0 0.0
    %448 = vmatpush1.msra.mxu0 0.0
    %449 = vmatprep.subr.mxu0 0.0
    %450 = vmatpush1.msra.mxu0 0.0
    %451 = vmatprep.subr.mxu0 0.0
    %452 = vmatpush1.msra.mxu0 0.0
    %453 = vmatprep.subr.mxu0 0.0
    %454 = vmatpush1.msra.mxu0 0.0
    %455 = vmatprep.subr.mxu0 0.0
    %456 = vmatpush1.msra.mxu0 %v49
    %457 = vmatprep.subr.mxu0 0.0
    %458 = vmatpush1.msra.mxu0 %v48
    %459 = vmatprep.subr.mxu0 0.0
    %460 = vmatpush1.msra.mxu0 %v47
    %461 = vmatprep.subr.mxu0 0.0
    %462 = vmatpush1.msra.mxu0 %v46
    %463 = vmatprep.subr.mxu0 0.0
    %464 = vmatpush2.msra.mxu0 0.0
    %465 = vmatprep.subr.mxu0 0.0
    %466 = vmatpush2.msra.mxu0 0.0
    %467 = vmatprep.subr.mxu0 0.0
    %468 = vmatpush2.msra.mxu0 0.0
    %469 = vmatprep.subr.mxu0 0.0
    %470 = vmatpush2.msra.mxu0 0.0
    %471 = vmatprep.subr.mxu0 0.0
    %472 = vmatpush2.msra.mxu0 0.0
    %473 = vmatprep.subr.mxu0 0.0
    %474 = vmatpush2.msra.mxu0 0.0
    %475 = vmatprep.subr.mxu0 0.0
    %476 = vmatpush2.msra.mxu0 0.0
    %477 = vmatprep.subr.mxu0 0.0
    %478 = vmatpush2.msra.mxu0 0.0
    %479 = vmatprep.subr.mxu0 0.0
    %480 = vmatpush2.msra.mxu0 0.0
    %481 = vmatprep.subr.mxu0 0.0
    %482 = vmatpush2.msra.mxu0 0.0
    %483 = vmatprep.subr.mxu0 0.0
    %484 = vmatpush2.msra.mxu0 0.0
    %485 = vmatprep.subr.mxu0 0.0
    %486 = vmatpush2.msra.mxu0 0.0
    %487 = vmatprep.subr.mxu0 0.0
    %488 = vmatpush2.msra.mxu0 0.0
    %489 = vmatprep.subr.mxu0 0.0
    %490 = vmatpush2.msra.mxu0 0.0
    %491 = vmatprep.subr.mxu0 0.0
    %492 = vmatpush2.msra.mxu0 0.0
    %493 = vmatprep.subr.mxu0 0.0
    %494 = vmatpush2.msra.mxu0 0.0
    %495 = vmatprep.mubr.f32.mxu0 0.0
    %496 = vmatmul.mubr.f32.gmra.mxu0 %v429
    %v497 = vpop.f32.mrf.mxu0
    %v498 = vadd.f32 0.0, %v497
    %v499 = vpop.f32.mrf.mxu0
    %500 = vdwg.mxu0
    %502 = vrot.lane.b32.xlu0 %v418, 96
    %v503 = vpop.permute.xlu0 %502
    %v505 = vmul.f32 %v421, %v503
    %v507 = vsel %vm376, %v505, 0
    %509 = vmatprep.subr.mxu0 0.0
    %510 = vmatpush1.msra.mxu0 0.0
    %511 = vmatprep.subr.mxu0 0.0
    %512 = vmatpush1.msra.mxu0 0.0
    %513 = vmatprep.subr.mxu0 0.0
    %514 = vmatpush1.msra.mxu0 0.0
    %515 = vmatprep.subr.mxu0 0.0
    %516 = vmatpush1.msra.mxu0 0.0
    %517 = vmatprep.subr.mxu0 0.0
    %518 = vmatpush1.msra.mxu0 0.0
    %519 = vmatprep.subr.mxu0 0.0
    %520 = vmatpush1.msra.mxu0 0.0
    %521 = vmatprep.subr.mxu0 0.0
    %522 = vmatpush1.msra.mxu0 0.0
    %523 = vmatprep.subr.mxu0 0.0
    %524 = vmatpush1.msra.mxu0 0.0
    %525 = vmatprep.subr.mxu0 0.0
    %526 = vmatpush1.msra.mxu0 0.0
    %527 = vmatprep.subr.mxu0 0.0
    %528 = vmatpush1.msra.mxu0 0.0
    %529 = vmatprep.subr.mxu0 0.0
    %530 = vmatpush1.msra.mxu0 0.0
    %531 = vmatprep.subr.mxu0 0.0
    %532 = vmatpush1.msra.mxu0 0.0
    %533 = vmatprep.subr.mxu0 0.0
    %534 = vmatpush1.msra.mxu0 %v49
    %535 = vmatprep.subr.mxu0 0.0
    %536 = vmatpush1.msra.mxu0 %v48
    %537 = vmatprep.subr.mxu0 0.0
    %538 = vmatpush1.msra.mxu0 %v47
    %539 = vmatprep.subr.mxu0 0.0
    %540 = vmatpush1.msra.mxu0 %v46
    %541 = vmatprep.subr.mxu0 0.0
    %542 = vmatpush2.msra.mxu0 0.0
    %543 = vmatprep.subr.mxu0 0.0
    %544 = vmatpush2.msra.mxu0 0.0
    %545 = vmatprep.subr.mxu0 0.0
    %546 = vmatpush2.msra.mxu0 0.0
    %547 = vmatprep.subr.mxu0 0.0
    %548 = vmatpush2.msra.mxu0 0.0
    %549 = vmatprep.subr.mxu0 0.0
    %550 = vmatpush2.msra.mxu0 0.0
    %551 = vmatprep.subr.mxu0 0.0
    %552 = vmatpush2.msra.mxu0 0.0
    %553 = vmatprep.subr.mxu0 0.0
    %554 = vmatpush2.msra.mxu0 0.0
    %555 = vmatprep.subr.mxu0 0.0
    %556 = vmatpush2.msra.mxu0 0.0
    %557 = vmatprep.subr.mxu0 0.0
    %558 = vmatpush2.msra.mxu0 0.0
    %559 = vmatprep.subr.mxu0 0.0
    %560 = vmatpush2.msra.mxu0 0.0
    %561 = vmatprep.subr.mxu0 0.0
    %562 = vmatpush2.msra.mxu0 0.0
    %563 = vmatprep.subr.mxu0 0.0
    %564 = vmatpush2.msra.mxu0 0.0
    %565 = vmatprep.subr.mxu0 0.0
    %566 = vmatpush2.msra.mxu0 0.0
    %567 = vmatprep.subr.mxu0 0.0
    %568 = vmatpush2.msra.mxu0 0.0
    %569 = vmatprep.subr.mxu0 0.0
    %570 = vmatpush2.msra.mxu0 0.0
    %571 = vmatprep.subr.mxu0 0.0
    %572 = vmatpush2.msra.mxu0 0.0
    %573 = vmatprep.mubr.f32.mxu0 0.0
    %574 = vmatmul.mubr.f32.gmra.mxu0 %v507
    %v575 = vpop.f32.mrf.mxu0
    %v576 = vadd.f32 0.0, %v575
    %v577 = vpop.f32.mrf.mxu0
    %578 = vdwg.mxu0
    %v579 = vmul.f32 %v422, %v425
    %v581 = vsel %vm376, %v579, 0
    %583 = vmatprep.subr.mxu0 0.0
    %584 = vmatpush1.msra.mxu0 0.0
    %585 = vmatprep.subr.mxu0 0.0
    %586 = vmatpush1.msra.mxu0 0.0
    %587 = vmatprep.subr.mxu0 0.0
    %588 = vmatpush1.msra.mxu0 0.0
    %589 = vmatprep.subr.mxu0 0.0
    %590 = vmatpush1.msra.mxu0 0.0
    %591 = vmatprep.subr.mxu0 0.0
    %592 = vmatpush1.msra.mxu0 0.0
    %593 = vmatprep.subr.mxu0 0.0
    %594 = vmatpush1.msra.mxu0 0.0
    %595 = vmatprep.subr.mxu0 0.0
    %596 = vmatpush1.msra.mxu0 0.0
    %597 = vmatprep.subr.mxu0 0.0
    %598 = vmatpush1.msra.mxu0 0.0
    %599 = vmatprep.subr.mxu0 0.0
    %600 = vmatpush1.msra.mxu0 0.0
    %601 = vmatprep.subr.mxu0 0.0
    %602 = vmatpush1.msra.mxu0 0.0
    %603 = vmatprep.subr.mxu0 0.0
    %604 = vmatpush1.msra.mxu0 0.0
    %605 = vmatprep.subr.mxu0 0.0
    %606 = vmatpush1.msra.mxu0 0.0
    %607 = vmatprep.subr.mxu0 0.0
    %608 = vmatpush1.msra.mxu0 %v49
    %609 = vmatprep.subr.mxu0 0.0
    %610 = vmatpush1.msra.mxu0 %v48
    %611 = vmatprep.subr.mxu0 0.0
    %612 = vmatpush1.msra.mxu0 %v47
    %613 = vmatprep.subr.mxu0 0.0
    %614 = vmatpush1.msra.mxu0 %v46
    %615 = vmatprep.subr.mxu0 0.0
    %616 = vmatpush2.msra.mxu0 0.0
    %617 = vmatprep.subr.mxu0 0.0
    %618 = vmatpush2.msra.mxu0 0.0
    %619 = vmatprep.subr.mxu0 0.0
    %620 = vmatpush2.msra.mxu0 0.0
    %621 = vmatprep.subr.mxu0 0.0
    %622 = vmatpush2.msra.mxu0 0.0
    %623 = vmatprep.subr.mxu0 0.0
    %624 = vmatpush2.msra.mxu0 0.0
    %625 = vmatprep.subr.mxu0 0.0
    %626 = vmatpush2.msra.mxu0 0.0
    %627 = vmatprep.subr.mxu0 0.0
    %628 = vmatpush2.msra.mxu0 0.0
    %629 = vmatprep.subr.mxu0 0.0
    %630 = vmatpush2.msra.mxu0 0.0
    %631 = vmatprep.subr.mxu0 0.0
    %632 = vmatpush2.msra.mxu0 0.0
    %633 = vmatprep.subr.mxu0 0.0
    %634 = vmatpush2.msra.mxu0 0.0
    %635 = vmatprep.subr.mxu0 0.0
    %636 = vmatpush2.msra.mxu0 0.0
    %637 = vmatprep.subr.mxu0 0.0
    %638 = vmatpush2.msra.mxu0 0.0
    %639 = vmatprep.subr.mxu0 0.0
    %640 = vmatpush2.msra.mxu0 0.0
    %641 = vmatprep.subr.mxu0 0.0
    %642 = vmatpush2.msra.mxu0 0.0
    %643 = vmatprep.subr.mxu0 0.0
    %644 = vmatpush2.msra.mxu0 0.0
    %645 = vmatprep.subr.mxu0 0.0
    %646 = vmatpush2.msra.mxu0 0.0
    %647 = vmatprep.mubr.f32.mxu0 0.0
    %648 = vmatmul.mubr.f32.gmra.mxu0 %v581
    %v649 = vpop.f32.mrf.mxu0
    %v650 = vadd.f32 0.0, %v649
    %v651 = vpop.f32.mrf.mxu0
    %652 = vdwg.mxu0
    %v653 = vmul.f32 %v422, %v503
    %v655 = vsel %vm376, %v653, 0
    %657 = vmatprep.subr.mxu0 0.0
    %658 = vmatpush1.msra.mxu0 0.0
    %659 = vmatprep.subr.mxu0 0.0
    %660 = vmatpush1.msra.mxu0 0.0
    %661 = vmatprep.subr.mxu0 0.0
    %662 = vmatpush1.msra.mxu0 0.0
    %663 = vmatprep.subr.mxu0 0.0
    %664 = vmatpush1.msra.mxu0 0.0
    %665 = vmatprep.subr.mxu0 0.0
    %666 = vmatpush1.msra.mxu0 0.0
    %667 = vmatprep.subr.mxu0 0.0
    %668 = vmatpush1.msra.mxu0 0.0
    %669 = vmatprep.subr.mxu0 0.0
    %670 = vmatpush1.msra.mxu0 0.0
    %671 = vmatprep.subr.mxu0 0.0
    %672 = vmatpush1.msra.mxu0 0.0
    %673 = vmatprep.subr.mxu0 0.0
    %674 = vmatpush1.msra.mxu0 0.0
    %675 = vmatprep.subr.mxu0 0.0
    %676 = vmatpush1.msra.mxu0 0.0
    %677 = vmatprep.subr.mxu0 0.0
    %678 = vmatpush1.msra.mxu0 0.0
    %679 = vmatprep.subr.mxu0 0.0
    %680 = vmatpush1.msra.mxu0 0.0
    %681 = vmatprep.subr.mxu0 0.0
    %682 = vmatpush1.msra.mxu0 %v49
    %683 = vmatprep.subr.mxu0 0.0
    %684 = vmatpush1.msra.mxu0 %v48
    %685 = vmatprep.subr.mxu0 0.0
    %686 = vmatpush1.msra.mxu0 %v47
    %687 = vmatprep.subr.mxu0 0.0
    %688 = vmatpush1.msra.mxu0 %v46
    %689 = vmatprep.subr.mxu0 0.0
    %690 = vmatpush2.msra.mxu0 0.0
    %691 = vmatprep.subr.mxu0 0.0
    %692 = vmatpush2.msra.mxu0 0.0
    %693 = vmatprep.subr.mxu0 0.0
    %694 = vmatpush2.msra.mxu0 0.0
    %695 = vmatprep.subr.mxu0 0.0
    %696 = vmatpush2.msra.mxu0 0.0
    %697 = vmatprep.subr.mxu0 0.0
    %698 = vmatpush2.msra.mxu0 0.0
    %699 = vmatprep.subr.mxu0 0.0
    %700 = vmatpush2.msra.mxu0 0.0
    %701 = vmatprep.subr.mxu0 0.0
    %702 = vmatpush2.msra.mxu0 0.0
    %703 = vmatprep.subr.mxu0 0.0
    %704 = vmatpush2.msra.mxu0 0.0
    %705 = vmatprep.subr.mxu0 0.0
    %706 = vmatpush2.msra.mxu0 0.0
    %707 = vmatprep.subr.mxu0 0.0
    %708 = vmatpush2.msra.mxu0 0.0
    %709 = vmatprep.subr.mxu0 0.0
    %710 = vmatpush2.msra.mxu0 0.0
    %711 = vmatprep.subr.mxu0 0.0
    %712 = vmatpush2.msra.mxu0 0.0
    %713 = vmatprep.subr.mxu0 0.0
    %714 = vmatpush2.msra.mxu0 0.0
    %715 = vmatprep.subr.mxu0 0.0
    %716 = vmatpush2.msra.mxu0 0.0
    %717 = vmatprep.subr.mxu0 0.0
    %718 = vmatpush2.msra.mxu0 0.0
    %719 = vmatprep.subr.mxu0 0.0
    %720 = vmatpush2.msra.mxu0 0.0
    %721 = vmatprep.mubr.f32.mxu0 0.0
    %722 = vmatmul.mubr.f32.gmra.mxu0 %v655
    %v723 = vpop.f32.mrf.mxu0
    %v724 = vadd.f32 0.0, %v723
    %v725 = vpop.f32.mrf.mxu0
    %726 = vdwg.mxu0
    %v727 = vmax.f32 %v498, %v576
    %v728 = vsub.f32 %v498, %v727
    %v729 = vmul.f32 %v728, 1.442695
    %v730 = vpow.pop %v729
    %v731 = vsub.f32 %v576, %v727
    %v732 = vmul.f32 %v731, 1.442695
    %v733 = vpow.pop %v732
    %v734 = vadd.f32 %v730, %v733
    %v735 = vrcp.pop %v734
    %v736 = vmul.f32 %v730, %v735
    %vm737 = vcmask 64512
    %v739 = vsel %vm737, %v736, 0
    %741 = vmatprep.subr.mxu0 0.0
    %742 = vmatpush1.msra.mxu0 0.0
    %743 = vmatprep.subr.mxu0 0.0
    %744 = vmatpush1.msra.mxu0 0.0
    %745 = vmatprep.subr.mxu0 0.0
    %746 = vmatpush1.msra.mxu0 0.0
    %747 = vmatprep.subr.mxu0 0.0
    %748 = vmatpush1.msra.mxu0 0.0
    %749 = vmatprep.subr.mxu0 0.0
    %750 = vmatpush1.msra.mxu0 0.0
    %751 = vmatprep.subr.mxu0 0.0
    %752 = vmatpush1.msra.mxu0 0.0
    %753 = vmatprep.subr.mxu0 0.0
    %754 = vmatpush1.msra.mxu0 0.0
    %755 = vmatprep.subr.mxu0 0.0
    %756 = vmatpush1.msra.mxu0 0.0
    %757 = vmatprep.subr.mxu0 0.0
    %758 = vmatpush1.msra.mxu0 0.0
    %759 = vmatprep.subr.mxu0 0.0
    %760 = vmatpush1.msra.mxu0 0.0
    %761 = vmatprep.subr.mxu0 0.0
    %762 = vmatpush1.msra.mxu0 0.0
    %763 = vmatprep.subr.mxu0 0.0
    %764 = vmatpush1.msra.mxu0 0.0
    %765 = vmatprep.subr.mxu0 0.0
    %766 = vmatpush1.msra.mxu0 0.0
    %767 = vmatprep.subr.mxu0 0.0
    %768 = vmatpush1.msra.mxu0 0.0
    %769 = vmatprep.subr.mxu0 0.0
    %770 = vmatpush1.msra.mxu0 0.0
    %771 = vmatprep.subr.mxu0 0.0
    %772 = vmatpush1.msra.mxu0 %v50
    %773 = vmatprep.subr.mxu0 0.0
    %774 = vmatpush2.msra.mxu0 0.0
    %775 = vmatprep.subr.mxu0 0.0
    %776 = vmatpush2.msra.mxu0 0.0
    %777 = vmatprep.subr.mxu0 0.0
    %778 = vmatpush2.msra.mxu0 0.0
    %779 = vmatprep.subr.mxu0 0.0
    %780 = vmatpush2.msra.mxu0 0.0
    %781 = vmatprep.subr.mxu0 0.0
    %782 = vmatpush2.msra.mxu0 0.0
    %783 = vmatprep.subr.mxu0 0.0
    %784 = vmatpush2.msra.mxu0 0.0
    %785 = vmatprep.subr.mxu0 0.0
    %786 = vmatpush2.msra.mxu0 0.0
    %787 = vmatprep.subr.mxu0 0.0
    %788 = vmatpush2.msra.mxu0 0.0
    %789 = vmatprep.subr.mxu0 0.0
    %790 = vmatpush2.msra.mxu0 0.0
    %791 = vmatprep.subr.mxu0 0.0
    %792 = vmatpush2.msra.mxu0 0.0
    %793 = vmatprep.subr.mxu0 0.0
    %794 = vmatpush2.msra.mxu0 0.0
    %795 = vmatprep.subr.mxu0 0.0
    %796 = vmatpush2.msra.mxu0 0.0
    %797 = vmatprep.subr.mxu0 0.0
    %798 = vmatpush2.msra.mxu0 0.0
    %799 = vmatprep.subr.mxu0 0.0
    %800 = vmatpush2.msra.mxu0 0.0
    %801 = vmatprep.subr.mxu0 0.0
    %802 = vmatpush2.msra.mxu0 0.0
    %803 = vmatprep.subr.mxu0 0.0
    %804 = vmatpush2.msra.mxu0 0.0
    %805 = vmatprep.mubr.f32.mxu0 0.0
    %806 = vmatmul.mubr.f32.gmra.mxu0 %v739
    %v807 = vpop.f32.mrf.mxu0
    %v808 = vadd.f32 0.0, %v807
    %v809 = vpop.f32.mrf.mxu0
    %810 = vdwg.mxu0
    %811 = vrot.lane.b32.xlu0 %v415, 64
    %v812 = vpop.permute.xlu0 %811
    %v814 = vmul.f32 %v808, %v812
    %v815 = vmul.f32 %v733, %v735
    %v817 = vsel %vm737, %v815, 0
    %819 = vmatprep.subr.mxu0 0.0
    %820 = vmatpush1.msra.mxu0 0.0
    %821 = vmatprep.subr.mxu0 0.0
    %822 = vmatpush1.msra.mxu0 0.0
    %823 = vmatprep.subr.mxu0 0.0
    %824 = vmatpush1.msra.mxu0 0.0
    %825 = vmatprep.subr.mxu0 0.0
    %826 = vmatpush1.msra.mxu0 0.0
    %827 = vmatprep.subr.mxu0 0.0
    %828 = vmatpush1.msra.mxu0 0.0
    %829 = vmatprep.subr.mxu0 0.0
    %830 = vmatpush1.msra.mxu0 0.0
    %831 = vmatprep.subr.mxu0 0.0
    %832 = vmatpush1.msra.mxu0 0.0
    %833 = vmatprep.subr.mxu0 0.0
    %834 = vmatpush1.msra.mxu0 0.0
    %835 = vmatprep.subr.mxu0 0.0
    %836 = vmatpush1.msra.mxu0 0.0
    %837 = vmatprep.subr.mxu0 0.0
    %838 = vmatpush1.msra.mxu0 0.0
    %839 = vmatprep.subr.mxu0 0.0
    %840 = vmatpush1.msra.mxu0 0.0
    %841 = vmatprep.subr.mxu0 0.0
    %842 = vmatpush1.msra.mxu0 0.0
    %843 = vmatprep.subr.mxu0 0.0
    %844 = vmatpush1.msra.mxu0 0.0
    %845 = vmatprep.subr.mxu0 0.0
    %846 = vmatpush1.msra.mxu0 0.0
    %847 = vmatprep.subr.mxu0 0.0
    %848 = vmatpush1.msra.mxu0 0.0
    %849 = vmatprep.subr.mxu0 0.0
    %850 = vmatpush1.msra.mxu0 %v50
    %851 = vmatprep.subr.mxu0 0.0
    %852 = vmatpush2.msra.mxu0 0.0
    %853 = vmatprep.subr.mxu0 0.0
    %854 = vmatpush2.msra.mxu0 0.0
    %855 = vmatprep.subr.mxu0 0.0
    %856 = vmatpush2.msra.mxu0 0.0
    %857 = vmatprep.subr.mxu0 0.0
    %858 = vmatpush2.msra.mxu0 0.0
    %859 = vmatprep.subr.mxu0 0.0
    %860 = vmatpush2.msra.mxu0 0.0
    %861 = vmatprep.subr.mxu0 0.0
    %862 = vmatpush2.msra.mxu0 0.0
    %863 = vmatprep.subr.mxu0 0.0
    %864 = vmatpush2.msra.mxu0 0.0
    %865 = vmatprep.subr.mxu0 0.0
    %866 = vmatpush2.msra.mxu0 0.0
    %867 = vmatprep.subr.mxu0 0.0
    %868 = vmatpush2.msra.mxu0 0.0
    %869 = vmatprep.subr.mxu0 0.0
    %870 = vmatpush2.msra.mxu0 0.0
    %871 = vmatprep.subr.mxu0 0.0
    %872 = vmatpush2.msra.mxu0 0.0
    %873 = vmatprep.subr.mxu0 0.0
    %874 = vmatpush2.msra.mxu0 0.0
    %875 = vmatprep.subr.mxu0 0.0
    %876 = vmatpush2.msra.mxu0 0.0
    %877 = vmatprep.subr.mxu0 0.0
    %878 = vmatpush2.msra.mxu0 0.0
    %879 = vmatprep.subr.mxu0 0.0
    %880 = vmatpush2.msra.mxu0 0.0
    %881 = vmatprep.subr.mxu0 0.0
    %882 = vmatpush2.msra.mxu0 0.0
    %883 = vmatprep.mubr.f32.mxu0 0.0
    %884 = vmatmul.mubr.f32.gmra.mxu0 %v817
    %v885 = vpop.f32.mrf.mxu0
    %v886 = vadd.f32 0.0, %v885
    %v887 = vpop.f32.mrf.mxu0
    %888 = vdwg.mxu0
    %889 = vrot.lane.b32.xlu0 %v418, 64
    %v890 = vpop.permute.xlu0 %889
    %v892 = vmul.f32 %v886, %v890
    %v893 = vadd.f32 %v814, %v892
    %v894 = vmax.f32 %v650, %v724
    %v895 = vsub.f32 %v650, %v894
    %v896 = vmul.f32 %v895, 1.442695
    %v897 = vpow.pop %v896
    %v898 = vsub.f32 %v724, %v894
    %v899 = vmul.f32 %v898, 1.442695
    %v900 = vpow.pop %v899
    %v901 = vadd.f32 %v897, %v900
    %v902 = vrcp.pop %v901
    %v903 = vmul.f32 %v897, %v902
    %v905 = vsel %vm737, %v903, 0
    %907 = vmatprep.subr.mxu0 0.0
    %908 = vmatpush1.msra.mxu0 0.0
    %909 = vmatprep.subr.mxu0 0.0
    %910 = vmatpush1.msra.mxu0 0.0
    %911 = vmatprep.subr.mxu0 0.0
    %912 = vmatpush1.msra.mxu0 0.0
    %913 = vmatprep.subr.mxu0 0.0
    %914 = vmatpush1.msra.mxu0 0.0
    %915 = vmatprep.subr.mxu0 0.0
    %916 = vmatpush1.msra.mxu0 0.0
    %917 = vmatprep.subr.mxu0 0.0
    %918 = vmatpush1.msra.mxu0 0.0
    %919 = vmatprep.subr.mxu0 0.0
    %920 = vmatpush1.msra.mxu0 0.0
    %921 = vmatprep.subr.mxu0 0.0
    %922 = vmatpush1.msra.mxu0 0.0
    %923 = vmatprep.subr.mxu0 0.0
    %924 = vmatpush1.msra.mxu0 0.0
    %925 = vmatprep.subr.mxu0 0.0
    %926 = vmatpush1.msra.mxu0 0.0
    %927 = vmatprep.subr.mxu0 0.0
    %928 = vmatpush1.msra.mxu0 0.0
    %929 = vmatprep.subr.mxu0 0.0
    %930 = vmatpush1.msra.mxu0 0.0
    %931 = vmatprep.subr.mxu0 0.0
    %932 = vmatpush1.msra.mxu0 0.0
    %933 = vmatprep.subr.mxu0 0.0
    %934 = vmatpush1.msra.mxu0 0.0
    %935 = vmatprep.subr.mxu0 0.0
    %936 = vmatpush1.msra.mxu0 0.0
    %937 = vmatprep.subr.mxu0 0.0
    %938 = vmatpush1.msra.mxu0 %v50
    %939 = vmatprep.subr.mxu0 0.0
    %940 = vmatpush2.msra.mxu0 0.0
    %941 = vmatprep.subr.mxu0 0.0
    %942 = vmatpush2.msra.mxu0 0.0
    %943 = vmatprep.subr.mxu0 0.0
    %944 = vmatpush2.msra.mxu0 0.0
    %945 = vmatprep.subr.mxu0 0.0
    %946 = vmatpush2.msra.mxu0 0.0
    %947 = vmatprep.subr.mxu0 0.0
    %948 = vmatpush2.msra.mxu0 0.0
    %949 = vmatprep.subr.mxu0 0.0
    %950 = vmatpush2.msra.mxu0 0.0
    %951 = vmatprep.subr.mxu0 0.0
    %952 = vmatpush2.msra.mxu0 0.0
    %953 = vmatprep.subr.mxu0 0.0
    %954 = vmatpush2.msra.mxu0 0.0
    %955 = vmatprep.subr.mxu0 0.0
    %956 = vmatpush2.msra.mxu0 0.0
    %957 = vmatprep.subr.mxu0 0.0
    %958 = vmatpush2.msra.mxu0 0.0
    %959 = vmatprep.subr.mxu0 0.0
    %960 = vmatpush2.msra.mxu0 0.0
    %961 = vmatprep.subr.mxu0 0.0
    %962 = vmatpush2.msra.mxu0 0.0
    %963 = vmatprep.subr.mxu0 0.0
    %964 = vmatpush2.msra.mxu0 0.0
    %965 = vmatprep.subr.mxu0 0.0
    %966 = vmatpush2.msra.mxu0 0.0
    %967 = vmatprep.subr.mxu0 0.0
    %968 = vmatpush2.msra.mxu0 0.0
    %969 = vmatprep.subr.mxu0 0.0
    %970 = vmatpush2.msra.mxu0 0.0
    %971 = vmatprep.mubr.f32.mxu0 0.0
    %972 = vmatmul.mubr.f32.gmra.mxu0 %v905
    %v973 = vpop.f32.mrf.mxu0
    %v974 = vadd.f32 0.0, %v973
    %v975 = vpop.f32.mrf.mxu0
    %976 = vdwg.mxu0
    %v977 = vmul.f32 %v974, %v812
    %v978 = vmul.f32 %v900, %v902
    %v980 = vsel %vm737, %v978, 0
    %982 = vmatprep.subr.mxu0 0.0
    %983 = vmatpush1.msra.mxu0 0.0
    %984 = vmatprep.subr.mxu0 0.0
    %985 = vmatpush1.msra.mxu0 0.0
    %986 = vmatprep.subr.mxu0 0.0
    %987 = vmatpush1.msra.mxu0 0.0
    %988 = vmatprep.subr.mxu0 0.0
    %989 = vmatpush1.msra.mxu0 0.0
    %990 = vmatprep.subr.mxu0 0.0
    %991 = vmatpush1.msra.mxu0 0.0
    %992 = vmatprep.subr.mxu0 0.0
    %993 = vmatpush1.msra.mxu0 0.0
    %994 = vmatprep.subr.mxu0 0.0
    %995 = vmatpush1.msra.mxu0 0.0
    %996 = vmatprep.subr.mxu0 0.0
    %997 = vmatpush1.msra.mxu0 0.0
    %998 = vmatprep.subr.mxu0 0.0
    %999 = vmatpush1.msra.mxu0 0.0
    %1000 = vmatprep.subr.mxu0 0.0
    %1001 = vmatpush1.msra.mxu0 0.0
    %1002 = vmatprep.subr.mxu0 0.0
    %1003 = vmatpush1.msra.mxu0 0.0
    %1004 = vmatprep.subr.mxu0 0.0
    %1005 = vmatpush1.msra.mxu0 0.0
    %1006 = vmatprep.subr.mxu0 0.0
    %1007 = vmatpush1.msra.mxu0 0.0
    %1008 = vmatprep.subr.mxu0 0.0
    %1009 = vmatpush1.msra.mxu0 0.0
    %1010 = vmatprep.subr.mxu0 0.0
    %1011 = vmatpush1.msra.mxu0 0.0
    %1012 = vmatprep.subr.mxu0 0.0
    %1013 = vmatpush1.msra.mxu0 %v50
    %1014 = vmatprep.subr.mxu0 0.0
    %1015 = vmatpush2.msra.mxu0 0.0
    %1016 = vmatprep.subr.mxu0 0.0
    %1017 = vmatpush2.msra.mxu0 0.0
    %1018 = vmatprep.subr.mxu0 0.0
    %1019 = vmatpush2.msra.mxu0 0.0
    %1020 = vmatprep.subr.mxu0 0.0
    %1021 = vmatpush2.msra.mxu0 0.0
    %1022 = vmatprep.subr.mxu0 0.0
    %1023 = vmatpush2.msra.mxu0 0.0
    %1024 = vmatprep.subr.mxu0 0.0
    %1025 = vmatpush2.msra.mxu0 0.0
    %1026 = vmatprep.subr.mxu0 0.0
    %1027 = vmatpush2.msra.mxu0 0.0
    %1028 = vmatprep.subr.mxu0 0.0
    %1029 = vmatpush2.msra.mxu0 0.0
    %1030 = vmatprep.subr.mxu0 0.0
    %1031 = vmatpush2.msra.mxu0 0.0
    %1032 = vmatprep.subr.mxu0 0.0
    %1033 = vmatpush2.msra.mxu0 0.0
    %1034 = vmatprep.subr.mxu0 0.0
    %1035 = vmatpush2.msra.mxu0 0.0
    %1036 = vmatprep.subr.mxu0 0.0
    %1037 = vmatpush2.msra.mxu0 0.0
    %1038 = vmatprep.subr.mxu0 0.0
    %1039 = vmatpush2.msra.mxu0 0.0
    %1040 = vmatprep.subr.mxu0 0.0
    %1041 = vmatpush2.msra.mxu0 0.0
    %1042 = vmatprep.subr.mxu0 0.0
    %1043 = vmatpush2.msra.mxu0 0.0
    %1044 = vmatprep.subr.mxu0 0.0
    %1045 = vmatpush2.msra.mxu0 0.0
    %1046 = vmatprep.mubr.f32.mxu0 0.0
    %1047 = vmatmul.mubr.f32.gmra.mxu0 %v980
    %v1048 = vpop.f32.mrf.mxu0
    %v1049 = vadd.f32 0.0, %v1048
    %v1050 = vpop.f32.mrf.mxu0
    %1051 = vdwg.mxu0
    %v1052 = vmul.f32 %v1049, %v890
    %v1053 = vadd.f32 %v977, %v1052
    %v1054 = vpack.c.bf16 %v1053, %v893
    %v1055 = vlaneseq
    %v1056 = vshrl.u32 %v1055, 7
    %v1057 = vsub.s32 0, %v1056
    %v1058 = vrot.slane %v356, %v1057
    %v1063 = vunpack.c.l.b16 %v62
    %v1064 = vunpack.c.l.b16 %v63
    %v1065 = vunpack.c.l.b16 %v64
    %v1066 = vunpack.c.l.b16 %v65
    %v1067 = vpack.c.b16 %v1064, %v1063
    %v1068 = vpack.c.b16 %v1066, %v1065
    %v1072 = vsel %vm376, %v1054, 0
    %1074 = vmatprep.subr.bf16.mxu0 0
    %1075 = vmatpush1.bf16.msra.mxu0 0
    %1076 = vmatprep.subr.bf16.mxu0 0
    %1077 = vmatpush1.bf16.msra.mxu0 0
    %1078 = vmatprep.subr.bf16.mxu0 0
    %1079 = vmatpush1.bf16.msra.mxu0 0
    %1080 = vmatprep.subr.bf16.mxu0 0
    %1081 = vmatpush1.bf16.msra.mxu0 0
    %1082 = vmatprep.subr.bf16.mxu0 0
    %1083 = vmatpush1.bf16.msra.mxu0 0
    %1084 = vmatprep.subr.bf16.mxu0 0
    %1085 = vmatpush1.bf16.msra.mxu0 0
    %1086 = vmatprep.subr.bf16.mxu0 0
    %1087 = vmatpush1.bf16.msra.mxu0 %v1068
    %1088 = vmatprep.subr.bf16.mxu0 0
    %1089 = vmatpush1.bf16.msra.mxu0 %v1067
    %1090 = vmatprep.subr.bf16.mxu0 0
    %1091 = vmatpush2.bf16.msra.mxu0 0
    %1092 = vmatprep.subr.bf16.mxu0 0
    %1093 = vmatpush2.bf16.msra.mxu0 0
    %1094 = vmatprep.subr.bf16.mxu0 0
    %1095 = vmatpush2.bf16.msra.mxu0 0
    %1096 = vmatprep.subr.bf16.mxu0 0
    %1097 = vmatpush2.bf16.msra.mxu0 0
    %1098 = vmatprep.subr.bf16.mxu0 0
    %1099 = vmatpush2.bf16.msra.mxu0 0
    %1100 = vmatprep.subr.bf16.mxu0 0
    %1101 = vmatpush2.bf16.msra.mxu0 0
    %1102 = vmatprep.subr.bf16.mxu0 0
    %1103 = vmatpush2.bf16.msra.mxu0 0
    %1104 = vmatprep.subr.bf16.mxu0 0
    %1105 = vmatpush2.bf16.msra.mxu0 0
    %1106 = vmatprep.mubr.bf16.mxu0 0
    %1107 = vmatmul.mubr.bf16.gmra.mxu0 %v1072
    %v1108 = vpop.f32.mrf.mxu0
    %v1109 = vadd.f32 %v1058, %v1108
    %v1110 = vpop.f32.mrf.mxu0
    %v1111 = vpop.f32.mrf.mxu0
    %v1112 = vadd.f32 %v1058, %v1111
    %v1113 = vpop.f32.mrf.mxu0
    %1114 = vdwg.mxu0
    %v1115 = vadd.f32 %v55, %v1109
    %v1116 = vadd.f32 %v56, %v1112
    %v1117 = vsel %vm376, %v1115, 0.0
    %1118 = vadd.xlane.f32.xlu0 %v1117
    %v1119 = vpop.xlane.xlu0 %1118
    %v1120 = vsel %vm376, %v1116, 0.0
    %1121 = vadd.xlane.f32.xlu0 %v1120
    %v1122 = vpop.xlane.xlu0 %1121
    %v1123 = vrcp.pop 32.0
    %v1124 = vmul.f32 %v1119, %v1123
    %v1125 = vmul.f32 %v1122, %v1123
    %v1126 = vsub.f32 %v1115, %v1124
    %v1127 = vsub.f32 %v1116, %v1125
    %v1128 = vmul.f32 %v1126, %v1126
    %v1129 = vmul.f32 %v1127, %v1127
    %v1130 = vsel %vm376, %v1128, 0.0
    %1131 = vadd.xlane.f32.xlu0 %v1130
    %v1132 = vpop.xlane.xlu0 %1131
    %v1133 = vsel %vm376, %v1129, 0.0
    %1134 = vadd.xlane.f32.xlu0 %v1133
    %v1135 = vpop.xlane.xlu0 %1134
    %v1136 = vmul.f32 %v1132, %v1123
    %v1137 = vmul.f32 %v1135, %v1123
    %v1138 = vadd.f32 %v1136, 1e-05
    %v1139 = vadd.f32 %v1137, 1e-05
    %v1140 = vrsqrt.pop %v1138
    %v1141 = vrsqrt.pop %v1139
    %v1142 = vmul.f32 %v1126, %v1140
    %v1143 = vmul.f32 %v1127, %v1141
    %v1144 = vlaneseq
    %v1145 = vshrl.u32 %v1144, 7
    %v1146 = vsub.s32 1, %v1145
    %v1147 = vrot.slane %v356, %v1146
    %v1148 = vmul.f32 %v1142, %v1147
    %v1149 = vmul.f32 %v1143, %v1147
    %v1150 = vlaneseq
    %v1151 = vshrl.u32 %v1150, 7
    %v1152 = vsub.s32 2, %v1151
    %v1153 = vrot.slane %v356, %v1152
    %v1154 = vadd.f32 %v1148, %v1153
    %v1155 = vadd.f32 %v1149, %v1153
    %v1156 = vpack.c.bf16 %v1155, %v1154
    %v1159 = vlaneseq
    %v1160 = vshrl.u32 %v1159, 7
    %v1161 = vsub.s32 0, %v1160
    %v1162 = vrot.slane %v98, %v1161
    %v1163 = vlaneseq
    %v1164 = vshrl.u32 %v1163, 7
    %v1165 = vsub.s32 1, %v1164
    %v1166 = vrot.slane %v98, %v1165
    %v1167 = vlaneseq
    %v1168 = vshrl.u32 %v1167, 7
    %v1169 = vsub.s32 2, %v1168
    %v1170 = vrot.slane %v98, %v1169
    %v1171 = vlaneseq
    %v1172 = vshrl.u32 %v1171, 7
    %v1173 = vsub.s32 3, %v1172
    %v1174 = vrot.slane %v98, %v1173
    %v1175 = vlaneseq
    %v1176 = vshrl.u32 %v1175, 7
    %v1177 = vsub.s32 4, %v1176
    %v1178 = vrot.slane %v98, %v1177
    %v1179 = vlaneseq
    %v1180 = vshrl.u32 %v1179, 7
    %v1181 = vsub.s32 5, %v1180
    %v1182 = vrot.slane %v98, %v1181
    %v1183 = vlaneseq
    %v1184 = vshrl.u32 %v1183, 7
    %v1185 = vsub.s32 6, %v1184
    %v1186 = vrot.slane %v98, %v1185
    %v1187 = vlaneseq
    %v1188 = vshrl.u32 %v1187, 7
    %v1189 = vsub.s32 7, %v1188
    %v1190 = vrot.slane %v98, %v1189
    %v1191 = vlaneseq
    %v1192 = vshrl.u32 %v1191, 7
    %v1193 = vsub.s32 0, %v1192
    %v1194 = vrot.slane %v99, %v1193
    %v1195 = vlaneseq
    %v1196 = vshrl.u32 %v1195, 7
    %v1197 = vsub.s32 1, %v1196
    %v1198 = vrot.slane %v99, %v1197
    %v1199 = vlaneseq
    %v1200 = vshrl.u32 %v1199, 7
    %v1201 = vsub.s32 2, %v1200
    %v1202 = vrot.slane %v99, %v1201
    %v1203 = vlaneseq
    %v1204 = vshrl.u32 %v1203, 7
    %v1205 = vsub.s32 3, %v1204
    %v1206 = vrot.slane %v99, %v1205
    %v1207 = vlaneseq
    %v1208 = vshrl.u32 %v1207, 7
    %v1209 = vsub.s32 4, %v1208
    %v1210 = vrot.slane %v99, %v1209
    %v1211 = vlaneseq
    %v1212 = vshrl.u32 %v1211, 7
    %v1213 = vsub.s32 5, %v1212
    %v1214 = vrot.slane %v99, %v1213
    %v1215 = vlaneseq
    %v1216 = vshrl.u32 %v1215, 7
    %v1217 = vsub.s32 6, %v1216
    %v1218 = vrot.slane %v99, %v1217
    %v1219 = vlaneseq
    %v1220 = vshrl.u32 %v1219, 7
    %v1221 = vsub.s32 7, %v1220
    %v1222 = vrot.slane %v99, %v1221
    %v1271 = vunpack.c.l.b16 %v66
    %v1272 = vunpack.c.h.b16 %v66
    %v1273 = vunpack.c.l.b16 %v67
    %v1274 = vunpack.c.h.b16 %v67
    %v1275 = vunpack.c.l.b16 %v68
    %v1276 = vunpack.c.h.b16 %v68
    %v1277 = vunpack.c.l.b16 %v69
    %v1278 = vunpack.c.h.b16 %v69
    %v1279 = vunpack.c.l.b16 %v70
    %v1280 = vunpack.c.h.b16 %v70
    %v1281 = vunpack.c.l.b16 %v71
    %v1282 = vunpack.c.h.b16 %v71
    %v1283 = vunpack.c.l.b16 %v72
    %v1284 = vunpack.c.h.b16 %v72
    %v1285 = vunpack.c.l.b16 %v73
    %v1286 = vunpack.c.h.b16 %v73
    %v1287 = vunpack.c.l.b16 %v74
    %v1288 = vunpack.c.h.b16 %v74
    %v1289 = vunpack.c.l.b16 %v75
    %v1290 = vunpack.c.h.b16 %v75
    %v1291 = vunpack.c.l.b16 %v76
    %v1292 = vunpack.c.h.b16 %v76
    %v1293 = vunpack.c.l.b16 %v77
    %v1294 = vunpack.c.h.b16 %v77
    %v1295 = vunpack.c.l.b16 %v78
    %v1296 = vunpack.c.h.b16 %v78
    %v1297 = vunpack.c.l.b16 %v79
    %v1298 = vunpack.c.h.b16 %v79
    %v1299 = vunpack.c.l.b16 %v80
    %v1300 = vunpack.c.h.b16 %v80
    %v1301 = vunpack.c.l.b16 %v81
    %v1302 = vunpack.c.h.b16 %v81
    %v1303 = vunpack.c.l.b16 %v82
    %v1304 = vunpack.c.h.b16 %v82
    %v1305 = vunpack.c.l.b16 %v83
    %v1306 = vunpack.c.h.b16 %v83
    %v1307 = vunpack.c.l.b16 %v84
    %v1308 = vunpack.c.h.b16 %v84
    %v1309 = vunpack.c.l.b16 %v85
    %v1310 = vunpack.c.h.b16 %v85
    %v1311 = vunpack.c.l.b16 %v86
    %v1312 = vunpack.c.h.b16 %v86
    %v1313 = vunpack.c.l.b16 %v87
    %v1314 = vunpack.c.h.b16 %v87
    %v1315 = vunpack.c.l.b16 %v88
    %v1316 = vunpack.c.h.b16 %v88
    %v1317 = vunpack.c.l.b16 %v89
    %v1318 = vunpack.c.h.b16 %v89
    %v1319 = vunpack.c.l.b16 %v90
    %v1320 = vunpack.c.h.b16 %v90
    %v1321 = vunpack.c.l.b16 %v91
    %v1322 = vunpack.c.h.b16 %v91
    %v1323 = vunpack.c.l.b16 %v92
    %v1324 = vunpack.c.h.b16 %v92
    %v1325 = vunpack.c.l.b16 %v93
    %v1326 = vunpack.c.h.b16 %v93
    %v1327 = vunpack.c.l.b16 %v94
    %v1328 = vunpack.c.h.b16 %v94
    %v1329 = vunpack.c.l.b16 %v95
    %v1330 = vunpack.c.h.b16 %v95
    %v1331 = vunpack.c.l.b16 %v96
    %v1332 = vunpack.c.h.b16 %v96
    %v1333 = vunpack.c.l.b16 %v97
    %v1334 = vunpack.c.h.b16 %v97
    %v1335 = vpack.c.b16 %v1287, %v1271
    %v1336 = vpack.c.b16 %v1288, %v1272
    %v1337 = vpack.c.b16 %v1289, %v1273
    %v1338 = vpack.c.b16 %v1290, %v1274
    %v1339 = vpack.c.b16 %v1291, %v1275
    %v1340 = vpack.c.b16 %v1292, %v1276
    %v1341 = vpack.c.b16 %v1293, %v1277
    %v1342 = vpack.c.b16 %v1294, %v1278
    %v1343 = vpack.c.b16 %v1295, %v1279
    %v1344 = vpack.c.b16 %v1296, %v1280
    %v1345 = vpack.c.b16 %v1297, %v1281
    %v1346 = vpack.c.b16 %v1298, %v1282
    %v1347 = vpack.c.b16 %v1299, %v1283
    %v1348 = vpack.c.b16 %v1300, %v1284
    %v1349 = vpack.c.b16 %v1301, %v1285
    %v1350 = vpack.c.b16 %v1302, %v1286
    %v1351 = vpack.c.b16 %v1319, %v1303
    %v1352 = vpack.c.b16 %v1320, %v1304
    %v1353 = vpack.c.b16 %v1321, %v1305
    %v1354 = vpack.c.b16 %v1322, %v1306
    %v1355 = vpack.c.b16 %v1323, %v1307
    %v1356 = vpack.c.b16 %v1324, %v1308
    %v1357 = vpack.c.b16 %v1325, %v1309
    %v1358 = vpack.c.b16 %v1326, %v1310
    %v1359 = vpack.c.b16 %v1327, %v1311
    %v1360 = vpack.c.b16 %v1328, %v1312
    %v1361 = vpack.c.b16 %v1329, %v1313
    %v1362 = vpack.c.b16 %v1330, %v1314
    %v1363 = vpack.c.b16 %v1331, %v1315
    %v1364 = vpack.c.b16 %v1332, %v1316
    %v1365 = vpack.c.b16 %v1333, %v1317
    %v1366 = vpack.c.b16 %v1334, %v1318
    %v1400 = vsel %vm376, %v1156, 0
    %1402 = vmatprep.subr.bf16.mxu0 0
    %1403 = vmatpush1.bf16.msra.mxu0 0
    %1404 = vmatprep.subr.bf16.mxu0 0
    %1405 = vmatpush1.bf16.msra.mxu0 0
    %1406 = vmatprep.subr.bf16.mxu0 0
    %1407 = vmatpush1.bf16.msra.mxu0 0
    %1408 = vmatprep.subr.bf16.mxu0 0
    %1409 = vmatpush1.bf16.msra.mxu0 0
    %1410 = vmatprep.subr.bf16.mxu0 0
    %1411 = vmatpush1.bf16.msra.mxu0 0
    %1412 = vmatprep.subr.bf16.mxu0 0
    %1413 = vmatpush1.bf16.msra.mxu0 0
    %1414 = vmatprep.subr.bf16.mxu0 %v1352
    %1415 = vmatpush1.bf16.msra.mxu0 %v1351
    %1416 = vmatprep.subr.bf16.mxu0 %v1336
    %1417 = vmatpush1.bf16.msra.mxu0 %v1335
    %1418 = vmatprep.subr.bf16.mxu0 0
    %1419 = vmatpush2.bf16.msra.mxu0 0
    %1420 = vmatprep.subr.bf16.mxu0 0
    %1421 = vmatpush2.bf16.msra.mxu0 0
    %1422 = vmatprep.subr.bf16.mxu0 0
    %1423 = vmatpush2.bf16.msra.mxu0 0
    %1424 = vmatprep.subr.bf16.mxu0 0
    %1425 = vmatpush2.bf16.msra.mxu0 0
    %1426 = vmatprep.subr.bf16.mxu0 0
    %1427 = vmatpush2.bf16.msra.mxu0 0
    %1428 = vmatprep.subr.bf16.mxu0 0
    %1429 = vmatpush2.bf16.msra.mxu0 0
    %1430 = vmatprep.subr.bf16.mxu0 0
    %1431 = vmatpush2.bf16.msra.mxu0 0
    %1432 = vmatprep.subr.bf16.mxu0 0
    %1433 = vmatpush2.bf16.msra.mxu0 0
    %1434 = vmatprep.mubr.bf16.mxu0 0
    %1435 = vmatmul.mubr.bf16.gmra.mxu0 %v1400
    %v1436 = vpop.f32.mrf.mxu0
    %v1437 = vadd.f32 %v1162, %v1436
    %v1438 = vpop.f32.mrf.mxu0
    %v1439 = vadd.f32 %v1166, %v1438
    %v1440 = vpop.f32.mrf.mxu0
    %v1441 = vadd.f32 %v1162, %v1440
    %v1442 = vpop.f32.mrf.mxu0
    %v1443 = vadd.f32 %v1166, %v1442
    %1444 = vdwg.mxu0
    %1445 = vmatprep.subr.bf16.mxu0 0
    %1446 = vmatpush1.bf16.msra.mxu0 0
    %1447 = vmatprep.subr.bf16.mxu0 0
    %1448 = vmatpush1.bf16.msra.mxu0 0
    %1449 = vmatprep.subr.bf16.mxu0 0
    %1450 = vmatpush1.bf16.msra.mxu0 0
    %1451 = vmatprep.subr.bf16.mxu0 0
    %1452 = vmatpush1.bf16.msra.mxu0 0
    %1453 = vmatprep.subr.bf16.mxu0 0
    %1454 = vmatpush1.bf16.msra.mxu0 0
    %1455 = vmatprep.subr.bf16.mxu0 0
    %1456 = vmatpush1.bf16.msra.mxu0 0
    %1457 = vmatprep.subr.bf16.mxu0 %v1354
    %1458 = vmatpush1.bf16.msra.mxu0 %v1353
    %1459 = vmatprep.subr.bf16.mxu0 %v1338
    %1460 = vmatpush1.bf16.msra.mxu0 %v1337
    %1461 = vmatprep.subr.bf16.mxu0 0
    %1462 = vmatpush2.bf16.msra.mxu0 0
    %1463 = vmatprep.subr.bf16.mxu0 0
    %1464 = vmatpush2.bf16.msra.mxu0 0
    %1465 = vmatprep.subr.bf16.mxu0 0
    %1466 = vmatpush2.bf16.msra.mxu0 0
    %1467 = vmatprep.subr.bf16.mxu0 0
    %1468 = vmatpush2.bf16.msra.mxu0 0
    %1469 = vmatprep.subr.bf16.mxu0 0
    %1470 = vmatpush2.bf16.msra.mxu0 0
    %1471 = vmatprep.subr.bf16.mxu0 0
    %1472 = vmatpush2.bf16.msra.mxu0 0
    %1473 = vmatprep.subr.bf16.mxu0 0
    %1474 = vmatpush2.bf16.msra.mxu0 0
    %1475 = vmatprep.subr.bf16.mxu0 0
    %1476 = vmatpush2.bf16.msra.mxu0 0
    %1477 = vmatprep.mubr.bf16.mxu0 0
    %1478 = vmatmul.mubr.bf16.gmra.mxu0 %v1400
    %v1479 = vpop.f32.mrf.mxu0
    %v1480 = vadd.f32 %v1170, %v1479
    %v1481 = vpop.f32.mrf.mxu0
    %v1482 = vadd.f32 %v1174, %v1481
    %v1483 = vpop.f32.mrf.mxu0
    %v1484 = vadd.f32 %v1170, %v1483
    %v1485 = vpop.f32.mrf.mxu0
    %v1486 = vadd.f32 %v1174, %v1485
    %1487 = vdwg.mxu0
    %1488 = vmatprep.subr.bf16.mxu0 0
    %1489 = vmatpush1.bf16.msra.mxu0 0
    %1490 = vmatprep.subr.bf16.mxu0 0
    %1491 = vmatpush1.bf16.msra.mxu0 0
    %1492 = vmatprep.subr.bf16.mxu0 0
    %1493 = vmatpush1.bf16.msra.mxu0 0
    %1494 = vmatprep.subr.bf16.mxu0 0
    %1495 = vmatpush1.bf16.msra.mxu0 0
    %1496 = vmatprep.subr.bf16.mxu0 0
    %1497 = vmatpush1.bf16.msra.mxu0 0
    %1498 = vmatprep.subr.bf16.mxu0 0
    %1499 = vmatpush1.bf16.msra.mxu0 0
    %1500 = vmatprep.subr.bf16.mxu0 %v1356
    %1501 = vmatpush1.bf16.msra.mxu0 %v1355
    %1502 = vmatprep.subr.bf16.mxu0 %v1340
    %1503 = vmatpush1.bf16.msra.mxu0 %v1339
    %1504 = vmatprep.subr.bf16.mxu0 0
    %1505 = vmatpush2.bf16.msra.mxu0 0
    %1506 = vmatprep.subr.bf16.mxu0 0
    %1507 = vmatpush2.bf16.msra.mxu0 0
    %1508 = vmatprep.subr.bf16.mxu0 0
    %1509 = vmatpush2.bf16.msra.mxu0 0
    %1510 = vmatprep.subr.bf16.mxu0 0
    %1511 = vmatpush2.bf16.msra.mxu0 0
    %1512 = vmatprep.subr.bf16.mxu0 0
    %1513 = vmatpush2.bf16.msra.mxu0 0
    %1514 = vmatprep.subr.bf16.mxu0 0
    %1515 = vmatpush2.bf16.msra.mxu0 0
    %1516 = vmatprep.subr.bf16.mxu0 0
    %1517 = vmatpush2.bf16.msra.mxu0 0
    %1518 = vmatprep.subr.bf16.mxu0 0
    %1519 = vmatpush2.bf16.msra.mxu0 0
    %1520 = vmatprep.mubr.bf16.mxu0 0
    %1521 = vmatmul.mubr.bf16.gmra.mxu0 %v1400
    %v1522 = vpop.f32.mrf.mxu0
    %v1523 = vadd.f32 %v1178, %v1522
    %v1524 = vpop.f32.mrf.mxu0
    %v1525 = vadd.f32 %v1182, %v1524
    %v1526 = vpop.f32.mrf.mxu0
    %v1527 = vadd.f32 %v1178, %v1526
    %v1528 = vpop.f32.mrf.mxu0
    %v1529 = vadd.f32 %v1182, %v1528
    %1530 = vdwg.mxu0
    %1531 = vmatprep.subr.bf16.mxu0 0
    %1532 = vmatpush1.bf16.msra.mxu0 0
    %1533 = vmatprep.subr.bf16.mxu0 0
    %1534 = vmatpush1.bf16.msra.mxu0 0
    %1535 = vmatprep.subr.bf16.mxu0 0
    %1536 = vmatpush1.bf16.msra.mxu0 0
    %1537 = vmatprep.subr.bf16.mxu0 0
    %1538 = vmatpush1.bf16.msra.mxu0 0
    %1539 = vmatprep.subr.bf16.mxu0 0
    %1540 = vmatpush1.bf16.msra.mxu0 0
    %1541 = vmatprep.subr.bf16.mxu0 0
    %1542 = vmatpush1.bf16.msra.mxu0 0
    %1543 = vmatprep.subr.bf16.mxu0 %v1358
    %1544 = vmatpush1.bf16.msra.mxu0 %v1357
    %1545 = vmatprep.subr.bf16.mxu0 %v1342
    %1546 = vmatpush1.bf16.msra.mxu0 %v1341
    %1547 = vmatprep.subr.bf16.mxu0 0
    %1548 = vmatpush2.bf16.msra.mxu0 0
    %1549 = vmatprep.subr.bf16.mxu0 0
    %1550 = vmatpush2.bf16.msra.mxu0 0
    %1551 = vmatprep.subr.bf16.mxu0 0
    %1552 = vmatpush2.bf16.msra.mxu0 0
    %1553 = vmatprep.subr.bf16.mxu0 0
    %1554 = vmatpush2.bf16.msra.mxu0 0
    %1555 = vmatprep.subr.bf16.mxu0 0
    %1556 = vmatpush2.bf16.msra.mxu0 0
    %1557 = vmatprep.subr.bf16.mxu0 0
    %1558 = vmatpush2.bf16.msra.mxu0 0
    %1559 = vmatprep.subr.bf16.mxu0 0
    %1560 = vmatpush2.bf16.msra.mxu0 0
    %1561 = vmatprep.subr.bf16.mxu0 0
    %1562 = vmatpush2.bf16.msra.mxu0 0
    %1563 = vmatprep.mubr.bf16.mxu0 0
    %1564 = vmatmul.mubr.bf16.gmra.mxu0 %v1400
    %v1565 = vpop.f32.mrf.mxu0
    %v1566 = vadd.f32 %v1186, %v1565
    %v1567 = vpop.f32.mrf.mxu0
    %v1568 = vadd.f32 %v1190, %v1567
    %v1569 = vpop.f32.mrf.mxu0
    %v1570 = vadd.f32 %v1186, %v1569
    %v1571 = vpop.f32.mrf.mxu0
    %v1572 = vadd.f32 %v1190, %v1571
    %1573 = vdwg.mxu0
    %1574 = vmatprep.subr.bf16.mxu0 0
    %1575 = vmatpush1.bf16.msra.mxu0 0
    %1576 = vmatprep.subr.bf16.mxu0 0
    %1577 = vmatpush1.bf16.msra.mxu0 0
    %1578 = vmatprep.subr.bf16.mxu0 0
    %1579 = vmatpush1.bf16.msra.mxu0 0
    %1580 = vmatprep.subr.bf16.mxu0 0
    %1581 = vmatpush1.bf16.msra.mxu0 0
    %1582 = vmatprep.subr.bf16.mxu0 0
    %1583 = vmatpush1.bf16.msra.mxu0 0
    %1584 = vmatprep.subr.bf16.mxu0 0
    %1585 = vmatpush1.bf16.msra.mxu0 0
    %1586 = vmatprep.subr.bf16.mxu0 %v1360
    %1587 = vmatpush1.bf16.msra.mxu0 %v1359
    %1588 = vmatprep.subr.bf16.mxu0 %v1344
    %1589 = vmatpush1.bf16.msra.mxu0 %v1343
    %1590 = vmatprep.subr.bf16.mxu0 0
    %1591 = vmatpush2.bf16.msra.mxu0 0
    %1592 = vmatprep.subr.bf16.mxu0 0
    %1593 = vmatpush2.bf16.msra.mxu0 0
    %1594 = vmatprep.subr.bf16.mxu0 0
    %1595 = vmatpush2.bf16.msra.mxu0 0
    %1596 = vmatprep.subr.bf16.mxu0 0
    %1597 = vmatpush2.bf16.msra.mxu0 0
    %1598 = vmatprep.subr.bf16.mxu0 0
    %1599 = vmatpush2.bf16.msra.mxu0 0
    %1600 = vmatprep.subr.bf16.mxu0 0
    %1601 = vmatpush2.bf16.msra.mxu0 0
    %1602 = vmatprep.subr.bf16.mxu0 0
    %1603 = vmatpush2.bf16.msra.mxu0 0
    %1604 = vmatprep.subr.bf16.mxu0 0
    %1605 = vmatpush2.bf16.msra.mxu0 0
    %1606 = vmatprep.mubr.bf16.mxu0 0
    %1607 = vmatmul.mubr.bf16.gmra.mxu0 %v1400
    %v1608 = vpop.f32.mrf.mxu0
    %v1609 = vadd.f32 %v1194, %v1608
    %v1610 = vpop.f32.mrf.mxu0
    %v1611 = vadd.f32 %v1198, %v1610
    %v1612 = vpop.f32.mrf.mxu0
    %v1613 = vadd.f32 %v1194, %v1612
    %v1614 = vpop.f32.mrf.mxu0
    %v1615 = vadd.f32 %v1198, %v1614
    %1616 = vdwg.mxu0
    %1617 = vmatprep.subr.bf16.mxu0 0
    %1618 = vmatpush1.bf16.msra.mxu0 0
    %1619 = vmatprep.subr.bf16.mxu0 0
    %1620 = vmatpush1.bf16.msra.mxu0 0
    %1621 = vmatprep.subr.bf16.mxu0 0
    %1622 = vmatpush1.bf16.msra.mxu0 0
    %1623 = vmatprep.subr.bf16.mxu0 0
    %1624 = vmatpush1.bf16.msra.mxu0 0
    %1625 = vmatprep.subr.bf16.mxu0 0
    %1626 = vmatpush1.bf16.msra.mxu0 0
    %1627 = vmatprep.subr.bf16.mxu0 0
    %1628 = vmatpush1.bf16.msra.mxu0 0
    %1629 = vmatprep.subr.bf16.mxu0 %v1362
    %1630 = vmatpush1.bf16.msra.mxu0 %v1361
    %1631 = vmatprep.subr.bf16.mxu0 %v1346
    %1632 = vmatpush1.bf16.msra.mxu0 %v1345
    %1633 = vmatprep.subr.bf16.mxu0 0
    %1634 = vmatpush2.bf16.msra.mxu0 0
    %1635 = vmatprep.subr.bf16.mxu0 0
    %1636 = vmatpush2.bf16.msra.mxu0 0
    %1637 = vmatprep.subr.bf16.mxu0 0
    %1638 = vmatpush2.bf16.msra.mxu0 0
    %1639 = vmatprep.subr.bf16.mxu0 0
    %1640 = vmatpush2.bf16.msra.mxu0 0
    %1641 = vmatprep.subr.bf16.mxu0 0
    %1642 = vmatpush2.bf16.msra.mxu0 0
    %1643 = vmatprep.subr.bf16.mxu0 0
    %1644 = vmatpush2.bf16.msra.mxu0 0
    %1645 = vmatprep.subr.bf16.mxu0 0
    %1646 = vmatpush2.bf16.msra.mxu0 0
    %1647 = vmatprep.subr.bf16.mxu0 0
    %1648 = vmatpush2.bf16.msra.mxu0 0
    %1649 = vmatprep.mubr.bf16.mxu0 0
    %1650 = vmatmul.mubr.bf16.gmra.mxu0 %v1400
    %v1651 = vpop.f32.mrf.mxu0
    %v1652 = vadd.f32 %v1202, %v1651
    %v1653 = vpop.f32.mrf.mxu0
    %v1654 = vadd.f32 %v1206, %v1653
    %v1655 = vpop.f32.mrf.mxu0
    %v1656 = vadd.f32 %v1202, %v1655
    %v1657 = vpop.f32.mrf.mxu0
    %v1658 = vadd.f32 %v1206, %v1657
    %1659 = vdwg.mxu0
    %1660 = vmatprep.subr.bf16.mxu0 0
    %1661 = vmatpush1.bf16.msra.mxu0 0
    %1662 = vmatprep.subr.bf16.mxu0 0
    %1663 = vmatpush1.bf16.msra.mxu0 0
    %1664 = vmatprep.subr.bf16.mxu0 0
    %1665 = vmatpush1.bf16.msra.mxu0 0
    %1666 = vmatprep.subr.bf16.mxu0 0
    %1667 = vmatpush1.bf16.msra.mxu0 0
    %1668 = vmatprep.subr.bf16.mxu0 0
    %1669 = vmatpush1.bf16.msra.mxu0 0
    %1670 = vmatprep.subr.bf16.mxu0 0
    %1671 = vmatpush1.bf16.msra.mxu0 0
    %1672 = vmatprep.subr.bf16.mxu0 %v1364
    %1673 = vmatpush1.bf16.msra.mxu0 %v1363
    %1674 = vmatprep.subr.bf16.mxu0 %v1348
    %1675 = vmatpush1.bf16.msra.mxu0 %v1347
    %1676 = vmatprep.subr.bf16.mxu0 0
    %1677 = vmatpush2.bf16.msra.mxu0 0
    %1678 = vmatprep.subr.bf16.mxu0 0
    %1679 = vmatpush2.bf16.msra.mxu0 0
    %1680 = vmatprep.subr.bf16.mxu0 0
    %1681 = vmatpush2.bf16.msra.mxu0 0
    %1682 = vmatprep.subr.bf16.mxu0 0
    %1683 = vmatpush2.bf16.msra.mxu0 0
    %1684 = vmatprep.subr.bf16.mxu0 0
    %1685 = vmatpush2.bf16.msra.mxu0 0
    %1686 = vmatprep.subr.bf16.mxu0 0
    %1687 = vmatpush2.bf16.msra.mxu0 0
    %1688 = vmatprep.subr.bf16.mxu0 0
    %1689 = vmatpush2.bf16.msra.mxu0 0
    %1690 = vmatprep.subr.bf16.mxu0 0
    %1691 = vmatpush2.bf16.msra.mxu0 0
    %1692 = vmatprep.mubr.bf16.mxu0 0
    %1693 = vmatmul.mubr.bf16.gmra.mxu0 %v1400
    %v1694 = vpop.f32.mrf.mxu0
    %v1695 = vadd.f32 %v1210, %v1694
    %v1696 = vpop.f32.mrf.mxu0
    %v1697 = vadd.f32 %v1214, %v1696
    %v1698 = vpop.f32.mrf.mxu0
    %v1699 = vadd.f32 %v1210, %v1698
    %v1700 = vpop.f32.mrf.mxu0
    %v1701 = vadd.f32 %v1214, %v1700
    %1702 = vdwg.mxu0
    %1703 = vmatprep.subr.bf16.mxu0 0
    %1704 = vmatpush1.bf16.msra.mxu0 0
    %1705 = vmatprep.subr.bf16.mxu0 0
    %1706 = vmatpush1.bf16.msra.mxu0 0
    %1707 = vmatprep.subr.bf16.mxu0 0
    %1708 = vmatpush1.bf16.msra.mxu0 0
    %1709 = vmatprep.subr.bf16.mxu0 0
    %1710 = vmatpush1.bf16.msra.mxu0 0
    %1711 = vmatprep.subr.bf16.mxu0 0
    %1712 = vmatpush1.bf16.msra.mxu0 0
    %1713 = vmatprep.subr.bf16.mxu0 0
    %1714 = vmatpush1.bf16.msra.mxu0 0
    %1715 = vmatprep.subr.bf16.mxu0 %v1366
    %1716 = vmatpush1.bf16.msra.mxu0 %v1365
    %1717 = vmatprep.subr.bf16.mxu0 %v1350
    %1718 = vmatpush1.bf16.msra.mxu0 %v1349
    %1719 = vmatprep.subr.bf16.mxu0 0
    %1720 = vmatpush2.bf16.msra.mxu0 0
    %1721 = vmatprep.subr.bf16.mxu0 0
    %1722 = vmatpush2.bf16.msra.mxu0 0
    %1723 = vmatprep.subr.bf16.mxu0 0
    %1724 = vmatpush2.bf16.msra.mxu0 0
    %1725 = vmatprep.subr.bf16.mxu0 0
    %1726 = vmatpush2.bf16.msra.mxu0 0
    %1727 = vmatprep.subr.bf16.mxu0 0
    %1728 = vmatpush2.bf16.msra.mxu0 0
    %1729 = vmatprep.subr.bf16.mxu0 0
    %1730 = vmatpush2.bf16.msra.mxu0 0
    %1731 = vmatprep.subr.bf16.mxu0 0
    %1732 = vmatpush2.bf16.msra.mxu0 0
    %1733 = vmatprep.subr.bf16.mxu0 0
    %1734 = vmatpush2.bf16.msra.mxu0 0
    %1735 = vmatprep.mubr.bf16.mxu0 0
    %1736 = vmatmul.mubr.bf16.gmra.mxu0 %v1400
    %v1737 = vpop.f32.mrf.mxu0
    %v1738 = vadd.f32 %v1218, %v1737
    %v1739 = vpop.f32.mrf.mxu0
    %v1740 = vadd.f32 %v1222, %v1739
    %v1741 = vpop.f32.mrf.mxu0
    %v1742 = vadd.f32 %v1218, %v1741
    %v1743 = vpop.f32.mrf.mxu0
    %v1744 = vadd.f32 %v1222, %v1743
    %1745 = vdwg.mxu0
    %v1746 = vmax.f32 %v1437, 0.0
    %v1747 = vmax.f32 %v1439, 0.0
    %v1748 = vmax.f32 %v1480, 0.0
    %v1749 = vmax.f32 %v1482, 0.0
    %v1750 = vmax.f32 %v1523, 0.0
    %v1751 = vmax.f32 %v1525, 0.0
    %v1752 = vmax.f32 %v1566, 0.0
    %v1753 = vmax.f32 %v1568, 0.0
    %v1754 = vmax.f32 %v1609, 0.0
    %v1755 = vmax.f32 %v1611, 0.0
    %v1756 = vmax.f32 %v1652, 0.0
    %v1757 = vmax.f32 %v1654, 0.0
    %v1758 = vmax.f32 %v1695, 0.0
    %v1759 = vmax.f32 %v1697, 0.0
    %v1760 = vmax.f32 %v1738, 0.0
    %v1761 = vmax.f32 %v1740, 0.0
    %v1762 = vmax.f32 %v1441, 0.0
    %v1763 = vmax.f32 %v1443, 0.0
    %v1764 = vmax.f32 %v1484, 0.0
    %v1765 = vmax.f32 %v1486, 0.0
    %v1766 = vmax.f32 %v1527, 0.0
    %v1767 = vmax.f32 %v1529, 0.0
    %v1768 = vmax.f32 %v1570, 0.0
    %v1769 = vmax.f32 %v1572, 0.0
    %v1770 = vmax.f32 %v1613, 0.0
    %v1771 = vmax.f32 %v1615, 0.0
    %v1772 = vmax.f32 %v1656, 0.0
    %v1773 = vmax.f32 %v1658, 0.0
    %v1774 = vmax.f32 %v1699, 0.0
    %v1775 = vmax.f32 %v1701, 0.0
    %v1776 = vmax.f32 %v1742, 0.0
    %v1777 = vmax.f32 %v1744, 0.0
    %v1778 = vpack.c.bf16 %v1762, %v1746
    %v1779 = vpack.c.bf16 %v1763, %v1747
    %v1780 = vpack.c.bf16 %v1764, %v1748
    %v1781 = vpack.c.bf16 %v1765, %v1749
    %v1782 = vpack.c.bf16 %v1766, %v1750
    %v1783 = vpack.c.bf16 %v1767, %v1751
    %v1784 = vpack.c.bf16 %v1768, %v1752
    %v1785 = vpack.c.bf16 %v1769, %v1753
    %v1786 = vpack.c.bf16 %v1770, %v1754
    %v1787 = vpack.c.bf16 %v1771, %v1755
    %v1788 = vpack.c.bf16 %v1772, %v1756
    %v1789 = vpack.c.bf16 %v1773, %v1757
    %v1790 = vpack.c.bf16 %v1774, %v1758
    %v1791 = vpack.c.bf16 %v1775, %v1759
    %v1792 = vpack.c.bf16 %v1776, %v1760
    %v1793 = vpack.c.bf16 %v1777, %v1761
    %v1794 = vlaneseq
    %v1795 = vshrl.u32 %v1794, 7
    %v1796 = vsub.s32 3, %v1795
    %v1797 = vrot.slane %v356, %v1796
    %v2054 = vunpack.c.l.b16 %v100
    %v2055 = vunpack.c.l.b16 %v101
    %v2056 = vunpack.c.l.b16 %v102
    %v2057 = vunpack.c.l.b16 %v103
    %v2058 = vunpack.c.l.b16 %v104
    %v2059 = vunpack.c.l.b16 %v105
    %v2060 = vunpack.c.l.b16 %v106
    %v2061 = vunpack.c.l.b16 %v107
    %v2062 = vunpack.c.l.b16 %v108
    %v2063 = vunpack.c.l.b16 %v109
    %v2064 = vunpack.c.l.b16 %v110
    %v2065 = vunpack.c.l.b16 %v111
    %v2066 = vunpack.c.l.b16 %v112
    %v2067 = vunpack.c.l.b16 %v113
    %v2068 = vunpack.c.l.b16 %v114
    %v2069 = vunpack.c.l.b16 %v115
    %v2070 = vunpack.c.l.b16 %v116
    %v2071 = vunpack.c.l.b16 %v117
    %v2072 = vunpack.c.l.b16 %v118
    %v2073 = vunpack.c.l.b16 %v119
    %v2074 = vunpack.c.l.b16 %v120
    %v2075 = vunpack.c.l.b16 %v121
    %v2076 = vunpack.c.l.b16 %v122
    %v2077 = vunpack.c.l.b16 %v123
    %v2078 = vunpack.c.l.b16 %v124
    %v2079 = vunpack.c.l.b16 %v125
    %v2080 = vunpack.c.l.b16 %v126
    %v2081 = vunpack.c.l.b16 %v127
    %v2082 = vunpack.c.l.b16 %v128
    %v2083 = vunpack.c.l.b16 %v129
    %v2084 = vunpack.c.l.b16 %v130
    %v2085 = vunpack.c.l.b16 %v131
    %v2086 = vunpack.c.l.b16 %v132
    %v2087 = vunpack.c.l.b16 %v133
    %v2088 = vunpack.c.l.b16 %v134
    %v2089 = vunpack.c.l.b16 %v135
    %v2090 = vunpack.c.l.b16 %v136
    %v2091 = vunpack.c.l.b16 %v137
    %v2092 = vunpack.c.l.b16 %v138
    %v2093 = vunpack.c.l.b16 %v139
    %v2094 = vunpack.c.l.b16 %v140
    %v2095 = vunpack.c.l.b16 %v141
    %v2096 = vunpack.c.l.b16 %v142
    %v2097 = vunpack.c.l.b16 %v143
    %v2098 = vunpack.c.l.b16 %v144
    %v2099 = vunpack.c.l.b16 %v145
    %v2100 = vunpack.c.l.b16 %v146
    %v2101 = vunpack.c.l.b16 %v147
    %v2102 = vunpack.c.l.b16 %v148
    %v2103 = vunpack.c.l.b16 %v149
    %v2104 = vunpack.c.l.b16 %v150
    %v2105 = vunpack.c.l.b16 %v151
    %v2106 = vunpack.c.l.b16 %v152
    %v2107 = vunpack.c.l.b16 %v153
    %v2108 = vunpack.c.l.b16 %v154
    %v2109 = vunpack.c.l.b16 %v155
    %v2110 = vunpack.c.l.b16 %v156
    %v2111 = vunpack.c.l.b16 %v157
    %v2112 = vunpack.c.l.b16 %v158
    %v2113 = vunpack.c.l.b16 %v159
    %v2114 = vunpack.c.l.b16 %v160
    %v2115 = vunpack.c.l.b16 %v161
    %v2116 = vunpack.c.l.b16 %v162
    %v2117 = vunpack.c.l.b16 %v163
    %v2118 = vunpack.c.l.b16 %v164
    %v2119 = vunpack.c.l.b16 %v165
    %v2120 = vunpack.c.l.b16 %v166
    %v2121 = vunpack.c.l.b16 %v167
    %v2122 = vunpack.c.l.b16 %v168
    %v2123 = vunpack.c.l.b16 %v169
    %v2124 = vunpack.c.l.b16 %v170
    %v2125 = vunpack.c.l.b16 %v171
    %v2126 = vunpack.c.l.b16 %v172
    %v2127 = vunpack.c.l.b16 %v173
    %v2128 = vunpack.c.l.b16 %v174
    %v2129 = vunpack.c.l.b16 %v175
    %v2130 = vunpack.c.l.b16 %v176
    %v2131 = vunpack.c.l.b16 %v177
    %v2132 = vunpack.c.l.b16 %v178
    %v2133 = vunpack.c.l.b16 %v179
    %v2134 = vunpack.c.l.b16 %v180
    %v2135 = vunpack.c.l.b16 %v181
    %v2136 = vunpack.c.l.b16 %v182
    %v2137 = vunpack.c.l.b16 %v183
    %v2138 = vunpack.c.l.b16 %v184
    %v2139 = vunpack.c.l.b16 %v185
    %v2140 = vunpack.c.l.b16 %v186
    %v2141 = vunpack.c.l.b16 %v187
    %v2142 = vunpack.c.l.b16 %v188
    %v2143 = vunpack.c.l.b16 %v189
    %v2144 = vunpack.c.l.b16 %v190
    %v2145 = vunpack.c.l.b16 %v191
    %v2146 = vunpack.c.l.b16 %v192
    %v2147 = vunpack.c.l.b16 %v193
    %v2148 = vunpack.c.l.b16 %v194
    %v2149 = vunpack.c.l.b16 %v195
    %v2150 = vunpack.c.l.b16 %v196
    %v2151 = vunpack.c.l.b16 %v197
    %v2152 = vunpack.c.l.b16 %v198
    %v2153 = vunpack.c.l.b16 %v199
    %v2154 = vunpack.c.l.b16 %v200
    %v2155 = vunpack.c.l.b16 %v201
    %v2156 = vunpack.c.l.b16 %v202
    %v2157 = vunpack.c.l.b16 %v203
    %v2158 = vunpack.c.l.b16 %v204
    %v2159 = vunpack.c.l.b16 %v205
    %v2160 = vunpack.c.l.b16 %v206
    %v2161 = vunpack.c.l.b16 %v207
    %v2162 = vunpack.c.l.b16 %v208
    %v2163 = vunpack.c.l.b16 %v209
    %v2164 = vunpack.c.l.b16 %v210
    %v2165 = vunpack.c.l.b16 %v211
    %v2166 = vunpack.c.l.b16 %v212
    %v2167 = vunpack.c.l.b16 %v213
    %v2168 = vunpack.c.l.b16 %v214
    %v2169 = vunpack.c.l.b16 %v215
    %v2170 = vunpack.c.l.b16 %v216
    %v2171 = vunpack.c.l.b16 %v217
    %v2172 = vunpack.c.l.b16 %v218
    %v2173 = vunpack.c.l.b16 %v219
    %v2174 = vunpack.c.l.b16 %v220
    %v2175 = vunpack.c.l.b16 %v221
    %v2176 = vunpack.c.l.b16 %v222
    %v2177 = vunpack.c.l.b16 %v223
    %v2178 = vunpack.c.l.b16 %v224
    %v2179 = vunpack.c.l.b16 %v225
    %v2180 = vunpack.c.l.b16 %v226
    %v2181 = vunpack.c.l.b16 %v227
    %v2182 = vunpack.c.l.b16 %v228
    %v2183 = vunpack.c.l.b16 %v229
    %v2184 = vunpack.c.l.b16 %v230
    %v2185 = vunpack.c.l.b16 %v231
    %v2186 = vunpack.c.l.b16 %v232
    %v2187 = vunpack.c.l.b16 %v233
    %v2188 = vunpack.c.l.b16 %v234
    %v2189 = vunpack.c.l.b16 %v235
    %v2190 = vunpack.c.l.b16 %v236
    %v2191 = vunpack.c.l.b16 %v237
    %v2192 = vunpack.c.l.b16 %v238
    %v2193 = vunpack.c.l.b16 %v239
    %v2194 = vunpack.c.l.b16 %v240
    %v2195 = vunpack.c.l.b16 %v241
    %v2196 = vunpack.c.l.b16 %v242
    %v2197 = vunpack.c.l.b16 %v243
    %v2198 = vunpack.c.l.b16 %v244
    %v2199 = vunpack.c.l.b16 %v245
    %v2200 = vunpack.c.l.b16 %v246
    %v2201 = vunpack.c.l.b16 %v247
    %v2202 = vunpack.c.l.b16 %v248
    %v2203 = vunpack.c.l.b16 %v249
    %v2204 = vunpack.c.l.b16 %v250
    %v2205 = vunpack.c.l.b16 %v251
    %v2206 = vunpack.c.l.b16 %v252
    %v2207 = vunpack.c.l.b16 %v253
    %v2208 = vunpack.c.l.b16 %v254
    %v2209 = vunpack.c.l.b16 %v255
    %v2210 = vunpack.c.l.b16 %v256
    %v2211 = vunpack.c.l.b16 %v257
    %v2212 = vunpack.c.l.b16 %v258
    %v2213 = vunpack.c.l.b16 %v259
    %v2214 = vunpack.c.l.b16 %v260
    %v2215 = vunpack.c.l.b16 %v261
    %v2216 = vunpack.c.l.b16 %v262
    %v2217 = vunpack.c.l.b16 %v263
    %v2218 = vunpack.c.l.b16 %v264
    %v2219 = vunpack.c.l.b16 %v265
    %v2220 = vunpack.c.l.b16 %v266
    %v2221 = vunpack.c.l.b16 %v267
    %v2222 = vunpack.c.l.b16 %v268
    %v2223 = vunpack.c.l.b16 %v269
    %v2224 = vunpack.c.l.b16 %v270
    %v2225 = vunpack.c.l.b16 %v271
    %v2226 = vunpack.c.l.b16 %v272
    %v2227 = vunpack.c.l.b16 %v273
    %v2228 = vunpack.c.l.b16 %v274
    %v2229 = vunpack.c.l.b16 %v275
    %v2230 = vunpack.c.l.b16 %v276
    %v2231 = vunpack.c.l.b16 %v277
    %v2232 = vunpack.c.l.b16 %v278
    %v2233 = vunpack.c.l.b16 %v279
    %v2234 = vunpack.c.l.b16 %v280
    %v2235 = vunpack.c.l.b16 %v281
    %v2236 = vunpack.c.l.b16 %v282
    %v2237 = vunpack.c.l.b16 %v283
    %v2238 = vunpack.c.l.b16 %v284
    %v2239 = vunpack.c.l.b16 %v285
    %v2240 = vunpack.c.l.b16 %v286
    %v2241 = vunpack.c.l.b16 %v287
    %v2242 = vunpack.c.l.b16 %v288
    %v2243 = vunpack.c.l.b16 %v289
    %v2244 = vunpack.c.l.b16 %v290
    %v2245 = vunpack.c.l.b16 %v291
    %v2246 = vunpack.c.l.b16 %v292
    %v2247 = vunpack.c.l.b16 %v293
    %v2248 = vunpack.c.l.b16 %v294
    %v2249 = vunpack.c.l.b16 %v295
    %v2250 = vunpack.c.l.b16 %v296
    %v2251 = vunpack.c.l.b16 %v297
    %v2252 = vunpack.c.l.b16 %v298
    %v2253 = vunpack.c.l.b16 %v299
    %v2254 = vunpack.c.l.b16 %v300
    %v2255 = vunpack.c.l.b16 %v301
    %v2256 = vunpack.c.l.b16 %v302
    %v2257 = vunpack.c.l.b16 %v303
    %v2258 = vunpack.c.l.b16 %v304
    %v2259 = vunpack.c.l.b16 %v305
    %v2260 = vunpack.c.l.b16 %v306
    %v2261 = vunpack.c.l.b16 %v307
    %v2262 = vunpack.c.l.b16 %v308
    %v2263 = vunpack.c.l.b16 %v309
    %v2264 = vunpack.c.l.b16 %v310
    %v2265 = vunpack.c.l.b16 %v311
    %v2266 = vunpack.c.l.b16 %v312
    %v2267 = vunpack.c.l.b16 %v313
    %v2268 = vunpack.c.l.b16 %v314
    %v2269 = vunpack.c.l.b16 %v315
    %v2270 = vunpack.c.l.b16 %v316
    %v2271 = vunpack.c.l.b16 %v317
    %v2272 = vunpack.c.l.b16 %v318
    %v2273 = vunpack.c.l.b16 %v319
    %v2274 = vunpack.c.l.b16 %v320
    %v2275 = vunpack.c.l.b16 %v321
    %v2276 = vunpack.c.l.b16 %v322
    %v2277 = vunpack.c.l.b16 %v323
    %v2278 = vunpack.c.l.b16 %v324
    %v2279 = vunpack.c.l.b16 %v325
    %v2280 = vunpack.c.l.b16 %v326
    %v2281 = vunpack.c.l.b16 %v327
    %v2282 = vunpack.c.l.b16 %v328
    %v2283 = vunpack.c.l.b16 %v329
    %v2284 = vunpack.c.l.b16 %v330
    %v2285 = vunpack.c.l.b16 %v331
    %v2286 = vunpack.c.l.b16 %v332
    %v2287 = vunpack.c.l.b16 %v333
    %v2288 = vunpack.c.l.b16 %v334
    %v2289 = vunpack.c.l.b16 %v335
    %v2290 = vunpack.c.l.b16 %v336
    %v2291 = vunpack.c.l.b16 %v337
    %v2292 = vunpack.c.l.b16 %v338
    %v2293 = vunpack.c.l.b16 %v339
    %v2294 = vunpack.c.l.b16 %v340
    %v2295 = vunpack.c.l.b16 %v341
    %v2296 = vunpack.c.l.b16 %v342
    %v2297 = vunpack.c.l.b16 %v343
    %v2298 = vunpack.c.l.b16 %v344
    %v2299 = vunpack.c.l.b16 %v345
    %v2300 = vunpack.c.l.b16 %v346
    %v2301 = vunpack.c.l.b16 %v347
    %v2302 = vunpack.c.l.b16 %v348
    %v2303 = vunpack.c.l.b16 %v349
    %v2304 = vunpack.c.l.b16 %v350
    %v2305 = vunpack.c.l.b16 %v351
    %v2306 = vunpack.c.l.b16 %v352
    %v2307 = vunpack.c.l.b16 %v353
    %v2308 = vunpack.c.l.b16 %v354
    %v2309 = vunpack.c.l.b16 %v355
    %v2310 = vpack.c.b16 %v2055, %v2054
    %v2311 = vpack.c.b16 %v2057, %v2056
    %v2312 = vpack.c.b16 %v2059, %v2058
    %v2313 = vpack.c.b16 %v2061, %v2060
    %v2314 = vpack.c.b16 %v2063, %v2062
    %v2315 = vpack.c.b16 %v2065, %v2064
    %v2316 = vpack.c.b16 %v2067, %v2066
    %v2317 = vpack.c.b16 %v2069, %v2068
    %v2318 = vpack.c.b16 %v2071, %v2070
    %v2319 = vpack.c.b16 %v2073, %v2072
    %v2320 = vpack.c.b16 %v2075, %v2074
    %v2321 = vpack.c.b16 %v2077, %v2076
    %v2322 = vpack.c.b16 %v2079, %v2078
    %v2323 = vpack.c.b16 %v2081, %v2080
    %v2324 = vpack.c.b16 %v2083, %v2082
    %v2325 = vpack.c.b16 %v2085, %v2084
    %v2326 = vpack.c.b16 %v2087, %v2086
    %v2327 = vpack.c.b16 %v2089, %v2088
    %v2328 = vpack.c.b16 %v2091, %v2090
    %v2329 = vpack.c.b16 %v2093, %v2092
    %v2330 = vpack.c.b16 %v2095, %v2094
    %v2331 = vpack.c.b16 %v2097, %v2096
    %v2332 = vpack.c.b16 %v2099, %v2098
    %v2333 = vpack.c.b16 %v2101, %v2100
    %v2334 = vpack.c.b16 %v2103, %v2102
    %v2335 = vpack.c.b16 %v2105, %v2104
    %v2336 = vpack.c.b16 %v2107, %v2106
    %v2337 = vpack.c.b16 %v2109, %v2108
    %v2338 = vpack.c.b16 %v2111, %v2110
    %v2339 = vpack.c.b16 %v2113, %v2112
    %v2340 = vpack.c.b16 %v2115, %v2114
    %v2341 = vpack.c.b16 %v2117, %v2116
    %v2342 = vpack.c.b16 %v2119, %v2118
    %v2343 = vpack.c.b16 %v2121, %v2120
    %v2344 = vpack.c.b16 %v2123, %v2122
    %v2345 = vpack.c.b16 %v2125, %v2124
    %v2346 = vpack.c.b16 %v2127, %v2126
    %v2347 = vpack.c.b16 %v2129, %v2128
    %v2348 = vpack.c.b16 %v2131, %v2130
    %v2349 = vpack.c.b16 %v2133, %v2132
    %v2350 = vpack.c.b16 %v2135, %v2134
    %v2351 = vpack.c.b16 %v2137, %v2136
    %v2352 = vpack.c.b16 %v2139, %v2138
    %v2353 = vpack.c.b16 %v2141, %v2140
    %v2354 = vpack.c.b16 %v2143, %v2142
    %v2355 = vpack.c.b16 %v2145, %v2144
    %v2356 = vpack.c.b16 %v2147, %v2146
    %v2357 = vpack.c.b16 %v2149, %v2148
    %v2358 = vpack.c.b16 %v2151, %v2150
    %v2359 = vpack.c.b16 %v2153, %v2152
    %v2360 = vpack.c.b16 %v2155, %v2154
    %v2361 = vpack.c.b16 %v2157, %v2156
    %v2362 = vpack.c.b16 %v2159, %v2158
    %v2363 = vpack.c.b16 %v2161, %v2160
    %v2364 = vpack.c.b16 %v2163, %v2162
    %v2365 = vpack.c.b16 %v2165, %v2164
    %v2366 = vpack.c.b16 %v2167, %v2166
    %v2367 = vpack.c.b16 %v2169, %v2168
    %v2368 = vpack.c.b16 %v2171, %v2170
    %v2369 = vpack.c.b16 %v2173, %v2172
    %v2370 = vpack.c.b16 %v2175, %v2174
    %v2371 = vpack.c.b16 %v2177, %v2176
    %v2372 = vpack.c.b16 %v2179, %v2178
    %v2373 = vpack.c.b16 %v2181, %v2180
    %v2374 = vpack.c.b16 %v2183, %v2182
    %v2375 = vpack.c.b16 %v2185, %v2184
    %v2376 = vpack.c.b16 %v2187, %v2186
    %v2377 = vpack.c.b16 %v2189, %v2188
    %v2378 = vpack.c.b16 %v2191, %v2190
    %v2379 = vpack.c.b16 %v2193, %v2192
    %v2380 = vpack.c.b16 %v2195, %v2194
    %v2381 = vpack.c.b16 %v2197, %v2196
    %v2382 = vpack.c.b16 %v2199, %v2198
    %v2383 = vpack.c.b16 %v2201, %v2200
    %v2384 = vpack.c.b16 %v2203, %v2202
    %v2385 = vpack.c.b16 %v2205, %v2204
    %v2386 = vpack.c.b16 %v2207, %v2206
    %v2387 = vpack.c.b16 %v2209, %v2208
    %v2388 = vpack.c.b16 %v2211, %v2210
    %v2389 = vpack.c.b16 %v2213, %v2212
    %v2390 = vpack.c.b16 %v2215, %v2214
    %v2391 = vpack.c.b16 %v2217, %v2216
    %v2392 = vpack.c.b16 %v2219, %v2218
    %v2393 = vpack.c.b16 %v2221, %v2220
    %v2394 = vpack.c.b16 %v2223, %v2222
    %v2395 = vpack.c.b16 %v2225, %v2224
    %v2396 = vpack.c.b16 %v2227, %v2226
    %v2397 = vpack.c.b16 %v2229, %v2228
    %v2398 = vpack.c.b16 %v2231, %v2230
    %v2399 = vpack.c.b16 %v2233, %v2232
    %v2400 = vpack.c.b16 %v2235, %v2234
    %v2401 = vpack.c.b16 %v2237, %v2236
    %v2402 = vpack.c.b16 %v2239, %v2238
    %v2403 = vpack.c.b16 %v2241, %v2240
    %v2404 = vpack.c.b16 %v2243, %v2242
    %v2405 = vpack.c.b16 %v2245, %v2244
    %v2406 = vpack.c.b16 %v2247, %v2246
    %v2407 = vpack.c.b16 %v2249, %v2248
    %v2408 = vpack.c.b16 %v2251, %v2250
    %v2409 = vpack.c.b16 %v2253, %v2252
    %v2410 = vpack.c.b16 %v2255, %v2254
    %v2411 = vpack.c.b16 %v2257, %v2256
    %v2412 = vpack.c.b16 %v2259, %v2258
    %v2413 = vpack.c.b16 %v2261, %v2260
    %v2414 = vpack.c.b16 %v2263, %v2262
    %v2415 = vpack.c.b16 %v2265, %v2264
    %v2416 = vpack.c.b16 %v2267, %v2266
    %v2417 = vpack.c.b16 %v2269, %v2268
    %v2418 = vpack.c.b16 %v2271, %v2270
    %v2419 = vpack.c.b16 %v2273, %v2272
    %v2420 = vpack.c.b16 %v2275, %v2274
    %v2421 = vpack.c.b16 %v2277, %v2276
    %v2422 = vpack.c.b16 %v2279, %v2278
    %v2423 = vpack.c.b16 %v2281, %v2280
    %v2424 = vpack.c.b16 %v2283, %v2282
    %v2425 = vpack.c.b16 %v2285, %v2284
    %v2426 = vpack.c.b16 %v2287, %v2286
    %v2427 = vpack.c.b16 %v2289, %v2288
    %v2428 = vpack.c.b16 %v2291, %v2290
    %v2429 = vpack.c.b16 %v2293, %v2292
    %v2430 = vpack.c.b16 %v2295, %v2294
    %v2431 = vpack.c.b16 %v2297, %v2296
    %v2432 = vpack.c.b16 %v2299, %v2298
    %v2433 = vpack.c.b16 %v2301, %v2300
    %v2434 = vpack.c.b16 %v2303, %v2302
    %v2435 = vpack.c.b16 %v2305, %v2304
    %v2436 = vpack.c.b16 %v2307, %v2306
    %v2437 = vpack.c.b16 %v2309, %v2308
    %2566 = vmatprep.subr.bf16.mxu0 0
    %2567 = vmatpush1.bf16.msra.mxu0 %v2317
    %2568 = vmatprep.subr.bf16.mxu0 0
    %2569 = vmatpush1.bf16.msra.mxu0 %v2316
    %2570 = vmatprep.subr.bf16.mxu0 0
    %2571 = vmatpush1.bf16.msra.mxu0 %v2315
    %2572 = vmatprep.subr.bf16.mxu0 0
    %2573 = vmatpush1.bf16.msra.mxu0 %v2314
    %2574 = vmatprep.subr.bf16.mxu0 0
    %2575 = vmatpush1.bf16.msra.mxu0 %v2313
    %2576 = vmatprep.subr.bf16.mxu0 0
    %2577 = vmatpush1.bf16.msra.mxu0 %v2312
    %2578 = vmatprep.subr.bf16.mxu0 0
    %2579 = vmatpush1.bf16.msra.mxu0 %v2311
    %2580 = vmatprep.subr.bf16.mxu0 0
    %2581 = vmatpush1.bf16.msra.mxu0 %v2310
    %2582 = vmatprep.subr.bf16.mxu0 0
    %2583 = vmatpush2.bf16.msra.mxu0 %v2325
    %2584 = vmatprep.subr.bf16.mxu0 0
    %2585 = vmatpush2.bf16.msra.mxu0 %v2324
    %2586 = vmatprep.subr.bf16.mxu0 0
    %2587 = vmatpush2.bf16.msra.mxu0 %v2323
    %2588 = vmatprep.subr.bf16.mxu0 0
    %2589 = vmatpush2.bf16.msra.mxu0 %v2322
    %2590 = vmatprep.subr.bf16.mxu0 0
    %2591 = vmatpush2.bf16.msra.mxu0 %v2321
    %2592 = vmatprep.subr.bf16.mxu0 0
    %2593 = vmatpush2.bf16.msra.mxu0 %v2320
    %2594 = vmatprep.subr.bf16.mxu0 0
    %2595 = vmatpush2.bf16.msra.mxu0 %v2319
    %2596 = vmatprep.subr.bf16.mxu0 0
    %2597 = vmatpush2.bf16.msra.mxu0 %v2318
    %2598 = vmatprep.mubr.bf16.mxu0 %v1779
    %2599 = vmatmul.mubr.bf16.gmra.mxu0 %v1778
    %v2600 = vpop.f32.mrf.mxu0
    %v2601 = vadd.f32 %v1797, %v2600
    %v2602 = vpop.f32.mrf.mxu0
    %v2603 = vpop.f32.mrf.mxu0
    %v2604 = vadd.f32 %v1797, %v2603
    %v2605 = vpop.f32.mrf.mxu0
    %2606 = vdwg.mxu0
    %2607 = vmatprep.subr.bf16.mxu0 0
    %2608 = vmatpush1.bf16.msra.mxu0 %v2333
    %2609 = vmatprep.subr.bf16.mxu0 0
    %2610 = vmatpush1.bf16.msra.mxu0 %v2332
    %2611 = vmatprep.subr.bf16.mxu0 0
    %2612 = vmatpush1.bf16.msra.mxu0 %v2331
    %2613 = vmatprep.subr.bf16.mxu0 0
    %2614 = vmatpush1.bf16.msra.mxu0 %v2330
    %2615 = vmatprep.subr.bf16.mxu0 0
    %2616 = vmatpush1.bf16.msra.mxu0 %v2329
    %2617 = vmatprep.subr.bf16.mxu0 0
    %2618 = vmatpush1.bf16.msra.mxu0 %v2328
    %2619 = vmatprep.subr.bf16.mxu0 0
    %2620 = vmatpush1.bf16.msra.mxu0 %v2327
    %2621 = vmatprep.subr.bf16.mxu0 0
    %2622 = vmatpush1.bf16.msra.mxu0 %v2326
    %2623 = vmatprep.subr.bf16.mxu0 0
    %2624 = vmatpush2.bf16.msra.mxu0 %v2341
    %2625 = vmatprep.subr.bf16.mxu0 0
    %2626 = vmatpush2.bf16.msra.mxu0 %v2340
    %2627 = vmatprep.subr.bf16.mxu0 0
    %2628 = vmatpush2.bf16.msra.mxu0 %v2339
    %2629 = vmatprep.subr.bf16.mxu0 0
    %2630 = vmatpush2.bf16.msra.mxu0 %v2338
    %2631 = vmatprep.subr.bf16.mxu0 0
    %2632 = vmatpush2.bf16.msra.mxu0 %v2337
    %2633 = vmatprep.subr.bf16.mxu0 0
    %2634 = vmatpush2.bf16.msra.mxu0 %v2336
    %2635 = vmatprep.subr.bf16.mxu0 0
    %2636 = vmatpush2.bf16.msra.mxu0 %v2335
    %2637 = vmatprep.subr.bf16.mxu0 0
    %2638 = vmatpush2.bf16.msra.mxu0 %v2334
    %2639 = vmatprep.mubr.bf16.mxu0 %v1781
    %2640 = vmatmul.mubr.bf16.gmra.mxu0 %v1780
    %v2641 = vpop.f32.mrf.mxu0
    %v2642 = vadd.f32 %v2601, %v2641
    %v2643 = vpop.f32.mrf.mxu0
    %v2644 = vpop.f32.mrf.mxu0
    %v2645 = vadd.f32 %v2604, %v2644
    %v2646 = vpop.f32.mrf.mxu0
    %2647 = vdwg.mxu0
    %2648 = vmatprep.subr.bf16.mxu0 0
    %2649 = vmatpush1.bf16.msra.mxu0 %v2349
    %2650 = vmatprep.subr.bf16.mxu0 0
    %2651 = vmatpush1.bf16.msra.mxu0 %v2348
    %2652 = vmatprep.subr.bf16.mxu0 0
    %2653 = vmatpush1.bf16.msra.mxu0 %v2347
    %2654 = vmatprep.subr.bf16.mxu0 0
    %2655 = vmatpush1.bf16.msra.mxu0 %v2346
    %2656 = vmatprep.subr.bf16.mxu0 0
    %2657 = vmatpush1.bf16.msra.mxu0 %v2345
    %2658 = vmatprep.subr.bf16.mxu0 0
    %2659 = vmatpush1.bf16.msra.mxu0 %v2344
    %2660 = vmatprep.subr.bf16.mxu0 0
    %2661 = vmatpush1.bf16.msra.mxu0 %v2343
    %2662 = vmatprep.subr.bf16.mxu0 0
    %2663 = vmatpush1.bf16.msra.mxu0 %v2342
    %2664 = vmatprep.subr.bf16.mxu0 0
    %2665 = vmatpush2.bf16.msra.mxu0 %v2357
    %2666 = vmatprep.subr.bf16.mxu0 0
    %2667 = vmatpush2.bf16.msra.mxu0 %v2356
    %2668 = vmatprep.subr.bf16.mxu0 0
    %2669 = vmatpush2.bf16.msra.mxu0 %v2355
    %2670 = vmatprep.subr.bf16.mxu0 0
    %2671 = vmatpush2.bf16.msra.mxu0 %v2354
    %2672 = vmatprep.subr.bf16.mxu0 0
    %2673 = vmatpush2.bf16.msra.mxu0 %v2353
    %2674 = vmatprep.subr.bf16.mxu0 0
    %2675 = vmatpush2.bf16.msra.mxu0 %v2352
    %2676 = vmatprep.subr.bf16.mxu0 0
    %2677 = vmatpush2.bf16.msra.mxu0 %v2351
    %2678 = vmatprep.subr.bf16.mxu0 0
    %2679 = vmatpush2.bf16.msra.mxu0 %v2350
    %2680 = vmatprep.mubr.bf16.mxu0 %v1783
    %2681 = vmatmul.mubr.bf16.gmra.mxu0 %v1782
    %v2682 = vpop.f32.mrf.mxu0
    %v2683 = vadd.f32 %v2642, %v2682
    %v2684 = vpop.f32.mrf.mxu0
    %v2685 = vpop.f32.mrf.mxu0
    %v2686 = vadd.f32 %v2645, %v2685
    %v2687 = vpop.f32.mrf.mxu0
    %2688 = vdwg.mxu0
    %2689 = vmatprep.subr.bf16.mxu0 0
    %2690 = vmatpush1.bf16.msra.mxu0 %v2365
    %2691 = vmatprep.subr.bf16.mxu0 0
    %2692 = vmatpush1.bf16.msra.mxu0 %v2364
    %2693 = vmatprep.subr.bf16.mxu0 0
    %2694 = vmatpush1.bf16.msra.mxu0 %v2363
    %2695 = vmatprep.subr.bf16.mxu0 0
    %2696 = vmatpush1.bf16.msra.mxu0 %v2362
    %2697 = vmatprep.subr.bf16.mxu0 0
    %2698 = vmatpush1.bf16.msra.mxu0 %v2361
    %2699 = vmatprep.subr.bf16.mxu0 0
    %2700 = vmatpush1.bf16.msra.mxu0 %v2360
    %2701 = vmatprep.subr.bf16.mxu0 0
    %2702 = vmatpush1.bf16.msra.mxu0 %v2359
    %2703 = vmatprep.subr.bf16.mxu0 0
    %2704 = vmatpush1.bf16.msra.mxu0 %v2358
    %2705 = vmatprep.subr.bf16.mxu0 0
    %2706 = vmatpush2.bf16.msra.mxu0 %v2373
    %2707 = vmatprep.subr.bf16.mxu0 0
    %2708 = vmatpush2.bf16.msra.mxu0 %v2372
    %2709 = vmatprep.subr.bf16.mxu0 0
    %2710 = vmatpush2.bf16.msra.mxu0 %v2371
    %2711 = vmatprep.subr.bf16.mxu0 0
    %2712 = vmatpush2.bf16.msra.mxu0 %v2370
    %2713 = vmatprep.subr.bf16.mxu0 0
    %2714 = vmatpush2.bf16.msra.mxu0 %v2369
    %2715 = vmatprep.subr.bf16.mxu0 0
    %2716 = vmatpush2.bf16.msra.mxu0 %v2368
    %2717 = vmatprep.subr.bf16.mxu0 0
    %2718 = vmatpush2.bf16.msra.mxu0 %v2367
    %2719 = vmatprep.subr.bf16.mxu0 0
    %2720 = vmatpush2.bf16.msra.mxu0 %v2366
    %2721 = vmatprep.mubr.bf16.mxu0 %v1785
    %2722 = vmatmul.mubr.bf16.gmra.mxu0 %v1784
    %v2723 = vpop.f32.mrf.mxu0
    %v2724 = vadd.f32 %v2683, %v2723
    %v2725 = vpop.f32.mrf.mxu0
    %v2726 = vpop.f32.mrf.mxu0
    %v2727 = vadd.f32 %v2686, %v2726
    %v2728 = vpop.f32.mrf.mxu0
    %2729 = vdwg.mxu0
    %2730 = vmatprep.subr.bf16.mxu0 0
    %2731 = vmatpush1.bf16.msra.mxu0 %v2381
    %2732 = vmatprep.subr.bf16.mxu0 0
    %2733 = vmatpush1.bf16.msra.mxu0 %v2380
    %2734 = vmatprep.subr.bf16.mxu0 0
    %2735 = vmatpush1.bf16.msra.mxu0 %v2379
    %2736 = vmatprep.subr.bf16.mxu0 0
    %2737 = vmatpush1.bf16.msra.mxu0 %v2378
    %2738 = vmatprep.subr.bf16.mxu0 0
    %2739 = vmatpush1.bf16.msra.mxu0 %v2377
    %2740 = vmatprep.subr.bf16.mxu0 0
    %2741 = vmatpush1.bf16.msra.mxu0 %v2376
    %2742 = vmatprep.subr.bf16.mxu0 0
    %2743 = vmatpush1.bf16.msra.mxu0 %v2375
    %2744 = vmatprep.subr.bf16.mxu0 0
    %2745 = vmatpush1.bf16.msra.mxu0 %v2374
    %2746 = vmatprep.subr.bf16.mxu0 0
    %2747 = vmatpush2.bf16.msra.mxu0 %v2389
    %2748 = vmatprep.subr.bf16.mxu0 0
    %2749 = vmatpush2.bf16.msra.mxu0 %v2388
    %2750 = vmatprep.subr.bf16.mxu0 0
    %2751 = vmatpush2.bf16.msra.mxu0 %v2387
    %2752 = vmatprep.subr.bf16.mxu0 0
    %2753 = vmatpush2.bf16.msra.mxu0 %v2386
    %2754 = vmatprep.subr.bf16.mxu0 0
    %2755 = vmatpush2.bf16.msra.mxu0 %v2385
    %2756 = vmatprep.subr.bf16.mxu0 0
    %2757 = vmatpush2.bf16.msra.mxu0 %v2384
    %2758 = vmatprep.subr.bf16.mxu0 0
    %2759 = vmatpush2.bf16.msra.mxu0 %v2383
    %2760 = vmatprep.subr.bf16.mxu0 0
    %2761 = vmatpush2.bf16.msra.mxu0 %v2382
    %2762 = vmatprep.mubr.bf16.mxu0 %v1787
    %2763 = vmatmul.mubr.bf16.gmra.mxu0 %v1786
    %v2764 = vpop.f32.mrf.mxu0
    %v2765 = vadd.f32 %v2724, %v2764
    %v2766 = vpop.f32.mrf.mxu0
    %v2767 = vpop.f32.mrf.mxu0
    %v2768 = vadd.f32 %v2727, %v2767
    %v2769 = vpop.f32.mrf.mxu0
    %2770 = vdwg.mxu0
    %2771 = vmatprep.subr.bf16.mxu0 0
    %2772 = vmatpush1.bf16.msra.mxu0 %v2397
    %2773 = vmatprep.subr.bf16.mxu0 0
    %2774 = vmatpush1.bf16.msra.mxu0 %v2396
    %2775 = vmatprep.subr.bf16.mxu0 0
    %2776 = vmatpush1.bf16.msra.mxu0 %v2395
    %2777 = vmatprep.subr.bf16.mxu0 0
    %2778 = vmatpush1.bf16.msra.mxu0 %v2394
    %2779 = vmatprep.subr.bf16.mxu0 0
    %2780 = vmatpush1.bf16.msra.mxu0 %v2393
    %2781 = vmatprep.subr.bf16.mxu0 0
    %2782 = vmatpush1.bf16.msra.mxu0 %v2392
    %2783 = vmatprep.subr.bf16.mxu0 0
    %2784 = vmatpush1.bf16.msra.mxu0 %v2391
    %2785 = vmatprep.subr.bf16.mxu0 0
    %2786 = vmatpush1.bf16.msra.mxu0 %v2390
    %2787 = vmatprep.subr.bf16.mxu0 0
    %2788 = vmatpush2.bf16.msra.mxu0 %v2405
    %2789 = vmatprep.subr.bf16.mxu0 0
    %2790 = vmatpush2.bf16.msra.mxu0 %v2404
    %2791 = vmatprep.subr.bf16.mxu0 0
    %2792 = vmatpush2.bf16.msra.mxu0 %v2403
    %2793 = vmatprep.subr.bf16.mxu0 0
    %2794 = vmatpush2.bf16.msra.mxu0 %v2402
    %2795 = vmatprep.subr.bf16.mxu0 0
    %2796 = vmatpush2.bf16.msra.mxu0 %v2401
    %2797 = vmatprep.subr.bf16.mxu0 0
    %2798 = vmatpush2.bf16.msra.mxu0 %v2400
    %2799 = vmatprep.subr.bf16.mxu0 0
    %2800 = vmatpush2.bf16.msra.mxu0 %v2399
    %2801 = vmatprep.subr.bf16.mxu0 0
    %2802 = vmatpush2.bf16.msra.mxu0 %v2398
    %2803 = vmatprep.mubr.bf16.mxu0 %v1789
    %2804 = vmatmul.mubr.bf16.gmra.mxu0 %v1788
    %v2805 = vpop.f32.mrf.mxu0
    %v2806 = vadd.f32 %v2765, %v2805
    %v2807 = vpop.f32.mrf.mxu0
    %v2808 = vpop.f32.mrf.mxu0
    %v2809 = vadd.f32 %v2768, %v2808
    %v2810 = vpop.f32.mrf.mxu0
    %2811 = vdwg.mxu0
    %2812 = vmatprep.subr.bf16.mxu0 0
    %2813 = vmatpush1.bf16.msra.mxu0 %v2413
    %2814 = vmatprep.subr.bf16.mxu0 0
    %2815 = vmatpush1.bf16.msra.mxu0 %v2412
    %2816 = vmatprep.subr.bf16.mxu0 0
    %2817 = vmatpush1.bf16.msra.mxu0 %v2411
    %2818 = vmatprep.subr.bf16.mxu0 0
    %2819 = vmatpush1.bf16.msra.mxu0 %v2410
    %2820 = vmatprep.subr.bf16.mxu0 0
    %2821 = vmatpush1.bf16.msra.mxu0 %v2409
    %2822 = vmatprep.subr.bf16.mxu0 0
    %2823 = vmatpush1.bf16.msra.mxu0 %v2408
    %2824 = vmatprep.subr.bf16.mxu0 0
    %2825 = vmatpush1.bf16.msra.mxu0 %v2407
    %2826 = vmatprep.subr.bf16.mxu0 0
    %2827 = vmatpush1.bf16.msra.mxu0 %v2406
    %2828 = vmatprep.subr.bf16.mxu0 0
    %2829 = vmatpush2.bf16.msra.mxu0 %v2421
    %2830 = vmatprep.subr.bf16.mxu0 0
    %2831 = vmatpush2.bf16.msra.mxu0 %v2420
    %2832 = vmatprep.subr.bf16.mxu0 0
    %2833 = vmatpush2.bf16.msra.mxu0 %v2419
    %2834 = vmatprep.subr.bf16.mxu0 0
    %2835 = vmatpush2.bf16.msra.mxu0 %v2418
    %2836 = vmatprep.subr.bf16.mxu0 0
    %2837 = vmatpush2.bf16.msra.mxu0 %v2417
    %2838 = vmatprep.subr.bf16.mxu0 0
    %2839 = vmatpush2.bf16.msra.mxu0 %v2416
    %2840 = vmatprep.subr.bf16.mxu0 0
    %2841 = vmatpush2.bf16.msra.mxu0 %v2415
    %2842 = vmatprep.subr.bf16.mxu0 0
    %2843 = vmatpush2.bf16.msra.mxu0 %v2414
    %2844 = vmatprep.mubr.bf16.mxu0 %v1791
    %2845 = vmatmul.mubr.bf16.gmra.mxu0 %v1790
    %v2846 = vpop.f32.mrf.mxu0
    %v2847 = vadd.f32 %v2806, %v2846
    %v2848 = vpop.f32.mrf.mxu0
    %v2849 = vpop.f32.mrf.mxu0
    %v2850 = vadd.f32 %v2809, %v2849
    %v2851 = vpop.f32.mrf.mxu0
    %2852 = vdwg.mxu0
    %2853 = vmatprep.subr.bf16.mxu0 0
    %2854 = vmatpush1.bf16.msra.mxu0 %v2429
    %2855 = vmatprep.subr.bf16.mxu0 0
    %2856 = vmatpush1.bf16.msra.mxu0 %v2428
    %2857 = vmatprep.subr.bf16.mxu0 0
    %2858 = vmatpush1.bf16.msra.mxu0 %v2427
    %2859 = vmatprep.subr.bf16.mxu0 0
    %2860 = vmatpush1.bf16.msra.mxu0 %v2426
    %2861 = vmatprep.subr.bf16.mxu0 0
    %2862 = vmatpush1.bf16.msra.mxu0 %v2425
    %2863 = vmatprep.subr.bf16.mxu0 0
    %2864 = vmatpush1.bf16.msra.mxu0 %v2424
    %2865 = vmatprep.subr.bf16.mxu0 0
    %2866 = vmatpush1.bf16.msra.mxu0 %v2423
    %2867 = vmatprep.subr.bf16.mxu0 0
    %2868 = vmatpush1.bf16.msra.mxu0 %v2422
    %2869 = vmatprep.subr.bf16.mxu0 0
    %2870 = vmatpush2.bf16.msra.mxu0 %v2437
    %2871 = vmatprep.subr.bf16.mxu0 0
    %2872 = vmatpush2.bf16.msra.mxu0 %v2436
    %2873 = vmatprep.subr.bf16.mxu0 0
    %2874 = vmatpush2.bf16.msra.mxu0 %v2435
    %2875 = vmatprep.subr.bf16.mxu0 0
    %2876 = vmatpush2.bf16.msra.mxu0 %v2434
    %2877 = vmatprep.subr.bf16.mxu0 0
    %2878 = vmatpush2.bf16.msra.mxu0 %v2433
    %2879 = vmatprep.subr.bf16.mxu0 0
    %2880 = vmatpush2.bf16.msra.mxu0 %v2432
    %2881 = vmatprep.subr.bf16.mxu0 0
    %2882 = vmatpush2.bf16.msra.mxu0 %v2431
    %2883 = vmatprep.subr.bf16.mxu0 0
    %2884 = vmatpush2.bf16.msra.mxu0 %v2430
    %2885 = vmatprep.mubr.bf16.mxu0 %v1793
    %2886 = vmatmul.mubr.bf16.gmra.mxu0 %v1792
    %v2887 = vpop.f32.mrf.mxu0
    %v2888 = vadd.f32 %v2847, %v2887
    %v2889 = vpop.f32.mrf.mxu0
    %v2890 = vpop.f32.mrf.mxu0
    %v2891 = vadd.f32 %v2850, %v2890
    %v2892 = vpop.f32.mrf.mxu0
    %2893 = vdwg.mxu0
    %v2894 = vadd.f32 %v1154, %v2888
    %v2895 = vadd.f32 %v1155, %v2891
    %v2896 = vsel %vm376, %v2894, 0.0
    %2897 = vadd.xlane.f32.xlu0 %v2896
    %v2898 = vpop.xlane.xlu0 %2897
    %v2899 = vsel %vm376, %v2895, 0.0
    %2900 = vadd.xlane.f32.xlu0 %v2899
    %v2901 = vpop.xlane.xlu0 %2900
    %v2902 = vmul.f32 %v2898, %v1123
    %v2903 = vmul.f32 %v2901, %v1123
    %v2904 = vsub.f32 %v2894, %v2902
    %v2905 = vsub.f32 %v2895, %v2903
    %v2906 = vmul.f32 %v2904, %v2904
    %v2907 = vmul.f32 %v2905, %v2905
    %v2908 = vsel %vm376, %v2906, 0.0
    %2909 = vadd.xlane.f32.xlu0 %v2908
    %v2910 = vpop.xlane.xlu0 %2909
    %v2911 = vsel %vm376, %v2907, 0.0
    %2912 = vadd.xlane.f32.xlu0 %v2911
    %v2913 = vpop.xlane.xlu0 %2912
    %v2914 = vmul.f32 %v2910, %v1123
    %v2915 = vmul.f32 %v2913, %v1123
    %v2916 = vadd.f32 %v2914, 1e-05
    %v2917 = vadd.f32 %v2915, 1e-05
    %v2918 = vrsqrt.pop %v2916
    %v2919 = vrsqrt.pop %v2917
    %v2920 = vmul.f32 %v2904, %v2918
    %v2921 = vmul.f32 %v2905, %v2919
    %v2922 = vlaneseq
    %v2923 = vshrl.u32 %v2922, 7
    %v2924 = vsub.s32 4, %v2923
    %v2925 = vrot.slane %v356, %v2924
    %v2926 = vmul.f32 %v2920, %v2925
    %v2927 = vmul.f32 %v2921, %v2925
    %v2928 = vlaneseq
    %v2929 = vshrl.u32 %v2928, 7
    %v2930 = vsub.s32 5, %v2929
    %v2931 = vrot.slane %v356, %v2930
    %v2932 = vadd.f32 %v2926, %v2931
    %v2933 = vadd.f32 %v2927, %v2931
    %s2934 = scalar_lea.vmem %s6, 16
    %v2935 = vld [vmem:[%s2934] sm:$0xf]
    %v2936 = vld [vmem:[%s2934 + $0x4] sm:$0xf]
    %v2937 = vld [vmem:[%s2934 + $0x8] sm:$0xf]
    %v2938 = vld [vmem:[%s2934 + $0xc] sm:$0xf]
    %s2939 = scalar_lea.vmem %s7, 1
    %v2940 = vld [vmem:[%s2939] sm:$0x1]
    %s2941 = scalar_lea.vmem %s8, 16
    %v2942 = vld [vmem:[%s2941] sm:$0xf]
    %v2943 = vld [vmem:[%s2941 + $0x4] sm:$0xf]
    %v2944 = vld [vmem:[%s2941 + $0x8] sm:$0xf]
    %v2945 = vld [vmem:[%s2941 + $0xc] sm:$0xf]
    %s2946 = scalar_lea.vmem %s10, 256
    %v2947 = vld [vmem:[%s2946] sm:$0xff]
    %v2948 = vld [vmem:[%s2946 + $0x8] sm:$0xff]
    %v2949 = vld [vmem:[%s2946 + $0x10] sm:$0xff]
    %v2950 = vld [vmem:[%s2946 + $0x18] sm:$0xff]
    %v2951 = vld [vmem:[%s2946 + $0x20] sm:$0xff]
    %v2952 = vld [vmem:[%s2946 + $0x28] sm:$0xff]
    %v2953 = vld [vmem:[%s2946 + $0x30] sm:$0xff]
    %v2954 = vld [vmem:[%s2946 + $0x38] sm:$0xff]
    %v2955 = vld [vmem:[%s2946 + $0x40] sm:$0xff]
    %v2956 = vld [vmem:[%s2946 + $0x48] sm:$0xff]
    %v2957 = vld [vmem:[%s2946 + $0x50] sm:$0xff]
    %v2958 = vld [vmem:[%s2946 + $0x58] sm:$0xff]
    %v2959 = vld [vmem:[%s2946 + $0x60] sm:$0xff]
    %v2960 = vld [vmem:[%s2946 + $0x68] sm:$0xff]
    %v2961 = vld [vmem:[%s2946 + $0x70] sm:$0xff]
    %v2962 = vld [vmem:[%s2946 + $0x78] sm:$0xff]
    %v2963 = vld [vmem:[%s2946 + $0x80] sm:$0xff]
    %v2964 = vld [vmem:[%s2946 + $0x88] sm:$0xff]
    %v2965 = vld [vmem:[%s2946 + $0x90] sm:$0xff]
    %v2966 = vld [vmem:[%s2946 + $0x98] sm:$0xff]
    %v2967 = vld [vmem:[%s2946 + $0xa0] sm:$0xff]
    %v2968 = vld [vmem:[%s2946 + $0xa8] sm:$0xff]
    %v2969 = vld [vmem:[%s2946 + $0xb0] sm:$0xff]
    %v2970 = vld [vmem:[%s2946 + $0xb8] sm:$0xff]
    %v2971 = vld [vmem:[%s2946 + $0xc0] sm:$0xff]
    %v2972 = vld [vmem:[%s2946 + $0xc8] sm:$0xff]
    %v2973 = vld [vmem:[%s2946 + $0xd0] sm:$0xff]
    %v2974 = vld [vmem:[%s2946 + $0xd8] sm:$0xff]
    %v2975 = vld [vmem:[%s2946 + $0xe0] sm:$0xff]
    %v2976 = vld [vmem:[%s2946 + $0xe8] sm:$0xff]
    %v2977 = vld [vmem:[%s2946 + $0xf0] sm:$0xff]
    %v2978 = vld [vmem:[%s2946 + $0xf8] sm:$0xff]
    %s2979 = scalar_lea.vmem %s11, 16
    %v2980 = vld [vmem:[%s2979] sm:$0xff]
    %v2981 = vld [vmem:[%s2979 + $0x8] sm:$0xff]
    %s2982 = scalar_lea.vmem %s12, 1024
    %v2983 = vld [vmem:[%s2982] sm:$0xf]
    %v2984 = vld [vmem:[%s2982 + $0x4] sm:$0xf]
    %v2985 = vld [vmem:[%s2982 + $0x8] sm:$0xf]
    %v2986 = vld [vmem:[%s2982 + $0xc] sm:$0xf]
    %v2987 = vld [vmem:[%s2982 + $0x10] sm:$0xf]
    %v2988 = vld [vmem:[%s2982 + $0x14] sm:$0xf]
    %v2989 = vld [vmem:[%s2982 + $0x18] sm:$0xf]
    %v2990 = vld [vmem:[%s2982 + $0x1c] sm:$0xf]
    %v2991 = vld [vmem:[%s2982 + $0x20] sm:$0xf]
    %v2992 = vld [vmem:[%s2982 + $0x24] sm:$0xf]
    %v2993 = vld [vmem:[%s2982 + $0x28] sm:$0xf]
    %v2994 = vld [vmem:[%s2982 + $0x2c] sm:$0xf]
    %v2995 = vld [vmem:[%s2982 + $0x30] sm:$0xf]
    %v2996 = vld [vmem:[%s2982 + $0x34] sm:$0xf]
    %v2997 = vld [vmem:[%s2982 + $0x38] sm:$0xf]
    %v2998 = vld [vmem:[%s2982 + $0x3c] sm:$0xf]
    %v2999 = vld [vmem:[%s2982 + $0x40] sm:$0xf]
    %v3000 = vld [vmem:[%s2982 + $0x44] sm:$0xf]
    %v3001 = vld [vmem:[%s2982 + $0x48] sm:$0xf]
    %v3002 = vld [vmem:[%s2982 + $0x4c] sm:$0xf]
    %v3003 = vld [vmem:[%s2982 + $0x50] sm:$0xf]
    %v3004 = vld [vmem:[%s2982 + $0x54] sm:$0xf]
    %v3005 = vld [vmem:[%s2982 + $0x58] sm:$0xf]
    %v3006 = vld [vmem:[%s2982 + $0x5c] sm:$0xf]
    %v3007 = vld [vmem:[%s2982 + $0x60] sm:$0xf]
    %v3008 = vld [vmem:[%s2982 + $0x64] sm:$0xf]
    %v3009 = vld [vmem:[%s2982 + $0x68] sm:$0xf]
    %v3010 = vld [vmem:[%s2982 + $0x6c] sm:$0xf]
    %v3011 = vld [vmem:[%s2982 + $0x70] sm:$0xf]
    %v3012 = vld [vmem:[%s2982 + $0x74] sm:$0xf]
    %v3013 = vld [vmem:[%s2982 + $0x78] sm:$0xf]
    %v3014 = vld [vmem:[%s2982 + $0x7c] sm:$0xf]
    %v3015 = vld [vmem:[%s2982 + $0x80] sm:$0xf]
    %v3016 = vld [vmem:[%s2982 + $0x84] sm:$0xf]
    %v3017 = vld [vmem:[%s2982 + $0x88] sm:$0xf]
    %v3018 = vld [vmem:[%s2982 + $0x8c] sm:$0xf]
    %v3019 = vld [vmem:[%s2982 + $0x90] sm:$0xf]
    %v3020 = vld [vmem:[%s2982 + $0x94] sm:$0xf]
    %v3021 = vld [vmem:[%s2982 + $0x98] sm:$0xf]
    %v3022 = vld [vmem:[%s2982 + $0x9c] sm:$0xf]
    %v3023 = vld [vmem:[%s2982 + $0xa0] sm:$0xf]
    %v3024 = vld [vmem:[%s2982 + $0xa4] sm:$0xf]
    %v3025 = vld [vmem:[%s2982 + $0xa8] sm:$0xf]
    %v3026 = vld [vmem:[%s2982 + $0xac] sm:$0xf]
    %v3027 = vld [vmem:[%s2982 + $0xb0] sm:$0xf]
    %v3028 = vld [vmem:[%s2982 + $0xb4] sm:$0xf]
    %v3029 = vld [vmem:[%s2982 + $0xb8] sm:$0xf]
    %v3030 = vld [vmem:[%s2982 + $0xbc] sm:$0xf]
    %v3031 = vld [vmem:[%s2982 + $0xc0] sm:$0xf]
    %v3032 = vld [vmem:[%s2982 + $0xc4] sm:$0xf]
    %v3033 = vld [vmem:[%s2982 + $0xc8] sm:$0xf]
    %v3034 = vld [vmem:[%s2982 + $0xcc] sm:$0xf]
    %v3035 = vld [vmem:[%s2982 + $0xd0] sm:$0xf]
    %v3036 = vld [vmem:[%s2982 + $0xd4] sm:$0xf]
    %v3037 = vld [vmem:[%s2982 + $0xd8] sm:$0xf]
    %v3038 = vld [vmem:[%s2982 + $0xdc] sm:$0xf]
    %v3039 = vld [vmem:[%s2982 + $0xe0] sm:$0xf]
    %v3040 = vld [vmem:[%s2982 + $0xe4] sm:$0xf]
    %v3041 = vld [vmem:[%s2982 + $0xe8] sm:$0xf]
    %v3042 = vld [vmem:[%s2982 + $0xec] sm:$0xf]
    %v3043 = vld [vmem:[%s2982 + $0xf0] sm:$0xf]
    %v3044 = vld [vmem:[%s2982 + $0xf4] sm:$0xf]
    %v3045 = vld [vmem:[%s2982 + $0xf8] sm:$0xf]
    %v3046 = vld [vmem:[%s2982 + $0xfc] sm:$0xf]
    %v3047 = vld [vmem:[%s2982 + $0x100] sm:$0xf]
    %v3048 = vld [vmem:[%s2982 + $0x104] sm:$0xf]
    %v3049 = vld [vmem:[%s2982 + $0x108] sm:$0xf]
    %v3050 = vld [vmem:[%s2982 + $0x10c] sm:$0xf]
    %v3051 = vld [vmem:[%s2982 + $0x110] sm:$0xf]
    %v3052 = vld [vmem:[%s2982 + $0x114] sm:$0xf]
    %v3053 = vld [vmem:[%s2982 + $0x118] sm:$0xf]
    %v3054 = vld [vmem:[%s2982 + $0x11c] sm:$0xf]
    %v3055 = vld [vmem:[%s2982 + $0x120] sm:$0xf]
    %v3056 = vld [vmem:[%s2982 + $0x124] sm:$0xf]
    %v3057 = vld [vmem:[%s2982 + $0x128] sm:$0xf]
    %v3058 = vld [vmem:[%s2982 + $0x12c] sm:$0xf]
    %v3059 = vld [vmem:[%s2982 + $0x130] sm:$0xf]
    %v3060 = vld [vmem:[%s2982 + $0x134] sm:$0xf]
    %v3061 = vld [vmem:[%s2982 + $0x138] sm:$0xf]
    %v3062 = vld [vmem:[%s2982 + $0x13c] sm:$0xf]
    %v3063 = vld [vmem:[%s2982 + $0x140] sm:$0xf]
    %v3064 = vld [vmem:[%s2982 + $0x144] sm:$0xf]
    %v3065 = vld [vmem:[%s2982 + $0x148] sm:$0xf]
    %v3066 = vld [vmem:[%s2982 + $0x14c] sm:$0xf]
    %v3067 = vld [vmem:[%s2982 + $0x150] sm:$0xf]
    %v3068 = vld [vmem:[%s2982 + $0x154] sm:$0xf]
    %v3069 = vld [vmem:[%s2982 + $0x158] sm:$0xf]
    %v3070 = vld [vmem:[%s2982 + $0x15c] sm:$0xf]
    %v3071 = vld [vmem:[%s2982 + $0x160] sm:$0xf]
    %v3072 = vld [vmem:[%s2982 + $0x164] sm:$0xf]
    %v3073 = vld [vmem:[%s2982 + $0x168] sm:$0xf]
    %v3074 = vld [vmem:[%s2982 + $0x16c] sm:$0xf]
    %v3075 = vld [vmem:[%s2982 + $0x170] sm:$0xf]
    %v3076 = vld [vmem:[%s2982 + $0x174] sm:$0xf]
    %v3077 = vld [vmem:[%s2982 + $0x178] sm:$0xf]
    %v3078 = vld [vmem:[%s2982 + $0x17c] sm:$0xf]
    %v3079 = vld [vmem:[%s2982 + $0x180] sm:$0xf]
    %v3080 = vld [vmem:[%s2982 + $0x184] sm:$0xf]
    %v3081 = vld [vmem:[%s2982 + $0x188] sm:$0xf]
    %v3082 = vld [vmem:[%s2982 + $0x18c] sm:$0xf]
    %v3083 = vld [vmem:[%s2982 + $0x190] sm:$0xf]
    %v3084 = vld [vmem:[%s2982 + $0x194] sm:$0xf]
    %v3085 = vld [vmem:[%s2982 + $0x198] sm:$0xf]
    %v3086 = vld [vmem:[%s2982 + $0x19c] sm:$0xf]
    %v3087 = vld [vmem:[%s2982 + $0x1a0] sm:$0xf]
    %v3088 = vld [vmem:[%s2982 + $0x1a4] sm:$0xf]
    %v3089 = vld [vmem:[%s2982 + $0x1a8] sm:$0xf]
    %v3090 = vld [vmem:[%s2982 + $0x1ac] sm:$0xf]
    %v3091 = vld [vmem:[%s2982 + $0x1b0] sm:$0xf]
    %v3092 = vld [vmem:[%s2982 + $0x1b4] sm:$0xf]
    %v3093 = vld [vmem:[%s2982 + $0x1b8] sm:$0xf]
    %v3094 = vld [vmem:[%s2982 + $0x1bc] sm:$0xf]
    %v3095 = vld [vmem:[%s2982 + $0x1c0] sm:$0xf]
    %v3096 = vld [vmem:[%s2982 + $0x1c4] sm:$0xf]
    %v3097 = vld [vmem:[%s2982 + $0x1c8] sm:$0xf]
    %v3098 = vld [vmem:[%s2982 + $0x1cc] sm:$0xf]
    %v3099 = vld [vmem:[%s2982 + $0x1d0] sm:$0xf]
    %v3100 = vld [vmem:[%s2982 + $0x1d4] sm:$0xf]
    %v3101 = vld [vmem:[%s2982 + $0x1d8] sm:$0xf]
    %v3102 = vld [vmem:[%s2982 + $0x1dc] sm:$0xf]
    %v3103 = vld [vmem:[%s2982 + $0x1e0] sm:$0xf]
    %v3104 = vld [vmem:[%s2982 + $0x1e4] sm:$0xf]
    %v3105 = vld [vmem:[%s2982 + $0x1e8] sm:$0xf]
    %v3106 = vld [vmem:[%s2982 + $0x1ec] sm:$0xf]
    %v3107 = vld [vmem:[%s2982 + $0x1f0] sm:$0xf]
    %v3108 = vld [vmem:[%s2982 + $0x1f4] sm:$0xf]
    %v3109 = vld [vmem:[%s2982 + $0x1f8] sm:$0xf]
    %v3110 = vld [vmem:[%s2982 + $0x1fc] sm:$0xf]
    %v3111 = vld [vmem:[%s2982 + $0x200] sm:$0xf]
    %v3112 = vld [vmem:[%s2982 + $0x204] sm:$0xf]
    %v3113 = vld [vmem:[%s2982 + $0x208] sm:$0xf]
    %v3114 = vld [vmem:[%s2982 + $0x20c] sm:$0xf]
    %v3115 = vld [vmem:[%s2982 + $0x210] sm:$0xf]
    %v3116 = vld [vmem:[%s2982 + $0x214] sm:$0xf]
    %v3117 = vld [vmem:[%s2982 + $0x218] sm:$0xf]
    %v3118 = vld [vmem:[%s2982 + $0x21c] sm:$0xf]
    %v3119 = vld [vmem:[%s2982 + $0x220] sm:$0xf]
    %v3120 = vld [vmem:[%s2982 + $0x224] sm:$0xf]
    %v3121 = vld [vmem:[%s2982 + $0x228] sm:$0xf]
    %v3122 = vld [vmem:[%s2982 + $0x22c] sm:$0xf]
    %v3123 = vld [vmem:[%s2982 + $0x230] sm:$0xf]
    %v3124 = vld [vmem:[%s2982 + $0x234] sm:$0xf]
    %v3125 = vld [vmem:[%s2982 + $0x238] sm:$0xf]
    %v3126 = vld [vmem:[%s2982 + $0x23c] sm:$0xf]
    %v3127 = vld [vmem:[%s2982 + $0x240] sm:$0xf]
    %v3128 = vld [vmem:[%s2982 + $0x244] sm:$0xf]
    %v3129 = vld [vmem:[%s2982 + $0x248] sm:$0xf]
    %v3130 = vld [vmem:[%s2982 + $0x24c] sm:$0xf]
    %v3131 = vld [vmem:[%s2982 + $0x250] sm:$0xf]
    %v3132 = vld [vmem:[%s2982 + $0x254] sm:$0xf]
    %v3133 = vld [vmem:[%s2982 + $0x258] sm:$0xf]
    %v3134 = vld [vmem:[%s2982 + $0x25c] sm:$0xf]
    %v3135 = vld [vmem:[%s2982 + $0x260] sm:$0xf]
    %v3136 = vld [vmem:[%s2982 + $0x264] sm:$0xf]
    %v3137 = vld [vmem:[%s2982 + $0x268] sm:$0xf]
    %v3138 = vld [vmem:[%s2982 + $0x26c] sm:$0xf]
    %v3139 = vld [vmem:[%s2982 + $0x270] sm:$0xf]
    %v3140 = vld [vmem:[%s2982 + $0x274] sm:$0xf]
    %v3141 = vld [vmem:[%s2982 + $0x278] sm:$0xf]
    %v3142 = vld [vmem:[%s2982 + $0x27c] sm:$0xf]
    %v3143 = vld [vmem:[%s2982 + $0x280] sm:$0xf]
    %v3144 = vld [vmem:[%s2982 + $0x284] sm:$0xf]
    %v3145 = vld [vmem:[%s2982 + $0x288] sm:$0xf]
    %v3146 = vld [vmem:[%s2982 + $0x28c] sm:$0xf]
    %v3147 = vld [vmem:[%s2982 + $0x290] sm:$0xf]
    %v3148 = vld [vmem:[%s2982 + $0x294] sm:$0xf]
    %v3149 = vld [vmem:[%s2982 + $0x298] sm:$0xf]
    %v3150 = vld [vmem:[%s2982 + $0x29c] sm:$0xf]
    %v3151 = vld [vmem:[%s2982 + $0x2a0] sm:$0xf]
    %v3152 = vld [vmem:[%s2982 + $0x2a4] sm:$0xf]
    %v3153 = vld [vmem:[%s2982 + $0x2a8] sm:$0xf]
    %v3154 = vld [vmem:[%s2982 + $0x2ac] sm:$0xf]
    %v3155 = vld [vmem:[%s2982 + $0x2b0] sm:$0xf]
    %v3156 = vld [vmem:[%s2982 + $0x2b4] sm:$0xf]
    %v3157 = vld [vmem:[%s2982 + $0x2b8] sm:$0xf]
    %v3158 = vld [vmem:[%s2982 + $0x2bc] sm:$0xf]
    %v3159 = vld [vmem:[%s2982 + $0x2c0] sm:$0xf]
    %v3160 = vld [vmem:[%s2982 + $0x2c4] sm:$0xf]
    %v3161 = vld [vmem:[%s2982 + $0x2c8] sm:$0xf]
    %v3162 = vld [vmem:[%s2982 + $0x2cc] sm:$0xf]
    %v3163 = vld [vmem:[%s2982 + $0x2d0] sm:$0xf]
    %v3164 = vld [vmem:[%s2982 + $0x2d4] sm:$0xf]
    %v3165 = vld [vmem:[%s2982 + $0x2d8] sm:$0xf]
    %v3166 = vld [vmem:[%s2982 + $0x2dc] sm:$0xf]
    %v3167 = vld [vmem:[%s2982 + $0x2e0] sm:$0xf]
    %v3168 = vld [vmem:[%s2982 + $0x2e4] sm:$0xf]
    %v3169 = vld [vmem:[%s2982 + $0x2e8] sm:$0xf]
    %v3170 = vld [vmem:[%s2982 + $0x2ec] sm:$0xf]
    %v3171 = vld [vmem:[%s2982 + $0x2f0] sm:$0xf]
    %v3172 = vld [vmem:[%s2982 + $0x2f4] sm:$0xf]
    %v3173 = vld [vmem:[%s2982 + $0x2f8] sm:$0xf]
    %v3174 = vld [vmem:[%s2982 + $0x2fc] sm:$0xf]
    %v3175 = vld [vmem:[%s2982 + $0x300] sm:$0xf]
    %v3176 = vld [vmem:[%s2982 + $0x304] sm:$0xf]
    %v3177 = vld [vmem:[%s2982 + $0x308] sm:$0xf]
    %v3178 = vld [vmem:[%s2982 + $0x30c] sm:$0xf]
    %v3179 = vld [vmem:[%s2982 + $0x310] sm:$0xf]
    %v3180 = vld [vmem:[%s2982 + $0x314] sm:$0xf]
    %v3181 = vld [vmem:[%s2982 + $0x318] sm:$0xf]
    %v3182 = vld [vmem:[%s2982 + $0x31c] sm:$0xf]
    %v3183 = vld [vmem:[%s2982 + $0x320] sm:$0xf]
    %v3184 = vld [vmem:[%s2982 + $0x324] sm:$0xf]
    %v3185 = vld [vmem:[%s2982 + $0x328] sm:$0xf]
    %v3186 = vld [vmem:[%s2982 + $0x32c] sm:$0xf]
    %v3187 = vld [vmem:[%s2982 + $0x330] sm:$0xf]
    %v3188 = vld [vmem:[%s2982 + $0x334] sm:$0xf]
    %v3189 = vld [vmem:[%s2982 + $0x338] sm:$0xf]
    %v3190 = vld [vmem:[%s2982 + $0x33c] sm:$0xf]
    %v3191 = vld [vmem:[%s2982 + $0x340] sm:$0xf]
    %v3192 = vld [vmem:[%s2982 + $0x344] sm:$0xf]
    %v3193 = vld [vmem:[%s2982 + $0x348] sm:$0xf]
    %v3194 = vld [vmem:[%s2982 + $0x34c] sm:$0xf]
    %v3195 = vld [vmem:[%s2982 + $0x350] sm:$0xf]
    %v3196 = vld [vmem:[%s2982 + $0x354] sm:$0xf]
    %v3197 = vld [vmem:[%s2982 + $0x358] sm:$0xf]
    %v3198 = vld [vmem:[%s2982 + $0x35c] sm:$0xf]
    %v3199 = vld [vmem:[%s2982 + $0x360] sm:$0xf]
    %v3200 = vld [vmem:[%s2982 + $0x364] sm:$0xf]
    %v3201 = vld [vmem:[%s2982 + $0x368] sm:$0xf]
    %v3202 = vld [vmem:[%s2982 + $0x36c] sm:$0xf]
    %v3203 = vld [vmem:[%s2982 + $0x370] sm:$0xf]
    %v3204 = vld [vmem:[%s2982 + $0x374] sm:$0xf]
    %v3205 = vld [vmem:[%s2982 + $0x378] sm:$0xf]
    %v3206 = vld [vmem:[%s2982 + $0x37c] sm:$0xf]
    %v3207 = vld [vmem:[%s2982 + $0x380] sm:$0xf]
    %v3208 = vld [vmem:[%s2982 + $0x384] sm:$0xf]
    %v3209 = vld [vmem:[%s2982 + $0x388] sm:$0xf]
    %v3210 = vld [vmem:[%s2982 + $0x38c] sm:$0xf]
    %v3211 = vld [vmem:[%s2982 + $0x390] sm:$0xf]
    %v3212 = vld [vmem:[%s2982 + $0x394] sm:$0xf]
    %v3213 = vld [vmem:[%s2982 + $0x398] sm:$0xf]
    %v3214 = vld [vmem:[%s2982 + $0x39c] sm:$0xf]
    %v3215 = vld [vmem:[%s2982 + $0x3a0] sm:$0xf]
    %v3216 = vld [vmem:[%s2982 + $0x3a4] sm:$0xf]
    %v3217 = vld [vmem:[%s2982 + $0x3a8] sm:$0xf]
    %v3218 = vld [vmem:[%s2982 + $0x3ac] sm:$0xf]
    %v3219 = vld [vmem:[%s2982 + $0x3b0] sm:$0xf]
    %v3220 = vld [vmem:[%s2982 + $0x3b4] sm:$0xf]
    %v3221 = vld [vmem:[%s2982 + $0x3b8] sm:$0xf]
    %v3222 = vld [vmem:[%s2982 + $0x3bc] sm:$0xf]
    %v3223 = vld [vmem:[%s2982 + $0x3c0] sm:$0xf]
    %v3224 = vld [vmem:[%s2982 + $0x3c4] sm:$0xf]
    %v3225 = vld [vmem:[%s2982 + $0x3c8] sm:$0xf]
    %v3226 = vld [vmem:[%s2982 + $0x3cc] sm:$0xf]
    %v3227 = vld [vmem:[%s2982 + $0x3d0] sm:$0xf]
    %v3228 = vld [vmem:[%s2982 + $0x3d4] sm:$0xf]
    %v3229 = vld [vmem:[%s2982 + $0x3d8] sm:$0xf]
    %v3230 = vld [vmem:[%s2982 + $0x3dc] sm:$0xf]
    %v3231 = vld [vmem:[%s2982 + $0x3e0] sm:$0xf]
    %v3232 = vld [vmem:[%s2982 + $0x3e4] sm:$0xf]
    %v3233 = vld [vmem:[%s2982 + $0x3e8] sm:$0xf]
    %v3234 = vld [vmem:[%s2982 + $0x3ec] sm:$0xf]
    %v3235 = vld [vmem:[%s2982 + $0x3f0] sm:$0xf]
    %v3236 = vld [vmem:[%s2982 + $0x3f4] sm:$0xf]
    %v3237 = vld [vmem:[%s2982 + $0x3f8] sm:$0xf]
    %v3238 = vld [vmem:[%s2982 + $0x3fc] sm:$0xf]
    %s3239 = scalar_lea.vmem %s9, 8
    %v3240 = vld [vmem:[%s3239] sm:$0xff]
    %v3241 = vpack.c.bf16 %v2933, %v2932
    %v3243 = vlaneseq
    %v3244 = vshrl.u32 %v3243, 7
    %v3245 = vsub.s32 0, %v3244
    %v3246 = vrot.slane %v2940, %v3245
    %v3252 = vunpack.c.l.b16 %v2935
    %v3253 = vunpack.c.l.b16 %v2936
    %v3254 = vunpack.c.l.b16 %v2937
    %v3255 = vunpack.c.l.b16 %v2938
    %v3256 = vpack.c.b16 %v3253, %v3252
    %v3257 = vpack.c.b16 %v3255, %v3254
    %v3261 = vsel %vm376, %v3241, 0
    %3263 = vmatprep.subr.bf16.mxu0 0
    %3264 = vmatpush1.bf16.msra.mxu0 0
    %3265 = vmatprep.subr.bf16.mxu0 0
    %3266 = vmatpush1.bf16.msra.mxu0 0
    %3267 = vmatprep.subr.bf16.mxu0 0
    %3268 = vmatpush1.bf16.msra.mxu0 0
    %3269 = vmatprep.subr.bf16.mxu0 0
    %3270 = vmatpush1.bf16.msra.mxu0 0
    %3271 = vmatprep.subr.bf16.mxu0 0
    %3272 = vmatpush1.bf16.msra.mxu0 0
    %3273 = vmatprep.subr.bf16.mxu0 0
    %3274 = vmatpush1.bf16.msra.mxu0 0
    %3275 = vmatprep.subr.bf16.mxu0 0
    %3276 = vmatpush1.bf16.msra.mxu0 %v3257
    %3277 = vmatprep.subr.bf16.mxu0 0
    %3278 = vmatpush1.bf16.msra.mxu0 %v3256
    %3279 = vmatprep.subr.bf16.mxu0 0
    %3280 = vmatpush2.bf16.msra.mxu0 0
    %3281 = vmatprep.subr.bf16.mxu0 0
    %3282 = vmatpush2.bf16.msra.mxu0 0
    %3283 = vmatprep.subr.bf16.mxu0 0
    %3284 = vmatpush2.bf16.msra.mxu0 0
    %3285 = vmatprep.subr.bf16.mxu0 0
    %3286 = vmatpush2.bf16.msra.mxu0 0
    %3287 = vmatprep.subr.bf16.mxu0 0
    %3288 = vmatpush2.bf16.msra.mxu0 0
    %3289 = vmatprep.subr.bf16.mxu0 0
    %3290 = vmatpush2.bf16.msra.mxu0 0
    %3291 = vmatprep.subr.bf16.mxu0 0
    %3292 = vmatpush2.bf16.msra.mxu0 0
    %3293 = vmatprep.subr.bf16.mxu0 0
    %3294 = vmatpush2.bf16.msra.mxu0 0
    %3295 = vmatprep.mubr.bf16.mxu0 0
    %3296 = vmatmul.mubr.bf16.gmra.mxu0 %v3261
    %v3297 = vpop.f32.mrf.mxu0
    %v3298 = vadd.f32 %v3246, %v3297
    %v3299 = vpop.f32.mrf.mxu0
    %v3300 = vpop.f32.mrf.mxu0
    %v3301 = vadd.f32 %v3246, %v3300
    %v3302 = vpop.f32.mrf.mxu0
    %3303 = vdwg.mxu0
    %v3304 = vmul.f32 %v3298, 0.5
    %v3305 = vmul.f32 %v3301, 0.5
    %3307 = vrot.lane.b32.xlu0 %v3298, 96
    %v3308 = vpop.permute.xlu0 %3307
    %v3310 = vmul.f32 %v3304, %v3308
    %v3312 = vsel %vm376, %v3310, 0
    %3314 = vmatprep.subr.mxu0 0.0
    %3315 = vmatpush1.msra.mxu0 0.0
    %3316 = vmatprep.subr.mxu0 0.0
    %3317 = vmatpush1.msra.mxu0 0.0
    %3318 = vmatprep.subr.mxu0 0.0
    %3319 = vmatpush1.msra.mxu0 0.0
    %3320 = vmatprep.subr.mxu0 0.0
    %3321 = vmatpush1.msra.mxu0 0.0
    %3322 = vmatprep.subr.mxu0 0.0
    %3323 = vmatpush1.msra.mxu0 0.0
    %3324 = vmatprep.subr.mxu0 0.0
    %3325 = vmatpush1.msra.mxu0 0.0
    %3326 = vmatprep.subr.mxu0 0.0
    %3327 = vmatpush1.msra.mxu0 0.0
    %3328 = vmatprep.subr.mxu0 0.0
    %3329 = vmatpush1.msra.mxu0 0.0
    %3330 = vmatprep.subr.mxu0 0.0
    %3331 = vmatpush1.msra.mxu0 0.0
    %3332 = vmatprep.subr.mxu0 0.0
    %3333 = vmatpush1.msra.mxu0 0.0
    %3334 = vmatprep.subr.mxu0 0.0
    %3335 = vmatpush1.msra.mxu0 0.0
    %3336 = vmatprep.subr.mxu0 0.0
    %3337 = vmatpush1.msra.mxu0 0.0
    %3338 = vmatprep.subr.mxu0 0.0
    %3339 = vmatpush1.msra.mxu0 %v49
    %3340 = vmatprep.subr.mxu0 0.0
    %3341 = vmatpush1.msra.mxu0 %v48
    %3342 = vmatprep.subr.mxu0 0.0
    %3343 = vmatpush1.msra.mxu0 %v47
    %3344 = vmatprep.subr.mxu0 0.0
    %3345 = vmatpush1.msra.mxu0 %v46
    %3346 = vmatprep.subr.mxu0 0.0
    %3347 = vmatpush2.msra.mxu0 0.0
    %3348 = vmatprep.subr.mxu0 0.0
    %3349 = vmatpush2.msra.mxu0 0.0
    %3350 = vmatprep.subr.mxu0 0.0
    %3351 = vmatpush2.msra.mxu0 0.0
    %3352 = vmatprep.subr.mxu0 0.0
    %3353 = vmatpush2.msra.mxu0 0.0
    %3354 = vmatprep.subr.mxu0 0.0
    %3355 = vmatpush2.msra.mxu0 0.0
    %3356 = vmatprep.subr.mxu0 0.0
    %3357 = vmatpush2.msra.mxu0 0.0
    %3358 = vmatprep.subr.mxu0 0.0
    %3359 = vmatpush2.msra.mxu0 0.0
    %3360 = vmatprep.subr.mxu0 0.0
    %3361 = vmatpush2.msra.mxu0 0.0
    %3362 = vmatprep.subr.mxu0 0.0
    %3363 = vmatpush2.msra.mxu0 0.0
    %3364 = vmatprep.subr.mxu0 0.0
    %3365 = vmatpush2.msra.mxu0 0.0
    %3366 = vmatprep.subr.mxu0 0.0
    %3367 = vmatpush2.msra.mxu0 0.0
    %3368 = vmatprep.subr.mxu0 0.0
    %3369 = vmatpush2.msra.mxu0 0.0
    %3370 = vmatprep.subr.mxu0 0.0
    %3371 = vmatpush2.msra.mxu0 0.0
    %3372 = vmatprep.subr.mxu0 0.0
    %3373 = vmatpush2.msra.mxu0 0.0
    %3374 = vmatprep.subr.mxu0 0.0
    %3375 = vmatpush2.msra.mxu0 0.0
    %3376 = vmatprep.subr.mxu0 0.0
    %3377 = vmatpush2.msra.mxu0 0.0
    %3378 = vmatprep.mubr.f32.mxu0 0.0
    %3379 = vmatmul.mubr.f32.gmra.mxu0 %v3312
    %v3380 = vpop.f32.mrf.mxu0
    %v3381 = vadd.f32 0.0, %v3380
    %v3382 = vpop.f32.mrf.mxu0
    %3383 = vdwg.mxu0
    %3385 = vrot.lane.b32.xlu0 %v3301, 96
    %v3386 = vpop.permute.xlu0 %3385
    %v3388 = vmul.f32 %v3304, %v3386
    %v3390 = vsel %vm376, %v3388, 0
    %3392 = vmatprep.subr.mxu0 0.0
    %3393 = vmatpush1.msra.mxu0 0.0
    %3394 = vmatprep.subr.mxu0 0.0
    %3395 = vmatpush1.msra.mxu0 0.0
    %3396 = vmatprep.subr.mxu0 0.0
    %3397 = vmatpush1.msra.mxu0 0.0
    %3398 = vmatprep.subr.mxu0 0.0
    %3399 = vmatpush1.msra.mxu0 0.0
    %3400 = vmatprep.subr.mxu0 0.0
    %3401 = vmatpush1.msra.mxu0 0.0
    %3402 = vmatprep.subr.mxu0 0.0
    %3403 = vmatpush1.msra.mxu0 0.0
    %3404 = vmatprep.subr.mxu0 0.0
    %3405 = vmatpush1.msra.mxu0 0.0
    %3406 = vmatprep.subr.mxu0 0.0
    %3407 = vmatpush1.msra.mxu0 0.0
    %3408 = vmatprep.subr.mxu0 0.0
    %3409 = vmatpush1.msra.mxu0 0.0
    %3410 = vmatprep.subr.mxu0 0.0
    %3411 = vmatpush1.msra.mxu0 0.0
    %3412 = vmatprep.subr.mxu0 0.0
    %3413 = vmatpush1.msra.mxu0 0.0
    %3414 = vmatprep.subr.mxu0 0.0
    %3415 = vmatpush1.msra.mxu0 0.0
    %3416 = vmatprep.subr.mxu0 0.0
    %3417 = vmatpush1.msra.mxu0 %v49
    %3418 = vmatprep.subr.mxu0 0.0
    %3419 = vmatpush1.msra.mxu0 %v48
    %3420 = vmatprep.subr.mxu0 0.0
    %3421 = vmatpush1.msra.mxu0 %v47
    %3422 = vmatprep.subr.mxu0 0.0
    %3423 = vmatpush1.msra.mxu0 %v46
    %3424 = vmatprep.subr.mxu0 0.0
    %3425 = vmatpush2.msra.mxu0 0.0
    %3426 = vmatprep.subr.mxu0 0.0
    %3427 = vmatpush2.msra.mxu0 0.0
    %3428 = vmatprep.subr.mxu0 0.0
    %3429 = vmatpush2.msra.mxu0 0.0
    %3430 = vmatprep.subr.mxu0 0.0
    %3431 = vmatpush2.msra.mxu0 0.0
    %3432 = vmatprep.subr.mxu0 0.0
    %3433 = vmatpush2.msra.mxu0 0.0
    %3434 = vmatprep.subr.mxu0 0.0
    %3435 = vmatpush2.msra.mxu0 0.0
    %3436 = vmatprep.subr.mxu0 0.0
    %3437 = vmatpush2.msra.mxu0 0.0
    %3438 = vmatprep.subr.mxu0 0.0
    %3439 = vmatpush2.msra.mxu0 0.0
    %3440 = vmatprep.subr.mxu0 0.0
    %3441 = vmatpush2.msra.mxu0 0.0
    %3442 = vmatprep.subr.mxu0 0.0
    %3443 = vmatpush2.msra.mxu0 0.0
    %3444 = vmatprep.subr.mxu0 0.0
    %3445 = vmatpush2.msra.mxu0 0.0
    %3446 = vmatprep.subr.mxu0 0.0
    %3447 = vmatpush2.msra.mxu0 0.0
    %3448 = vmatprep.subr.mxu0 0.0
    %3449 = vmatpush2.msra.mxu0 0.0
    %3450 = vmatprep.subr.mxu0 0.0
    %3451 = vmatpush2.msra.mxu0 0.0
    %3452 = vmatprep.subr.mxu0 0.0
    %3453 = vmatpush2.msra.mxu0 0.0
    %3454 = vmatprep.subr.mxu0 0.0
    %3455 = vmatpush2.msra.mxu0 0.0
    %3456 = vmatprep.mubr.f32.mxu0 0.0
    %3457 = vmatmul.mubr.f32.gmra.mxu0 %v3390
    %v3458 = vpop.f32.mrf.mxu0
    %v3459 = vadd.f32 0.0, %v3458
    %v3460 = vpop.f32.mrf.mxu0
    %3461 = vdwg.mxu0
    %v3462 = vmul.f32 %v3305, %v3308
    %v3464 = vsel %vm376, %v3462, 0
    %3466 = vmatprep.subr.mxu0 0.0
    %3467 = vmatpush1.msra.mxu0 0.0
    %3468 = vmatprep.subr.mxu0 0.0
    %3469 = vmatpush1.msra.mxu0 0.0
    %3470 = vmatprep.subr.mxu0 0.0
    %3471 = vmatpush1.msra.mxu0 0.0
    %3472 = vmatprep.subr.mxu0 0.0
    %3473 = vmatpush1.msra.mxu0 0.0
    %3474 = vmatprep.subr.mxu0 0.0
    %3475 = vmatpush1.msra.mxu0 0.0
    %3476 = vmatprep.subr.mxu0 0.0
    %3477 = vmatpush1.msra.mxu0 0.0
    %3478 = vmatprep.subr.mxu0 0.0
    %3479 = vmatpush1.msra.mxu0 0.0
    %3480 = vmatprep.subr.mxu0 0.0
    %3481 = vmatpush1.msra.mxu0 0.0
    %3482 = vmatprep.subr.mxu0 0.0
    %3483 = vmatpush1.msra.mxu0 0.0
    %3484 = vmatprep.subr.mxu0 0.0
    %3485 = vmatpush1.msra.mxu0 0.0
    %3486 = vmatprep.subr.mxu0 0.0
    %3487 = vmatpush1.msra.mxu0 0.0
    %3488 = vmatprep.subr.mxu0 0.0
    %3489 = vmatpush1.msra.mxu0 0.0
    %3490 = vmatprep.subr.mxu0 0.0
    %3491 = vmatpush1.msra.mxu0 %v49
    %3492 = vmatprep.subr.mxu0 0.0
    %3493 = vmatpush1.msra.mxu0 %v48
    %3494 = vmatprep.subr.mxu0 0.0
    %3495 = vmatpush1.msra.mxu0 %v47
    %3496 = vmatprep.subr.mxu0 0.0
    %3497 = vmatpush1.msra.mxu0 %v46
    %3498 = vmatprep.subr.mxu0 0.0
    %3499 = vmatpush2.msra.mxu0 0.0
    %3500 = vmatprep.subr.mxu0 0.0
    %3501 = vmatpush2.msra.mxu0 0.0
    %3502 = vmatprep.subr.mxu0 0.0
    %3503 = vmatpush2.msra.mxu0 0.0
    %3504 = vmatprep.subr.mxu0 0.0
    %3505 = vmatpush2.msra.mxu0 0.0
    %3506 = vmatprep.subr.mxu0 0.0
    %3507 = vmatpush2.msra.mxu0 0.0
    %3508 = vmatprep.subr.mxu0 0.0
    %3509 = vmatpush2.msra.mxu0 0.0
    %3510 = vmatprep.subr.mxu0 0.0
    %3511 = vmatpush2.msra.mxu0 0.0
    %3512 = vmatprep.subr.mxu0 0.0
    %3513 = vmatpush2.msra.mxu0 0.0
    %3514 = vmatprep.subr.mxu0 0.0
    %3515 = vmatpush2.msra.mxu0 0.0
    %3516 = vmatprep.subr.mxu0 0.0
    %3517 = vmatpush2.msra.mxu0 0.0
    %3518 = vmatprep.subr.mxu0 0.0
    %3519 = vmatpush2.msra.mxu0 0.0
    %3520 = vmatprep.subr.mxu0 0.0
    %3521 = vmatpush2.msra.mxu0 0.0
    %3522 = vmatprep.subr.mxu0 0.0
    %3523 = vmatpush2.msra.mxu0 0.0
    %3524 = vmatprep.subr.mxu0 0.0
    %3525 = vmatpush2.msra.mxu0 0.0
    %3526 = vmatprep.subr.mxu0 0.0
    %3527 = vmatpush2.msra.mxu0 0.0
    %3528 = vmatprep.subr.mxu0 0.0
    %3529 = vmatpush2.msra.mxu0 0.0
    %3530 = vmatprep.mubr.f32.mxu0 0.0
    %3531 = vmatmul.mubr.f32.gmra.mxu0 %v3464
    %v3532 = vpop.f32.mrf.mxu0
    %v3533 = vadd.f32 0.0, %v3532
    %v3534 = vpop.f32.mrf.mxu0
    %3535 = vdwg.mxu0
    %v3536 = vmul.f32 %v3305, %v3386
    %v3538 = vsel %vm376, %v3536, 0
    %3540 = vmatprep.subr.mxu0 0.0
    %3541 = vmatpush1.msra.mxu0 0.0
    %3542 = vmatprep.subr.mxu0 0.0
    %3543 = vmatpush1.msra.mxu0 0.0
    %3544 = vmatprep.subr.mxu0 0.0
    %3545 = vmatpush1.msra.mxu0 0.0
    %3546 = vmatprep.subr.mxu0 0.0
    %3547 = vmatpush1.msra.mxu0 0.0
    %3548 = vmatprep.subr.mxu0 0.0
    %3549 = vmatpush1.msra.mxu0 0.0
    %3550 = vmatprep.subr.mxu0 0.0
    %3551 = vmatpush1.msra.mxu0 0.0
    %3552 = vmatprep.subr.mxu0 0.0
    %3553 = vmatpush1.msra.mxu0 0.0
    %3554 = vmatprep.subr.mxu0 0.0
    %3555 = vmatpush1.msra.mxu0 0.0
    %3556 = vmatprep.subr.mxu0 0.0
    %3557 = vmatpush1.msra.mxu0 0.0
    %3558 = vmatprep.subr.mxu0 0.0
    %3559 = vmatpush1.msra.mxu0 0.0
    %3560 = vmatprep.subr.mxu0 0.0
    %3561 = vmatpush1.msra.mxu0 0.0
    %3562 = vmatprep.subr.mxu0 0.0
    %3563 = vmatpush1.msra.mxu0 0.0
    %3564 = vmatprep.subr.mxu0 0.0
    %3565 = vmatpush1.msra.mxu0 %v49
    %3566 = vmatprep.subr.mxu0 0.0
    %3567 = vmatpush1.msra.mxu0 %v48
    %3568 = vmatprep.subr.mxu0 0.0
    %3569 = vmatpush1.msra.mxu0 %v47
    %3570 = vmatprep.subr.mxu0 0.0
    %3571 = vmatpush1.msra.mxu0 %v46
    %3572 = vmatprep.subr.mxu0 0.0
    %3573 = vmatpush2.msra.mxu0 0.0
    %3574 = vmatprep.subr.mxu0 0.0
    %3575 = vmatpush2.msra.mxu0 0.0
    %3576 = vmatprep.subr.mxu0 0.0
    %3577 = vmatpush2.msra.mxu0 0.0
    %3578 = vmatprep.subr.mxu0 0.0
    %3579 = vmatpush2.msra.mxu0 0.0
    %3580 = vmatprep.subr.mxu0 0.0
    %3581 = vmatpush2.msra.mxu0 0.0
    %3582 = vmatprep.subr.mxu0 0.0
    %3583 = vmatpush2.msra.mxu0 0.0
    %3584 = vmatprep.subr.mxu0 0.0
    %3585 = vmatpush2.msra.mxu0 0.0
    %3586 = vmatprep.subr.mxu0 0.0
    %3587 = vmatpush2.msra.mxu0 0.0
    %3588 = vmatprep.subr.mxu0 0.0
    %3589 = vmatpush2.msra.mxu0 0.0
    %3590 = vmatprep.subr.mxu0 0.0
    %3591 = vmatpush2.msra.mxu0 0.0
    %3592 = vmatprep.subr.mxu0 0.0
    %3593 = vmatpush2.msra.mxu0 0.0
    %3594 = vmatprep.subr.mxu0 0.0
    %3595 = vmatpush2.msra.mxu0 0.0
    %3596 = vmatprep.subr.mxu0 0.0
    %3597 = vmatpush2.msra.mxu0 0.0
    %3598 = vmatprep.subr.mxu0 0.0
    %3599 = vmatpush2.msra.mxu0 0.0
    %3600 = vmatprep.subr.mxu0 0.0
    %3601 = vmatpush2.msra.mxu0 0.0
    %3602 = vmatprep.subr.mxu0 0.0
    %3603 = vmatpush2.msra.mxu0 0.0
    %3604 = vmatprep.mubr.f32.mxu0 0.0
    %3605 = vmatmul.mubr.f32.gmra.mxu0 %v3538
    %v3606 = vpop.f32.mrf.mxu0
    %v3607 = vadd.f32 0.0, %v3606
    %v3608 = vpop.f32.mrf.mxu0
    %3609 = vdwg.mxu0
    %v3610 = vmax.f32 %v3381, %v3459
    %v3611 = vsub.f32 %v3381, %v3610
    %v3612 = vmul.f32 %v3611, 1.442695
    %v3613 = vpow.pop %v3612
    %v3614 = vsub.f32 %v3459, %v3610
    %v3615 = vmul.f32 %v3614, 1.442695
    %v3616 = vpow.pop %v3615
    %v3617 = vadd.f32 %v3613, %v3616
    %v3618 = vrcp.pop %v3617
    %v3619 = vmul.f32 %v3613, %v3618
    %v3621 = vsel %vm737, %v3619, 0
    %3623 = vmatprep.subr.mxu0 0.0
    %3624 = vmatpush1.msra.mxu0 0.0
    %3625 = vmatprep.subr.mxu0 0.0
    %3626 = vmatpush1.msra.mxu0 0.0
    %3627 = vmatprep.subr.mxu0 0.0
    %3628 = vmatpush1.msra.mxu0 0.0
    %3629 = vmatprep.subr.mxu0 0.0
    %3630 = vmatpush1.msra.mxu0 0.0
    %3631 = vmatprep.subr.mxu0 0.0
    %3632 = vmatpush1.msra.mxu0 0.0
    %3633 = vmatprep.subr.mxu0 0.0
    %3634 = vmatpush1.msra.mxu0 0.0
    %3635 = vmatprep.subr.mxu0 0.0
    %3636 = vmatpush1.msra.mxu0 0.0
    %3637 = vmatprep.subr.mxu0 0.0
    %3638 = vmatpush1.msra.mxu0 0.0
    %3639 = vmatprep.subr.mxu0 0.0
    %3640 = vmatpush1.msra.mxu0 0.0
    %3641 = vmatprep.subr.mxu0 0.0
    %3642 = vmatpush1.msra.mxu0 0.0
    %3643 = vmatprep.subr.mxu0 0.0
    %3644 = vmatpush1.msra.mxu0 0.0
    %3645 = vmatprep.subr.mxu0 0.0
    %3646 = vmatpush1.msra.mxu0 0.0
    %3647 = vmatprep.subr.mxu0 0.0
    %3648 = vmatpush1.msra.mxu0 0.0
    %3649 = vmatprep.subr.mxu0 0.0
    %3650 = vmatpush1.msra.mxu0 0.0
    %3651 = vmatprep.subr.mxu0 0.0
    %3652 = vmatpush1.msra.mxu0 0.0
    %3653 = vmatprep.subr.mxu0 0.0
    %3654 = vmatpush1.msra.mxu0 %v50
    %3655 = vmatprep.subr.mxu0 0.0
    %3656 = vmatpush2.msra.mxu0 0.0
    %3657 = vmatprep.subr.mxu0 0.0
    %3658 = vmatpush2.msra.mxu0 0.0
    %3659 = vmatprep.subr.mxu0 0.0
    %3660 = vmatpush2.msra.mxu0 0.0
    %3661 = vmatprep.subr.mxu0 0.0
    %3662 = vmatpush2.msra.mxu0 0.0
    %3663 = vmatprep.subr.mxu0 0.0
    %3664 = vmatpush2.msra.mxu0 0.0
    %3665 = vmatprep.subr.mxu0 0.0
    %3666 = vmatpush2.msra.mxu0 0.0
    %3667 = vmatprep.subr.mxu0 0.0
    %3668 = vmatpush2.msra.mxu0 0.0
    %3669 = vmatprep.subr.mxu0 0.0
    %3670 = vmatpush2.msra.mxu0 0.0
    %3671 = vmatprep.subr.mxu0 0.0
    %3672 = vmatpush2.msra.mxu0 0.0
    %3673 = vmatprep.subr.mxu0 0.0
    %3674 = vmatpush2.msra.mxu0 0.0
    %3675 = vmatprep.subr.mxu0 0.0
    %3676 = vmatpush2.msra.mxu0 0.0
    %3677 = vmatprep.subr.mxu0 0.0
    %3678 = vmatpush2.msra.mxu0 0.0
    %3679 = vmatprep.subr.mxu0 0.0
    %3680 = vmatpush2.msra.mxu0 0.0
    %3681 = vmatprep.subr.mxu0 0.0
    %3682 = vmatpush2.msra.mxu0 0.0
    %3683 = vmatprep.subr.mxu0 0.0
    %3684 = vmatpush2.msra.mxu0 0.0
    %3685 = vmatprep.subr.mxu0 0.0
    %3686 = vmatpush2.msra.mxu0 0.0
    %3687 = vmatprep.mubr.f32.mxu0 0.0
    %3688 = vmatmul.mubr.f32.gmra.mxu0 %v3621
    %v3689 = vpop.f32.mrf.mxu0
    %v3690 = vadd.f32 0.0, %v3689
    %v3691 = vpop.f32.mrf.mxu0
    %3692 = vdwg.mxu0
    %3693 = vrot.lane.b32.xlu0 %v3298, 64
    %v3694 = vpop.permute.xlu0 %3693
    %v3696 = vmul.f32 %v3690, %v3694
    %v3697 = vmul.f32 %v3616, %v3618
    %v3699 = vsel %vm737, %v3697, 0
    %3701 = vmatprep.subr.mxu0 0.0
    %3702 = vmatpush1.msra.mxu0 0.0
    %3703 = vmatprep.subr.mxu0 0.0
    %3704 = vmatpush1.msra.mxu0 0.0
    %3705 = vmatprep.subr.mxu0 0.0
    %3706 = vmatpush1.msra.mxu0 0.0
    %3707 = vmatprep.subr.mxu0 0.0
    %3708 = vmatpush1.msra.mxu0 0.0
    %3709 = vmatprep.subr.mxu0 0.0
    %3710 = vmatpush1.msra.mxu0 0.0
    %3711 = vmatprep.subr.mxu0 0.0
    %3712 = vmatpush1.msra.mxu0 0.0
    %3713 = vmatprep.subr.mxu0 0.0
    %3714 = vmatpush1.msra.mxu0 0.0
    %3715 = vmatprep.subr.mxu0 0.0
    %3716 = vmatpush1.msra.mxu0 0.0
    %3717 = vmatprep.subr.mxu0 0.0
    %3718 = vmatpush1.msra.mxu0 0.0
    %3719 = vmatprep.subr.mxu0 0.0
    %3720 = vmatpush1.msra.mxu0 0.0
    %3721 = vmatprep.subr.mxu0 0.0
    %3722 = vmatpush1.msra.mxu0 0.0
    %3723 = vmatprep.subr.mxu0 0.0
    %3724 = vmatpush1.msra.mxu0 0.0
    %3725 = vmatprep.subr.mxu0 0.0
    %3726 = vmatpush1.msra.mxu0 0.0
    %3727 = vmatprep.subr.mxu0 0.0
    %3728 = vmatpush1.msra.mxu0 0.0
    %3729 = vmatprep.subr.mxu0 0.0
    %3730 = vmatpush1.msra.mxu0 0.0
    %3731 = vmatprep.subr.mxu0 0.0
    %3732 = vmatpush1.msra.mxu0 %v50
    %3733 = vmatprep.subr.mxu0 0.0
    %3734 = vmatpush2.msra.mxu0 0.0
    %3735 = vmatprep.subr.mxu0 0.0
    %3736 = vmatpush2.msra.mxu0 0.0
    %3737 = vmatprep.subr.mxu0 0.0
    %3738 = vmatpush2.msra.mxu0 0.0
    %3739 = vmatprep.subr.mxu0 0.0
    %3740 = vmatpush2.msra.mxu0 0.0
    %3741 = vmatprep.subr.mxu0 0.0
    %3742 = vmatpush2.msra.mxu0 0.0
    %3743 = vmatprep.subr.mxu0 0.0
    %3744 = vmatpush2.msra.mxu0 0.0
    %3745 = vmatprep.subr.mxu0 0.0
    %3746 = vmatpush2.msra.mxu0 0.0
    %3747 = vmatprep.subr.mxu0 0.0
    %3748 = vmatpush2.msra.mxu0 0.0
    %3749 = vmatprep.subr.mxu0 0.0
    %3750 = vmatpush2.msra.mxu0 0.0
    %3751 = vmatprep.subr.mxu0 0.0
    %3752 = vmatpush2.msra.mxu0 0.0
    %3753 = vmatprep.subr.mxu0 0.0
    %3754 = vmatpush2.msra.mxu0 0.0
    %3755 = vmatprep.subr.mxu0 0.0
    %3756 = vmatpush2.msra.mxu0 0.0
    %3757 = vmatprep.subr.mxu0 0.0
    %3758 = vmatpush2.msra.mxu0 0.0
    %3759 = vmatprep.subr.mxu0 0.0
    %3760 = vmatpush2.msra.mxu0 0.0
    %3761 = vmatprep.subr.mxu0 0.0
    %3762 = vmatpush2.msra.mxu0 0.0
    %3763 = vmatprep.subr.mxu0 0.0
    %3764 = vmatpush2.msra.mxu0 0.0
    %3765 = vmatprep.mubr.f32.mxu0 0.0
    %3766 = vmatmul.mubr.f32.gmra.mxu0 %v3699
    %v3767 = vpop.f32.mrf.mxu0
    %v3768 = vadd.f32 0.0, %v3767
    %v3769 = vpop.f32.mrf.mxu0
    %3770 = vdwg.mxu0
    %3771 = vrot.lane.b32.xlu0 %v3301, 64
    %v3772 = vpop.permute.xlu0 %3771
    %v3774 = vmul.f32 %v3768, %v3772
    %v3775 = vadd.f32 %v3696, %v3774
    %v3776 = vmax.f32 %v3533, %v3607
    %v3777 = vsub.f32 %v3533, %v3776
    %v3778 = vmul.f32 %v3777, 1.442695
    %v3779 = vpow.pop %v3778
    %v3780 = vsub.f32 %v3607, %v3776
    %v3781 = vmul.f32 %v3780, 1.442695
    %v3782 = vpow.pop %v3781
    %v3783 = vadd.f32 %v3779, %v3782
    %v3784 = vrcp.pop %v3783
    %v3785 = vmul.f32 %v3779, %v3784
    %v3787 = vsel %vm737, %v3785, 0
    %3789 = vmatprep.subr.mxu0 0.0
    %3790 = vmatpush1.msra.mxu0 0.0
    %3791 = vmatprep.subr.mxu0 0.0
    %3792 = vmatpush1.msra.mxu0 0.0
    %3793 = vmatprep.subr.mxu0 0.0
    %3794 = vmatpush1.msra.mxu0 0.0
    %3795 = vmatprep.subr.mxu0 0.0
    %3796 = vmatpush1.msra.mxu0 0.0
    %3797 = vmatprep.subr.mxu0 0.0
    %3798 = vmatpush1.msra.mxu0 0.0
    %3799 = vmatprep.subr.mxu0 0.0
    %3800 = vmatpush1.msra.mxu0 0.0
    %3801 = vmatprep.subr.mxu0 0.0
    %3802 = vmatpush1.msra.mxu0 0.0
    %3803 = vmatprep.subr.mxu0 0.0
    %3804 = vmatpush1.msra.mxu0 0.0
    %3805 = vmatprep.subr.mxu0 0.0
    %3806 = vmatpush1.msra.mxu0 0.0
    %3807 = vmatprep.subr.mxu0 0.0
    %3808 = vmatpush1.msra.mxu0 0.0
    %3809 = vmatprep.subr.mxu0 0.0
    %3810 = vmatpush1.msra.mxu0 0.0
    %3811 = vmatprep.subr.mxu0 0.0
    %3812 = vmatpush1.msra.mxu0 0.0
    %3813 = vmatprep.subr.mxu0 0.0
    %3814 = vmatpush1.msra.mxu0 0.0
    %3815 = vmatprep.subr.mxu0 0.0
    %3816 = vmatpush1.msra.mxu0 0.0
    %3817 = vmatprep.subr.mxu0 0.0
    %3818 = vmatpush1.msra.mxu0 0.0
    %3819 = vmatprep.subr.mxu0 0.0
    %3820 = vmatpush1.msra.mxu0 %v50
    %3821 = vmatprep.subr.mxu0 0.0
    %3822 = vmatpush2.msra.mxu0 0.0
    %3823 = vmatprep.subr.mxu0 0.0
    %3824 = vmatpush2.msra.mxu0 0.0
    %3825 = vmatprep.subr.mxu0 0.0
    %3826 = vmatpush2.msra.mxu0 0.0
    %3827 = vmatprep.subr.mxu0 0.0
    %3828 = vmatpush2.msra.mxu0 0.0
    %3829 = vmatprep.subr.mxu0 0.0
    %3830 = vmatpush2.msra.mxu0 0.0
    %3831 = vmatprep.subr.mxu0 0.0
    %3832 = vmatpush2.msra.mxu0 0.0
    %3833 = vmatprep.subr.mxu0 0.0
    %3834 = vmatpush2.msra.mxu0 0.0
    %3835 = vmatprep.subr.mxu0 0.0
    %3836 = vmatpush2.msra.mxu0 0.0
    %3837 = vmatprep.subr.mxu0 0.0
    %3838 = vmatpush2.msra.mxu0 0.0
    %3839 = vmatprep.subr.mxu0 0.0
    %3840 = vmatpush2.msra.mxu0 0.0
    %3841 = vmatprep.subr.mxu0 0.0
    %3842 = vmatpush2.msra.mxu0 0.0
    %3843 = vmatprep.subr.mxu0 0.0
    %3844 = vmatpush2.msra.mxu0 0.0
    %3845 = vmatprep.subr.mxu0 0.0
    %3846 = vmatpush2.msra.mxu0 0.0
    %3847 = vmatprep.subr.mxu0 0.0
    %3848 = vmatpush2.msra.mxu0 0.0
    %3849 = vmatprep.subr.mxu0 0.0
    %3850 = vmatpush2.msra.mxu0 0.0
    %3851 = vmatprep.subr.mxu0 0.0
    %3852 = vmatpush2.msra.mxu0 0.0
    %3853 = vmatprep.mubr.f32.mxu0 0.0
    %3854 = vmatmul.mubr.f32.gmra.mxu0 %v3787
    %v3855 = vpop.f32.mrf.mxu0
    %v3856 = vadd.f32 0.0, %v3855
    %v3857 = vpop.f32.mrf.mxu0
    %3858 = vdwg.mxu0
    %v3859 = vmul.f32 %v3856, %v3694
    %v3860 = vmul.f32 %v3782, %v3784
    %v3862 = vsel %vm737, %v3860, 0
    %3864 = vmatprep.subr.mxu0 0.0
    %3865 = vmatpush1.msra.mxu0 0.0
    %3866 = vmatprep.subr.mxu0 0.0
    %3867 = vmatpush1.msra.mxu0 0.0
    %3868 = vmatprep.subr.mxu0 0.0
    %3869 = vmatpush1.msra.mxu0 0.0
    %3870 = vmatprep.subr.mxu0 0.0
    %3871 = vmatpush1.msra.mxu0 0.0
    %3872 = vmatprep.subr.mxu0 0.0
    %3873 = vmatpush1.msra.mxu0 0.0
    %3874 = vmatprep.subr.mxu0 0.0
    %3875 = vmatpush1.msra.mxu0 0.0
    %3876 = vmatprep.subr.mxu0 0.0
    %3877 = vmatpush1.msra.mxu0 0.0
    %3878 = vmatprep.subr.mxu0 0.0
    %3879 = vmatpush1.msra.mxu0 0.0
    %3880 = vmatprep.subr.mxu0 0.0
    %3881 = vmatpush1.msra.mxu0 0.0
    %3882 = vmatprep.subr.mxu0 0.0
    %3883 = vmatpush1.msra.mxu0 0.0
    %3884 = vmatprep.subr.mxu0 0.0
    %3885 = vmatpush1.msra.mxu0 0.0
    %3886 = vmatprep.subr.mxu0 0.0
    %3887 = vmatpush1.msra.mxu0 0.0
    %3888 = vmatprep.subr.mxu0 0.0
    %3889 = vmatpush1.msra.mxu0 0.0
    %3890 = vmatprep.subr.mxu0 0.0
    %3891 = vmatpush1.msra.mxu0 0.0
    %3892 = vmatprep.subr.mxu0 0.0
    %3893 = vmatpush1.msra.mxu0 0.0
    %3894 = vmatprep.subr.mxu0 0.0
    %3895 = vmatpush1.msra.mxu0 %v50
    %3896 = vmatprep.subr.mxu0 0.0
    %3897 = vmatpush2.msra.mxu0 0.0
    %3898 = vmatprep.subr.mxu0 0.0
    %3899 = vmatpush2.msra.mxu0 0.0
    %3900 = vmatprep.subr.mxu0 0.0
    %3901 = vmatpush2.msra.mxu0 0.0
    %3902 = vmatprep.subr.mxu0 0.0
    %3903 = vmatpush2.msra.mxu0 0.0
    %3904 = vmatprep.subr.mxu0 0.0
    %3905 = vmatpush2.msra.mxu0 0.0
    %3906 = vmatprep.subr.mxu0 0.0
    %3907 = vmatpush2.msra.mxu0 0.0
    %3908 = vmatprep.subr.mxu0 0.0
    %3909 = vmatpush2.msra.mxu0 0.0
    %3910 = vmatprep.subr.mxu0 0.0
    %3911 = vmatpush2.msra.mxu0 0.0
    %3912 = vmatprep.subr.mxu0 0.0
    %3913 = vmatpush2.msra.mxu0 0.0
    %3914 = vmatprep.subr.mxu0 0.0
    %3915 = vmatpush2.msra.mxu0 0.0
    %3916 = vmatprep.subr.mxu0 0.0
    %3917 = vmatpush2.msra.mxu0 0.0
    %3918 = vmatprep.subr.mxu0 0.0
    %3919 = vmatpush2.msra.mxu0 0.0
    %3920 = vmatprep.subr.mxu0 0.0
    %3921 = vmatpush2.msra.mxu0 0.0
    %3922 = vmatprep.subr.mxu0 0.0
    %3923 = vmatpush2.msra.mxu0 0.0
    %3924 = vmatprep.subr.mxu0 0.0
    %3925 = vmatpush2.msra.mxu0 0.0
    %3926 = vmatprep.subr.mxu0 0.0
    %3927 = vmatpush2.msra.mxu0 0.0
    %3928 = vmatprep.mubr.f32.mxu0 0.0
    %3929 = vmatmul.mubr.f32.gmra.mxu0 %v3862
    %v3930 = vpop.f32.mrf.mxu0
    %v3931 = vadd.f32 0.0, %v3930
    %v3932 = vpop.f32.mrf.mxu0
    %3933 = vdwg.mxu0
    %v3934 = vmul.f32 %v3931, %v3772
    %v3935 = vadd.f32 %v3859, %v3934
    %v3936 = vpack.c.bf16 %v3935, %v3775
    %v3937 = vlaneseq
    %v3938 = vshrl.u32 %v3937, 7
    %v3939 = vsub.s32 0, %v3938
    %v3940 = vrot.slane %v3240, %v3939
    %v3945 = vunpack.c.l.b16 %v2942
    %v3946 = vunpack.c.l.b16 %v2943
    %v3947 = vunpack.c.l.b16 %v2944
    %v3948 = vunpack.c.l.b16 %v2945
    %v3949 = vpack.c.b16 %v3946, %v3945
    %v3950 = vpack.c.b16 %v3948, %v3947
    %v3954 = vsel %vm376, %v3936, 0
    %3956 = vmatprep.subr.bf16.mxu0 0
    %3957 = vmatpush1.bf16.msra.mxu0 0
    %3958 = vmatprep.subr.bf16.mxu0 0
    %3959 = vmatpush1.bf16.msra.mxu0 0
    %3960 = vmatprep.subr.bf16.mxu0 0
    %3961 = vmatpush1.bf16.msra.mxu0 0
    %3962 = vmatprep.subr.bf16.mxu0 0
    %3963 = vmatpush1.bf16.msra.mxu0 0
    %3964 = vmatprep.subr.bf16.mxu0 0
    %3965 = vmatpush1.bf16.msra.mxu0 0
    %3966 = vmatprep.subr.bf16.mxu0 0
    %3967 = vmatpush1.bf16.msra.mxu0 0
    %3968 = vmatprep.subr.bf16.mxu0 0
    %3969 = vmatpush1.bf16.msra.mxu0 %v3950
    %3970 = vmatprep.subr.bf16.mxu0 0
    %3971 = vmatpush1.bf16.msra.mxu0 %v3949
    %3972 = vmatprep.subr.bf16.mxu0 0
    %3973 = vmatpush2.bf16.msra.mxu0 0
    %3974 = vmatprep.subr.bf16.mxu0 0
    %3975 = vmatpush2.bf16.msra.mxu0 0
    %3976 = vmatprep.subr.bf16.mxu0 0
    %3977 = vmatpush2.bf16.msra.mxu0 0
    %3978 = vmatprep.subr.bf16.mxu0 0
    %3979 = vmatpush2.bf16.msra.mxu0 0
    %3980 = vmatprep.subr.bf16.mxu0 0
    %3981 = vmatpush2.bf16.msra.mxu0 0
    %3982 = vmatprep.subr.bf16.mxu0 0
    %3983 = vmatpush2.bf16.msra.mxu0 0
    %3984 = vmatprep.subr.bf16.mxu0 0
    %3985 = vmatpush2.bf16.msra.mxu0 0
    %3986 = vmatprep.subr.bf16.mxu0 0
    %3987 = vmatpush2.bf16.msra.mxu0 0
    %3988 = vmatprep.mubr.bf16.mxu0 0
    %3989 = vmatmul.mubr.bf16.gmra.mxu0 %v3954
    %v3990 = vpop.f32.mrf.mxu0
    %v3991 = vadd.f32 %v3940, %v3990
    %v3992 = vpop.f32.mrf.mxu0
    %v3993 = vpop.f32.mrf.mxu0
    %v3994 = vadd.f32 %v3940, %v3993
    %v3995 = vpop.f32.mrf.mxu0
    %3996 = vdwg.mxu0
    %v3997 = vadd.f32 %v2932, %v3991
    %v3998 = vadd.f32 %v2933, %v3994
    %v3999 = vsel %vm376, %v3997, 0.0
    %4000 = vadd.xlane.f32.xlu0 %v3999
    %v4001 = vpop.xlane.xlu0 %4000
    %v4002 = vsel %vm376, %v3998, 0.0
    %4003 = vadd.xlane.f32.xlu0 %v4002
    %v4004 = vpop.xlane.xlu0 %4003
    %v4005 = vmul.f32 %v4001, %v1123
    %v4006 = vmul.f32 %v4004, %v1123
    %v4007 = vsub.f32 %v3997, %v4005
    %v4008 = vsub.f32 %v3998, %v4006
    %v4009 = vmul.f32 %v4007, %v4007
    %v4010 = vmul.f32 %v4008, %v4008
    %v4011 = vsel %vm376, %v4009, 0.0
    %4012 = vadd.xlane.f32.xlu0 %v4011
    %v4013 = vpop.xlane.xlu0 %4012
    %v4014 = vsel %vm376, %v4010, 0.0
    %4015 = vadd.xlane.f32.xlu0 %v4014
    %v4016 = vpop.xlane.xlu0 %4015
    %v4017 = vmul.f32 %v4013, %v1123
    %v4018 = vmul.f32 %v4016, %v1123
    %v4019 = vadd.f32 %v4017, 1e-05
    %v4020 = vadd.f32 %v4018, 1e-05
    %v4021 = vrsqrt.pop %v4019
    %v4022 = vrsqrt.pop %v4020
    %v4023 = vmul.f32 %v4007, %v4021
    %v4024 = vmul.f32 %v4008, %v4022
    %v4025 = vlaneseq
    %v4026 = vshrl.u32 %v4025, 7
    %v4027 = vsub.s32 1, %v4026
    %v4028 = vrot.slane %v3240, %v4027
    %v4029 = vmul.f32 %v4023, %v4028
    %v4030 = vmul.f32 %v4024, %v4028
    %v4031 = vlaneseq
    %v4032 = vshrl.u32 %v4031, 7
    %v4033 = vsub.s32 2, %v4032
    %v4034 = vrot.slane %v3240, %v4033
    %v4035 = vadd.f32 %v4029, %v4034
    %v4036 = vadd.f32 %v4030, %v4034
    %v4037 = vpack.c.bf16 %v4036, %v4035
    %v4040 = vlaneseq
    %v4041 = vshrl.u32 %v4040, 7
    %v4042 = vsub.s32 0, %v4041
    %v4043 = vrot.slane %v2980, %v4042
    %v4044 = vlaneseq
    %v4045 = vshrl.u32 %v4044, 7
    %v4046 = vsub.s32 1, %v4045
    %v4047 = vrot.slane %v2980, %v4046
    %v4048 = vlaneseq
    %v4049 = vshrl.u32 %v4048, 7
    %v4050 = vsub.s32 2, %v4049
    %v4051 = vrot.slane %v2980, %v4050
    %v4052 = vlaneseq
    %v4053 = vshrl.u32 %v4052, 7
    %v4054 = vsub.s32 3, %v4053
    %v4055 = vrot.slane %v2980, %v4054
    %v4056 = vlaneseq
    %v4057 = vshrl.u32 %v4056, 7
    %v4058 = vsub.s32 4, %v4057
    %v4059 = vrot.slane %v2980, %v4058
    %v4060 = vlaneseq
    %v4061 = vshrl.u32 %v4060, 7
    %v4062 = vsub.s32 5, %v4061
    %v4063 = vrot.slane %v2980, %v4062
    %v4064 = vlaneseq
    %v4065 = vshrl.u32 %v4064, 7
    %v4066 = vsub.s32 6, %v4065
    %v4067 = vrot.slane %v2980, %v4066
    %v4068 = vlaneseq
    %v4069 = vshrl.u32 %v4068, 7
    %v4070 = vsub.s32 7, %v4069
    %v4071 = vrot.slane %v2980, %v4070
    %v4072 = vlaneseq
    %v4073 = vshrl.u32 %v4072, 7
    %v4074 = vsub.s32 0, %v4073
    %v4075 = vrot.slane %v2981, %v4074
    %v4076 = vlaneseq
    %v4077 = vshrl.u32 %v4076, 7
    %v4078 = vsub.s32 1, %v4077
    %v4079 = vrot.slane %v2981, %v4078
    %v4080 = vlaneseq
    %v4081 = vshrl.u32 %v4080, 7
    %v4082 = vsub.s32 2, %v4081
    %v4083 = vrot.slane %v2981, %v4082
    %v4084 = vlaneseq
    %v4085 = vshrl.u32 %v4084, 7
    %v4086 = vsub.s32 3, %v4085
    %v4087 = vrot.slane %v2981, %v4086
    %v4088 = vlaneseq
    %v4089 = vshrl.u32 %v4088, 7
    %v4090 = vsub.s32 4, %v4089
    %v4091 = vrot.slane %v2981, %v4090
    %v4092 = vlaneseq
    %v4093 = vshrl.u32 %v4092, 7
    %v4094 = vsub.s32 5, %v4093
    %v4095 = vrot.slane %v2981, %v4094
    %v4096 = vlaneseq
    %v4097 = vshrl.u32 %v4096, 7
    %v4098 = vsub.s32 6, %v4097
    %v4099 = vrot.slane %v2981, %v4098
    %v4100 = vlaneseq
    %v4101 = vshrl.u32 %v4100, 7
    %v4102 = vsub.s32 7, %v4101
    %v4103 = vrot.slane %v2981, %v4102
    %v4152 = vunpack.c.l.b16 %v2947
    %v4153 = vunpack.c.h.b16 %v2947
    %v4154 = vunpack.c.l.b16 %v2948
    %v4155 = vunpack.c.h.b16 %v2948
    %v4156 = vunpack.c.l.b16 %v2949
    %v4157 = vunpack.c.h.b16 %v2949
    %v4158 = vunpack.c.l.b16 %v2950
    %v4159 = vunpack.c.h.b16 %v2950
    %v4160 = vunpack.c.l.b16 %v2951
    %v4161 = vunpack.c.h.b16 %v2951
    %v4162 = vunpack.c.l.b16 %v2952
    %v4163 = vunpack.c.h.b16 %v2952
    %v4164 = vunpack.c.l.b16 %v2953
    %v4165 = vunpack.c.h.b16 %v2953
    %v4166 = vunpack.c.l.b16 %v2954
    %v4167 = vunpack.c.h.b16 %v2954
    %v4168 = vunpack.c.l.b16 %v2955
    %v4169 = vunpack.c.h.b16 %v2955
    %v4170 = vunpack.c.l.b16 %v2956
    %v4171 = vunpack.c.h.b16 %v2956
    %v4172 = vunpack.c.l.b16 %v2957
    %v4173 = vunpack.c.h.b16 %v2957
    %v4174 = vunpack.c.l.b16 %v2958
    %v4175 = vunpack.c.h.b16 %v2958
    %v4176 = vunpack.c.l.b16 %v2959
    %v4177 = vunpack.c.h.b16 %v2959
    %v4178 = vunpack.c.l.b16 %v2960
    %v4179 = vunpack.c.h.b16 %v2960
    %v4180 = vunpack.c.l.b16 %v2961
    %v4181 = vunpack.c.h.b16 %v2961
    %v4182 = vunpack.c.l.b16 %v2962
    %v4183 = vunpack.c.h.b16 %v2962
    %v4184 = vunpack.c.l.b16 %v2963
    %v4185 = vunpack.c.h.b16 %v2963
    %v4186 = vunpack.c.l.b16 %v2964
    %v4187 = vunpack.c.h.b16 %v2964
    %v4188 = vunpack.c.l.b16 %v2965
    %v4189 = vunpack.c.h.b16 %v2965
    %v4190 = vunpack.c.l.b16 %v2966
    %v4191 = vunpack.c.h.b16 %v2966
    %v4192 = vunpack.c.l.b16 %v2967
    %v4193 = vunpack.c.h.b16 %v2967
    %v4194 = vunpack.c.l.b16 %v2968
    %v4195 = vunpack.c.h.b16 %v2968
    %v4196 = vunpack.c.l.b16 %v2969
    %v4197 = vunpack.c.h.b16 %v2969
    %v4198 = vunpack.c.l.b16 %v2970
    %v4199 = vunpack.c.h.b16 %v2970
    %v4200 = vunpack.c.l.b16 %v2971
    %v4201 = vunpack.c.h.b16 %v2971
    %v4202 = vunpack.c.l.b16 %v2972
    %v4203 = vunpack.c.h.b16 %v2972
    %v4204 = vunpack.c.l.b16 %v2973
    %v4205 = vunpack.c.h.b16 %v2973
    %v4206 = vunpack.c.l.b16 %v2974
    %v4207 = vunpack.c.h.b16 %v2974
    %v4208 = vunpack.c.l.b16 %v2975
    %v4209 = vunpack.c.h.b16 %v2975
    %v4210 = vunpack.c.l.b16 %v2976
    %v4211 = vunpack.c.h.b16 %v2976
    %v4212 = vunpack.c.l.b16 %v2977
    %v4213 = vunpack.c.h.b16 %v2977
    %v4214 = vunpack.c.l.b16 %v2978
    %v4215 = vunpack.c.h.b16 %v2978
    %v4216 = vpack.c.b16 %v4168, %v4152
    %v4217 = vpack.c.b16 %v4169, %v4153
    %v4218 = vpack.c.b16 %v4170, %v4154
    %v4219 = vpack.c.b16 %v4171, %v4155
    %v4220 = vpack.c.b16 %v4172, %v4156
    %v4221 = vpack.c.b16 %v4173, %v4157
    %v4222 = vpack.c.b16 %v4174, %v4158
    %v4223 = vpack.c.b16 %v4175, %v4159
    %v4224 = vpack.c.b16 %v4176, %v4160
    %v4225 = vpack.c.b16 %v4177, %v4161
    %v4226 = vpack.c.b16 %v4178, %v4162
    %v4227 = vpack.c.b16 %v4179, %v4163
    %v4228 = vpack.c.b16 %v4180, %v4164
    %v4229 = vpack.c.b16 %v4181, %v4165
    %v4230 = vpack.c.b16 %v4182, %v4166
    %v4231 = vpack.c.b16 %v4183, %v4167
    %v4232 = vpack.c.b16 %v4200, %v4184
    %v4233 = vpack.c.b16 %v4201, %v4185
    %v4234 = vpack.c.b16 %v4202, %v4186
    %v4235 = vpack.c.b16 %v4203, %v4187
    %v4236 = vpack.c.b16 %v4204, %v4188
    %v4237 = vpack.c.b16 %v4205, %v4189
    %v4238 = vpack.c.b16 %v4206, %v4190
    %v4239 = vpack.c.b16 %v4207, %v4191
    %v4240 = vpack.c.b16 %v4208, %v4192
    %v4241 = vpack.c.b16 %v4209, %v4193
    %v4242 = vpack.c.b16 %v4210, %v4194
    %v4243 = vpack.c.b16 %v4211, %v4195
    %v4244 = vpack.c.b16 %v4212, %v4196
    %v4245 = vpack.c.b16 %v4213, %v4197
    %v4246 = vpack.c.b16 %v4214, %v4198
    %v4247 = vpack.c.b16 %v4215, %v4199
    %v4281 = vsel %vm376, %v4037, 0
    %4283 = vmatprep.subr.bf16.mxu0 0
    %4284 = vmatpush1.bf16.msra.mxu0 0
    %4285 = vmatprep.subr.bf16.mxu0 0
    %4286 = vmatpush1.bf16.msra.mxu0 0
    %4287 = vmatprep.subr.bf16.mxu0 0
    %4288 = vmatpush1.bf16.msra.mxu0 0
    %4289 = vmatprep.subr.bf16.mxu0 0
    %4290 = vmatpush1.bf16.msra.mxu0 0
    %4291 = vmatprep.subr.bf16.mxu0 0
    %4292 = vmatpush1.bf16.msra.mxu0 0
    %4293 = vmatprep.subr.bf16.mxu0 0
    %4294 = vmatpush1.bf16.msra.mxu0 0
    %4295 = vmatprep.subr.bf16.mxu0 %v4233
    %4296 = vmatpush1.bf16.msra.mxu0 %v4232
    %4297 = vmatprep.subr.bf16.mxu0 %v4217
    %4298 = vmatpush1.bf16.msra.mxu0 %v4216
    %4299 = vmatprep.subr.bf16.mxu0 0
    %4300 = vmatpush2.bf16.msra.mxu0 0
    %4301 = vmatprep.subr.bf16.mxu0 0
    %4302 = vmatpush2.bf16.msra.mxu0 0
    %4303 = vmatprep.subr.bf16.mxu0 0
    %4304 = vmatpush2.bf16.msra.mxu0 0
    %4305 = vmatprep.subr.bf16.mxu0 0
    %4306 = vmatpush2.bf16.msra.mxu0 0
    %4307 = vmatprep.subr.bf16.mxu0 0
    %4308 = vmatpush2.bf16.msra.mxu0 0
    %4309 = vmatprep.subr.bf16.mxu0 0
    %4310 = vmatpush2.bf16.msra.mxu0 0
    %4311 = vmatprep.subr.bf16.mxu0 0
    %4312 = vmatpush2.bf16.msra.mxu0 0
    %4313 = vmatprep.subr.bf16.mxu0 0
    %4314 = vmatpush2.bf16.msra.mxu0 0
    %4315 = vmatprep.mubr.bf16.mxu0 0
    %4316 = vmatmul.mubr.bf16.gmra.mxu0 %v4281
    %v4317 = vpop.f32.mrf.mxu0
    %v4318 = vadd.f32 %v4043, %v4317
    %v4319 = vpop.f32.mrf.mxu0
    %v4320 = vadd.f32 %v4047, %v4319
    %v4321 = vpop.f32.mrf.mxu0
    %v4322 = vadd.f32 %v4043, %v4321
    %v4323 = vpop.f32.mrf.mxu0
    %v4324 = vadd.f32 %v4047, %v4323
    %4325 = vdwg.mxu0
    %4326 = vmatprep.subr.bf16.mxu0 0
    %4327 = vmatpush1.bf16.msra.mxu0 0
    %4328 = vmatprep.subr.bf16.mxu0 0
    %4329 = vmatpush1.bf16.msra.mxu0 0
    %4330 = vmatprep.subr.bf16.mxu0 0
    %4331 = vmatpush1.bf16.msra.mxu0 0
    %4332 = vmatprep.subr.bf16.mxu0 0
    %4333 = vmatpush1.bf16.msra.mxu0 0
    %4334 = vmatprep.subr.bf16.mxu0 0
    %4335 = vmatpush1.bf16.msra.mxu0 0
    %4336 = vmatprep.subr.bf16.mxu0 0
    %4337 = vmatpush1.bf16.msra.mxu0 0
    %4338 = vmatprep.subr.bf16.mxu0 %v4235
    %4339 = vmatpush1.bf16.msra.mxu0 %v4234
    %4340 = vmatprep.subr.bf16.mxu0 %v4219
    %4341 = vmatpush1.bf16.msra.mxu0 %v4218
    %4342 = vmatprep.subr.bf16.mxu0 0
    %4343 = vmatpush2.bf16.msra.mxu0 0
    %4344 = vmatprep.subr.bf16.mxu0 0
    %4345 = vmatpush2.bf16.msra.mxu0 0
    %4346 = vmatprep.subr.bf16.mxu0 0
    %4347 = vmatpush2.bf16.msra.mxu0 0
    %4348 = vmatprep.subr.bf16.mxu0 0
    %4349 = vmatpush2.bf16.msra.mxu0 0
    %4350 = vmatprep.subr.bf16.mxu0 0
    %4351 = vmatpush2.bf16.msra.mxu0 0
    %4352 = vmatprep.subr.bf16.mxu0 0
    %4353 = vmatpush2.bf16.msra.mxu0 0
    %4354 = vmatprep.subr.bf16.mxu0 0
    %4355 = vmatpush2.bf16.msra.mxu0 0
    %4356 = vmatprep.subr.bf16.mxu0 0
    %4357 = vmatpush2.bf16.msra.mxu0 0
    %4358 = vmatprep.mubr.bf16.mxu0 0
    %4359 = vmatmul.mubr.bf16.gmra.mxu0 %v4281
    %v4360 = vpop.f32.mrf.mxu0
    %v4361 = vadd.f32 %v4051, %v4360
    %v4362 = vpop.f32.mrf.mxu0
    %v4363 = vadd.f32 %v4055, %v4362
    %v4364 = vpop.f32.mrf.mxu0
    %v4365 = vadd.f32 %v4051, %v4364
    %v4366 = vpop.f32.mrf.mxu0
    %v4367 = vadd.f32 %v4055, %v4366
    %4368 = vdwg.mxu0
    %4369 = vmatprep.subr.bf16.mxu0 0
    %4370 = vmatpush1.bf16.msra.mxu0 0
    %4371 = vmatprep.subr.bf16.mxu0 0
    %4372 = vmatpush1.bf16.msra.mxu0 0
    %4373 = vmatprep.subr.bf16.mxu0 0
    %4374 = vmatpush1.bf16.msra.mxu0 0
    %4375 = vmatprep.subr.bf16.mxu0 0
    %4376 = vmatpush1.bf16.msra.mxu0 0
    %4377 = vmatprep.subr.bf16.mxu0 0
    %4378 = vmatpush1.bf16.msra.mxu0 0
    %4379 = vmatprep.subr.bf16.mxu0 0
    %4380 = vmatpush1.bf16.msra.mxu0 0
    %4381 = vmatprep.subr.bf16.mxu0 %v4237
    %4382 = vmatpush1.bf16.msra.mxu0 %v4236
    %4383 = vmatprep.subr.bf16.mxu0 %v4221
    %4384 = vmatpush1.bf16.msra.mxu0 %v4220
    %4385 = vmatprep.subr.bf16.mxu0 0
    %4386 = vmatpush2.bf16.msra.mxu0 0
    %4387 = vmatprep.subr.bf16.mxu0 0
    %4388 = vmatpush2.bf16.msra.mxu0 0
    %4389 = vmatprep.subr.bf16.mxu0 0
    %4390 = vmatpush2.bf16.msra.mxu0 0
    %4391 = vmatprep.subr.bf16.mxu0 0
    %4392 = vmatpush2.bf16.msra.mxu0 0
    %4393 = vmatprep.subr.bf16.mxu0 0
    %4394 = vmatpush2.bf16.msra.mxu0 0
    %4395 = vmatprep.subr.bf16.mxu0 0
    %4396 = vmatpush2.bf16.msra.mxu0 0
    %4397 = vmatprep.subr.bf16.mxu0 0
    %4398 = vmatpush2.bf16.msra.mxu0 0
    %4399 = vmatprep.subr.bf16.mxu0 0
    %4400 = vmatpush2.bf16.msra.mxu0 0
    %4401 = vmatprep.mubr.bf16.mxu0 0
    %4402 = vmatmul.mubr.bf16.gmra.mxu0 %v4281
    %v4403 = vpop.f32.mrf.mxu0
    %v4404 = vadd.f32 %v4059, %v4403
    %v4405 = vpop.f32.mrf.mxu0
    %v4406 = vadd.f32 %v4063, %v4405
    %v4407 = vpop.f32.mrf.mxu0
    %v4408 = vadd.f32 %v4059, %v4407
    %v4409 = vpop.f32.mrf.mxu0
    %v4410 = vadd.f32 %v4063, %v4409
    %4411 = vdwg.mxu0
    %4412 = vmatprep.subr.bf16.mxu0 0
    %4413 = vmatpush1.bf16.msra.mxu0 0
    %4414 = vmatprep.subr.bf16.mxu0 0
    %4415 = vmatpush1.bf16.msra.mxu0 0
    %4416 = vmatprep.subr.bf16.mxu0 0
    %4417 = vmatpush1.bf16.msra.mxu0 0
    %4418 = vmatprep.subr.bf16.mxu0 0
    %4419 = vmatpush1.bf16.msra.mxu0 0
    %4420 = vmatprep.subr.bf16.mxu0 0
    %4421 = vmatpush1.bf16.msra.mxu0 0
    %4422 = vmatprep.subr.bf16.mxu0 0
    %4423 = vmatpush1.bf16.msra.mxu0 0
    %4424 = vmatprep.subr.bf16.mxu0 %v4239
    %4425 = vmatpush1.bf16.msra.mxu0 %v4238
    %4426 = vmatprep.subr.bf16.mxu0 %v4223
    %4427 = vmatpush1.bf16.msra.mxu0 %v4222
    %4428 = vmatprep.subr.bf16.mxu0 0
    %4429 = vmatpush2.bf16.msra.mxu0 0
    %4430 = vmatprep.subr.bf16.mxu0 0
    %4431 = vmatpush2.bf16.msra.mxu0 0
    %4432 = vmatprep.subr.bf16.mxu0 0
    %4433 = vmatpush2.bf16.msra.mxu0 0
    %4434 = vmatprep.subr.bf16.mxu0 0
    %4435 = vmatpush2.bf16.msra.mxu0 0
    %4436 = vmatprep.subr.bf16.mxu0 0
    %4437 = vmatpush2.bf16.msra.mxu0 0
    %4438 = vmatprep.subr.bf16.mxu0 0
    %4439 = vmatpush2.bf16.msra.mxu0 0
    %4440 = vmatprep.subr.bf16.mxu0 0
    %4441 = vmatpush2.bf16.msra.mxu0 0
    %4442 = vmatprep.subr.bf16.mxu0 0
    %4443 = vmatpush2.bf16.msra.mxu0 0
    %4444 = vmatprep.mubr.bf16.mxu0 0
    %4445 = vmatmul.mubr.bf16.gmra.mxu0 %v4281
    %v4446 = vpop.f32.mrf.mxu0
    %v4447 = vadd.f32 %v4067, %v4446
    %v4448 = vpop.f32.mrf.mxu0
    %v4449 = vadd.f32 %v4071, %v4448
    %v4450 = vpop.f32.mrf.mxu0
    %v4451 = vadd.f32 %v4067, %v4450
    %v4452 = vpop.f32.mrf.mxu0
    %v4453 = vadd.f32 %v4071, %v4452
    %4454 = vdwg.mxu0
    %4455 = vmatprep.subr.bf16.mxu0 0
    %4456 = vmatpush1.bf16.msra.mxu0 0
    %4457 = vmatprep.subr.bf16.mxu0 0
    %4458 = vmatpush1.bf16.msra.mxu0 0
    %4459 = vmatprep.subr.bf16.mxu0 0
    %4460 = vmatpush1.bf16.msra.mxu0 0
    %4461 = vmatprep.subr.bf16.mxu0 0
    %4462 = vmatpush1.bf16.msra.mxu0 0
    %4463 = vmatprep.subr.bf16.mxu0 0
    %4464 = vmatpush1.bf16.msra.mxu0 0
    %4465 = vmatprep.subr.bf16.mxu0 0
    %4466 = vmatpush1.bf16.msra.mxu0 0
    %4467 = vmatprep.subr.bf16.mxu0 %v4241
    %4468 = vmatpush1.bf16.msra.mxu0 %v4240
    %4469 = vmatprep.subr.bf16.mxu0 %v4225
    %4470 = vmatpush1.bf16.msra.mxu0 %v4224
    %4471 = vmatprep.subr.bf16.mxu0 0
    %4472 = vmatpush2.bf16.msra.mxu0 0
    %4473 = vmatprep.subr.bf16.mxu0 0
    %4474 = vmatpush2.bf16.msra.mxu0 0
    %4475 = vmatprep.subr.bf16.mxu0 0
    %4476 = vmatpush2.bf16.msra.mxu0 0
    %4477 = vmatprep.subr.bf16.mxu0 0
    %4478 = vmatpush2.bf16.msra.mxu0 0
    %4479 = vmatprep.subr.bf16.mxu0 0
    %4480 = vmatpush2.bf16.msra.mxu0 0
    %4481 = vmatprep.subr.bf16.mxu0 0
    %4482 = vmatpush2.bf16.msra.mxu0 0
    %4483 = vmatprep.subr.bf16.mxu0 0
    %4484 = vmatpush2.bf16.msra.mxu0 0
    %4485 = vmatprep.subr.bf16.mxu0 0
    %4486 = vmatpush2.bf16.msra.mxu0 0
    %4487 = vmatprep.mubr.bf16.mxu0 0
    %4488 = vmatmul.mubr.bf16.gmra.mxu0 %v4281
    %v4489 = vpop.f32.mrf.mxu0
    %v4490 = vadd.f32 %v4075, %v4489
    %v4491 = vpop.f32.mrf.mxu0
    %v4492 = vadd.f32 %v4079, %v4491
    %v4493 = vpop.f32.mrf.mxu0
    %v4494 = vadd.f32 %v4075, %v4493
    %v4495 = vpop.f32.mrf.mxu0
    %v4496 = vadd.f32 %v4079, %v4495
    %4497 = vdwg.mxu0
    %4498 = vmatprep.subr.bf16.mxu0 0
    %4499 = vmatpush1.bf16.msra.mxu0 0
    %4500 = vmatprep.subr.bf16.mxu0 0
    %4501 = vmatpush1.bf16.msra.mxu0 0
    %4502 = vmatprep.subr.bf16.mxu0 0
    %4503 = vmatpush1.bf16.msra.mxu0 0
    %4504 = vmatprep.subr.bf16.mxu0 0
    %4505 = vmatpush1.bf16.msra.mxu0 0
    %4506 = vmatprep.subr.bf16.mxu0 0
    %4507 = vmatpush1.bf16.msra.mxu0 0
    %4508 = vmatprep.subr.bf16.mxu0 0
    %4509 = vmatpush1.bf16.msra.mxu0 0
    %4510 = vmatprep.subr.bf16.mxu0 %v4243
    %4511 = vmatpush1.bf16.msra.mxu0 %v4242
    %4512 = vmatprep.subr.bf16.mxu0 %v4227
    %4513 = vmatpush1.bf16.msra.mxu0 %v4226
    %4514 = vmatprep.subr.bf16.mxu0 0
    %4515 = vmatpush2.bf16.msra.mxu0 0
    %4516 = vmatprep.subr.bf16.mxu0 0
    %4517 = vmatpush2.bf16.msra.mxu0 0
    %4518 = vmatprep.subr.bf16.mxu0 0
    %4519 = vmatpush2.bf16.msra.mxu0 0
    %4520 = vmatprep.subr.bf16.mxu0 0
    %4521 = vmatpush2.bf16.msra.mxu0 0
    %4522 = vmatprep.subr.bf16.mxu0 0
    %4523 = vmatpush2.bf16.msra.mxu0 0
    %4524 = vmatprep.subr.bf16.mxu0 0
    %4525 = vmatpush2.bf16.msra.mxu0 0
    %4526 = vmatprep.subr.bf16.mxu0 0
    %4527 = vmatpush2.bf16.msra.mxu0 0
    %4528 = vmatprep.subr.bf16.mxu0 0
    %4529 = vmatpush2.bf16.msra.mxu0 0
    %4530 = vmatprep.mubr.bf16.mxu0 0
    %4531 = vmatmul.mubr.bf16.gmra.mxu0 %v4281
    %v4532 = vpop.f32.mrf.mxu0
    %v4533 = vadd.f32 %v4083, %v4532
    %v4534 = vpop.f32.mrf.mxu0
    %v4535 = vadd.f32 %v4087, %v4534
    %v4536 = vpop.f32.mrf.mxu0
    %v4537 = vadd.f32 %v4083, %v4536
    %v4538 = vpop.f32.mrf.mxu0
    %v4539 = vadd.f32 %v4087, %v4538
    %4540 = vdwg.mxu0
    %4541 = vmatprep.subr.bf16.mxu0 0
    %4542 = vmatpush1.bf16.msra.mxu0 0
    %4543 = vmatprep.subr.bf16.mxu0 0
    %4544 = vmatpush1.bf16.msra.mxu0 0
    %4545 = vmatprep.subr.bf16.mxu0 0
    %4546 = vmatpush1.bf16.msra.mxu0 0
    %4547 = vmatprep.subr.bf16.mxu0 0
    %4548 = vmatpush1.bf16.msra.mxu0 0
    %4549 = vmatprep.subr.bf16.mxu0 0
    %4550 = vmatpush1.bf16.msra.mxu0 0
    %4551 = vmatprep.subr.bf16.mxu0 0
    %4552 = vmatpush1.bf16.msra.mxu0 0
    %4553 = vmatprep.subr.bf16.mxu0 %v4245
    %4554 = vmatpush1.bf16.msra.mxu0 %v4244
    %4555 = vmatprep.subr.bf16.mxu0 %v4229
    %4556 = vmatpush1.bf16.msra.mxu0 %v4228
    %4557 = vmatprep.subr.bf16.mxu0 0
    %4558 = vmatpush2.bf16.msra.mxu0 0
    %4559 = vmatprep.subr.bf16.mxu0 0
    %4560 = vmatpush2.bf16.msra.mxu0 0
    %4561 = vmatprep.subr.bf16.mxu0 0
    %4562 = vmatpush2.bf16.msra.mxu0 0
    %4563 = vmatprep.subr.bf16.mxu0 0
    %4564 = vmatpush2.bf16.msra.mxu0 0
    %4565 = vmatprep.subr.bf16.mxu0 0
    %4566 = vmatpush2.bf16.msra.mxu0 0
    %4567 = vmatprep.subr.bf16.mxu0 0
    %4568 = vmatpush2.bf16.msra.mxu0 0
    %4569 = vmatprep.subr.bf16.mxu0 0
    %4570 = vmatpush2.bf16.msra.mxu0 0
    %4571 = vmatprep.subr.bf16.mxu0 0
    %4572 = vmatpush2.bf16.msra.mxu0 0
    %4573 = vmatprep.mubr.bf16.mxu0 0
    %4574 = vmatmul.mubr.bf16.gmra.mxu0 %v4281
    %v4575 = vpop.f32.mrf.mxu0
    %v4576 = vadd.f32 %v4091, %v4575
    %v4577 = vpop.f32.mrf.mxu0
    %v4578 = vadd.f32 %v4095, %v4577
    %v4579 = vpop.f32.mrf.mxu0
    %v4580 = vadd.f32 %v4091, %v4579
    %v4581 = vpop.f32.mrf.mxu0
    %v4582 = vadd.f32 %v4095, %v4581
    %4583 = vdwg.mxu0
    %4584 = vmatprep.subr.bf16.mxu0 0
    %4585 = vmatpush1.bf16.msra.mxu0 0
    %4586 = vmatprep.subr.bf16.mxu0 0
    %4587 = vmatpush1.bf16.msra.mxu0 0
    %4588 = vmatprep.subr.bf16.mxu0 0
    %4589 = vmatpush1.bf16.msra.mxu0 0
    %4590 = vmatprep.subr.bf16.mxu0 0
    %4591 = vmatpush1.bf16.msra.mxu0 0
    %4592 = vmatprep.subr.bf16.mxu0 0
    %4593 = vmatpush1.bf16.msra.mxu0 0
    %4594 = vmatprep.subr.bf16.mxu0 0
    %4595 = vmatpush1.bf16.msra.mxu0 0
    %4596 = vmatprep.subr.bf16.mxu0 %v4247
    %4597 = vmatpush1.bf16.msra.mxu0 %v4246
    %4598 = vmatprep.subr.bf16.mxu0 %v4231
    %4599 = vmatpush1.bf16.msra.mxu0 %v4230
    %4600 = vmatprep.subr.bf16.mxu0 0
    %4601 = vmatpush2.bf16.msra.mxu0 0
    %4602 = vmatprep.subr.bf16.mxu0 0
    %4603 = vmatpush2.bf16.msra.mxu0 0
    %4604 = vmatprep.subr.bf16.mxu0 0
    %4605 = vmatpush2.bf16.msra.mxu0 0
    %4606 = vmatprep.subr.bf16.mxu0 0
    %4607 = vmatpush2.bf16.msra.mxu0 0
    %4608 = vmatprep.subr.bf16.mxu0 0
    %4609 = vmatpush2.bf16.msra.mxu0 0
    %4610 = vmatprep.subr.bf16.mxu0 0
    %4611 = vmatpush2.bf16.msra.mxu0 0
    %4612 = vmatprep.subr.bf16.mxu0 0
    %4613 = vmatpush2.bf16.msra.mxu0 0
    %4614 = vmatprep.subr.bf16.mxu0 0
    %4615 = vmatpush2.bf16.msra.mxu0 0
    %4616 = vmatprep.mubr.bf16.mxu0 0
    %4617 = vmatmul.mubr.bf16.gmra.mxu0 %v4281
    %v4618 = vpop.f32.mrf.mxu0
    %v4619 = vadd.f32 %v4099, %v4618
    %v4620 = vpop.f32.mrf.mxu0
    %v4621 = vadd.f32 %v4103, %v4620
    %v4622 = vpop.f32.mrf.mxu0
    %v4623 = vadd.f32 %v4099, %v4622
    %v4624 = vpop.f32.mrf.mxu0
    %v4625 = vadd.f32 %v4103, %v4624
    %4626 = vdwg.mxu0
    %v4627 = vmax.f32 %v4318, 0.0
    %v4628 = vmax.f32 %v4320, 0.0
    %v4629 = vmax.f32 %v4361, 0.0
    %v4630 = vmax.f32 %v4363, 0.0
    %v4631 = vmax.f32 %v4404, 0.0
    %v4632 = vmax.f32 %v4406, 0.0
    %v4633 = vmax.f32 %v4447, 0.0
    %v4634 = vmax.f32 %v4449, 0.0
    %v4635 = vmax.f32 %v4490, 0.0
    %v4636 = vmax.f32 %v4492, 0.0
    %v4637 = vmax.f32 %v4533, 0.0
    %v4638 = vmax.f32 %v4535, 0.0
    %v4639 = vmax.f32 %v4576, 0.0
    %v4640 = vmax.f32 %v4578, 0.0
    %v4641 = vmax.f32 %v4619, 0.0
    %v4642 = vmax.f32 %v4621, 0.0
    %v4643 = vmax.f32 %v4322, 0.0
    %v4644 = vmax.f32 %v4324, 0.0
    %v4645 = vmax.f32 %v4365, 0.0
    %v4646 = vmax.f32 %v4367, 0.0
    %v4647 = vmax.f32 %v4408, 0.0
    %v4648 = vmax.f32 %v4410, 0.0
    %v4649 = vmax.f32 %v4451, 0.0
    %v4650 = vmax.f32 %v4453, 0.0
    %v4651 = vmax.f32 %v4494, 0.0
    %v4652 = vmax.f32 %v4496, 0.0
    %v4653 = vmax.f32 %v4537, 0.0
    %v4654 = vmax.f32 %v4539, 0.0
    %v4655 = vmax.f32 %v4580, 0.0
    %v4656 = vmax.f32 %v4582, 0.0
    %v4657 = vmax.f32 %v4623, 0.0
    %v4658 = vmax.f32 %v4625, 0.0
    %v4659 = vpack.c.bf16 %v4643, %v4627
    %v4660 = vpack.c.bf16 %v4644, %v4628
    %v4661 = vpack.c.bf16 %v4645, %v4629
    %v4662 = vpack.c.bf16 %v4646, %v4630
    %v4663 = vpack.c.bf16 %v4647, %v4631
    %v4664 = vpack.c.bf16 %v4648, %v4632
    %v4665 = vpack.c.bf16 %v4649, %v4633
    %v4666 = vpack.c.bf16 %v4650, %v4634
    %v4667 = vpack.c.bf16 %v4651, %v4635
    %v4668 = vpack.c.bf16 %v4652, %v4636
    %v4669 = vpack.c.bf16 %v4653, %v4637
    %v4670 = vpack.c.bf16 %v4654, %v4638
    %v4671 = vpack.c.bf16 %v4655, %v4639
    %v4672 = vpack.c.bf16 %v4656, %v4640
    %v4673 = vpack.c.bf16 %v4657, %v4641
    %v4674 = vpack.c.bf16 %v4658, %v4642
    %v4675 = vlaneseq
    %v4676 = vshrl.u32 %v4675, 7
    %v4677 = vsub.s32 3, %v4676
    %v4678 = vrot.slane %v3240, %v4677
    %v4935 = vunpack.c.l.b16 %v2983
    %v4936 = vunpack.c.l.b16 %v2984
    %v4937 = vunpack.c.l.b16 %v2985
    %v4938 = vunpack.c.l.b16 %v2986
    %v4939 = vunpack.c.l.b16 %v2987
    %v4940 = vunpack.c.l.b16 %v2988
    %v4941 = vunpack.c.l.b16 %v2989
    %v4942 = vunpack.c.l.b16 %v2990
    %v4943 = vunpack.c.l.b16 %v2991
    %v4944 = vunpack.c.l.b16 %v2992
    %v4945 = vunpack.c.l.b16 %v2993
    %v4946 = vunpack.c.l.b16 %v2994
    %v4947 = vunpack.c.l.b16 %v2995
    %v4948 = vunpack.c.l.b16 %v2996
    %v4949 = vunpack.c.l.b16 %v2997
    %v4950 = vunpack.c.l.b16 %v2998
    %v4951 = vunpack.c.l.b16 %v2999
    %v4952 = vunpack.c.l.b16 %v3000
    %v4953 = vunpack.c.l.b16 %v3001
    %v4954 = vunpack.c.l.b16 %v3002
    %v4955 = vunpack.c.l.b16 %v3003
    %v4956 = vunpack.c.l.b16 %v3004
    %v4957 = vunpack.c.l.b16 %v3005
    %v4958 = vunpack.c.l.b16 %v3006
    %v4959 = vunpack.c.l.b16 %v3007
    %v4960 = vunpack.c.l.b16 %v3008
    %v4961 = vunpack.c.l.b16 %v3009
    %v4962 = vunpack.c.l.b16 %v3010
    %v4963 = vunpack.c.l.b16 %v3011
    %v4964 = vunpack.c.l.b16 %v3012
    %v4965 = vunpack.c.l.b16 %v3013
    %v4966 = vunpack.c.l.b16 %v3014
    %v4967 = vunpack.c.l.b16 %v3015
    %v4968 = vunpack.c.l.b16 %v3016
    %v4969 = vunpack.c.l.b16 %v3017
    %v4970 = vunpack.c.l.b16 %v3018
    %v4971 = vunpack.c.l.b16 %v3019
    %v4972 = vunpack.c.l.b16 %v3020
    %v4973 = vunpack.c.l.b16 %v3021
    %v4974 = vunpack.c.l.b16 %v3022
    %v4975 = vunpack.c.l.b16 %v3023
    %v4976 = vunpack.c.l.b16 %v3024
    %v4977 = vunpack.c.l.b16 %v3025
    %v4978 = vunpack.c.l.b16 %v3026
    %v4979 = vunpack.c.l.b16 %v3027
    %v4980 = vunpack.c.l.b16 %v3028
    %v4981 = vunpack.c.l.b16 %v3029
    %v4982 = vunpack.c.l.b16 %v3030
    %v4983 = vunpack.c.l.b16 %v3031
    %v4984 = vunpack.c.l.b16 %v3032
    %v4985 = vunpack.c.l.b16 %v3033
    %v4986 = vunpack.c.l.b16 %v3034
    %v4987 = vunpack.c.l.b16 %v3035
    %v4988 = vunpack.c.l.b16 %v3036
    %v4989 = vunpack.c.l.b16 %v3037
    %v4990 = vunpack.c.l.b16 %v3038
    %v4991 = vunpack.c.l.b16 %v3039
    %v4992 = vunpack.c.l.b16 %v3040
    %v4993 = vunpack.c.l.b16 %v3041
    %v4994 = vunpack.c.l.b16 %v3042
    %v4995 = vunpack.c.l.b16 %v3043
    %v4996 = vunpack.c.l.b16 %v3044
    %v4997 = vunpack.c.l.b16 %v3045
    %v4998 = vunpack.c.l.b16 %v3046
    %v4999 = vunpack.c.l.b16 %v3047
    %v5000 = vunpack.c.l.b16 %v3048
    %v5001 = vunpack.c.l.b16 %v3049
    %v5002 = vunpack.c.l.b16 %v3050
    %v5003 = vunpack.c.l.b16 %v3051
    %v5004 = vunpack.c.l.b16 %v3052
    %v5005 = vunpack.c.l.b16 %v3053
    %v5006 = vunpack.c.l.b16 %v3054
    %v5007 = vunpack.c.l.b16 %v3055
    %v5008 = vunpack.c.l.b16 %v3056
    %v5009 = vunpack.c.l.b16 %v3057
    %v5010 = vunpack.c.l.b16 %v3058
    %v5011 = vunpack.c.l.b16 %v3059
    %v5012 = vunpack.c.l.b16 %v3060
    %v5013 = vunpack.c.l.b16 %v3061
    %v5014 = vunpack.c.l.b16 %v3062
    %v5015 = vunpack.c.l.b16 %v3063
    %v5016 = vunpack.c.l.b16 %v3064
    %v5017 = vunpack.c.l.b16 %v3065
    %v5018 = vunpack.c.l.b16 %v3066
    %v5019 = vunpack.c.l.b16 %v3067
    %v5020 = vunpack.c.l.b16 %v3068
    %v5021 = vunpack.c.l.b16 %v3069
    %v5022 = vunpack.c.l.b16 %v3070
    %v5023 = vunpack.c.l.b16 %v3071
    %v5024 = vunpack.c.l.b16 %v3072
    %v5025 = vunpack.c.l.b16 %v3073
    %v5026 = vunpack.c.l.b16 %v3074
    %v5027 = vunpack.c.l.b16 %v3075
    %v5028 = vunpack.c.l.b16 %v3076
    %v5029 = vunpack.c.l.b16 %v3077
    %v5030 = vunpack.c.l.b16 %v3078
    %v5031 = vunpack.c.l.b16 %v3079
    %v5032 = vunpack.c.l.b16 %v3080
    %v5033 = vunpack.c.l.b16 %v3081
    %v5034 = vunpack.c.l.b16 %v3082
    %v5035 = vunpack.c.l.b16 %v3083
    %v5036 = vunpack.c.l.b16 %v3084
    %v5037 = vunpack.c.l.b16 %v3085
    %v5038 = vunpack.c.l.b16 %v3086
    %v5039 = vunpack.c.l.b16 %v3087
    %v5040 = vunpack.c.l.b16 %v3088
    %v5041 = vunpack.c.l.b16 %v3089
    %v5042 = vunpack.c.l.b16 %v3090
    %v5043 = vunpack.c.l.b16 %v3091
    %v5044 = vunpack.c.l.b16 %v3092
    %v5045 = vunpack.c.l.b16 %v3093
    %v5046 = vunpack.c.l.b16 %v3094
    %v5047 = vunpack.c.l.b16 %v3095
    %v5048 = vunpack.c.l.b16 %v3096
    %v5049 = vunpack.c.l.b16 %v3097
    %v5050 = vunpack.c.l.b16 %v3098
    %v5051 = vunpack.c.l.b16 %v3099
    %v5052 = vunpack.c.l.b16 %v3100
    %v5053 = vunpack.c.l.b16 %v3101
    %v5054 = vunpack.c.l.b16 %v3102
    %v5055 = vunpack.c.l.b16 %v3103
    %v5056 = vunpack.c.l.b16 %v3104
    %v5057 = vunpack.c.l.b16 %v3105
    %v5058 = vunpack.c.l.b16 %v3106
    %v5059 = vunpack.c.l.b16 %v3107
    %v5060 = vunpack.c.l.b16 %v3108
    %v5061 = vunpack.c.l.b16 %v3109
    %v5062 = vunpack.c.l.b16 %v3110
    %v5063 = vunpack.c.l.b16 %v3111
    %v5064 = vunpack.c.l.b16 %v3112
    %v5065 = vunpack.c.l.b16 %v3113
    %v5066 = vunpack.c.l.b16 %v3114
    %v5067 = vunpack.c.l.b16 %v3115
    %v5068 = vunpack.c.l.b16 %v3116
    %v5069 = vunpack.c.l.b16 %v3117
    %v5070 = vunpack.c.l.b16 %v3118
    %v5071 = vunpack.c.l.b16 %v3119
    %v5072 = vunpack.c.l.b16 %v3120
    %v5073 = vunpack.c.l.b16 %v3121
    %v5074 = vunpack.c.l.b16 %v3122
    %v5075 = vunpack.c.l.b16 %v3123
    %v5076 = vunpack.c.l.b16 %v3124
    %v5077 = vunpack.c.l.b16 %v3125
    %v5078 = vunpack.c.l.b16 %v3126
    %v5079 = vunpack.c.l.b16 %v3127
    %v5080 = vunpack.c.l.b16 %v3128
    %v5081 = vunpack.c.l.b16 %v3129
    %v5082 = vunpack.c.l.b16 %v3130
    %v5083 = vunpack.c.l.b16 %v3131
    %v5084 = vunpack.c.l.b16 %v3132
    %v5085 = vunpack.c.l.b16 %v3133
    %v5086 = vunpack.c.l.b16 %v3134
    %v5087 = vunpack.c.l.b16 %v3135
    %v5088 = vunpack.c.l.b16 %v3136
    %v5089 = vunpack.c.l.b16 %v3137
    %v5090 = vunpack.c.l.b16 %v3138
    %v5091 = vunpack.c.l.b16 %v3139
    %v5092 = vunpack.c.l.b16 %v3140
    %v5093 = vunpack.c.l.b16 %v3141
    %v5094 = vunpack.c.l.b16 %v3142
    %v5095 = vunpack.c.l.b16 %v3143
    %v5096 = vunpack.c.l.b16 %v3144
    %v5097 = vunpack.c.l.b16 %v3145
    %v5098 = vunpack.c.l.b16 %v3146
    %v5099 = vunpack.c.l.b16 %v3147
    %v5100 = vunpack.c.l.b16 %v3148
    %v5101 = vunpack.c.l.b16 %v3149
    %v5102 = vunpack.c.l.b16 %v3150
    %v5103 = vunpack.c.l.b16 %v3151
    %v5104 = vunpack.c.l.b16 %v3152
    %v5105 = vunpack.c.l.b16 %v3153
    %v5106 = vunpack.c.l.b16 %v3154
    %v5107 = vunpack.c.l.b16 %v3155
    %v5108 = vunpack.c.l.b16 %v3156
    %v5109 = vunpack.c.l.b16 %v3157
    %v5110 = vunpack.c.l.b16 %v3158
    %v5111 = vunpack.c.l.b16 %v3159
    %v5112 = vunpack.c.l.b16 %v3160
    %v5113 = vunpack.c.l.b16 %v3161
    %v5114 = vunpack.c.l.b16 %v3162
    %v5115 = vunpack.c.l.b16 %v3163
    %v5116 = vunpack.c.l.b16 %v3164
    %v5117 = vunpack.c.l.b16 %v3165
    %v5118 = vunpack.c.l.b16 %v3166
    %v5119 = vunpack.c.l.b16 %v3167
    %v5120 = vunpack.c.l.b16 %v3168
    %v5121 = vunpack.c.l.b16 %v3169
    %v5122 = vunpack.c.l.b16 %v3170
    %v5123 = vunpack.c.l.b16 %v3171
    %v5124 = vunpack.c.l.b16 %v3172
    %v5125 = vunpack.c.l.b16 %v3173
    %v5126 = vunpack.c.l.b16 %v3174
    %v5127 = vunpack.c.l.b16 %v3175
    %v5128 = vunpack.c.l.b16 %v3176
    %v5129 = vunpack.c.l.b16 %v3177
    %v5130 = vunpack.c.l.b16 %v3178
    %v5131 = vunpack.c.l.b16 %v3179
    %v5132 = vunpack.c.l.b16 %v3180
    %v5133 = vunpack.c.l.b16 %v3181
    %v5134 = vunpack.c.l.b16 %v3182
    %v5135 = vunpack.c.l.b16 %v3183
    %v5136 = vunpack.c.l.b16 %v3184
    %v5137 = vunpack.c.l.b16 %v3185
    %v5138 = vunpack.c.l.b16 %v3186
    %v5139 = vunpack.c.l.b16 %v3187
    %v5140 = vunpack.c.l.b16 %v3188
    %v5141 = vunpack.c.l.b16 %v3189
    %v5142 = vunpack.c.l.b16 %v3190
    %v5143 = vunpack.c.l.b16 %v3191
    %v5144 = vunpack.c.l.b16 %v3192
    %v5145 = vunpack.c.l.b16 %v3193
    %v5146 = vunpack.c.l.b16 %v3194
    %v5147 = vunpack.c.l.b16 %v3195
    %v5148 = vunpack.c.l.b16 %v3196
    %v5149 = vunpack.c.l.b16 %v3197
    %v5150 = vunpack.c.l.b16 %v3198
    %v5151 = vunpack.c.l.b16 %v3199
    %v5152 = vunpack.c.l.b16 %v3200
    %v5153 = vunpack.c.l.b16 %v3201
    %v5154 = vunpack.c.l.b16 %v3202
    %v5155 = vunpack.c.l.b16 %v3203
    %v5156 = vunpack.c.l.b16 %v3204
    %v5157 = vunpack.c.l.b16 %v3205
    %v5158 = vunpack.c.l.b16 %v3206
    %v5159 = vunpack.c.l.b16 %v3207
    %v5160 = vunpack.c.l.b16 %v3208
    %v5161 = vunpack.c.l.b16 %v3209
    %v5162 = vunpack.c.l.b16 %v3210
    %v5163 = vunpack.c.l.b16 %v3211
    %v5164 = vunpack.c.l.b16 %v3212
    %v5165 = vunpack.c.l.b16 %v3213
    %v5166 = vunpack.c.l.b16 %v3214
    %v5167 = vunpack.c.l.b16 %v3215
    %v5168 = vunpack.c.l.b16 %v3216
    %v5169 = vunpack.c.l.b16 %v3217
    %v5170 = vunpack.c.l.b16 %v3218
    %v5171 = vunpack.c.l.b16 %v3219
    %v5172 = vunpack.c.l.b16 %v3220
    %v5173 = vunpack.c.l.b16 %v3221
    %v5174 = vunpack.c.l.b16 %v3222
    %v5175 = vunpack.c.l.b16 %v3223
    %v5176 = vunpack.c.l.b16 %v3224
    %v5177 = vunpack.c.l.b16 %v3225
    %v5178 = vunpack.c.l.b16 %v3226
    %v5179 = vunpack.c.l.b16 %v3227
    %v5180 = vunpack.c.l.b16 %v3228
    %v5181 = vunpack.c.l.b16 %v3229
    %v5182 = vunpack.c.l.b16 %v3230
    %v5183 = vunpack.c.l.b16 %v3231
    %v5184 = vunpack.c.l.b16 %v3232
    %v5185 = vunpack.c.l.b16 %v3233
    %v5186 = vunpack.c.l.b16 %v3234
    %v5187 = vunpack.c.l.b16 %v3235
    %v5188 = vunpack.c.l.b16 %v3236
    %v5189 = vunpack.c.l.b16 %v3237
    %v5190 = vunpack.c.l.b16 %v3238
    %v5191 = vpack.c.b16 %v4936, %v4935
    %v5192 = vpack.c.b16 %v4938, %v4937
    %v5193 = vpack.c.b16 %v4940, %v4939
    %v5194 = vpack.c.b16 %v4942, %v4941
    %v5195 = vpack.c.b16 %v4944, %v4943
    %v5196 = vpack.c.b16 %v4946, %v4945
    %v5197 = vpack.c.b16 %v4948, %v4947
    %v5198 = vpack.c.b16 %v4950, %v4949
    %v5199 = vpack.c.b16 %v4952, %v4951
    %v5200 = vpack.c.b16 %v4954, %v4953
    %v5201 = vpack.c.b16 %v4956, %v4955
    %v5202 = vpack.c.b16 %v4958, %v4957
    %v5203 = vpack.c.b16 %v4960, %v4959
    %v5204 = vpack.c.b16 %v4962, %v4961
    %v5205 = vpack.c.b16 %v4964, %v4963
    %v5206 = vpack.c.b16 %v4966, %v4965
    %v5207 = vpack.c.b16 %v4968, %v4967
    %v5208 = vpack.c.b16 %v4970, %v4969
    %v5209 = vpack.c.b16 %v4972, %v4971
    %v5210 = vpack.c.b16 %v4974, %v4973
    %v5211 = vpack.c.b16 %v4976, %v4975
    %v5212 = vpack.c.b16 %v4978, %v4977
    %v5213 = vpack.c.b16 %v4980, %v4979
    %v5214 = vpack.c.b16 %v4982, %v4981
    %v5215 = vpack.c.b16 %v4984, %v4983
    %v5216 = vpack.c.b16 %v4986, %v4985
    %v5217 = vpack.c.b16 %v4988, %v4987
    %v5218 = vpack.c.b16 %v4990, %v4989
    %v5219 = vpack.c.b16 %v4992, %v4991
    %v5220 = vpack.c.b16 %v4994, %v4993
    %v5221 = vpack.c.b16 %v4996, %v4995
    %v5222 = vpack.c.b16 %v4998, %v4997
    %v5223 = vpack.c.b16 %v5000, %v4999
    %v5224 = vpack.c.b16 %v5002, %v5001
    %v5225 = vpack.c.b16 %v5004, %v5003
    %v5226 = vpack.c.b16 %v5006, %v5005
    %v5227 = vpack.c.b16 %v5008, %v5007
    %v5228 = vpack.c.b16 %v5010, %v5009
    %v5229 = vpack.c.b16 %v5012, %v5011
    %v5230 = vpack.c.b16 %v5014, %v5013
    %v5231 = vpack.c.b16 %v5016, %v5015
    %v5232 = vpack.c.b16 %v5018, %v5017
    %v5233 = vpack.c.b16 %v5020, %v5019
    %v5234 = vpack.c.b16 %v5022, %v5021
    %v5235 = vpack.c.b16 %v5024, %v5023
    %v5236 = vpack.c.b16 %v5026, %v5025
    %v5237 = vpack.c.b16 %v5028, %v5027
    %v5238 = vpack.c.b16 %v5030, %v5029
    %v5239 = vpack.c.b16 %v5032, %v5031
    %v5240 = vpack.c.b16 %v5034, %v5033
    %v5241 = vpack.c.b16 %v5036, %v5035
    %v5242 = vpack.c.b16 %v5038, %v5037
    %v5243 = vpack.c.b16 %v5040, %v5039
    %v5244 = vpack.c.b16 %v5042, %v5041
    %v5245 = vpack.c.b16 %v5044, %v5043
    %v5246 = vpack.c.b16 %v5046, %v5045
    %v5247 = vpack.c.b16 %v5048, %v5047
    %v5248 = vpack.c.b16 %v5050, %v5049
    %v5249 = vpack.c.b16 %v5052, %v5051
    %v5250 = vpack.c.b16 %v5054, %v5053
    %v5251 = vpack.c.b16 %v5056, %v5055
    %v5252 = vpack.c.b16 %v5058, %v5057
    %v5253 = vpack.c.b16 %v5060, %v5059
    %v5254 = vpack.c.b16 %v5062, %v5061
    %v5255 = vpack.c.b16 %v5064, %v5063
    %v5256 = vpack.c.b16 %v5066, %v5065
    %v5257 = vpack.c.b16 %v5068, %v5067
    %v5258 = vpack.c.b16 %v5070, %v5069
    %v5259 = vpack.c.b16 %v5072, %v5071
    %v5260 = vpack.c.b16 %v5074, %v5073
    %v5261 = vpack.c.b16 %v5076, %v5075
    %v5262 = vpack.c.b16 %v5078, %v5077
    %v5263 = vpack.c.b16 %v5080, %v5079
    %v5264 = vpack.c.b16 %v5082, %v5081
    %v5265 = vpack.c.b16 %v5084, %v5083
    %v5266 = vpack.c.b16 %v5086, %v5085
    %v5267 = vpack.c.b16 %v5088, %v5087
    %v5268 = vpack.c.b16 %v5090, %v5089
    %v5269 = vpack.c.b16 %v5092, %v5091
    %v5270 = vpack.c.b16 %v5094, %v5093
    %v5271 = vpack.c.b16 %v5096, %v5095
    %v5272 = vpack.c.b16 %v5098, %v5097
    %v5273 = vpack.c.b16 %v5100, %v5099
    %v5274 = vpack.c.b16 %v5102, %v5101
    %v5275 = vpack.c.b16 %v5104, %v5103
    %v5276 = vpack.c.b16 %v5106, %v5105
    %v5277 = vpack.c.b16 %v5108, %v5107
    %v5278 = vpack.c.b16 %v5110, %v5109
    %v5279 = vpack.c.b16 %v5112, %v5111
    %v5280 = vpack.c.b16 %v5114, %v5113
    %v5281 = vpack.c.b16 %v5116, %v5115
    %v5282 = vpack.c.b16 %v5118, %v5117
    %v5283 = vpack.c.b16 %v5120, %v5119
    %v5284 = vpack.c.b16 %v5122, %v5121
    %v5285 = vpack.c.b16 %v5124, %v5123
    %v5286 = vpack.c.b16 %v5126, %v5125
    %v5287 = vpack.c.b16 %v5128, %v5127
    %v5288 = vpack.c.b16 %v5130, %v5129
    %v5289 = vpack.c.b16 %v5132, %v5131
    %v5290 = vpack.c.b16 %v5134, %v5133
    %v5291 = vpack.c.b16 %v5136, %v5135
    %v5292 = vpack.c.b16 %v5138, %v5137
    %v5293 = vpack.c.b16 %v5140, %v5139
    %v5294 = vpack.c.b16 %v5142, %v5141
    %v5295 = vpack.c.b16 %v5144, %v5143
    %v5296 = vpack.c.b16 %v5146, %v5145
    %v5297 = vpack.c.b16 %v5148, %v5147
    %v5298 = vpack.c.b16 %v5150, %v5149
    %v5299 = vpack.c.b16 %v5152, %v5151
    %v5300 = vpack.c.b16 %v5154, %v5153
    %v5301 = vpack.c.b16 %v5156, %v5155
    %v5302 = vpack.c.b16 %v5158, %v5157
    %v5303 = vpack.c.b16 %v5160, %v5159
    %v5304 = vpack.c.b16 %v5162, %v5161
    %v5305 = vpack.c.b16 %v5164, %v5163
    %v5306 = vpack.c.b16 %v5166, %v5165
    %v5307 = vpack.c.b16 %v5168, %v5167
    %v5308 = vpack.c.b16 %v5170, %v5169
    %v5309 = vpack.c.b16 %v5172, %v5171
    %v5310 = vpack.c.b16 %v5174, %v5173
    %v5311 = vpack.c.b16 %v5176, %v5175
    %v5312 = vpack.c.b16 %v5178, %v5177
    %v5313 = vpack.c.b16 %v5180, %v5179
    %v5314 = vpack.c.b16 %v5182, %v5181
    %v5315 = vpack.c.b16 %v5184, %v5183
    %v5316 = vpack.c.b16 %v5186, %v5185
    %v5317 = vpack.c.b16 %v5188, %v5187
    %v5318 = vpack.c.b16 %v5190, %v5189
    %5447 = vmatprep.subr.bf16.mxu0 0
    %5448 = vmatpush1.bf16.msra.mxu0 %v5198
    %5449 = vmatprep.subr.bf16.mxu0 0
    %5450 = vmatpush1.bf16.msra.mxu0 %v5197
    %5451 = vmatprep.subr.bf16.mxu0 0
    %5452 = vmatpush1.bf16.msra.mxu0 %v5196
    %5453 = vmatprep.subr.bf16.mxu0 0
    %5454 = vmatpush1.bf16.msra.mxu0 %v5195
    %5455 = vmatprep.subr.bf16.mxu0 0
    %5456 = vmatpush1.bf16.msra.mxu0 %v5194
    %5457 = vmatprep.subr.bf16.mxu0 0
    %5458 = vmatpush1.bf16.msra.mxu0 %v5193
    %5459 = vmatprep.subr.bf16.mxu0 0
    %5460 = vmatpush1.bf16.msra.mxu0 %v5192
    %5461 = vmatprep.subr.bf16.mxu0 0
    %5462 = vmatpush1.bf16.msra.mxu0 %v5191
    %5463 = vmatprep.subr.bf16.mxu0 0
    %5464 = vmatpush2.bf16.msra.mxu0 %v5206
    %5465 = vmatprep.subr.bf16.mxu0 0
    %5466 = vmatpush2.bf16.msra.mxu0 %v5205
    %5467 = vmatprep.subr.bf16.mxu0 0
    %5468 = vmatpush2.bf16.msra.mxu0 %v5204
    %5469 = vmatprep.subr.bf16.mxu0 0
    %5470 = vmatpush2.bf16.msra.mxu0 %v5203
    %5471 = vmatprep.subr.bf16.mxu0 0
    %5472 = vmatpush2.bf16.msra.mxu0 %v5202
    %5473 = vmatprep.subr.bf16.mxu0 0
    %5474 = vmatpush2.bf16.msra.mxu0 %v5201
    %5475 = vmatprep.subr.bf16.mxu0 0
    %5476 = vmatpush2.bf16.msra.mxu0 %v5200
    %5477 = vmatprep.subr.bf16.mxu0 0
    %5478 = vmatpush2.bf16.msra.mxu0 %v5199
    %5479 = vmatprep.mubr.bf16.mxu0 %v4660
    %5480 = vmatmul.mubr.bf16.gmra.mxu0 %v4659
    %v5481 = vpop.f32.mrf.mxu0
    %v5482 = vadd.f32 %v4678, %v5481
    %v5483 = vpop.f32.mrf.mxu0
    %v5484 = vpop.f32.mrf.mxu0
    %v5485 = vadd.f32 %v4678, %v5484
    %v5486 = vpop.f32.mrf.mxu0
    %5487 = vdwg.mxu0
    %5488 = vmatprep.subr.bf16.mxu0 0
    %5489 = vmatpush1.bf16.msra.mxu0 %v5214
    %5490 = vmatprep.subr.bf16.mxu0 0
    %5491 = vmatpush1.bf16.msra.mxu0 %v5213
    %5492 = vmatprep.subr.bf16.mxu0 0
    %5493 = vmatpush1.bf16.msra.mxu0 %v5212
    %5494 = vmatprep.subr.bf16.mxu0 0
    %5495 = vmatpush1.bf16.msra.mxu0 %v5211
    %5496 = vmatprep.subr.bf16.mxu0 0
    %5497 = vmatpush1.bf16.msra.mxu0 %v5210
    %5498 = vmatprep.subr.bf16.mxu0 0
    %5499 = vmatpush1.bf16.msra.mxu0 %v5209
    %5500 = vmatprep.subr.bf16.mxu0 0
    %5501 = vmatpush1.bf16.msra.mxu0 %v5208
    %5502 = vmatprep.subr.bf16.mxu0 0
    %5503 = vmatpush1.bf16.msra.mxu0 %v5207
    %5504 = vmatprep.subr.bf16.mxu0 0
    %5505 = vmatpush2.bf16.msra.mxu0 %v5222
    %5506 = vmatprep.subr.bf16.mxu0 0
    %5507 = vmatpush2.bf16.msra.mxu0 %v5221
    %5508 = vmatprep.subr.bf16.mxu0 0
    %5509 = vmatpush2.bf16.msra.mxu0 %v5220
    %5510 = vmatprep.subr.bf16.mxu0 0
    %5511 = vmatpush2.bf16.msra.mxu0 %v5219
    %5512 = vmatprep.subr.bf16.mxu0 0
    %5513 = vmatpush2.bf16.msra.mxu0 %v5218
    %5514 = vmatprep.subr.bf16.mxu0 0
    %5515 = vmatpush2.bf16.msra.mxu0 %v5217
    %5516 = vmatprep.subr.bf16.mxu0 0
    %5517 = vmatpush2.bf16.msra.mxu0 %v5216
    %5518 = vmatprep.subr.bf16.mxu0 0
    %5519 = vmatpush2.bf16.msra.mxu0 %v5215
    %5520 = vmatprep.mubr.bf16.mxu0 %v4662
    %5521 = vmatmul.mubr.bf16.gmra.mxu0 %v4661
    %v5522 = vpop.f32.mrf.mxu0
    %v5523 = vadd.f32 %v5482, %v5522
    %v5524 = vpop.f32.mrf.mxu0
    %v5525 = vpop.f32.mrf.mxu0
    %v5526 = vadd.f32 %v5485, %v5525
    %v5527 = vpop.f32.mrf.mxu0
    %5528 = vdwg.mxu0
    %5529 = vmatprep.subr.bf16.mxu0 0
    %5530 = vmatpush1.bf16.msra.mxu0 %v5230
    %5531 = vmatprep.subr.bf16.mxu0 0
    %5532 = vmatpush1.bf16.msra.mxu0 %v5229
    %5533 = vmatprep.subr.bf16.mxu0 0
    %5534 = vmatpush1.bf16.msra.mxu0 %v5228
    %5535 = vmatprep.subr.bf16.mxu0 0
    %5536 = vmatpush1.bf16.msra.mxu0 %v5227
    %5537 = vmatprep.subr.bf16.mxu0 0
    %5538 = vmatpush1.bf16.msra.mxu0 %v5226
    %5539 = vmatprep.subr.bf16.mxu0 0
    %5540 = vmatpush1.bf16.msra.mxu0 %v5225
    %5541 = vmatprep.subr.bf16.mxu0 0
    %5542 = vmatpush1.bf16.msra.mxu0 %v5224
    %5543 = vmatprep.subr.bf16.mxu0 0
    %5544 = vmatpush1.bf16.msra.mxu0 %v5223
    %5545 = vmatprep.subr.bf16.mxu0 0
    %5546 = vmatpush2.bf16.msra.mxu0 %v5238
    %5547 = vmatprep.subr.bf16.mxu0 0
    %5548 = vmatpush2.bf16.msra.mxu0 %v5237
    %5549 = vmatprep.subr.bf16.mxu0 0
    %5550 = vmatpush2.bf16.msra.mxu0 %v5236
    %5551 = vmatprep.subr.bf16.mxu0 0
    %5552 = vmatpush2.bf16.msra.mxu0 %v5235
    %5553 = vmatprep.subr.bf16.mxu0 0
    %5554 = vmatpush2.bf16.msra.mxu0 %v5234
    %5555 = vmatprep.subr.bf16.mxu0 0
    %5556 = vmatpush2.bf16.msra.mxu0 %v5233
    %5557 = vmatprep.subr.bf16.mxu0 0
    %5558 = vmatpush2.bf16.msra.mxu0 %v5232
    %5559 = vmatprep.subr.bf16.mxu0 0
    %5560 = vmatpush2.bf16.msra.mxu0 %v5231
    %5561 = vmatprep.mubr.bf16.mxu0 %v4664
    %5562 = vmatmul.mubr.bf16.gmra.mxu0 %v4663
    %v5563 = vpop.f32.mrf.mxu0
    %v5564 = vadd.f32 %v5523, %v5563
    %v5565 = vpop.f32.mrf.mxu0
    %v5566 = vpop.f32.mrf.mxu0
    %v5567 = vadd.f32 %v5526, %v5566
    %v5568 = vpop.f32.mrf.mxu0
    %5569 = vdwg.mxu0
    %5570 = vmatprep.subr.bf16.mxu0 0
    %5571 = vmatpush1.bf16.msra.mxu0 %v5246
    %5572 = vmatprep.subr.bf16.mxu0 0
    %5573 = vmatpush1.bf16.msra.mxu0 %v5245
    %5574 = vmatprep.subr.bf16.mxu0 0
    %5575 = vmatpush1.bf16.msra.mxu0 %v5244
    %5576 = vmatprep.subr.bf16.mxu0 0
    %5577 = vmatpush1.bf16.msra.mxu0 %v5243
    %5578 = vmatprep.subr.bf16.mxu0 0
    %5579 = vmatpush1.bf16.msra.mxu0 %v5242
    %5580 = vmatprep.subr.bf16.mxu0 0
    %5581 = vmatpush1.bf16.msra.mxu0 %v5241
    %5582 = vmatprep.subr.bf16.mxu0 0
    %5583 = vmatpush1.bf16.msra.mxu0 %v5240
    %5584 = vmatprep.subr.bf16.mxu0 0
    %5585 = vmatpush1.bf16.msra.mxu0 %v5239
    %5586 = vmatprep.subr.bf16.mxu0 0
    %5587 = vmatpush2.bf16.msra.mxu0 %v5254
    %5588 = vmatprep.subr.bf16.mxu0 0
    %5589 = vmatpush2.bf16.msra.mxu0 %v5253
    %5590 = vmatprep.subr.bf16.mxu0 0
    %5591 = vmatpush2.bf16.msra.mxu0 %v5252
    %5592 = vmatprep.subr.bf16.mxu0 0
    %5593 = vmatpush2.bf16.msra.mxu0 %v5251
    %5594 = vmatprep.subr.bf16.mxu0 0
    %5595 = vmatpush2.bf16.msra.mxu0 %v5250
    %5596 = vmatprep.subr.bf16.mxu0 0
    %5597 = vmatpush2.bf16.msra.mxu0 %v5249
    %5598 = vmatprep.subr.bf16.mxu0 0
    %5599 = vmatpush2.bf16.msra.mxu0 %v5248
    %5600 = vmatprep.subr.bf16.mxu0 0
    %5601 = vmatpush2.bf16.msra.mxu0 %v5247
    %5602 = vmatprep.mubr.bf16.mxu0 %v4666
    %5603 = vmatmul.mubr.bf16.gmra.mxu0 %v4665
    %v5604 = vpop.f32.mrf.mxu0
    %v5605 = vadd.f32 %v5564, %v5604
    %v5606 = vpop.f32.mrf.mxu0
    %v5607 = vpop.f32.mrf.mxu0
    %v5608 = vadd.f32 %v5567, %v5607
    %v5609 = vpop.f32.mrf.mxu0
    %5610 = vdwg.mxu0
    %5611 = vmatprep.subr.bf16.mxu0 0
    %5612 = vmatpush1.bf16.msra.mxu0 %v5262
    %5613 = vmatprep.subr.bf16.mxu0 0
    %5614 = vmatpush1.bf16.msra.mxu0 %v5261
    %5615 = vmatprep.subr.bf16.mxu0 0
    %5616 = vmatpush1.bf16.msra.mxu0 %v5260
    %5617 = vmatprep.subr.bf16.mxu0 0
    %5618 = vmatpush1.bf16.msra.mxu0 %v5259
    %5619 = vmatprep.subr.bf16.mxu0 0
    %5620 = vmatpush1.bf16.msra.mxu0 %v5258
    %5621 = vmatprep.subr.bf16.mxu0 0
    %5622 = vmatpush1.bf16.msra.mxu0 %v5257
    %5623 = vmatprep.subr.bf16.mxu0 0
    %5624 = vmatpush1.bf16.msra.mxu0 %v5256
    %5625 = vmatprep.subr.bf16.mxu0 0
    %5626 = vmatpush1.bf16.msra.mxu0 %v5255
    %5627 = vmatprep.subr.bf16.mxu0 0
    %5628 = vmatpush2.bf16.msra.mxu0 %v5270
    %5629 = vmatprep.subr.bf16.mxu0 0
    %5630 = vmatpush2.bf16.msra.mxu0 %v5269
    %5631 = vmatprep.subr.bf16.mxu0 0
    %5632 = vmatpush2.bf16.msra.mxu0 %v5268
    %5633 = vmatprep.subr.bf16.mxu0 0
    %5634 = vmatpush2.bf16.msra.mxu0 %v5267
    %5635 = vmatprep.subr.bf16.mxu0 0
    %5636 = vmatpush2.bf16.msra.mxu0 %v5266
    %5637 = vmatprep.subr.bf16.mxu0 0
    %5638 = vmatpush2.bf16.msra.mxu0 %v5265
    %5639 = vmatprep.subr.bf16.mxu0 0
    %5640 = vmatpush2.bf16.msra.mxu0 %v5264
    %5641 = vmatprep.subr.bf16.mxu0 0
    %5642 = vmatpush2.bf16.msra.mxu0 %v5263
    %5643 = vmatprep.mubr.bf16.mxu0 %v4668
    %5644 = vmatmul.mubr.bf16.gmra.mxu0 %v4667
    %v5645 = vpop.f32.mrf.mxu0
    %v5646 = vadd.f32 %v5605, %v5645
    %v5647 = vpop.f32.mrf.mxu0
    %v5648 = vpop.f32.mrf.mxu0
    %v5649 = vadd.f32 %v5608, %v5648
    %v5650 = vpop.f32.mrf.mxu0
    %5651 = vdwg.mxu0
    %5652 = vmatprep.subr.bf16.mxu0 0
    %5653 = vmatpush1.bf16.msra.mxu0 %v5278
    %5654 = vmatprep.subr.bf16.mxu0 0
    %5655 = vmatpush1.bf16.msra.mxu0 %v5277
    %5656 = vmatprep.subr.bf16.mxu0 0
    %5657 = vmatpush1.bf16.msra.mxu0 %v5276
    %5658 = vmatprep.subr.bf16.mxu0 0
    %5659 = vmatpush1.bf16.msra.mxu0 %v5275
    %5660 = vmatprep.subr.bf16.mxu0 0
    %5661 = vmatpush1.bf16.msra.mxu0 %v5274
    %5662 = vmatprep.subr.bf16.mxu0 0
    %5663 = vmatpush1.bf16.msra.mxu0 %v5273
    %5664 = vmatprep.subr.bf16.mxu0 0
    %5665 = vmatpush1.bf16.msra.mxu0 %v5272
    %5666 = vmatprep.subr.bf16.mxu0 0
    %5667 = vmatpush1.bf16.msra.mxu0 %v5271
    %5668 = vmatprep.subr.bf16.mxu0 0
    %5669 = vmatpush2.bf16.msra.mxu0 %v5286
    %5670 = vmatprep.subr.bf16.mxu0 0
    %5671 = vmatpush2.bf16.msra.mxu0 %v5285
    %5672 = vmatprep.subr.bf16.mxu0 0
    %5673 = vmatpush2.bf16.msra.mxu0 %v5284
    %5674 = vmatprep.subr.bf16.mxu0 0
    %5675 = vmatpush2.bf16.msra.mxu0 %v5283
    %5676 = vmatprep.subr.bf16.mxu0 0
    %5677 = vmatpush2.bf16.msra.mxu0 %v5282
    %5678 = vmatprep.subr.bf16.mxu0 0
    %5679 = vmatpush2.bf16.msra.mxu0 %v5281
    %5680 = vmatprep.subr.bf16.mxu0 0
    %5681 = vmatpush2.bf16.msra.mxu0 %v5280
    %5682 = vmatprep.subr.bf16.mxu0 0
    %5683 = vmatpush2.bf16.msra.mxu0 %v5279
    %5684 = vmatprep.mubr.bf16.mxu0 %v4670
    %5685 = vmatmul.mubr.bf16.gmra.mxu0 %v4669
    %v5686 = vpop.f32.mrf.mxu0
    %v5687 = vadd.f32 %v5646, %v5686
    %v5688 = vpop.f32.mrf.mxu0
    %v5689 = vpop.f32.mrf.mxu0
    %v5690 = vadd.f32 %v5649, %v5689
    %v5691 = vpop.f32.mrf.mxu0
    %5692 = vdwg.mxu0
    %5693 = vmatprep.subr.bf16.mxu0 0
    %5694 = vmatpush1.bf16.msra.mxu0 %v5294
    %5695 = vmatprep.subr.bf16.mxu0 0
    %5696 = vmatpush1.bf16.msra.mxu0 %v5293
    %5697 = vmatprep.subr.bf16.mxu0 0
    %5698 = vmatpush1.bf16.msra.mxu0 %v5292
    %5699 = vmatprep.subr.bf16.mxu0 0
    %5700 = vmatpush1.bf16.msra.mxu0 %v5291
    %5701 = vmatprep.subr.bf16.mxu0 0
    %5702 = vmatpush1.bf16.msra.mxu0 %v5290
    %5703 = vmatprep.subr.bf16.mxu0 0
    %5704 = vmatpush1.bf16.msra.mxu0 %v5289
    %5705 = vmatprep.subr.bf16.mxu0 0
    %5706 = vmatpush1.bf16.msra.mxu0 %v5288
    %5707 = vmatprep.subr.bf16.mxu0 0
    %5708 = vmatpush1.bf16.msra.mxu0 %v5287
    %5709 = vmatprep.subr.bf16.mxu0 0
    %5710 = vmatpush2.bf16.msra.mxu0 %v5302
    %5711 = vmatprep.subr.bf16.mxu0 0
    %5712 = vmatpush2.bf16.msra.mxu0 %v5301
    %5713 = vmatprep.subr.bf16.mxu0 0
    %5714 = vmatpush2.bf16.msra.mxu0 %v5300
    %5715 = vmatprep.subr.bf16.mxu0 0
    %5716 = vmatpush2.bf16.msra.mxu0 %v5299
    %5717 = vmatprep.subr.bf16.mxu0 0
    %5718 = vmatpush2.bf16.msra.mxu0 %v5298
    %5719 = vmatprep.subr.bf16.mxu0 0
    %5720 = vmatpush2.bf16.msra.mxu0 %v5297
    %5721 = vmatprep.subr.bf16.mxu0 0
    %5722 = vmatpush2.bf16.msra.mxu0 %v5296
    %5723 = vmatprep.subr.bf16.mxu0 0
    %5724 = vmatpush2.bf16.msra.mxu0 %v5295
    %5725 = vmatprep.mubr.bf16.mxu0 %v4672
    %5726 = vmatmul.mubr.bf16.gmra.mxu0 %v4671
    %v5727 = vpop.f32.mrf.mxu0
    %v5728 = vadd.f32 %v5687, %v5727
    %v5729 = vpop.f32.mrf.mxu0
    %v5730 = vpop.f32.mrf.mxu0
    %v5731 = vadd.f32 %v5690, %v5730
    %v5732 = vpop.f32.mrf.mxu0
    %5733 = vdwg.mxu0
    %5734 = vmatprep.subr.bf16.mxu0 0
    %5735 = vmatpush1.bf16.msra.mxu0 %v5310
    %5736 = vmatprep.subr.bf16.mxu0 0
    %5737 = vmatpush1.bf16.msra.mxu0 %v5309
    %5738 = vmatprep.subr.bf16.mxu0 0
    %5739 = vmatpush1.bf16.msra.mxu0 %v5308
    %5740 = vmatprep.subr.bf16.mxu0 0
    %5741 = vmatpush1.bf16.msra.mxu0 %v5307
    %5742 = vmatprep.subr.bf16.mxu0 0
    %5743 = vmatpush1.bf16.msra.mxu0 %v5306
    %5744 = vmatprep.subr.bf16.mxu0 0
    %5745 = vmatpush1.bf16.msra.mxu0 %v5305
    %5746 = vmatprep.subr.bf16.mxu0 0
    %5747 = vmatpush1.bf16.msra.mxu0 %v5304
    %5748 = vmatprep.subr.bf16.mxu0 0
    %5749 = vmatpush1.bf16.msra.mxu0 %v5303
    %5750 = vmatprep.subr.bf16.mxu0 0
    %5751 = vmatpush2.bf16.msra.mxu0 %v5318
    %5752 = vmatprep.subr.bf16.mxu0 0
    %5753 = vmatpush2.bf16.msra.mxu0 %v5317
    %5754 = vmatprep.subr.bf16.mxu0 0
    %5755 = vmatpush2.bf16.msra.mxu0 %v5316
    %5756 = vmatprep.subr.bf16.mxu0 0
    %5757 = vmatpush2.bf16.msra.mxu0 %v5315
    %5758 = vmatprep.subr.bf16.mxu0 0
    %5759 = vmatpush2.bf16.msra.mxu0 %v5314
    %5760 = vmatprep.subr.bf16.mxu0 0
    %5761 = vmatpush2.bf16.msra.mxu0 %v5313
    %5762 = vmatprep.subr.bf16.mxu0 0
    %5763 = vmatpush2.bf16.msra.mxu0 %v5312
    %5764 = vmatprep.subr.bf16.mxu0 0
    %5765 = vmatpush2.bf16.msra.mxu0 %v5311
    %5766 = vmatprep.mubr.bf16.mxu0 %v4674
    %5767 = vmatmul.mubr.bf16.gmra.mxu0 %v4673
    %v5768 = vpop.f32.mrf.mxu0
    %v5769 = vadd.f32 %v5728, %v5768
    %v5770 = vpop.f32.mrf.mxu0
    %v5771 = vpop.f32.mrf.mxu0
    %v5772 = vadd.f32 %v5731, %v5771
    %v5773 = vpop.f32.mrf.mxu0
    %5774 = vdwg.mxu0
    %v5775 = vadd.f32 %v4035, %v5769
    %v5776 = vadd.f32 %v4036, %v5772
    %v5777 = vsel %vm376, %v5775, 0.0
    %5778 = vadd.xlane.f32.xlu0 %v5777
    %v5779 = vpop.xlane.xlu0 %5778
    %v5780 = vsel %vm376, %v5776, 0.0
    %5781 = vadd.xlane.f32.xlu0 %v5780
    %v5782 = vpop.xlane.xlu0 %5781
    %v5783 = vmul.f32 %v5779, %v1123
    %v5784 = vmul.f32 %v5782, %v1123
    %v5785 = vsub.f32 %v5775, %v5783
    %v5786 = vsub.f32 %v5776, %v5784
    %v5787 = vmul.f32 %v5785, %v5785
    %v5788 = vmul.f32 %v5786, %v5786
    %v5789 = vsel %vm376, %v5787, 0.0
    %5790 = vadd.xlane.f32.xlu0 %v5789
    %v5791 = vpop.xlane.xlu0 %5790
    %v5792 = vsel %vm376, %v5788, 0.0
    %5793 = vadd.xlane.f32.xlu0 %v5792
    %v5794 = vpop.xlane.xlu0 %5793
    %v5795 = vmul.f32 %v5791, %v1123
    %v5796 = vmul.f32 %v5794, %v1123
    %v5797 = vadd.f32 %v5795, 1e-05
    %v5798 = vadd.f32 %v5796, 1e-05
    %v5799 = vrsqrt.pop %v5797
    %v5800 = vrsqrt.pop %v5798
    %v5801 = vmul.f32 %v5785, %v5799
    %v5802 = vmul.f32 %v5786, %v5800
    %v5803 = vlaneseq
    %v5804 = vshrl.u32 %v5803, 7
    %v5805 = vsub.s32 4, %v5804
    %v5806 = vrot.slane %v3240, %v5805
    %v5807 = vmul.f32 %v5801, %v5806
    %v5808 = vmul.f32 %v5802, %v5806
    %v5809 = vlaneseq
    %v5810 = vshrl.u32 %v5809, 7
    %v5811 = vsub.s32 5, %v5810
    %v5812 = vrot.slane %v3240, %v5811
    %v5813 = vadd.f32 %v5807, %v5812
    %v5814 = vadd.f32 %v5808, %v5812
    %s5815 = scalar_lea.vmem %s6, 32
    %v5816 = vld [vmem:[%s5815] sm:$0xf]
    %v5817 = vld [vmem:[%s5815 + $0x4] sm:$0xf]
    %v5818 = vld [vmem:[%s5815 + $0x8] sm:$0xf]
    %v5819 = vld [vmem:[%s5815 + $0xc] sm:$0xf]
    %s5820 = scalar_lea.vmem %s7, 2
    %v5821 = vld [vmem:[%s5820] sm:$0x1]
    %s5822 = scalar_lea.vmem %s8, 32
    %v5823 = vld [vmem:[%s5822] sm:$0xf]
    %v5824 = vld [vmem:[%s5822 + $0x4] sm:$0xf]
    %v5825 = vld [vmem:[%s5822 + $0x8] sm:$0xf]
    %v5826 = vld [vmem:[%s5822 + $0xc] sm:$0xf]
    %s5827 = scalar_lea.vmem %s10, 512
    %v5828 = vld [vmem:[%s5827] sm:$0xff]
    %v5829 = vld [vmem:[%s5827 + $0x8] sm:$0xff]
    %v5830 = vld [vmem:[%s5827 + $0x10] sm:$0xff]
    %v5831 = vld [vmem:[%s5827 + $0x18] sm:$0xff]
    %v5832 = vld [vmem:[%s5827 + $0x20] sm:$0xff]
    %v5833 = vld [vmem:[%s5827 + $0x28] sm:$0xff]
    %v5834 = vld [vmem:[%s5827 + $0x30] sm:$0xff]
    %v5835 = vld [vmem:[%s5827 + $0x38] sm:$0xff]
    %v5836 = vld [vmem:[%s5827 + $0x40] sm:$0xff]
    %v5837 = vld [vmem:[%s5827 + $0x48] sm:$0xff]
    %v5838 = vld [vmem:[%s5827 + $0x50] sm:$0xff]
    %v5839 = vld [vmem:[%s5827 + $0x58] sm:$0xff]
    %v5840 = vld [vmem:[%s5827 + $0x60] sm:$0xff]
    %v5841 = vld [vmem:[%s5827 + $0x68] sm:$0xff]
    %v5842 = vld [vmem:[%s5827 + $0x70] sm:$0xff]
    %v5843 = vld [vmem:[%s5827 + $0x78] sm:$0xff]
    %v5844 = vld [vmem:[%s5827 + $0x80] sm:$0xff]
    %v5845 = vld [vmem:[%s5827 + $0x88] sm:$0xff]
    %v5846 = vld [vmem:[%s5827 + $0x90] sm:$0xff]
    %v5847 = vld [vmem:[%s5827 + $0x98] sm:$0xff]
    %v5848 = vld [vmem:[%s5827 + $0xa0] sm:$0xff]
    %v5849 = vld [vmem:[%s5827 + $0xa8] sm:$0xff]
    %v5850 = vld [vmem:[%s5827 + $0xb0] sm:$0xff]
    %v5851 = vld [vmem:[%s5827 + $0xb8] sm:$0xff]
    %v5852 = vld [vmem:[%s5827 + $0xc0] sm:$0xff]
    %v5853 = vld [vmem:[%s5827 + $0xc8] sm:$0xff]
    %v5854 = vld [vmem:[%s5827 + $0xd0] sm:$0xff]
    %v5855 = vld [vmem:[%s5827 + $0xd8] sm:$0xff]
    %v5856 = vld [vmem:[%s5827 + $0xe0] sm:$0xff]
    %v5857 = vld [vmem:[%s5827 + $0xe8] sm:$0xff]
    %v5858 = vld [vmem:[%s5827 + $0xf0] sm:$0xff]
    %v5859 = vld [vmem:[%s5827 + $0xf8] sm:$0xff]
    %s5860 = scalar_lea.vmem %s11, 32
    %v5861 = vld [vmem:[%s5860] sm:$0xff]
    %v5862 = vld [vmem:[%s5860 + $0x8] sm:$0xff]
    %s5863 = scalar_lea.vmem %s12, 2048
    %v5864 = vld [vmem:[%s5863] sm:$0xf]
    %v5865 = vld [vmem:[%s5863 + $0x4] sm:$0xf]
    %v5866 = vld [vmem:[%s5863 + $0x8] sm:$0xf]
    %v5867 = vld [vmem:[%s5863 + $0xc] sm:$0xf]
    %v5868 = vld [vmem:[%s5863 + $0x10] sm:$0xf]
    %v5869 = vld [vmem:[%s5863 + $0x14] sm:$0xf]
    %v5870 = vld [vmem:[%s5863 + $0x18] sm:$0xf]
    %v5871 = vld [vmem:[%s5863 + $0x1c] sm:$0xf]
    %v5872 = vld [vmem:[%s5863 + $0x20] sm:$0xf]
    %v5873 = vld [vmem:[%s5863 + $0x24] sm:$0xf]
    %v5874 = vld [vmem:[%s5863 + $0x28] sm:$0xf]
    %v5875 = vld [vmem:[%s5863 + $0x2c] sm:$0xf]
    %v5876 = vld [vmem:[%s5863 + $0x30] sm:$0xf]
    %v5877 = vld [vmem:[%s5863 + $0x34] sm:$0xf]
    %v5878 = vld [vmem:[%s5863 + $0x38] sm:$0xf]
    %v5879 = vld [vmem:[%s5863 + $0x3c] sm:$0xf]
    %v5880 = vld [vmem:[%s5863 + $0x40] sm:$0xf]
    %v5881 = vld [vmem:[%s5863 + $0x44] sm:$0xf]
    %v5882 = vld [vmem:[%s5863 + $0x48] sm:$0xf]
    %v5883 = vld [vmem:[%s5863 + $0x4c] sm:$0xf]
    %v5884 = vld [vmem:[%s5863 + $0x50] sm:$0xf]
    %v5885 = vld [vmem:[%s5863 + $0x54] sm:$0xf]
    %v5886 = vld [vmem:[%s5863 + $0x58] sm:$0xf]
    %v5887 = vld [vmem:[%s5863 + $0x5c] sm:$0xf]
    %v5888 = vld [vmem:[%s5863 + $0x60] sm:$0xf]
    %v5889 = vld [vmem:[%s5863 + $0x64] sm:$0xf]
    %v5890 = vld [vmem:[%s5863 + $0x68] sm:$0xf]
    %v5891 = vld [vmem:[%s5863 + $0x6c] sm:$0xf]
    %v5892 = vld [vmem:[%s5863 + $0x70] sm:$0xf]
    %v5893 = vld [vmem:[%s5863 + $0x74] sm:$0xf]
    %v5894 = vld [vmem:[%s5863 + $0x78] sm:$0xf]
    %v5895 = vld [vmem:[%s5863 + $0x7c] sm:$0xf]
    %v5896 = vld [vmem:[%s5863 + $0x80] sm:$0xf]
    %v5897 = vld [vmem:[%s5863 + $0x84] sm:$0xf]
    %v5898 = vld [vmem:[%s5863 + $0x88] sm:$0xf]
    %v5899 = vld [vmem:[%s5863 + $0x8c] sm:$0xf]
    %v5900 = vld [vmem:[%s5863 + $0x90] sm:$0xf]
    %v5901 = vld [vmem:[%s5863 + $0x94] sm:$0xf]
    %v5902 = vld [vmem:[%s5863 + $0x98] sm:$0xf]
    %v5903 = vld [vmem:[%s5863 + $0x9c] sm:$0xf]
    %v5904 = vld [vmem:[%s5863 + $0xa0] sm:$0xf]
    %v5905 = vld [vmem:[%s5863 + $0xa4] sm:$0xf]
    %v5906 = vld [vmem:[%s5863 + $0xa8] sm:$0xf]
    %v5907 = vld [vmem:[%s5863 + $0xac] sm:$0xf]
    %v5908 = vld [vmem:[%s5863 + $0xb0] sm:$0xf]
    %v5909 = vld [vmem:[%s5863 + $0xb4] sm:$0xf]
    %v5910 = vld [vmem:[%s5863 + $0xb8] sm:$0xf]
    %v5911 = vld [vmem:[%s5863 + $0xbc] sm:$0xf]
    %v5912 = vld [vmem:[%s5863 + $0xc0] sm:$0xf]
    %v5913 = vld [vmem:[%s5863 + $0xc4] sm:$0xf]
    %v5914 = vld [vmem:[%s5863 + $0xc8] sm:$0xf]
    %v5915 = vld [vmem:[%s5863 + $0xcc] sm:$0xf]
    %v5916 = vld [vmem:[%s5863 + $0xd0] sm:$0xf]
    %v5917 = vld [vmem:[%s5863 + $0xd4] sm:$0xf]
    %v5918 = vld [vmem:[%s5863 + $0xd8] sm:$0xf]
    %v5919 = vld [vmem:[%s5863 + $0xdc] sm:$0xf]
    %v5920 = vld [vmem:[%s5863 + $0xe0] sm:$0xf]
    %v5921 = vld [vmem:[%s5863 + $0xe4] sm:$0xf]
    %v5922 = vld [vmem:[%s5863 + $0xe8] sm:$0xf]
    %v5923 = vld [vmem:[%s5863 + $0xec] sm:$0xf]
    %v5924 = vld [vmem:[%s5863 + $0xf0] sm:$0xf]
    %v5925 = vld [vmem:[%s5863 + $0xf4] sm:$0xf]
    %v5926 = vld [vmem:[%s5863 + $0xf8] sm:$0xf]
    %v5927 = vld [vmem:[%s5863 + $0xfc] sm:$0xf]
    %v5928 = vld [vmem:[%s5863 + $0x100] sm:$0xf]
    %v5929 = vld [vmem:[%s5863 + $0x104] sm:$0xf]
    %v5930 = vld [vmem:[%s5863 + $0x108] sm:$0xf]
    %v5931 = vld [vmem:[%s5863 + $0x10c] sm:$0xf]
    %v5932 = vld [vmem:[%s5863 + $0x110] sm:$0xf]
    %v5933 = vld [vmem:[%s5863 + $0x114] sm:$0xf]
    %v5934 = vld [vmem:[%s5863 + $0x118] sm:$0xf]
    %v5935 = vld [vmem:[%s5863 + $0x11c] sm:$0xf]
    %v5936 = vld [vmem:[%s5863 + $0x120] sm:$0xf]
    %v5937 = vld [vmem:[%s5863 + $0x124] sm:$0xf]
    %v5938 = vld [vmem:[%s5863 + $0x128] sm:$0xf]
    %v5939 = vld [vmem:[%s5863 + $0x12c] sm:$0xf]
    %v5940 = vld [vmem:[%s5863 + $0x130] sm:$0xf]
    %v5941 = vld [vmem:[%s5863 + $0x134] sm:$0xf]
    %v5942 = vld [vmem:[%s5863 + $0x138] sm:$0xf]
    %v5943 = vld [vmem:[%s5863 + $0x13c] sm:$0xf]
    %v5944 = vld [vmem:[%s5863 + $0x140] sm:$0xf]
    %v5945 = vld [vmem:[%s5863 + $0x144] sm:$0xf]
    %v5946 = vld [vmem:[%s5863 + $0x148] sm:$0xf]
    %v5947 = vld [vmem:[%s5863 + $0x14c] sm:$0xf]
    %v5948 = vld [vmem:[%s5863 + $0x150] sm:$0xf]
    %v5949 = vld [vmem:[%s5863 + $0x154] sm:$0xf]
    %v5950 = vld [vmem:[%s5863 + $0x158] sm:$0xf]
    %v5951 = vld [vmem:[%s5863 + $0x15c] sm:$0xf]
    %v5952 = vld [vmem:[%s5863 + $0x160] sm:$0xf]
    %v5953 = vld [vmem:[%s5863 + $0x164] sm:$0xf]
    %v5954 = vld [vmem:[%s5863 + $0x168] sm:$0xf]
    %v5955 = vld [vmem:[%s5863 + $0x16c] sm:$0xf]
    %v5956 = vld [vmem:[%s5863 + $0x170] sm:$0xf]
    %v5957 = vld [vmem:[%s5863 + $0x174] sm:$0xf]
    %v5958 = vld [vmem:[%s5863 + $0x178] sm:$0xf]
    %v5959 = vld [vmem:[%s5863 + $0x17c] sm:$0xf]
    %v5960 = vld [vmem:[%s5863 + $0x180] sm:$0xf]
    %v5961 = vld [vmem:[%s5863 + $0x184] sm:$0xf]
    %v5962 = vld [vmem:[%s5863 + $0x188] sm:$0xf]
    %v5963 = vld [vmem:[%s5863 + $0x18c] sm:$0xf]
    %v5964 = vld [vmem:[%s5863 + $0x190] sm:$0xf]
    %v5965 = vld [vmem:[%s5863 + $0x194] sm:$0xf]
    %v5966 = vld [vmem:[%s5863 + $0x198] sm:$0xf]
    %v5967 = vld [vmem:[%s5863 + $0x19c] sm:$0xf]
    %v5968 = vld [vmem:[%s5863 + $0x1a0] sm:$0xf]
    %v5969 = vld [vmem:[%s5863 + $0x1a4] sm:$0xf]
    %v5970 = vld [vmem:[%s5863 + $0x1a8] sm:$0xf]
    %v5971 = vld [vmem:[%s5863 + $0x1ac] sm:$0xf]
    %v5972 = vld [vmem:[%s5863 + $0x1b0] sm:$0xf]
    %v5973 = vld [vmem:[%s5863 + $0x1b4] sm:$0xf]
    %v5974 = vld [vmem:[%s5863 + $0x1b8] sm:$0xf]
    %v5975 = vld [vmem:[%s5863 + $0x1bc] sm:$0xf]
    %v5976 = vld [vmem:[%s5863 + $0x1c0] sm:$0xf]
    %v5977 = vld [vmem:[%s5863 + $0x1c4] sm:$0xf]
    %v5978 = vld [vmem:[%s5863 + $0x1c8] sm:$0xf]
    %v5979 = vld [vmem:[%s5863 + $0x1cc] sm:$0xf]
    %v5980 = vld [vmem:[%s5863 + $0x1d0] sm:$0xf]
    %v5981 = vld [vmem:[%s5863 + $0x1d4] sm:$0xf]
    %v5982 = vld [vmem:[%s5863 + $0x1d8] sm:$0xf]
    %v5983 = vld [vmem:[%s5863 + $0x1dc] sm:$0xf]
    %v5984 = vld [vmem:[%s5863 + $0x1e0] sm:$0xf]
    %v5985 = vld [vmem:[%s5863 + $0x1e4] sm:$0xf]
    %v5986 = vld [vmem:[%s5863 + $0x1e8] sm:$0xf]
    %v5987 = vld [vmem:[%s5863 + $0x1ec] sm:$0xf]
    %v5988 = vld [vmem:[%s5863 + $0x1f0] sm:$0xf]
    %v5989 = vld [vmem:[%s5863 + $0x1f4] sm:$0xf]
    %v5990 = vld [vmem:[%s5863 + $0x1f8] sm:$0xf]
    %v5991 = vld [vmem:[%s5863 + $0x1fc] sm:$0xf]
    %v5992 = vld [vmem:[%s5863 + $0x200] sm:$0xf]
    %v5993 = vld [vmem:[%s5863 + $0x204] sm:$0xf]
    %v5994 = vld [vmem:[%s5863 + $0x208] sm:$0xf]
    %v5995 = vld [vmem:[%s5863 + $0x20c] sm:$0xf]
    %v5996 = vld [vmem:[%s5863 + $0x210] sm:$0xf]
    %v5997 = vld [vmem:[%s5863 + $0x214] sm:$0xf]
    %v5998 = vld [vmem:[%s5863 + $0x218] sm:$0xf]
    %v5999 = vld [vmem:[%s5863 + $0x21c] sm:$0xf]
    %v6000 = vld [vmem:[%s5863 + $0x220] sm:$0xf]
    %v6001 = vld [vmem:[%s5863 + $0x224] sm:$0xf]
    %v6002 = vld [vmem:[%s5863 + $0x228] sm:$0xf]
    %v6003 = vld [vmem:[%s5863 + $0x22c] sm:$0xf]
    %v6004 = vld [vmem:[%s5863 + $0x230] sm:$0xf]
    %v6005 = vld [vmem:[%s5863 + $0x234] sm:$0xf]
    %v6006 = vld [vmem:[%s5863 + $0x238] sm:$0xf]
    %v6007 = vld [vmem:[%s5863 + $0x23c] sm:$0xf]
    %v6008 = vld [vmem:[%s5863 + $0x240] sm:$0xf]
    %v6009 = vld [vmem:[%s5863 + $0x244] sm:$0xf]
    %v6010 = vld [vmem:[%s5863 + $0x248] sm:$0xf]
    %v6011 = vld [vmem:[%s5863 + $0x24c] sm:$0xf]
    %v6012 = vld [vmem:[%s5863 + $0x250] sm:$0xf]
    %v6013 = vld [vmem:[%s5863 + $0x254] sm:$0xf]
    %v6014 = vld [vmem:[%s5863 + $0x258] sm:$0xf]
    %v6015 = vld [vmem:[%s5863 + $0x25c] sm:$0xf]
    %v6016 = vld [vmem:[%s5863 + $0x260] sm:$0xf]
    %v6017 = vld [vmem:[%s5863 + $0x264] sm:$0xf]
    %v6018 = vld [vmem:[%s5863 + $0x268] sm:$0xf]
    %v6019 = vld [vmem:[%s5863 + $0x26c] sm:$0xf]
    %v6020 = vld [vmem:[%s5863 + $0x270] sm:$0xf]
    %v6021 = vld [vmem:[%s5863 + $0x274] sm:$0xf]
    %v6022 = vld [vmem:[%s5863 + $0x278] sm:$0xf]
    %v6023 = vld [vmem:[%s5863 + $0x27c] sm:$0xf]
    %v6024 = vld [vmem:[%s5863 + $0x280] sm:$0xf]
    %v6025 = vld [vmem:[%s5863 + $0x284] sm:$0xf]
    %v6026 = vld [vmem:[%s5863 + $0x288] sm:$0xf]
    %v6027 = vld [vmem:[%s5863 + $0x28c] sm:$0xf]
    %v6028 = vld [vmem:[%s5863 + $0x290] sm:$0xf]
    %v6029 = vld [vmem:[%s5863 + $0x294] sm:$0xf]
    %v6030 = vld [vmem:[%s5863 + $0x298] sm:$0xf]
    %v6031 = vld [vmem:[%s5863 + $0x29c] sm:$0xf]
    %v6032 = vld [vmem:[%s5863 + $0x2a0] sm:$0xf]
    %v6033 = vld [vmem:[%s5863 + $0x2a4] sm:$0xf]
    %v6034 = vld [vmem:[%s5863 + $0x2a8] sm:$0xf]
    %v6035 = vld [vmem:[%s5863 + $0x2ac] sm:$0xf]
    %v6036 = vld [vmem:[%s5863 + $0x2b0] sm:$0xf]
    %v6037 = vld [vmem:[%s5863 + $0x2b4] sm:$0xf]
    %v6038 = vld [vmem:[%s5863 + $0x2b8] sm:$0xf]
    %v6039 = vld [vmem:[%s5863 + $0x2bc] sm:$0xf]
    %v6040 = vld [vmem:[%s5863 + $0x2c0] sm:$0xf]
    %v6041 = vld [vmem:[%s5863 + $0x2c4] sm:$0xf]
    %v6042 = vld [vmem:[%s5863 + $0x2c8] sm:$0xf]
    %v6043 = vld [vmem:[%s5863 + $0x2cc] sm:$0xf]
    %v6044 = vld [vmem:[%s5863 + $0x2d0] sm:$0xf]
    %v6045 = vld [vmem:[%s5863 + $0x2d4] sm:$0xf]
    %v6046 = vld [vmem:[%s5863 + $0x2d8] sm:$0xf]
    %v6047 = vld [vmem:[%s5863 + $0x2dc] sm:$0xf]
    %v6048 = vld [vmem:[%s5863 + $0x2e0] sm:$0xf]
    %v6049 = vld [vmem:[%s5863 + $0x2e4] sm:$0xf]
    %v6050 = vld [vmem:[%s5863 + $0x2e8] sm:$0xf]
    %v6051 = vld [vmem:[%s5863 + $0x2ec] sm:$0xf]
    %v6052 = vld [vmem:[%s5863 + $0x2f0] sm:$0xf]
    %v6053 = vld [vmem:[%s5863 + $0x2f4] sm:$0xf]
    %v6054 = vld [vmem:[%s5863 + $0x2f8] sm:$0xf]
    %v6055 = vld [vmem:[%s5863 + $0x2fc] sm:$0xf]
    %v6056 = vld [vmem:[%s5863 + $0x300] sm:$0xf]
    %v6057 = vld [vmem:[%s5863 + $0x304] sm:$0xf]
    %v6058 = vld [vmem:[%s5863 + $0x308] sm:$0xf]
    %v6059 = vld [vmem:[%s5863 + $0x30c] sm:$0xf]
    %v6060 = vld [vmem:[%s5863 + $0x310] sm:$0xf]
    %v6061 = vld [vmem:[%s5863 + $0x314] sm:$0xf]
    %v6062 = vld [vmem:[%s5863 + $0x318] sm:$0xf]
    %v6063 = vld [vmem:[%s5863 + $0x31c] sm:$0xf]
    %v6064 = vld [vmem:[%s5863 + $0x320] sm:$0xf]
    %v6065 = vld [vmem:[%s5863 + $0x324] sm:$0xf]
    %v6066 = vld [vmem:[%s5863 + $0x328] sm:$0xf]
    %v6067 = vld [vmem:[%s5863 + $0x32c] sm:$0xf]
    %v6068 = vld [vmem:[%s5863 + $0x330] sm:$0xf]
    %v6069 = vld [vmem:[%s5863 + $0x334] sm:$0xf]
    %v6070 = vld [vmem:[%s5863 + $0x338] sm:$0xf]
    %v6071 = vld [vmem:[%s5863 + $0x33c] sm:$0xf]
    %v6072 = vld [vmem:[%s5863 + $0x340] sm:$0xf]
    %v6073 = vld [vmem:[%s5863 + $0x344] sm:$0xf]
    %v6074 = vld [vmem:[%s5863 + $0x348] sm:$0xf]
    %v6075 = vld [vmem:[%s5863 + $0x34c] sm:$0xf]
    %v6076 = vld [vmem:[%s5863 + $0x350] sm:$0xf]
    %v6077 = vld [vmem:[%s5863 + $0x354] sm:$0xf]
    %v6078 = vld [vmem:[%s5863 + $0x358] sm:$0xf]
    %v6079 = vld [vmem:[%s5863 + $0x35c] sm:$0xf]
    %v6080 = vld [vmem:[%s5863 + $0x360] sm:$0xf]
    %v6081 = vld [vmem:[%s5863 + $0x364] sm:$0xf]
    %v6082 = vld [vmem:[%s5863 + $0x368] sm:$0xf]
    %v6083 = vld [vmem:[%s5863 + $0x36c] sm:$0xf]
    %v6084 = vld [vmem:[%s5863 + $0x370] sm:$0xf]
    %v6085 = vld [vmem:[%s5863 + $0x374] sm:$0xf]
    %v6086 = vld [vmem:[%s5863 + $0x378] sm:$0xf]
    %v6087 = vld [vmem:[%s5863 + $0x37c] sm:$0xf]
    %v6088 = vld [vmem:[%s5863 + $0x380] sm:$0xf]
    %v6089 = vld [vmem:[%s5863 + $0x384] sm:$0xf]
    %v6090 = vld [vmem:[%s5863 + $0x388] sm:$0xf]
    %v6091 = vld [vmem:[%s5863 + $0x38c] sm:$0xf]
    %v6092 = vld [vmem:[%s5863 + $0x390] sm:$0xf]
    %v6093 = vld [vmem:[%s5863 + $0x394] sm:$0xf]
    %v6094 = vld [vmem:[%s5863 + $0x398] sm:$0xf]
    %v6095 = vld [vmem:[%s5863 + $0x39c] sm:$0xf]
    %v6096 = vld [vmem:[%s5863 + $0x3a0] sm:$0xf]
    %v6097 = vld [vmem:[%s5863 + $0x3a4] sm:$0xf]
    %v6098 = vld [vmem:[%s5863 + $0x3a8] sm:$0xf]
    %v6099 = vld [vmem:[%s5863 + $0x3ac] sm:$0xf]
    %v6100 = vld [vmem:[%s5863 + $0x3b0] sm:$0xf]
    %v6101 = vld [vmem:[%s5863 + $0x3b4] sm:$0xf]
    %v6102 = vld [vmem:[%s5863 + $0x3b8] sm:$0xf]
    %v6103 = vld [vmem:[%s5863 + $0x3bc] sm:$0xf]
    %v6104 = vld [vmem:[%s5863 + $0x3c0] sm:$0xf]
    %v6105 = vld [vmem:[%s5863 + $0x3c4] sm:$0xf]
    %v6106 = vld [vmem:[%s5863 + $0x3c8] sm:$0xf]
    %v6107 = vld [vmem:[%s5863 + $0x3cc] sm:$0xf]
    %v6108 = vld [vmem:[%s5863 + $0x3d0] sm:$0xf]
    %v6109 = vld [vmem:[%s5863 + $0x3d4] sm:$0xf]
    %v6110 = vld [vmem:[%s5863 + $0x3d8] sm:$0xf]
    %v6111 = vld [vmem:[%s5863 + $0x3dc] sm:$0xf]
    %v6112 = vld [vmem:[%s5863 + $0x3e0] sm:$0xf]
    %v6113 = vld [vmem:[%s5863 + $0x3e4] sm:$0xf]
    %v6114 = vld [vmem:[%s5863 + $0x3e8] sm:$0xf]
    %v6115 = vld [vmem:[%s5863 + $0x3ec] sm:$0xf]
    %v6116 = vld [vmem:[%s5863 + $0x3f0] sm:$0xf]
    %v6117 = vld [vmem:[%s5863 + $0x3f4] sm:$0xf]
    %v6118 = vld [vmem:[%s5863 + $0x3f8] sm:$0xf]
    %v6119 = vld [vmem:[%s5863 + $0x3fc] sm:$0xf]
    %s6120 = scalar_lea.vmem %s9, 16
    %v6121 = vld [vmem:[%s6120] sm:$0xff]
    %v6122 = vpack.c.bf16 %v5814, %v5813
    %v6124 = vlaneseq
    %v6125 = vshrl.u32 %v6124, 7
    %v6126 = vsub.s32 0, %v6125
    %v6127 = vrot.slane %v5821, %v6126
    %v6133 = vunpack.c.l.b16 %v5816
    %v6134 = vunpack.c.l.b16 %v5817
    %v6135 = vunpack.c.l.b16 %v5818
    %v6136 = vunpack.c.l.b16 %v5819
    %v6137 = vpack.c.b16 %v6134, %v6133
    %v6138 = vpack.c.b16 %v6136, %v6135
    %v6142 = vsel %vm376, %v6122, 0
    %6144 = vmatprep.subr.bf16.mxu0 0
    %6145 = vmatpush1.bf16.msra.mxu0 0
    %6146 = vmatprep.subr.bf16.mxu0 0
    %6147 = vmatpush1.bf16.msra.mxu0 0
    %6148 = vmatprep.subr.bf16.mxu0 0
    %6149 = vmatpush1.bf16.msra.mxu0 0
    %6150 = vmatprep.subr.bf16.mxu0 0
    %6151 = vmatpush1.bf16.msra.mxu0 0
    %6152 = vmatprep.subr.bf16.mxu0 0
    %6153 = vmatpush1.bf16.msra.mxu0 0
    %6154 = vmatprep.subr.bf16.mxu0 0
    %6155 = vmatpush1.bf16.msra.mxu0 0
    %6156 = vmatprep.subr.bf16.mxu0 0
    %6157 = vmatpush1.bf16.msra.mxu0 %v6138
    %6158 = vmatprep.subr.bf16.mxu0 0
    %6159 = vmatpush1.bf16.msra.mxu0 %v6137
    %6160 = vmatprep.subr.bf16.mxu0 0
    %6161 = vmatpush2.bf16.msra.mxu0 0
    %6162 = vmatprep.subr.bf16.mxu0 0
    %6163 = vmatpush2.bf16.msra.mxu0 0
    %6164 = vmatprep.subr.bf16.mxu0 0
    %6165 = vmatpush2.bf16.msra.mxu0 0
    %6166 = vmatprep.subr.bf16.mxu0 0
    %6167 = vmatpush2.bf16.msra.mxu0 0
    %6168 = vmatprep.subr.bf16.mxu0 0
    %6169 = vmatpush2.bf16.msra.mxu0 0
    %6170 = vmatprep.subr.bf16.mxu0 0
    %6171 = vmatpush2.bf16.msra.mxu0 0
    %6172 = vmatprep.subr.bf16.mxu0 0
    %6173 = vmatpush2.bf16.msra.mxu0 0
    %6174 = vmatprep.subr.bf16.mxu0 0
    %6175 = vmatpush2.bf16.msra.mxu0 0
    %6176 = vmatprep.mubr.bf16.mxu0 0
    %6177 = vmatmul.mubr.bf16.gmra.mxu0 %v6142
    %v6178 = vpop.f32.mrf.mxu0
    %v6179 = vadd.f32 %v6127, %v6178
    %v6180 = vpop.f32.mrf.mxu0
    %v6181 = vpop.f32.mrf.mxu0
    %v6182 = vadd.f32 %v6127, %v6181
    %v6183 = vpop.f32.mrf.mxu0
    %6184 = vdwg.mxu0
    %v6185 = vmul.f32 %v6179, 0.5
    %v6186 = vmul.f32 %v6182, 0.5
    %6188 = vrot.lane.b32.xlu0 %v6179, 96
    %v6189 = vpop.permute.xlu0 %6188
    %v6191 = vmul.f32 %v6185, %v6189
    %v6193 = vsel %vm376, %v6191, 0
    %6195 = vmatprep.subr.mxu0 0.0
    %6196 = vmatpush1.msra.mxu0 0.0
    %6197 = vmatprep.subr.mxu0 0.0
    %6198 = vmatpush1.msra.mxu0 0.0
    %6199 = vmatprep.subr.mxu0 0.0
    %6200 = vmatpush1.msra.mxu0 0.0
    %6201 = vmatprep.subr.mxu0 0.0
    %6202 = vmatpush1.msra.mxu0 0.0
    %6203 = vmatprep.subr.mxu0 0.0
    %6204 = vmatpush1.msra.mxu0 0.0
    %6205 = vmatprep.subr.mxu0 0.0
    %6206 = vmatpush1.msra.mxu0 0.0
    %6207 = vmatprep.subr.mxu0 0.0
    %6208 = vmatpush1.msra.mxu0 0.0
    %6209 = vmatprep.subr.mxu0 0.0
    %6210 = vmatpush1.msra.mxu0 0.0
    %6211 = vmatprep.subr.mxu0 0.0
    %6212 = vmatpush1.msra.mxu0 0.0
    %6213 = vmatprep.subr.mxu0 0.0
    %6214 = vmatpush1.msra.mxu0 0.0
    %6215 = vmatprep.subr.mxu0 0.0
    %6216 = vmatpush1.msra.mxu0 0.0
    %6217 = vmatprep.subr.mxu0 0.0
    %6218 = vmatpush1.msra.mxu0 0.0
    %6219 = vmatprep.subr.mxu0 0.0
    %6220 = vmatpush1.msra.mxu0 %v49
    %6221 = vmatprep.subr.mxu0 0.0
    %6222 = vmatpush1.msra.mxu0 %v48
    %6223 = vmatprep.subr.mxu0 0.0
    %6224 = vmatpush1.msra.mxu0 %v47
    %6225 = vmatprep.subr.mxu0 0.0
    %6226 = vmatpush1.msra.mxu0 %v46
    %6227 = vmatprep.subr.mxu0 0.0
    %6228 = vmatpush2.msra.mxu0 0.0
    %6229 = vmatprep.subr.mxu0 0.0
    %6230 = vmatpush2.msra.mxu0 0.0
    %6231 = vmatprep.subr.mxu0 0.0
    %6232 = vmatpush2.msra.mxu0 0.0
    %6233 = vmatprep.subr.mxu0 0.0
    %6234 = vmatpush2.msra.mxu0 0.0
    %6235 = vmatprep.subr.mxu0 0.0
    %6236 = vmatpush2.msra.mxu0 0.0
    %6237 = vmatprep.subr.mxu0 0.0
    %6238 = vmatpush2.msra.mxu0 0.0
    %6239 = vmatprep.subr.mxu0 0.0
    %6240 = vmatpush2.msra.mxu0 0.0
    %6241 = vmatprep.subr.mxu0 0.0
    %6242 = vmatpush2.msra.mxu0 0.0
    %6243 = vmatprep.subr.mxu0 0.0
    %6244 = vmatpush2.msra.mxu0 0.0
    %6245 = vmatprep.subr.mxu0 0.0
    %6246 = vmatpush2.msra.mxu0 0.0
    %6247 = vmatprep.subr.mxu0 0.0
    %6248 = vmatpush2.msra.mxu0 0.0
    %6249 = vmatprep.subr.mxu0 0.0
    %6250 = vmatpush2.msra.mxu0 0.0
    %6251 = vmatprep.subr.mxu0 0.0
    %6252 = vmatpush2.msra.mxu0 0.0
    %6253 = vmatprep.subr.mxu0 0.0
    %6254 = vmatpush2.msra.mxu0 0.0
    %6255 = vmatprep.subr.mxu0 0.0
    %6256 = vmatpush2.msra.mxu0 0.0
    %6257 = vmatprep.subr.mxu0 0.0
    %6258 = vmatpush2.msra.mxu0 0.0
    %6259 = vmatprep.mubr.f32.mxu0 0.0
    %6260 = vmatmul.mubr.f32.gmra.mxu0 %v6193
    %v6261 = vpop.f32.mrf.mxu0
    %v6262 = vadd.f32 0.0, %v6261
    %v6263 = vpop.f32.mrf.mxu0
    %6264 = vdwg.mxu0
    %6266 = vrot.lane.b32.xlu0 %v6182, 96
    %v6267 = vpop.permute.xlu0 %6266
    %v6269 = vmul.f32 %v6185, %v6267
    %v6271 = vsel %vm376, %v6269, 0
    %6273 = vmatprep.subr.mxu0 0.0
    %6274 = vmatpush1.msra.mxu0 0.0
    %6275 = vmatprep.subr.mxu0 0.0
    %6276 = vmatpush1.msra.mxu0 0.0
    %6277 = vmatprep.subr.mxu0 0.0
    %6278 = vmatpush1.msra.mxu0 0.0
    %6279 = vmatprep.subr.mxu0 0.0
    %6280 = vmatpush1.msra.mxu0 0.0
    %6281 = vmatprep.subr.mxu0 0.0
    %6282 = vmatpush1.msra.mxu0 0.0
    %6283 = vmatprep.subr.mxu0 0.0
    %6284 = vmatpush1.msra.mxu0 0.0
    %6285 = vmatprep.subr.mxu0 0.0
    %6286 = vmatpush1.msra.mxu0 0.0
    %6287 = vmatprep.subr.mxu0 0.0
    %6288 = vmatpush1.msra.mxu0 0.0
    %6289 = vmatprep.subr.mxu0 0.0
    %6290 = vmatpush1.msra.mxu0 0.0
    %6291 = vmatprep.subr.mxu0 0.0
    %6292 = vmatpush1.msra.mxu0 0.0
    %6293 = vmatprep.subr.mxu0 0.0
    %6294 = vmatpush1.msra.mxu0 0.0
    %6295 = vmatprep.subr.mxu0 0.0
    %6296 = vmatpush1.msra.mxu0 0.0
    %6297 = vmatprep.subr.mxu0 0.0
    %6298 = vmatpush1.msra.mxu0 %v49
    %6299 = vmatprep.subr.mxu0 0.0
    %6300 = vmatpush1.msra.mxu0 %v48
    %6301 = vmatprep.subr.mxu0 0.0
    %6302 = vmatpush1.msra.mxu0 %v47
    %6303 = vmatprep.subr.mxu0 0.0
    %6304 = vmatpush1.msra.mxu0 %v46
    %6305 = vmatprep.subr.mxu0 0.0
    %6306 = vmatpush2.msra.mxu0 0.0
    %6307 = vmatprep.subr.mxu0 0.0
    %6308 = vmatpush2.msra.mxu0 0.0
    %6309 = vmatprep.subr.mxu0 0.0
    %6310 = vmatpush2.msra.mxu0 0.0
    %6311 = vmatprep.subr.mxu0 0.0
    %6312 = vmatpush2.msra.mxu0 0.0
    %6313 = vmatprep.subr.mxu0 0.0
    %6314 = vmatpush2.msra.mxu0 0.0
    %6315 = vmatprep.subr.mxu0 0.0
    %6316 = vmatpush2.msra.mxu0 0.0
    %6317 = vmatprep.subr.mxu0 0.0
    %6318 = vmatpush2.msra.mxu0 0.0
    %6319 = vmatprep.subr.mxu0 0.0
    %6320 = vmatpush2.msra.mxu0 0.0
    %6321 = vmatprep.subr.mxu0 0.0
    %6322 = vmatpush2.msra.mxu0 0.0
    %6323 = vmatprep.subr.mxu0 0.0
    %6324 = vmatpush2.msra.mxu0 0.0
    %6325 = vmatprep.subr.mxu0 0.0
    %6326 = vmatpush2.msra.mxu0 0.0
    %6327 = vmatprep.subr.mxu0 0.0
    %6328 = vmatpush2.msra.mxu0 0.0
    %6329 = vmatprep.subr.mxu0 0.0
    %6330 = vmatpush2.msra.mxu0 0.0
    %6331 = vmatprep.subr.mxu0 0.0
    %6332 = vmatpush2.msra.mxu0 0.0
    %6333 = vmatprep.subr.mxu0 0.0
    %6334 = vmatpush2.msra.mxu0 0.0
    %6335 = vmatprep.subr.mxu0 0.0
    %6336 = vmatpush2.msra.mxu0 0.0
    %6337 = vmatprep.mubr.f32.mxu0 0.0
    %6338 = vmatmul.mubr.f32.gmra.mxu0 %v6271
    %v6339 = vpop.f32.mrf.mxu0
    %v6340 = vadd.f32 0.0, %v6339
    %v6341 = vpop.f32.mrf.mxu0
    %6342 = vdwg.mxu0
    %v6343 = vmul.f32 %v6186, %v6189
    %v6345 = vsel %vm376, %v6343, 0
    %6347 = vmatprep.subr.mxu0 0.0
    %6348 = vmatpush1.msra.mxu0 0.0
    %6349 = vmatprep.subr.mxu0 0.0
    %6350 = vmatpush1.msra.mxu0 0.0
    %6351 = vmatprep.subr.mxu0 0.0
    %6352 = vmatpush1.msra.mxu0 0.0
    %6353 = vmatprep.subr.mxu0 0.0
    %6354 = vmatpush1.msra.mxu0 0.0
    %6355 = vmatprep.subr.mxu0 0.0
    %6356 = vmatpush1.msra.mxu0 0.0
    %6357 = vmatprep.subr.mxu0 0.0
    %6358 = vmatpush1.msra.mxu0 0.0
    %6359 = vmatprep.subr.mxu0 0.0
    %6360 = vmatpush1.msra.mxu0 0.0
    %6361 = vmatprep.subr.mxu0 0.0
    %6362 = vmatpush1.msra.mxu0 0.0
    %6363 = vmatprep.subr.mxu0 0.0
    %6364 = vmatpush1.msra.mxu0 0.0
    %6365 = vmatprep.subr.mxu0 0.0
    %6366 = vmatpush1.msra.mxu0 0.0
    %6367 = vmatprep.subr.mxu0 0.0
    %6368 = vmatpush1.msra.mxu0 0.0
    %6369 = vmatprep.subr.mxu0 0.0
    %6370 = vmatpush1.msra.mxu0 0.0
    %6371 = vmatprep.subr.mxu0 0.0
    %6372 = vmatpush1.msra.mxu0 %v49
    %6373 = vmatprep.subr.mxu0 0.0
    %6374 = vmatpush1.msra.mxu0 %v48
    %6375 = vmatprep.subr.mxu0 0.0
    %6376 = vmatpush1.msra.mxu0 %v47
    %6377 = vmatprep.subr.mxu0 0.0
    %6378 = vmatpush1.msra.mxu0 %v46
    %6379 = vmatprep.subr.mxu0 0.0
    %6380 = vmatpush2.msra.mxu0 0.0
    %6381 = vmatprep.subr.mxu0 0.0
    %6382 = vmatpush2.msra.mxu0 0.0
    %6383 = vmatprep.subr.mxu0 0.0
    %6384 = vmatpush2.msra.mxu0 0.0
    %6385 = vmatprep.subr.mxu0 0.0
    %6386 = vmatpush2.msra.mxu0 0.0
    %6387 = vmatprep.subr.mxu0 0.0
    %6388 = vmatpush2.msra.mxu0 0.0
    %6389 = vmatprep.subr.mxu0 0.0
    %6390 = vmatpush2.msra.mxu0 0.0
    %6391 = vmatprep.subr.mxu0 0.0
    %6392 = vmatpush2.msra.mxu0 0.0
    %6393 = vmatprep.subr.mxu0 0.0
    %6394 = vmatpush2.msra.mxu0 0.0
    %6395 = vmatprep.subr.mxu0 0.0
    %6396 = vmatpush2.msra.mxu0 0.0
    %6397 = vmatprep.subr.mxu0 0.0
    %6398 = vmatpush2.msra.mxu0 0.0
    %6399 = vmatprep.subr.mxu0 0.0
    %6400 = vmatpush2.msra.mxu0 0.0
    %6401 = vmatprep.subr.mxu0 0.0
    %6402 = vmatpush2.msra.mxu0 0.0
    %6403 = vmatprep.subr.mxu0 0.0
    %6404 = vmatpush2.msra.mxu0 0.0
    %6405 = vmatprep.subr.mxu0 0.0
    %6406 = vmatpush2.msra.mxu0 0.0
    %6407 = vmatprep.subr.mxu0 0.0
    %6408 = vmatpush2.msra.mxu0 0.0
    %6409 = vmatprep.subr.mxu0 0.0
    %6410 = vmatpush2.msra.mxu0 0.0
    %6411 = vmatprep.mubr.f32.mxu0 0.0
    %6412 = vmatmul.mubr.f32.gmra.mxu0 %v6345
    %v6413 = vpop.f32.mrf.mxu0
    %v6414 = vadd.f32 0.0, %v6413
    %v6415 = vpop.f32.mrf.mxu0
    %6416 = vdwg.mxu0
    %v6417 = vmul.f32 %v6186, %v6267
    %v6419 = vsel %vm376, %v6417, 0
    %6421 = vmatprep.subr.mxu0 0.0
    %6422 = vmatpush1.msra.mxu0 0.0
    %6423 = vmatprep.subr.mxu0 0.0
    %6424 = vmatpush1.msra.mxu0 0.0
    %6425 = vmatprep.subr.mxu0 0.0
    %6426 = vmatpush1.msra.mxu0 0.0
    %6427 = vmatprep.subr.mxu0 0.0
    %6428 = vmatpush1.msra.mxu0 0.0
    %6429 = vmatprep.subr.mxu0 0.0
    %6430 = vmatpush1.msra.mxu0 0.0
    %6431 = vmatprep.subr.mxu0 0.0
    %6432 = vmatpush1.msra.mxu0 0.0
    %6433 = vmatprep.subr.mxu0 0.0
    %6434 = vmatpush1.msra.mxu0 0.0
    %6435 = vmatprep.subr.mxu0 0.0
    %6436 = vmatpush1.msra.mxu0 0.0
    %6437 = vmatprep.subr.mxu0 0.0
    %6438 = vmatpush1.msra.mxu0 0.0
    %6439 = vmatprep.subr.mxu0 0.0
    %6440 = vmatpush1.msra.mxu0 0.0
    %6441 = vmatprep.subr.mxu0 0.0
    %6442 = vmatpush1.msra.mxu0 0.0
    %6443 = vmatprep.subr.mxu0 0.0
    %6444 = vmatpush1.msra.mxu0 0.0
    %6445 = vmatprep.subr.mxu0 0.0
    %6446 = vmatpush1.msra.mxu0 %v49
    %6447 = vmatprep.subr.mxu0 0.0
    %6448 = vmatpush1.msra.mxu0 %v48
    %6449 = vmatprep.subr.mxu0 0.0
    %6450 = vmatpush1.msra.mxu0 %v47
    %6451 = vmatprep.subr.mxu0 0.0
    %6452 = vmatpush1.msra.mxu0 %v46
    %6453 = vmatprep.subr.mxu0 0.0
    %6454 = vmatpush2.msra.mxu0 0.0
    %6455 = vmatprep.subr.mxu0 0.0
    %6456 = vmatpush2.msra.mxu0 0.0
    %6457 = vmatprep.subr.mxu0 0.0
    %6458 = vmatpush2.msra.mxu0 0.0
    %6459 = vmatprep.subr.mxu0 0.0
    %6460 = vmatpush2.msra.mxu0 0.0
    %6461 = vmatprep.subr.mxu0 0.0
    %6462 = vmatpush2.msra.mxu0 0.0
    %6463 = vmatprep.subr.mxu0 0.0
    %6464 = vmatpush2.msra.mxu0 0.0
    %6465 = vmatprep.subr.mxu0 0.0
    %6466 = vmatpush2.msra.mxu0 0.0
    %6467 = vmatprep.subr.mxu0 0.0
    %6468 = vmatpush2.msra.mxu0 0.0
    %6469 = vmatprep.subr.mxu0 0.0
    %6470 = vmatpush2.msra.mxu0 0.0
    %6471 = vmatprep.subr.mxu0 0.0
    %6472 = vmatpush2.msra.mxu0 0.0
    %6473 = vmatprep.subr.mxu0 0.0
    %6474 = vmatpush2.msra.mxu0 0.0
    %6475 = vmatprep.subr.mxu0 0.0
    %6476 = vmatpush2.msra.mxu0 0.0
    %6477 = vmatprep.subr.mxu0 0.0
    %6478 = vmatpush2.msra.mxu0 0.0
    %6479 = vmatprep.subr.mxu0 0.0
    %6480 = vmatpush2.msra.mxu0 0.0
    %6481 = vmatprep.subr.mxu0 0.0
    %6482 = vmatpush2.msra.mxu0 0.0
    %6483 = vmatprep.subr.mxu0 0.0
    %6484 = vmatpush2.msra.mxu0 0.0
    %6485 = vmatprep.mubr.f32.mxu0 0.0
    %6486 = vmatmul.mubr.f32.gmra.mxu0 %v6419
    %v6487 = vpop.f32.mrf.mxu0
    %v6488 = vadd.f32 0.0, %v6487
    %v6489 = vpop.f32.mrf.mxu0
    %6490 = vdwg.mxu0
    %v6491 = vmax.f32 %v6262, %v6340
    %v6492 = vsub.f32 %v6262, %v6491
    %v6493 = vmul.f32 %v6492, 1.442695
    %v6494 = vpow.pop %v6493
    %v6495 = vsub.f32 %v6340, %v6491
    %v6496 = vmul.f32 %v6495, 1.442695
    %v6497 = vpow.pop %v6496
    %v6498 = vadd.f32 %v6494, %v6497
    %v6499 = vrcp.pop %v6498
    %v6500 = vmul.f32 %v6494, %v6499
    %v6502 = vsel %vm737, %v6500, 0
    %6504 = vmatprep.subr.mxu0 0.0
    %6505 = vmatpush1.msra.mxu0 0.0
    %6506 = vmatprep.subr.mxu0 0.0
    %6507 = vmatpush1.msra.mxu0 0.0
    %6508 = vmatprep.subr.mxu0 0.0
    %6509 = vmatpush1.msra.mxu0 0.0
    %6510 = vmatprep.subr.mxu0 0.0
    %6511 = vmatpush1.msra.mxu0 0.0
    %6512 = vmatprep.subr.mxu0 0.0
    %6513 = vmatpush1.msra.mxu0 0.0
    %6514 = vmatprep.subr.mxu0 0.0
    %6515 = vmatpush1.msra.mxu0 0.0
    %6516 = vmatprep.subr.mxu0 0.0
    %6517 = vmatpush1.msra.mxu0 0.0
    %6518 = vmatprep.subr.mxu0 0.0
    %6519 = vmatpush1.msra.mxu0 0.0
    %6520 = vmatprep.subr.mxu0 0.0
    %6521 = vmatpush1.msra.mxu0 0.0
    %6522 = vmatprep.subr.mxu0 0.0
    %6523 = vmatpush1.msra.mxu0 0.0
    %6524 = vmatprep.subr.mxu0 0.0
    %6525 = vmatpush1.msra.mxu0 0.0
    %6526 = vmatprep.subr.mxu0 0.0
    %6527 = vmatpush1.msra.mxu0 0.0
    %6528 = vmatprep.subr.mxu0 0.0
    %6529 = vmatpush1.msra.mxu0 0.0
    %6530 = vmatprep.subr.mxu0 0.0
    %6531 = vmatpush1.msra.mxu0 0.0
    %6532 = vmatprep.subr.mxu0 0.0
    %6533 = vmatpush1.msra.mxu0 0.0
    %6534 = vmatprep.subr.mxu0 0.0
    %6535 = vmatpush1.msra.mxu0 %v50
    %6536 = vmatprep.subr.mxu0 0.0
    %6537 = vmatpush2.msra.mxu0 0.0
    %6538 = vmatprep.subr.mxu0 0.0
    %6539 = vmatpush2.msra.mxu0 0.0
    %6540 = vmatprep.subr.mxu0 0.0
    %6541 = vmatpush2.msra.mxu0 0.0
    %6542 = vmatprep.subr.mxu0 0.0
    %6543 = vmatpush2.msra.mxu0 0.0
    %6544 = vmatprep.subr.mxu0 0.0
    %6545 = vmatpush2.msra.mxu0 0.0
    %6546 = vmatprep.subr.mxu0 0.0
    %6547 = vmatpush2.msra.mxu0 0.0
    %6548 = vmatprep.subr.mxu0 0.0
    %6549 = vmatpush2.msra.mxu0 0.0
    %6550 = vmatprep.subr.mxu0 0.0
    %6551 = vmatpush2.msra.mxu0 0.0
    %6552 = vmatprep.subr.mxu0 0.0
    %6553 = vmatpush2.msra.mxu0 0.0
    %6554 = vmatprep.subr.mxu0 0.0
    %6555 = vmatpush2.msra.mxu0 0.0
    %6556 = vmatprep.subr.mxu0 0.0
    %6557 = vmatpush2.msra.mxu0 0.0
    %6558 = vmatprep.subr.mxu0 0.0
    %6559 = vmatpush2.msra.mxu0 0.0
    %6560 = vmatprep.subr.mxu0 0.0
    %6561 = vmatpush2.msra.mxu0 0.0
    %6562 = vmatprep.subr.mxu0 0.0
    %6563 = vmatpush2.msra.mxu0 0.0
    %6564 = vmatprep.subr.mxu0 0.0
    %6565 = vmatpush2.msra.mxu0 0.0
    %6566 = vmatprep.subr.mxu0 0.0
    %6567 = vmatpush2.msra.mxu0 0.0
    %6568 = vmatprep.mubr.f32.mxu0 0.0
    %6569 = vmatmul.mubr.f32.gmra.mxu0 %v6502
    %v6570 = vpop.f32.mrf.mxu0
    %v6571 = vadd.f32 0.0, %v6570
    %v6572 = vpop.f32.mrf.mxu0
    %6573 = vdwg.mxu0
    %6574 = vrot.lane.b32.xlu0 %v6179, 64
    %v6575 = vpop.permute.xlu0 %6574
    %v6577 = vmul.f32 %v6571, %v6575
    %v6578 = vmul.f32 %v6497, %v6499
    %v6580 = vsel %vm737, %v6578, 0
    %6582 = vmatprep.subr.mxu0 0.0
    %6583 = vmatpush1.msra.mxu0 0.0
    %6584 = vmatprep.subr.mxu0 0.0
    %6585 = vmatpush1.msra.mxu0 0.0
    %6586 = vmatprep.subr.mxu0 0.0
    %6587 = vmatpush1.msra.mxu0 0.0
    %6588 = vmatprep.subr.mxu0 0.0
    %6589 = vmatpush1.msra.mxu0 0.0
    %6590 = vmatprep.subr.mxu0 0.0
    %6591 = vmatpush1.msra.mxu0 0.0
    %6592 = vmatprep.subr.mxu0 0.0
    %6593 = vmatpush1.msra.mxu0 0.0
    %6594 = vmatprep.subr.mxu0 0.0
    %6595 = vmatpush1.msra.mxu0 0.0
    %6596 = vmatprep.subr.mxu0 0.0
    %6597 = vmatpush1.msra.mxu0 0.0
    %6598 = vmatprep.subr.mxu0 0.0
    %6599 = vmatpush1.msra.mxu0 0.0
    %6600 = vmatprep.subr.mxu0 0.0
    %6601 = vmatpush1.msra.mxu0 0.0
    %6602 = vmatprep.subr.mxu0 0.0
    %6603 = vmatpush1.msra.mxu0 0.0
    %6604 = vmatprep.subr.mxu0 0.0
    %6605 = vmatpush1.msra.mxu0 0.0
    %6606 = vmatprep.subr.mxu0 0.0
    %6607 = vmatpush1.msra.mxu0 0.0
    %6608 = vmatprep.subr.mxu0 0.0
    %6609 = vmatpush1.msra.mxu0 0.0
    %6610 = vmatprep.subr.mxu0 0.0
    %6611 = vmatpush1.msra.mxu0 0.0
    %6612 = vmatprep.subr.mxu0 0.0
    %6613 = vmatpush1.msra.mxu0 %v50
    %6614 = vmatprep.subr.mxu0 0.0
    %6615 = vmatpush2.msra.mxu0 0.0
    %6616 = vmatprep.subr.mxu0 0.0
    %6617 = vmatpush2.msra.mxu0 0.0
    %6618 = vmatprep.subr.mxu0 0.0
    %6619 = vmatpush2.msra.mxu0 0.0
    %6620 = vmatprep.subr.mxu0 0.0
    %6621 = vmatpush2.msra.mxu0 0.0
    %6622 = vmatprep.subr.mxu0 0.0
    %6623 = vmatpush2.msra.mxu0 0.0
    %6624 = vmatprep.subr.mxu0 0.0
    %6625 = vmatpush2.msra.mxu0 0.0
    %6626 = vmatprep.subr.mxu0 0.0
    %6627 = vmatpush2.msra.mxu0 0.0
    %6628 = vmatprep.subr.mxu0 0.0
    %6629 = vmatpush2.msra.mxu0 0.0
    %6630 = vmatprep.subr.mxu0 0.0
    %6631 = vmatpush2.msra.mxu0 0.0
    %6632 = vmatprep.subr.mxu0 0.0
    %6633 = vmatpush2.msra.mxu0 0.0
    %6634 = vmatprep.subr.mxu0 0.0
    %6635 = vmatpush2.msra.mxu0 0.0
    %6636 = vmatprep.subr.mxu0 0.0
    %6637 = vmatpush2.msra.mxu0 0.0
    %6638 = vmatprep.subr.mxu0 0.0
    %6639 = vmatpush2.msra.mxu0 0.0
    %6640 = vmatprep.subr.mxu0 0.0
    %6641 = vmatpush2.msra.mxu0 0.0
    %6642 = vmatprep.subr.mxu0 0.0
    %6643 = vmatpush2.msra.mxu0 0.0
    %6644 = vmatprep.subr.mxu0 0.0
    %6645 = vmatpush2.msra.mxu0 0.0
    %6646 = vmatprep.mubr.f32.mxu0 0.0
    %6647 = vmatmul.mubr.f32.gmra.mxu0 %v6580
    %v6648 = vpop.f32.mrf.mxu0
    %v6649 = vadd.f32 0.0, %v6648
    %v6650 = vpop.f32.mrf.mxu0
    %6651 = vdwg.mxu0
    %6652 = vrot.lane.b32.xlu0 %v6182, 64
    %v6653 = vpop.permute.xlu0 %6652
    %v6655 = vmul.f32 %v6649, %v6653
    %v6656 = vadd.f32 %v6577, %v6655
    %v6657 = vmax.f32 %v6414, %v6488
    %v6658 = vsub.f32 %v6414, %v6657
    %v6659 = vmul.f32 %v6658, 1.442695
    %v6660 = vpow.pop %v6659
    %v6661 = vsub.f32 %v6488, %v6657
    %v6662 = vmul.f32 %v6661, 1.442695
    %v6663 = vpow.pop %v6662
    %v6664 = vadd.f32 %v6660, %v6663
    %v6665 = vrcp.pop %v6664
    %v6666 = vmul.f32 %v6660, %v6665
    %v6668 = vsel %vm737, %v6666, 0
    %6670 = vmatprep.subr.mxu0 0.0
    %6671 = vmatpush1.msra.mxu0 0.0
    %6672 = vmatprep.subr.mxu0 0.0
    %6673 = vmatpush1.msra.mxu0 0.0
    %6674 = vmatprep.subr.mxu0 0.0
    %6675 = vmatpush1.msra.mxu0 0.0
    %6676 = vmatprep.subr.mxu0 0.0
    %6677 = vmatpush1.msra.mxu0 0.0
    %6678 = vmatprep.subr.mxu0 0.0
    %6679 = vmatpush1.msra.mxu0 0.0
    %6680 = vmatprep.subr.mxu0 0.0
    %6681 = vmatpush1.msra.mxu0 0.0
    %6682 = vmatprep.subr.mxu0 0.0
    %6683 = vmatpush1.msra.mxu0 0.0
    %6684 = vmatprep.subr.mxu0 0.0
    %6685 = vmatpush1.msra.mxu0 0.0
    %6686 = vmatprep.subr.mxu0 0.0
    %6687 = vmatpush1.msra.mxu0 0.0
    %6688 = vmatprep.subr.mxu0 0.0
    %6689 = vmatpush1.msra.mxu0 0.0
    %6690 = vmatprep.subr.mxu0 0.0
    %6691 = vmatpush1.msra.mxu0 0.0
    %6692 = vmatprep.subr.mxu0 0.0
    %6693 = vmatpush1.msra.mxu0 0.0
    %6694 = vmatprep.subr.mxu0 0.0
    %6695 = vmatpush1.msra.mxu0 0.0
    %6696 = vmatprep.subr.mxu0 0.0
    %6697 = vmatpush1.msra.mxu0 0.0
    %6698 = vmatprep.subr.mxu0 0.0
    %6699 = vmatpush1.msra.mxu0 0.0
    %6700 = vmatprep.subr.mxu0 0.0
    %6701 = vmatpush1.msra.mxu0 %v50
    %6702 = vmatprep.subr.mxu0 0.0
    %6703 = vmatpush2.msra.mxu0 0.0
    %6704 = vmatprep.subr.mxu0 0.0
    %6705 = vmatpush2.msra.mxu0 0.0
    %6706 = vmatprep.subr.mxu0 0.0
    %6707 = vmatpush2.msra.mxu0 0.0
    %6708 = vmatprep.subr.mxu0 0.0
    %6709 = vmatpush2.msra.mxu0 0.0
    %6710 = vmatprep.subr.mxu0 0.0
    %6711 = vmatpush2.msra.mxu0 0.0
    %6712 = vmatprep.subr.mxu0 0.0
    %6713 = vmatpush2.msra.mxu0 0.0
    %6714 = vmatprep.subr.mxu0 0.0
    %6715 = vmatpush2.msra.mxu0 0.0
    %6716 = vmatprep.subr.mxu0 0.0
    %6717 = vmatpush2.msra.mxu0 0.0
    %6718 = vmatprep.subr.mxu0 0.0
    %6719 = vmatpush2.msra.mxu0 0.0
    %6720 = vmatprep.subr.mxu0 0.0
    %6721 = vmatpush2.msra.mxu0 0.0
    %6722 = vmatprep.subr.mxu0 0.0
    %6723 = vmatpush2.msra.mxu0 0.0
    %6724 = vmatprep.subr.mxu0 0.0
    %6725 = vmatpush2.msra.mxu0 0.0
    %6726 = vmatprep.subr.mxu0 0.0
    %6727 = vmatpush2.msra.mxu0 0.0
    %6728 = vmatprep.subr.mxu0 0.0
    %6729 = vmatpush2.msra.mxu0 0.0
    %6730 = vmatprep.subr.mxu0 0.0
    %6731 = vmatpush2.msra.mxu0 0.0
    %6732 = vmatprep.subr.mxu0 0.0
    %6733 = vmatpush2.msra.mxu0 0.0
    %6734 = vmatprep.mubr.f32.mxu0 0.0
    %6735 = vmatmul.mubr.f32.gmra.mxu0 %v6668
    %v6736 = vpop.f32.mrf.mxu0
    %v6737 = vadd.f32 0.0, %v6736
    %v6738 = vpop.f32.mrf.mxu0
    %6739 = vdwg.mxu0
    %v6740 = vmul.f32 %v6737, %v6575
    %v6741 = vmul.f32 %v6663, %v6665
    %v6743 = vsel %vm737, %v6741, 0
    %6745 = vmatprep.subr.mxu0 0.0
    %6746 = vmatpush1.msra.mxu0 0.0
    %6747 = vmatprep.subr.mxu0 0.0
    %6748 = vmatpush1.msra.mxu0 0.0
    %6749 = vmatprep.subr.mxu0 0.0
    %6750 = vmatpush1.msra.mxu0 0.0
    %6751 = vmatprep.subr.mxu0 0.0
    %6752 = vmatpush1.msra.mxu0 0.0
    %6753 = vmatprep.subr.mxu0 0.0
    %6754 = vmatpush1.msra.mxu0 0.0
    %6755 = vmatprep.subr.mxu0 0.0
    %6756 = vmatpush1.msra.mxu0 0.0
    %6757 = vmatprep.subr.mxu0 0.0
    %6758 = vmatpush1.msra.mxu0 0.0
    %6759 = vmatprep.subr.mxu0 0.0
    %6760 = vmatpush1.msra.mxu0 0.0
    %6761 = vmatprep.subr.mxu0 0.0
    %6762 = vmatpush1.msra.mxu0 0.0
    %6763 = vmatprep.subr.mxu0 0.0
    %6764 = vmatpush1.msra.mxu0 0.0
    %6765 = vmatprep.subr.mxu0 0.0
    %6766 = vmatpush1.msra.mxu0 0.0
    %6767 = vmatprep.subr.mxu0 0.0
    %6768 = vmatpush1.msra.mxu0 0.0
    %6769 = vmatprep.subr.mxu0 0.0
    %6770 = vmatpush1.msra.mxu0 0.0
    %6771 = vmatprep.subr.mxu0 0.0
    %6772 = vmatpush1.msra.mxu0 0.0
    %6773 = vmatprep.subr.mxu0 0.0
    %6774 = vmatpush1.msra.mxu0 0.0
    %6775 = vmatprep.subr.mxu0 0.0
    %6776 = vmatpush1.msra.mxu0 %v50
    %6777 = vmatprep.subr.mxu0 0.0
    %6778 = vmatpush2.msra.mxu0 0.0
    %6779 = vmatprep.subr.mxu0 0.0
    %6780 = vmatpush2.msra.mxu0 0.0
    %6781 = vmatprep.subr.mxu0 0.0
    %6782 = vmatpush2.msra.mxu0 0.0
    %6783 = vmatprep.subr.mxu0 0.0
    %6784 = vmatpush2.msra.mxu0 0.0
    %6785 = vmatprep.subr.mxu0 0.0
    %6786 = vmatpush2.msra.mxu0 0.0
    %6787 = vmatprep.subr.mxu0 0.0
    %6788 = vmatpush2.msra.mxu0 0.0
    %6789 = vmatprep.subr.mxu0 0.0
    %6790 = vmatpush2.msra.mxu0 0.0
    %6791 = vmatprep.subr.mxu0 0.0
    %6792 = vmatpush2.msra.mxu0 0.0
    %6793 = vmatprep.subr.mxu0 0.0
    %6794 = vmatpush2.msra.mxu0 0.0
    %6795 = vmatprep.subr.mxu0 0.0
    %6796 = vmatpush2.msra.mxu0 0.0
    %6797 = vmatprep.subr.mxu0 0.0
    %6798 = vmatpush2.msra.mxu0 0.0
    %6799 = vmatprep.subr.mxu0 0.0
    %6800 = vmatpush2.msra.mxu0 0.0
    %6801 = vmatprep.subr.mxu0 0.0
    %6802 = vmatpush2.msra.mxu0 0.0
    %6803 = vmatprep.subr.mxu0 0.0
    %6804 = vmatpush2.msra.mxu0 0.0
    %6805 = vmatprep.subr.mxu0 0.0
    %6806 = vmatpush2.msra.mxu0 0.0
    %6807 = vmatprep.subr.mxu0 0.0
    %6808 = vmatpush2.msra.mxu0 0.0
    %6809 = vmatprep.mubr.f32.mxu0 0.0
    %6810 = vmatmul.mubr.f32.gmra.mxu0 %v6743
    %v6811 = vpop.f32.mrf.mxu0
    %v6812 = vadd.f32 0.0, %v6811
    %v6813 = vpop.f32.mrf.mxu0
    %6814 = vdwg.mxu0
    %v6815 = vmul.f32 %v6812, %v6653
    %v6816 = vadd.f32 %v6740, %v6815
    %v6817 = vpack.c.bf16 %v6816, %v6656
    %v6818 = vlaneseq
    %v6819 = vshrl.u32 %v6818, 7
    %v6820 = vsub.s32 0, %v6819
    %v6821 = vrot.slane %v6121, %v6820
    %v6826 = vunpack.c.l.b16 %v5823
    %v6827 = vunpack.c.l.b16 %v5824
    %v6828 = vunpack.c.l.b16 %v5825
    %v6829 = vunpack.c.l.b16 %v5826
    %v6830 = vpack.c.b16 %v6827, %v6826
    %v6831 = vpack.c.b16 %v6829, %v6828
    %v6835 = vsel %vm376, %v6817, 0
    %6837 = vmatprep.subr.bf16.mxu0 0
    %6838 = vmatpush1.bf16.msra.mxu0 0
    %6839 = vmatprep.subr.bf16.mxu0 0
    %6840 = vmatpush1.bf16.msra.mxu0 0
    %6841 = vmatprep.subr.bf16.mxu0 0
    %6842 = vmatpush1.bf16.msra.mxu0 0
    %6843 = vmatprep.subr.bf16.mxu0 0
    %6844 = vmatpush1.bf16.msra.mxu0 0
    %6845 = vmatprep.subr.bf16.mxu0 0
    %6846 = vmatpush1.bf16.msra.mxu0 0
    %6847 = vmatprep.subr.bf16.mxu0 0
    %6848 = vmatpush1.bf16.msra.mxu0 0
    %6849 = vmatprep.subr.bf16.mxu0 0
    %6850 = vmatpush1.bf16.msra.mxu0 %v6831
    %6851 = vmatprep.subr.bf16.mxu0 0
    %6852 = vmatpush1.bf16.msra.mxu0 %v6830
    %6853 = vmatprep.subr.bf16.mxu0 0
    %6854 = vmatpush2.bf16.msra.mxu0 0
    %6855 = vmatprep.subr.bf16.mxu0 0
    %6856 = vmatpush2.bf16.msra.mxu0 0
    %6857 = vmatprep.subr.bf16.mxu0 0
    %6858 = vmatpush2.bf16.msra.mxu0 0
    %6859 = vmatprep.subr.bf16.mxu0 0
    %6860 = vmatpush2.bf16.msra.mxu0 0
    %6861 = vmatprep.subr.bf16.mxu0 0
    %6862 = vmatpush2.bf16.msra.mxu0 0
    %6863 = vmatprep.subr.bf16.mxu0 0
    %6864 = vmatpush2.bf16.msra.mxu0 0
    %6865 = vmatprep.subr.bf16.mxu0 0
    %6866 = vmatpush2.bf16.msra.mxu0 0
    %6867 = vmatprep.subr.bf16.mxu0 0
    %6868 = vmatpush2.bf16.msra.mxu0 0
    %6869 = vmatprep.mubr.bf16.mxu0 0
    %6870 = vmatmul.mubr.bf16.gmra.mxu0 %v6835
    %v6871 = vpop.f32.mrf.mxu0
    %v6872 = vadd.f32 %v6821, %v6871
    %v6873 = vpop.f32.mrf.mxu0
    %v6874 = vpop.f32.mrf.mxu0
    %v6875 = vadd.f32 %v6821, %v6874
    %v6876 = vpop.f32.mrf.mxu0
    %6877 = vdwg.mxu0
    %v6878 = vadd.f32 %v5813, %v6872
    %v6879 = vadd.f32 %v5814, %v6875
    %v6880 = vsel %vm376, %v6878, 0.0
    %6881 = vadd.xlane.f32.xlu0 %v6880
    %v6882 = vpop.xlane.xlu0 %6881
    %v6883 = vsel %vm376, %v6879, 0.0
    %6884 = vadd.xlane.f32.xlu0 %v6883
    %v6885 = vpop.xlane.xlu0 %6884
    %v6886 = vmul.f32 %v6882, %v1123
    %v6887 = vmul.f32 %v6885, %v1123
    %v6888 = vsub.f32 %v6878, %v6886
    %v6889 = vsub.f32 %v6879, %v6887
    %v6890 = vmul.f32 %v6888, %v6888
    %v6891 = vmul.f32 %v6889, %v6889
    %v6892 = vsel %vm376, %v6890, 0.0
    %6893 = vadd.xlane.f32.xlu0 %v6892
    %v6894 = vpop.xlane.xlu0 %6893
    %v6895 = vsel %vm376, %v6891, 0.0
    %6896 = vadd.xlane.f32.xlu0 %v6895
    %v6897 = vpop.xlane.xlu0 %6896
    %v6898 = vmul.f32 %v6894, %v1123
    %v6899 = vmul.f32 %v6897, %v1123
    %v6900 = vadd.f32 %v6898, 1e-05
    %v6901 = vadd.f32 %v6899, 1e-05
    %v6902 = vrsqrt.pop %v6900
    %v6903 = vrsqrt.pop %v6901
    %v6904 = vmul.f32 %v6888, %v6902
    %v6905 = vmul.f32 %v6889, %v6903
    %v6906 = vlaneseq
    %v6907 = vshrl.u32 %v6906, 7
    %v6908 = vsub.s32 1, %v6907
    %v6909 = vrot.slane %v6121, %v6908
    %v6910 = vmul.f32 %v6904, %v6909
    %v6911 = vmul.f32 %v6905, %v6909
    %v6912 = vlaneseq
    %v6913 = vshrl.u32 %v6912, 7
    %v6914 = vsub.s32 2, %v6913
    %v6915 = vrot.slane %v6121, %v6914
    %v6916 = vadd.f32 %v6910, %v6915
    %v6917 = vadd.f32 %v6911, %v6915
    %v6918 = vpack.c.bf16 %v6917, %v6916
    %v6921 = vlaneseq
    %v6922 = vshrl.u32 %v6921, 7
    %v6923 = vsub.s32 0, %v6922
    %v6924 = vrot.slane %v5861, %v6923
    %v6925 = vlaneseq
    %v6926 = vshrl.u32 %v6925, 7
    %v6927 = vsub.s32 1, %v6926
    %v6928 = vrot.slane %v5861, %v6927
    %v6929 = vlaneseq
    %v6930 = vshrl.u32 %v6929, 7
    %v6931 = vsub.s32 2, %v6930
    %v6932 = vrot.slane %v5861, %v6931
    %v6933 = vlaneseq
    %v6934 = vshrl.u32 %v6933, 7
    %v6935 = vsub.s32 3, %v6934
    %v6936 = vrot.slane %v5861, %v6935
    %v6937 = vlaneseq
    %v6938 = vshrl.u32 %v6937, 7
    %v6939 = vsub.s32 4, %v6938
    %v6940 = vrot.slane %v5861, %v6939
    %v6941 = vlaneseq
    %v6942 = vshrl.u32 %v6941, 7
    %v6943 = vsub.s32 5, %v6942
    %v6944 = vrot.slane %v5861, %v6943
    %v6945 = vlaneseq
    %v6946 = vshrl.u32 %v6945, 7
    %v6947 = vsub.s32 6, %v6946
    %v6948 = vrot.slane %v5861, %v6947
    %v6949 = vlaneseq
    %v6950 = vshrl.u32 %v6949, 7
    %v6951 = vsub.s32 7, %v6950
    %v6952 = vrot.slane %v5861, %v6951
    %v6953 = vlaneseq
    %v6954 = vshrl.u32 %v6953, 7
    %v6955 = vsub.s32 0, %v6954
    %v6956 = vrot.slane %v5862, %v6955
    %v6957 = vlaneseq
    %v6958 = vshrl.u32 %v6957, 7
    %v6959 = vsub.s32 1, %v6958
    %v6960 = vrot.slane %v5862, %v6959
    %v6961 = vlaneseq
    %v6962 = vshrl.u32 %v6961, 7
    %v6963 = vsub.s32 2, %v6962
    %v6964 = vrot.slane %v5862, %v6963
    %v6965 = vlaneseq
    %v6966 = vshrl.u32 %v6965, 7
    %v6967 = vsub.s32 3, %v6966
    %v6968 = vrot.slane %v5862, %v6967
    %v6969 = vlaneseq
    %v6970 = vshrl.u32 %v6969, 7
    %v6971 = vsub.s32 4, %v6970
    %v6972 = vrot.slane %v5862, %v6971
    %v6973 = vlaneseq
    %v6974 = vshrl.u32 %v6973, 7
    %v6975 = vsub.s32 5, %v6974
    %v6976 = vrot.slane %v5862, %v6975
    %v6977 = vlaneseq
    %v6978 = vshrl.u32 %v6977, 7
    %v6979 = vsub.s32 6, %v6978
    %v6980 = vrot.slane %v5862, %v6979
    %v6981 = vlaneseq
    %v6982 = vshrl.u32 %v6981, 7
    %v6983 = vsub.s32 7, %v6982
    %v6984 = vrot.slane %v5862, %v6983
    %v7033 = vunpack.c.l.b16 %v5828
    %v7034 = vunpack.c.h.b16 %v5828
    %v7035 = vunpack.c.l.b16 %v5829
    %v7036 = vunpack.c.h.b16 %v5829
    %v7037 = vunpack.c.l.b16 %v5830
    %v7038 = vunpack.c.h.b16 %v5830
    %v7039 = vunpack.c.l.b16 %v5831
    %v7040 = vunpack.c.h.b16 %v5831
    %v7041 = vunpack.c.l.b16 %v5832
    %v7042 = vunpack.c.h.b16 %v5832
    %v7043 = vunpack.c.l.b16 %v5833
    %v7044 = vunpack.c.h.b16 %v5833
    %v7045 = vunpack.c.l.b16 %v5834
    %v7046 = vunpack.c.h.b16 %v5834
    %v7047 = vunpack.c.l.b16 %v5835
    %v7048 = vunpack.c.h.b16 %v5835
    %v7049 = vunpack.c.l.b16 %v5836
    %v7050 = vunpack.c.h.b16 %v5836
    %v7051 = vunpack.c.l.b16 %v5837
    %v7052 = vunpack.c.h.b16 %v5837
    %v7053 = vunpack.c.l.b16 %v5838
    %v7054 = vunpack.c.h.b16 %v5838
    %v7055 = vunpack.c.l.b16 %v5839
    %v7056 = vunpack.c.h.b16 %v5839
    %v7057 = vunpack.c.l.b16 %v5840
    %v7058 = vunpack.c.h.b16 %v5840
    %v7059 = vunpack.c.l.b16 %v5841
    %v7060 = vunpack.c.h.b16 %v5841
    %v7061 = vunpack.c.l.b16 %v5842
    %v7062 = vunpack.c.h.b16 %v5842
    %v7063 = vunpack.c.l.b16 %v5843
    %v7064 = vunpack.c.h.b16 %v5843
    %v7065 = vunpack.c.l.b16 %v5844
    %v7066 = vunpack.c.h.b16 %v5844
    %v7067 = vunpack.c.l.b16 %v5845
    %v7068 = vunpack.c.h.b16 %v5845
    %v7069 = vunpack.c.l.b16 %v5846
    %v7070 = vunpack.c.h.b16 %v5846
    %v7071 = vunpack.c.l.b16 %v5847
    %v7072 = vunpack.c.h.b16 %v5847
    %v7073 = vunpack.c.l.b16 %v5848
    %v7074 = vunpack.c.h.b16 %v5848
    %v7075 = vunpack.c.l.b16 %v5849
    %v7076 = vunpack.c.h.b16 %v5849
    %v7077 = vunpack.c.l.b16 %v5850
    %v7078 = vunpack.c.h.b16 %v5850
    %v7079 = vunpack.c.l.b16 %v5851
    %v7080 = vunpack.c.h.b16 %v5851
    %v7081 = vunpack.c.l.b16 %v5852
    %v7082 = vunpack.c.h.b16 %v5852
    %v7083 = vunpack.c.l.b16 %v5853
    %v7084 = vunpack.c.h.b16 %v5853
    %v7085 = vunpack.c.l.b16 %v5854
    %v7086 = vunpack.c.h.b16 %v5854
    %v7087 = vunpack.c.l.b16 %v5855
    %v7088 = vunpack.c.h.b16 %v5855
    %v7089 = vunpack.c.l.b16 %v5856
    %v7090 = vunpack.c.h.b16 %v5856
    %v7091 = vunpack.c.l.b16 %v5857
    %v7092 = vunpack.c.h.b16 %v5857
    %v7093 = vunpack.c.l.b16 %v5858
    %v7094 = vunpack.c.h.b16 %v5858
    %v7095 = vunpack.c.l.b16 %v5859
    %v7096 = vunpack.c.h.b16 %v5859
    %v7097 = vpack.c.b16 %v7049, %v7033
    %v7098 = vpack.c.b16 %v7050, %v7034
    %v7099 = vpack.c.b16 %v7051, %v7035
    %v7100 = vpack.c.b16 %v7052, %v7036
    %v7101 = vpack.c.b16 %v7053, %v7037
    %v7102 = vpack.c.b16 %v7054, %v7038
    %v7103 = vpack.c.b16 %v7055, %v7039
    %v7104 = vpack.c.b16 %v7056, %v7040
    %v7105 = vpack.c.b16 %v7057, %v7041
    %v7106 = vpack.c.b16 %v7058, %v7042
    %v7107 = vpack.c.b16 %v7059, %v7043
    %v7108 = vpack.c.b16 %v7060, %v7044
    %v7109 = vpack.c.b16 %v7061, %v7045
    %v7110 = vpack.c.b16 %v7062, %v7046
    %v7111 = vpack.c.b16 %v7063, %v7047
    %v7112 = vpack.c.b16 %v7064, %v7048
    %v7113 = vpack.c.b16 %v7081, %v7065
    %v7114 = vpack.c.b16 %v7082, %v7066
    %v7115 = vpack.c.b16 %v7083, %v7067
    %v7116 = vpack.c.b16 %v7084, %v7068
    %v7117 = vpack.c.b16 %v7085, %v7069
    %v7118 = vpack.c.b16 %v7086, %v7070
    %v7119 = vpack.c.b16 %v7087, %v7071
    %v7120 = vpack.c.b16 %v7088, %v7072
    %v7121 = vpack.c.b16 %v7089, %v7073
    %v7122 = vpack.c.b16 %v7090, %v7074
    %v7123 = vpack.c.b16 %v7091, %v7075
    %v7124 = vpack.c.b16 %v7092, %v7076
    %v7125 = vpack.c.b16 %v7093, %v7077
    %v7126 = vpack.c.b16 %v7094, %v7078
    %v7127 = vpack.c.b16 %v7095, %v7079
    %v7128 = vpack.c.b16 %v7096, %v7080
    %v7162 = vsel %vm376, %v6918, 0
    %7164 = vmatprep.subr.bf16.mxu0 0
    %7165 = vmatpush1.bf16.msra.mxu0 0
    %7166 = vmatprep.subr.bf16.mxu0 0
    %7167 = vmatpush1.bf16.msra.mxu0 0
    %7168 = vmatprep.subr.bf16.mxu0 0
    %7169 = vmatpush1.bf16.msra.mxu0 0
    %7170 = vmatprep.subr.bf16.mxu0 0
    %7171 = vmatpush1.bf16.msra.mxu0 0
    %7172 = vmatprep.subr.bf16.mxu0 0
    %7173 = vmatpush1.bf16.msra.mxu0 0
    %7174 = vmatprep.subr.bf16.mxu0 0
    %7175 = vmatpush1.bf16.msra.mxu0 0
    %7176 = vmatprep.subr.bf16.mxu0 %v7114
    %7177 = vmatpush1.bf16.msra.mxu0 %v7113
    %7178 = vmatprep.subr.bf16.mxu0 %v7098
    %7179 = vmatpush1.bf16.msra.mxu0 %v7097
    %7180 = vmatprep.subr.bf16.mxu0 0
    %7181 = vmatpush2.bf16.msra.mxu0 0
    %7182 = vmatprep.subr.bf16.mxu0 0
    %7183 = vmatpush2.bf16.msra.mxu0 0
    %7184 = vmatprep.subr.bf16.mxu0 0
    %7185 = vmatpush2.bf16.msra.mxu0 0
    %7186 = vmatprep.subr.bf16.mxu0 0
    %7187 = vmatpush2.bf16.msra.mxu0 0
    %7188 = vmatprep.subr.bf16.mxu0 0
    %7189 = vmatpush2.bf16.msra.mxu0 0
    %7190 = vmatprep.subr.bf16.mxu0 0
    %7191 = vmatpush2.bf16.msra.mxu0 0
    %7192 = vmatprep.subr.bf16.mxu0 0
    %7193 = vmatpush2.bf16.msra.mxu0 0
    %7194 = vmatprep.subr.bf16.mxu0 0
    %7195 = vmatpush2.bf16.msra.mxu0 0
    %7196 = vmatprep.mubr.bf16.mxu0 0
    %7197 = vmatmul.mubr.bf16.gmra.mxu0 %v7162
    %v7198 = vpop.f32.mrf.mxu0
    %v7199 = vadd.f32 %v6924, %v7198
    %v7200 = vpop.f32.mrf.mxu0
    %v7201 = vadd.f32 %v6928, %v7200
    %v7202 = vpop.f32.mrf.mxu0
    %v7203 = vadd.f32 %v6924, %v7202
    %v7204 = vpop.f32.mrf.mxu0
    %v7205 = vadd.f32 %v6928, %v7204
    %7206 = vdwg.mxu0
    %7207 = vmatprep.subr.bf16.mxu0 0
    %7208 = vmatpush1.bf16.msra.mxu0 0
    %7209 = vmatprep.subr.bf16.mxu0 0
    %7210 = vmatpush1.bf16.msra.mxu0 0
    %7211 = vmatprep.subr.bf16.mxu0 0
    %7212 = vmatpush1.bf16.msra.mxu0 0
    %7213 = vmatprep.subr.bf16.mxu0 0
    %7214 = vmatpush1.bf16.msra.mxu0 0
    %7215 = vmatprep.subr.bf16.mxu0 0
    %7216 = vmatpush1.bf16.msra.mxu0 0
    %7217 = vmatprep.subr.bf16.mxu0 0
    %7218 = vmatpush1.bf16.msra.mxu0 0
    %7219 = vmatprep.subr.bf16.mxu0 %v7116
    %7220 = vmatpush1.bf16.msra.mxu0 %v7115
    %7221 = vmatprep.subr.bf16.mxu0 %v7100
    %7222 = vmatpush1.bf16.msra.mxu0 %v7099
    %7223 = vmatprep.subr.bf16.mxu0 0
    %7224 = vmatpush2.bf16.msra.mxu0 0
    %7225 = vmatprep.subr.bf16.mxu0 0
    %7226 = vmatpush2.bf16.msra.mxu0 0
    %7227 = vmatprep.subr.bf16.mxu0 0
    %7228 = vmatpush2.bf16.msra.mxu0 0
    %7229 = vmatprep.subr.bf16.mxu0 0
    %7230 = vmatpush2.bf16.msra.mxu0 0
    %7231 = vmatprep.subr.bf16.mxu0 0
    %7232 = vmatpush2.bf16.msra.mxu0 0
    %7233 = vmatprep.subr.bf16.mxu0 0
    %7234 = vmatpush2.bf16.msra.mxu0 0
    %7235 = vmatprep.subr.bf16.mxu0 0
    %7236 = vmatpush2.bf16.msra.mxu0 0
    %7237 = vmatprep.subr.bf16.mxu0 0
    %7238 = vmatpush2.bf16.msra.mxu0 0
    %7239 = vmatprep.mubr.bf16.mxu0 0
    %7240 = vmatmul.mubr.bf16.gmra.mxu0 %v7162
    %v7241 = vpop.f32.mrf.mxu0
    %v7242 = vadd.f32 %v6932, %v7241
    %v7243 = vpop.f32.mrf.mxu0
    %v7244 = vadd.f32 %v6936, %v7243
    %v7245 = vpop.f32.mrf.mxu0
    %v7246 = vadd.f32 %v6932, %v7245
    %v7247 = vpop.f32.mrf.mxu0
    %v7248 = vadd.f32 %v6936, %v7247
    %7249 = vdwg.mxu0
    %7250 = vmatprep.subr.bf16.mxu0 0
    %7251 = vmatpush1.bf16.msra.mxu0 0
    %7252 = vmatprep.subr.bf16.mxu0 0
    %7253 = vmatpush1.bf16.msra.mxu0 0
    %7254 = vmatprep.subr.bf16.mxu0 0
    %7255 = vmatpush1.bf16.msra.mxu0 0
    %7256 = vmatprep.subr.bf16.mxu0 0
    %7257 = vmatpush1.bf16.msra.mxu0 0
    %7258 = vmatprep.subr.bf16.mxu0 0
    %7259 = vmatpush1.bf16.msra.mxu0 0
    %7260 = vmatprep.subr.bf16.mxu0 0
    %7261 = vmatpush1.bf16.msra.mxu0 0
    %7262 = vmatprep.subr.bf16.mxu0 %v7118
    %7263 = vmatpush1.bf16.msra.mxu0 %v7117
    %7264 = vmatprep.subr.bf16.mxu0 %v7102
    %7265 = vmatpush1.bf16.msra.mxu0 %v7101
    %7266 = vmatprep.subr.bf16.mxu0 0
    %7267 = vmatpush2.bf16.msra.mxu0 0
    %7268 = vmatprep.subr.bf16.mxu0 0
    %7269 = vmatpush2.bf16.msra.mxu0 0
    %7270 = vmatprep.subr.bf16.mxu0 0
    %7271 = vmatpush2.bf16.msra.mxu0 0
    %7272 = vmatprep.subr.bf16.mxu0 0
    %7273 = vmatpush2.bf16.msra.mxu0 0
    %7274 = vmatprep.subr.bf16.mxu0 0
    %7275 = vmatpush2.bf16.msra.mxu0 0
    %7276 = vmatprep.subr.bf16.mxu0 0
    %7277 = vmatpush2.bf16.msra.mxu0 0
    %7278 = vmatprep.subr.bf16.mxu0 0
    %7279 = vmatpush2.bf16.msra.mxu0 0
    %7280 = vmatprep.subr.bf16.mxu0 0
    %7281 = vmatpush2.bf16.msra.mxu0 0
    %7282 = vmatprep.mubr.bf16.mxu0 0
    %7283 = vmatmul.mubr.bf16.gmra.mxu0 %v7162
    %v7284 = vpop.f32.mrf.mxu0
    %v7285 = vadd.f32 %v6940, %v7284
    %v7286 = vpop.f32.mrf.mxu0
    %v7287 = vadd.f32 %v6944, %v7286
    %v7288 = vpop.f32.mrf.mxu0
    %v7289 = vadd.f32 %v6940, %v7288
    %v7290 = vpop.f32.mrf.mxu0
    %v7291 = vadd.f32 %v6944, %v7290
    %7292 = vdwg.mxu0
    %7293 = vmatprep.subr.bf16.mxu0 0
    %7294 = vmatpush1.bf16.msra.mxu0 0
    %7295 = vmatprep.subr.bf16.mxu0 0
    %7296 = vmatpush1.bf16.msra.mxu0 0
    %7297 = vmatprep.subr.bf16.mxu0 0
    %7298 = vmatpush1.bf16.msra.mxu0 0
    %7299 = vmatprep.subr.bf16.mxu0 0
    %7300 = vmatpush1.bf16.msra.mxu0 0
    %7301 = vmatprep.subr.bf16.mxu0 0
    %7302 = vmatpush1.bf16.msra.mxu0 0
    %7303 = vmatprep.subr.bf16.mxu0 0
    %7304 = vmatpush1.bf16.msra.mxu0 0
    %7305 = vmatprep.subr.bf16.mxu0 %v7120
    %7306 = vmatpush1.bf16.msra.mxu0 %v7119
    %7307 = vmatprep.subr.bf16.mxu0 %v7104
    %7308 = vmatpush1.bf16.msra.mxu0 %v7103
    %7309 = vmatprep.subr.bf16.mxu0 0
    %7310 = vmatpush2.bf16.msra.mxu0 0
    %7311 = vmatprep.subr.bf16.mxu0 0
    %7312 = vmatpush2.bf16.msra.mxu0 0
    %7313 = vmatprep.subr.bf16.mxu0 0
    %7314 = vmatpush2.bf16.msra.mxu0 0
    %7315 = vmatprep.subr.bf16.mxu0 0
    %7316 = vmatpush2.bf16.msra.mxu0 0
    %7317 = vmatprep.subr.bf16.mxu0 0
    %7318 = vmatpush2.bf16.msra.mxu0 0
    %7319 = vmatprep.subr.bf16.mxu0 0
    %7320 = vmatpush2.bf16.msra.mxu0 0
    %7321 = vmatprep.subr.bf16.mxu0 0
    %7322 = vmatpush2.bf16.msra.mxu0 0
    %7323 = vmatprep.subr.bf16.mxu0 0
    %7324 = vmatpush2.bf16.msra.mxu0 0
    %7325 = vmatprep.mubr.bf16.mxu0 0
    %7326 = vmatmul.mubr.bf16.gmra.mxu0 %v7162
    %v7327 = vpop.f32.mrf.mxu0
    %v7328 = vadd.f32 %v6948, %v7327
    %v7329 = vpop.f32.mrf.mxu0
    %v7330 = vadd.f32 %v6952, %v7329
    %v7331 = vpop.f32.mrf.mxu0
    %v7332 = vadd.f32 %v6948, %v7331
    %v7333 = vpop.f32.mrf.mxu0
    %v7334 = vadd.f32 %v6952, %v7333
    %7335 = vdwg.mxu0
    %7336 = vmatprep.subr.bf16.mxu0 0
    %7337 = vmatpush1.bf16.msra.mxu0 0
    %7338 = vmatprep.subr.bf16.mxu0 0
    %7339 = vmatpush1.bf16.msra.mxu0 0
    %7340 = vmatprep.subr.bf16.mxu0 0
    %7341 = vmatpush1.bf16.msra.mxu0 0
    %7342 = vmatprep.subr.bf16.mxu0 0
    %7343 = vmatpush1.bf16.msra.mxu0 0
    %7344 = vmatprep.subr.bf16.mxu0 0
    %7345 = vmatpush1.bf16.msra.mxu0 0
    %7346 = vmatprep.subr.bf16.mxu0 0
    %7347 = vmatpush1.bf16.msra.mxu0 0
    %7348 = vmatprep.subr.bf16.mxu0 %v7122
    %7349 = vmatpush1.bf16.msra.mxu0 %v7121
    %7350 = vmatprep.subr.bf16.mxu0 %v7106
    %7351 = vmatpush1.bf16.msra.mxu0 %v7105
    %7352 = vmatprep.subr.bf16.mxu0 0
    %7353 = vmatpush2.bf16.msra.mxu0 0
    %7354 = vmatprep.subr.bf16.mxu0 0
    %7355 = vmatpush2.bf16.msra.mxu0 0
    %7356 = vmatprep.subr.bf16.mxu0 0
    %7357 = vmatpush2.bf16.msra.mxu0 0
    %7358 = vmatprep.subr.bf16.mxu0 0
    %7359 = vmatpush2.bf16.msra.mxu0 0
    %7360 = vmatprep.subr.bf16.mxu0 0
    %7361 = vmatpush2.bf16.msra.mxu0 0
    %7362 = vmatprep.subr.bf16.mxu0 0
    %7363 = vmatpush2.bf16.msra.mxu0 0
    %7364 = vmatprep.subr.bf16.mxu0 0
    %7365 = vmatpush2.bf16.msra.mxu0 0
    %7366 = vmatprep.subr.bf16.mxu0 0
    %7367 = vmatpush2.bf16.msra.mxu0 0
    %7368 = vmatprep.mubr.bf16.mxu0 0
    %7369 = vmatmul.mubr.bf16.gmra.mxu0 %v7162
    %v7370 = vpop.f32.mrf.mxu0
    %v7371 = vadd.f32 %v6956, %v7370
    %v7372 = vpop.f32.mrf.mxu0
    %v7373 = vadd.f32 %v6960, %v7372
    %v7374 = vpop.f32.mrf.mxu0
    %v7375 = vadd.f32 %v6956, %v7374
    %v7376 = vpop.f32.mrf.mxu0
    %v7377 = vadd.f32 %v6960, %v7376
    %7378 = vdwg.mxu0
    %7379 = vmatprep.subr.bf16.mxu0 0
    %7380 = vmatpush1.bf16.msra.mxu0 0
    %7381 = vmatprep.subr.bf16.mxu0 0
    %7382 = vmatpush1.bf16.msra.mxu0 0
    %7383 = vmatprep.subr.bf16.mxu0 0
    %7384 = vmatpush1.bf16.msra.mxu0 0
    %7385 = vmatprep.subr.bf16.mxu0 0
    %7386 = vmatpush1.bf16.msra.mxu0 0
    %7387 = vmatprep.subr.bf16.mxu0 0
    %7388 = vmatpush1.bf16.msra.mxu0 0
    %7389 = vmatprep.subr.bf16.mxu0 0
    %7390 = vmatpush1.bf16.msra.mxu0 0
    %7391 = vmatprep.subr.bf16.mxu0 %v7124
    %7392 = vmatpush1.bf16.msra.mxu0 %v7123
    %7393 = vmatprep.subr.bf16.mxu0 %v7108
    %7394 = vmatpush1.bf16.msra.mxu0 %v7107
    %7395 = vmatprep.subr.bf16.mxu0 0
    %7396 = vmatpush2.bf16.msra.mxu0 0
    %7397 = vmatprep.subr.bf16.mxu0 0
    %7398 = vmatpush2.bf16.msra.mxu0 0
    %7399 = vmatprep.subr.bf16.mxu0 0
    %7400 = vmatpush2.bf16.msra.mxu0 0
    %7401 = vmatprep.subr.bf16.mxu0 0
    %7402 = vmatpush2.bf16.msra.mxu0 0
    %7403 = vmatprep.subr.bf16.mxu0 0
    %7404 = vmatpush2.bf16.msra.mxu0 0
    %7405 = vmatprep.subr.bf16.mxu0 0
    %7406 = vmatpush2.bf16.msra.mxu0 0
    %7407 = vmatprep.subr.bf16.mxu0 0
    %7408 = vmatpush2.bf16.msra.mxu0 0
    %7409 = vmatprep.subr.bf16.mxu0 0
    %7410 = vmatpush2.bf16.msra.mxu0 0
    %7411 = vmatprep.mubr.bf16.mxu0 0
    %7412 = vmatmul.mubr.bf16.gmra.mxu0 %v7162
    %v7413 = vpop.f32.mrf.mxu0
    %v7414 = vadd.f32 %v6964, %v7413
    %v7415 = vpop.f32.mrf.mxu0
    %v7416 = vadd.f32 %v6968, %v7415
    %v7417 = vpop.f32.mrf.mxu0
    %v7418 = vadd.f32 %v6964, %v7417
    %v7419 = vpop.f32.mrf.mxu0
    %v7420 = vadd.f32 %v6968, %v7419
    %7421 = vdwg.mxu0
    %7422 = vmatprep.subr.bf16.mxu0 0
    %7423 = vmatpush1.bf16.msra.mxu0 0
    %7424 = vmatprep.subr.bf16.mxu0 0
    %7425 = vmatpush1.bf16.msra.mxu0 0
    %7426 = vmatprep.subr.bf16.mxu0 0
    %7427 = vmatpush1.bf16.msra.mxu0 0
    %7428 = vmatprep.subr.bf16.mxu0 0
    %7429 = vmatpush1.bf16.msra.mxu0 0
    %7430 = vmatprep.subr.bf16.mxu0 0
    %7431 = vmatpush1.bf16.msra.mxu0 0
    %7432 = vmatprep.subr.bf16.mxu0 0
    %7433 = vmatpush1.bf16.msra.mxu0 0
    %7434 = vmatprep.subr.bf16.mxu0 %v7126
    %7435 = vmatpush1.bf16.msra.mxu0 %v7125
    %7436 = vmatprep.subr.bf16.mxu0 %v7110
    %7437 = vmatpush1.bf16.msra.mxu0 %v7109
    %7438 = vmatprep.subr.bf16.mxu0 0
    %7439 = vmatpush2.bf16.msra.mxu0 0
    %7440 = vmatprep.subr.bf16.mxu0 0
    %7441 = vmatpush2.bf16.msra.mxu0 0
    %7442 = vmatprep.subr.bf16.mxu0 0
    %7443 = vmatpush2.bf16.msra.mxu0 0
    %7444 = vmatprep.subr.bf16.mxu0 0
    %7445 = vmatpush2.bf16.msra.mxu0 0
    %7446 = vmatprep.subr.bf16.mxu0 0
    %7447 = vmatpush2.bf16.msra.mxu0 0
    %7448 = vmatprep.subr.bf16.mxu0 0
    %7449 = vmatpush2.bf16.msra.mxu0 0
    %7450 = vmatprep.subr.bf16.mxu0 0
    %7451 = vmatpush2.bf16.msra.mxu0 0
    %7452 = vmatprep.subr.bf16.mxu0 0
    %7453 = vmatpush2.bf16.msra.mxu0 0
    %7454 = vmatprep.mubr.bf16.mxu0 0
    %7455 = vmatmul.mubr.bf16.gmra.mxu0 %v7162
    %v7456 = vpop.f32.mrf.mxu0
    %v7457 = vadd.f32 %v6972, %v7456
    %v7458 = vpop.f32.mrf.mxu0
    %v7459 = vadd.f32 %v6976, %v7458
    %v7460 = vpop.f32.mrf.mxu0
    %v7461 = vadd.f32 %v6972, %v7460
    %v7462 = vpop.f32.mrf.mxu0
    %v7463 = vadd.f32 %v6976, %v7462
    %7464 = vdwg.mxu0
    %7465 = vmatprep.subr.bf16.mxu0 0
    %7466 = vmatpush1.bf16.msra.mxu0 0
    %7467 = vmatprep.subr.bf16.mxu0 0
    %7468 = vmatpush1.bf16.msra.mxu0 0
    %7469 = vmatprep.subr.bf16.mxu0 0
    %7470 = vmatpush1.bf16.msra.mxu0 0
    %7471 = vmatprep.subr.bf16.mxu0 0
    %7472 = vmatpush1.bf16.msra.mxu0 0
    %7473 = vmatprep.subr.bf16.mxu0 0
    %7474 = vmatpush1.bf16.msra.mxu0 0
    %7475 = vmatprep.subr.bf16.mxu0 0
    %7476 = vmatpush1.bf16.msra.mxu0 0
    %7477 = vmatprep.subr.bf16.mxu0 %v7128
    %7478 = vmatpush1.bf16.msra.mxu0 %v7127
    %7479 = vmatprep.subr.bf16.mxu0 %v7112
    %7480 = vmatpush1.bf16.msra.mxu0 %v7111
    %7481 = vmatprep.subr.bf16.mxu0 0
    %7482 = vmatpush2.bf16.msra.mxu0 0
    %7483 = vmatprep.subr.bf16.mxu0 0
    %7484 = vmatpush2.bf16.msra.mxu0 0
    %7485 = vmatprep.subr.bf16.mxu0 0
    %7486 = vmatpush2.bf16.msra.mxu0 0
    %7487 = vmatprep.subr.bf16.mxu0 0
    %7488 = vmatpush2.bf16.msra.mxu0 0
    %7489 = vmatprep.subr.bf16.mxu0 0
    %7490 = vmatpush2.bf16.msra.mxu0 0
    %7491 = vmatprep.subr.bf16.mxu0 0
    %7492 = vmatpush2.bf16.msra.mxu0 0
    %7493 = vmatprep.subr.bf16.mxu0 0
    %7494 = vmatpush2.bf16.msra.mxu0 0
    %7495 = vmatprep.subr.bf16.mxu0 0
    %7496 = vmatpush2.bf16.msra.mxu0 0
    %7497 = vmatprep.mubr.bf16.mxu0 0
    %7498 = vmatmul.mubr.bf16.gmra.mxu0 %v7162
    %v7499 = vpop.f32.mrf.mxu0
    %v7500 = vadd.f32 %v6980, %v7499
    %v7501 = vpop.f32.mrf.mxu0
    %v7502 = vadd.f32 %v6984, %v7501
    %v7503 = vpop.f32.mrf.mxu0
    %v7504 = vadd.f32 %v6980, %v7503
    %v7505 = vpop.f32.mrf.mxu0
    %v7506 = vadd.f32 %v6984, %v7505
    %7507 = vdwg.mxu0
    %v7508 = vmax.f32 %v7199, 0.0
    %v7509 = vmax.f32 %v7201, 0.0
    %v7510 = vmax.f32 %v7242, 0.0
    %v7511 = vmax.f32 %v7244, 0.0
    %v7512 = vmax.f32 %v7285, 0.0
    %v7513 = vmax.f32 %v7287, 0.0
    %v7514 = vmax.f32 %v7328, 0.0
    %v7515 = vmax.f32 %v7330, 0.0
    %v7516 = vmax.f32 %v7371, 0.0
    %v7517 = vmax.f32 %v7373, 0.0
    %v7518 = vmax.f32 %v7414, 0.0
    %v7519 = vmax.f32 %v7416, 0.0
    %v7520 = vmax.f32 %v7457, 0.0
    %v7521 = vmax.f32 %v7459, 0.0
    %v7522 = vmax.f32 %v7500, 0.0
    %v7523 = vmax.f32 %v7502, 0.0
    %v7524 = vmax.f32 %v7203, 0.0
    %v7525 = vmax.f32 %v7205, 0.0
    %v7526 = vmax.f32 %v7246, 0.0
    %v7527 = vmax.f32 %v7248, 0.0
    %v7528 = vmax.f32 %v7289, 0.0
    %v7529 = vmax.f32 %v7291, 0.0
    %v7530 = vmax.f32 %v7332, 0.0
    %v7531 = vmax.f32 %v7334, 0.0
    %v7532 = vmax.f32 %v7375, 0.0
    %v7533 = vmax.f32 %v7377, 0.0
    %v7534 = vmax.f32 %v7418, 0.0
    %v7535 = vmax.f32 %v7420, 0.0
    %v7536 = vmax.f32 %v7461, 0.0
    %v7537 = vmax.f32 %v7463, 0.0
    %v7538 = vmax.f32 %v7504, 0.0
    %v7539 = vmax.f32 %v7506, 0.0
    %v7540 = vpack.c.bf16 %v7524, %v7508
    %v7541 = vpack.c.bf16 %v7525, %v7509
    %v7542 = vpack.c.bf16 %v7526, %v7510
    %v7543 = vpack.c.bf16 %v7527, %v7511
    %v7544 = vpack.c.bf16 %v7528, %v7512
    %v7545 = vpack.c.bf16 %v7529, %v7513
    %v7546 = vpack.c.bf16 %v7530, %v7514
    %v7547 = vpack.c.bf16 %v7531, %v7515
    %v7548 = vpack.c.bf16 %v7532, %v7516
    %v7549 = vpack.c.bf16 %v7533, %v7517
    %v7550 = vpack.c.bf16 %v7534, %v7518
    %v7551 = vpack.c.bf16 %v7535, %v7519
    %v7552 = vpack.c.bf16 %v7536, %v7520
    %v7553 = vpack.c.bf16 %v7537, %v7521
    %v7554 = vpack.c.bf16 %v7538, %v7522
    %v7555 = vpack.c.bf16 %v7539, %v7523
    %v7556 = vlaneseq
    %v7557 = vshrl.u32 %v7556, 7
    %v7558 = vsub.s32 3, %v7557
    %v7559 = vrot.slane %v6121, %v7558
    %v7816 = vunpack.c.l.b16 %v5864
    %v7817 = vunpack.c.l.b16 %v5865
    %v7818 = vunpack.c.l.b16 %v5866
    %v7819 = vunpack.c.l.b16 %v5867
    %v7820 = vunpack.c.l.b16 %v5868
    %v7821 = vunpack.c.l.b16 %v5869
    %v7822 = vunpack.c.l.b16 %v5870
    %v7823 = vunpack.c.l.b16 %v5871
    %v7824 = vunpack.c.l.b16 %v5872
    %v7825 = vunpack.c.l.b16 %v5873
    %v7826 = vunpack.c.l.b16 %v5874
    %v7827 = vunpack.c.l.b16 %v5875
    %v7828 = vunpack.c.l.b16 %v5876
    %v7829 = vunpack.c.l.b16 %v5877
    %v7830 = vunpack.c.l.b16 %v5878
    %v7831 = vunpack.c.l.b16 %v5879
    %v7832 = vunpack.c.l.b16 %v5880
    %v7833 = vunpack.c.l.b16 %v5881
    %v7834 = vunpack.c.l.b16 %v5882
    %v7835 = vunpack.c.l.b16 %v5883
    %v7836 = vunpack.c.l.b16 %v5884
    %v7837 = vunpack.c.l.b16 %v5885
    %v7838 = vunpack.c.l.b16 %v5886
    %v7839 = vunpack.c.l.b16 %v5887
    %v7840 = vunpack.c.l.b16 %v5888
    %v7841 = vunpack.c.l.b16 %v5889
    %v7842 = vunpack.c.l.b16 %v5890
    %v7843 = vunpack.c.l.b16 %v5891
    %v7844 = vunpack.c.l.b16 %v5892
    %v7845 = vunpack.c.l.b16 %v5893
    %v7846 = vunpack.c.l.b16 %v5894
    %v7847 = vunpack.c.l.b16 %v5895
    %v7848 = vunpack.c.l.b16 %v5896
    %v7849 = vunpack.c.l.b16 %v5897
    %v7850 = vunpack.c.l.b16 %v5898
    %v7851 = vunpack.c.l.b16 %v5899
    %v7852 = vunpack.c.l.b16 %v5900
    %v7853 = vunpack.c.l.b16 %v5901
    %v7854 = vunpack.c.l.b16 %v5902
    %v7855 = vunpack.c.l.b16 %v5903
    %v7856 = vunpack.c.l.b16 %v5904
    %v7857 = vunpack.c.l.b16 %v5905
    %v7858 = vunpack.c.l.b16 %v5906
    %v7859 = vunpack.c.l.b16 %v5907
    %v7860 = vunpack.c.l.b16 %v5908
    %v7861 = vunpack.c.l.b16 %v5909
    %v7862 = vunpack.c.l.b16 %v5910
    %v7863 = vunpack.c.l.b16 %v5911
    %v7864 = vunpack.c.l.b16 %v5912
    %v7865 = vunpack.c.l.b16 %v5913
    %v7866 = vunpack.c.l.b16 %v5914
    %v7867 = vunpack.c.l.b16 %v5915
    %v7868 = vunpack.c.l.b16 %v5916
    %v7869 = vunpack.c.l.b16 %v5917
    %v7870 = vunpack.c.l.b16 %v5918
    %v7871 = vunpack.c.l.b16 %v5919
    %v7872 = vunpack.c.l.b16 %v5920
    %v7873 = vunpack.c.l.b16 %v5921
    %v7874 = vunpack.c.l.b16 %v5922
    %v7875 = vunpack.c.l.b16 %v5923
    %v7876 = vunpack.c.l.b16 %v5924
    %v7877 = vunpack.c.l.b16 %v5925
    %v7878 = vunpack.c.l.b16 %v5926
    %v7879 = vunpack.c.l.b16 %v5927
    %v7880 = vunpack.c.l.b16 %v5928
    %v7881 = vunpack.c.l.b16 %v5929
    %v7882 = vunpack.c.l.b16 %v5930
    %v7883 = vunpack.c.l.b16 %v5931
    %v7884 = vunpack.c.l.b16 %v5932
    %v7885 = vunpack.c.l.b16 %v5933
    %v7886 = vunpack.c.l.b16 %v5934
    %v7887 = vunpack.c.l.b16 %v5935
    %v7888 = vunpack.c.l.b16 %v5936
    %v7889 = vunpack.c.l.b16 %v5937
    %v7890 = vunpack.c.l.b16 %v5938
    %v7891 = vunpack.c.l.b16 %v5939
    %v7892 = vunpack.c.l.b16 %v5940
    %v7893 = vunpack.c.l.b16 %v5941
    %v7894 = vunpack.c.l.b16 %v5942
    %v7895 = vunpack.c.l.b16 %v5943
    %v7896 = vunpack.c.l.b16 %v5944
    %v7897 = vunpack.c.l.b16 %v5945
    %v7898 = vunpack.c.l.b16 %v5946
    %v7899 = vunpack.c.l.b16 %v5947
    %v7900 = vunpack.c.l.b16 %v5948
    %v7901 = vunpack.c.l.b16 %v5949
    %v7902 = vunpack.c.l.b16 %v5950
    %v7903 = vunpack.c.l.b16 %v5951
    %v7904 = vunpack.c.l.b16 %v5952
    %v7905 = vunpack.c.l.b16 %v5953
    %v7906 = vunpack.c.l.b16 %v5954
    %v7907 = vunpack.c.l.b16 %v5955
    %v7908 = vunpack.c.l.b16 %v5956
    %v7909 = vunpack.c.l.b16 %v5957
    %v7910 = vunpack.c.l.b16 %v5958
    %v7911 = vunpack.c.l.b16 %v5959
    %v7912 = vunpack.c.l.b16 %v5960
    %v7913 = vunpack.c.l.b16 %v5961
    %v7914 = vunpack.c.l.b16 %v5962
    %v7915 = vunpack.c.l.b16 %v5963
    %v7916 = vunpack.c.l.b16 %v5964
    %v7917 = vunpack.c.l.b16 %v5965
    %v7918 = vunpack.c.l.b16 %v5966
    %v7919 = vunpack.c.l.b16 %v5967
    %v7920 = vunpack.c.l.b16 %v5968
    %v7921 = vunpack.c.l.b16 %v5969
    %v7922 = vunpack.c.l.b16 %v5970
    %v7923 = vunpack.c.l.b16 %v5971
    %v7924 = vunpack.c.l.b16 %v5972
    %v7925 = vunpack.c.l.b16 %v5973
    %v7926 = vunpack.c.l.b16 %v5974
    %v7927 = vunpack.c.l.b16 %v5975
    %v7928 = vunpack.c.l.b16 %v5976
    %v7929 = vunpack.c.l.b16 %v5977
    %v7930 = vunpack.c.l.b16 %v5978
    %v7931 = vunpack.c.l.b16 %v5979
    %v7932 = vunpack.c.l.b16 %v5980
    %v7933 = vunpack.c.l.b16 %v5981
    %v7934 = vunpack.c.l.b16 %v5982
    %v7935 = vunpack.c.l.b16 %v5983
    %v7936 = vunpack.c.l.b16 %v5984
    %v7937 = vunpack.c.l.b16 %v5985
    %v7938 = vunpack.c.l.b16 %v5986
    %v7939 = vunpack.c.l.b16 %v5987
    %v7940 = vunpack.c.l.b16 %v5988
    %v7941 = vunpack.c.l.b16 %v5989
    %v7942 = vunpack.c.l.b16 %v5990
    %v7943 = vunpack.c.l.b16 %v5991
    %v7944 = vunpack.c.l.b16 %v5992
    %v7945 = vunpack.c.l.b16 %v5993
    %v7946 = vunpack.c.l.b16 %v5994
    %v7947 = vunpack.c.l.b16 %v5995
    %v7948 = vunpack.c.l.b16 %v5996
    %v7949 = vunpack.c.l.b16 %v5997
    %v7950 = vunpack.c.l.b16 %v5998
    %v7951 = vunpack.c.l.b16 %v5999
    %v7952 = vunpack.c.l.b16 %v6000
    %v7953 = vunpack.c.l.b16 %v6001
    %v7954 = vunpack.c.l.b16 %v6002
    %v7955 = vunpack.c.l.b16 %v6003
    %v7956 = vunpack.c.l.b16 %v6004
    %v7957 = vunpack.c.l.b16 %v6005
    %v7958 = vunpack.c.l.b16 %v6006
    %v7959 = vunpack.c.l.b16 %v6007
    %v7960 = vunpack.c.l.b16 %v6008
    %v7961 = vunpack.c.l.b16 %v6009
    %v7962 = vunpack.c.l.b16 %v6010
    %v7963 = vunpack.c.l.b16 %v6011
    %v7964 = vunpack.c.l.b16 %v6012
    %v7965 = vunpack.c.l.b16 %v6013
    %v7966 = vunpack.c.l.b16 %v6014
    %v7967 = vunpack.c.l.b16 %v6015
    %v7968 = vunpack.c.l.b16 %v6016
    %v7969 = vunpack.c.l.b16 %v6017
    %v7970 = vunpack.c.l.b16 %v6018
    %v7971 = vunpack.c.l.b16 %v6019
    %v7972 = vunpack.c.l.b16 %v6020
    %v7973 = vunpack.c.l.b16 %v6021
    %v7974 = vunpack.c.l.b16 %v6022
    %v7975 = vunpack.c.l.b16 %v6023
    %v7976 = vunpack.c.l.b16 %v6024
    %v7977 = vunpack.c.l.b16 %v6025
    %v7978 = vunpack.c.l.b16 %v6026
    %v7979 = vunpack.c.l.b16 %v6027
    %v7980 = vunpack.c.l.b16 %v6028
    %v7981 = vunpack.c.l.b16 %v6029
    %v7982 = vunpack.c.l.b16 %v6030
    %v7983 = vunpack.c.l.b16 %v6031
    %v7984 = vunpack.c.l.b16 %v6032
    %v7985 = vunpack.c.l.b16 %v6033
    %v7986 = vunpack.c.l.b16 %v6034
    %v7987 = vunpack.c.l.b16 %v6035
    %v7988 = vunpack.c.l.b16 %v6036
    %v7989 = vunpack.c.l.b16 %v6037
    %v7990 = vunpack.c.l.b16 %v6038
    %v7991 = vunpack.c.l.b16 %v6039
    %v7992 = vunpack.c.l.b16 %v6040
    %v7993 = vunpack.c.l.b16 %v6041
    %v7994 = vunpack.c.l.b16 %v6042
    %v7995 = vunpack.c.l.b16 %v6043
    %v7996 = vunpack.c.l.b16 %v6044
    %v7997 = vunpack.c.l.b16 %v6045
    %v7998 = vunpack.c.l.b16 %v6046
    %v7999 = vunpack.c.l.b16 %v6047
    %v8000 = vunpack.c.l.b16 %v6048
    %v8001 = vunpack.c.l.b16 %v6049
    %v8002 = vunpack.c.l.b16 %v6050
    %v8003 = vunpack.c.l.b16 %v6051
    %v8004 = vunpack.c.l.b16 %v6052
    %v8005 = vunpack.c.l.b16 %v6053
    %v8006 = vunpack.c.l.b16 %v6054
    %v8007 = vunpack.c.l.b16 %v6055
    %v8008 = vunpack.c.l.b16 %v6056
    %v8009 = vunpack.c.l.b16 %v6057
    %v8010 = vunpack.c.l.b16 %v6058
    %v8011 = vunpack.c.l.b16 %v6059
    %v8012 = vunpack.c.l.b16 %v6060
    %v8013 = vunpack.c.l.b16 %v6061
    %v8014 = vunpack.c.l.b16 %v6062
    %v8015 = vunpack.c.l.b16 %v6063
    %v8016 = vunpack.c.l.b16 %v6064
    %v8017 = vunpack.c.l.b16 %v6065
    %v8018 = vunpack.c.l.b16 %v6066
    %v8019 = vunpack.c.l.b16 %v6067
    %v8020 = vunpack.c.l.b16 %v6068
    %v8021 = vunpack.c.l.b16 %v6069
    %v8022 = vunpack.c.l.b16 %v6070
    %v8023 = vunpack.c.l.b16 %v6071
    %v8024 = vunpack.c.l.b16 %v6072
    %v8025 = vunpack.c.l.b16 %v6073
    %v8026 = vunpack.c.l.b16 %v6074
    %v8027 = vunpack.c.l.b16 %v6075
    %v8028 = vunpack.c.l.b16 %v6076
    %v8029 = vunpack.c.l.b16 %v6077
    %v8030 = vunpack.c.l.b16 %v6078
    %v8031 = vunpack.c.l.b16 %v6079
    %v8032 = vunpack.c.l.b16 %v6080
    %v8033 = vunpack.c.l.b16 %v6081
    %v8034 = vunpack.c.l.b16 %v6082
    %v8035 = vunpack.c.l.b16 %v6083
    %v8036 = vunpack.c.l.b16 %v6084
    %v8037 = vunpack.c.l.b16 %v6085
    %v8038 = vunpack.c.l.b16 %v6086
    %v8039 = vunpack.c.l.b16 %v6087
    %v8040 = vunpack.c.l.b16 %v6088
    %v8041 = vunpack.c.l.b16 %v6089
    %v8042 = vunpack.c.l.b16 %v6090
    %v8043 = vunpack.c.l.b16 %v6091
    %v8044 = vunpack.c.l.b16 %v6092
    %v8045 = vunpack.c.l.b16 %v6093
    %v8046 = vunpack.c.l.b16 %v6094
    %v8047 = vunpack.c.l.b16 %v6095
    %v8048 = vunpack.c.l.b16 %v6096
    %v8049 = vunpack.c.l.b16 %v6097
    %v8050 = vunpack.c.l.b16 %v6098
    %v8051 = vunpack.c.l.b16 %v6099
    %v8052 = vunpack.c.l.b16 %v6100
    %v8053 = vunpack.c.l.b16 %v6101
    %v8054 = vunpack.c.l.b16 %v6102
    %v8055 = vunpack.c.l.b16 %v6103
    %v8056 = vunpack.c.l.b16 %v6104
    %v8057 = vunpack.c.l.b16 %v6105
    %v8058 = vunpack.c.l.b16 %v6106
    %v8059 = vunpack.c.l.b16 %v6107
    %v8060 = vunpack.c.l.b16 %v6108
    %v8061 = vunpack.c.l.b16 %v6109
    %v8062 = vunpack.c.l.b16 %v6110
    %v8063 = vunpack.c.l.b16 %v6111
    %v8064 = vunpack.c.l.b16 %v6112
    %v8065 = vunpack.c.l.b16 %v6113
    %v8066 = vunpack.c.l.b16 %v6114
    %v8067 = vunpack.c.l.b16 %v6115
    %v8068 = vunpack.c.l.b16 %v6116
    %v8069 = vunpack.c.l.b16 %v6117
    %v8070 = vunpack.c.l.b16 %v6118
    %v8071 = vunpack.c.l.b16 %v6119
    %v8072 = vpack.c.b16 %v7817, %v7816
    %v8073 = vpack.c.b16 %v7819, %v7818
    %v8074 = vpack.c.b16 %v7821, %v7820
    %v8075 = vpack.c.b16 %v7823, %v7822
    %v8076 = vpack.c.b16 %v7825, %v7824
    %v8077 = vpack.c.b16 %v7827, %v7826
    %v8078 = vpack.c.b16 %v7829, %v7828
    %v8079 = vpack.c.b16 %v7831, %v7830
    %v8080 = vpack.c.b16 %v7833, %v7832
    %v8081 = vpack.c.b16 %v7835, %v7834
    %v8082 = vpack.c.b16 %v7837, %v7836
    %v8083 = vpack.c.b16 %v7839, %v7838
    %v8084 = vpack.c.b16 %v7841, %v7840
    %v8085 = vpack.c.b16 %v7843, %v7842
    %v8086 = vpack.c.b16 %v7845, %v7844
    %v8087 = vpack.c.b16 %v7847, %v7846
    %v8088 = vpack.c.b16 %v7849, %v7848
    %v8089 = vpack.c.b16 %v7851, %v7850
    %v8090 = vpack.c.b16 %v7853, %v7852
    %v8091 = vpack.c.b16 %v7855, %v7854
    %v8092 = vpack.c.b16 %v7857, %v7856
    %v8093 = vpack.c.b16 %v7859, %v7858
    %v8094 = vpack.c.b16 %v7861, %v7860
    %v8095 = vpack.c.b16 %v7863, %v7862
    %v8096 = vpack.c.b16 %v7865, %v7864
    %v8097 = vpack.c.b16 %v7867, %v7866
    %v8098 = vpack.c.b16 %v7869, %v7868
    %v8099 = vpack.c.b16 %v7871, %v7870
    %v8100 = vpack.c.b16 %v7873, %v7872
    %v8101 = vpack.c.b16 %v7875, %v7874
    %v8102 = vpack.c.b16 %v7877, %v7876
    %v8103 = vpack.c.b16 %v7879, %v7878
    %v8104 = vpack.c.b16 %v7881, %v7880
    %v8105 = vpack.c.b16 %v7883, %v7882
    %v8106 = vpack.c.b16 %v7885, %v7884
    %v8107 = vpack.c.b16 %v7887, %v7886
    %v8108 = vpack.c.b16 %v7889, %v7888
    %v8109 = vpack.c.b16 %v7891, %v7890
    %v8110 = vpack.c.b16 %v7893, %v7892
    %v8111 = vpack.c.b16 %v7895, %v7894
    %v8112 = vpack.c.b16 %v7897, %v7896
    %v8113 = vpack.c.b16 %v7899, %v7898
    %v8114 = vpack.c.b16 %v7901, %v7900
    %v8115 = vpack.c.b16 %v7903, %v7902
    %v8116 = vpack.c.b16 %v7905, %v7904
    %v8117 = vpack.c.b16 %v7907, %v7906
    %v8118 = vpack.c.b16 %v7909, %v7908
    %v8119 = vpack.c.b16 %v7911, %v7910
    %v8120 = vpack.c.b16 %v7913, %v7912
    %v8121 = vpack.c.b16 %v7915, %v7914
    %v8122 = vpack.c.b16 %v7917, %v7916
    %v8123 = vpack.c.b16 %v7919, %v7918
    %v8124 = vpack.c.b16 %v7921, %v7920
    %v8125 = vpack.c.b16 %v7923, %v7922
    %v8126 = vpack.c.b16 %v7925, %v7924
    %v8127 = vpack.c.b16 %v7927, %v7926
    %v8128 = vpack.c.b16 %v7929, %v7928
    %v8129 = vpack.c.b16 %v7931, %v7930
    %v8130 = vpack.c.b16 %v7933, %v7932
    %v8131 = vpack.c.b16 %v7935, %v7934
    %v8132 = vpack.c.b16 %v7937, %v7936
    %v8133 = vpack.c.b16 %v7939, %v7938
    %v8134 = vpack.c.b16 %v7941, %v7940
    %v8135 = vpack.c.b16 %v7943, %v7942
    %v8136 = vpack.c.b16 %v7945, %v7944
    %v8137 = vpack.c.b16 %v7947, %v7946
    %v8138 = vpack.c.b16 %v7949, %v7948
    %v8139 = vpack.c.b16 %v7951, %v7950
    %v8140 = vpack.c.b16 %v7953, %v7952
    %v8141 = vpack.c.b16 %v7955, %v7954
    %v8142 = vpack.c.b16 %v7957, %v7956
    %v8143 = vpack.c.b16 %v7959, %v7958
    %v8144 = vpack.c.b16 %v7961, %v7960
    %v8145 = vpack.c.b16 %v7963, %v7962
    %v8146 = vpack.c.b16 %v7965, %v7964
    %v8147 = vpack.c.b16 %v7967, %v7966
    %v8148 = vpack.c.b16 %v7969, %v7968
    %v8149 = vpack.c.b16 %v7971, %v7970
    %v8150 = vpack.c.b16 %v7973, %v7972
    %v8151 = vpack.c.b16 %v7975, %v7974
    %v8152 = vpack.c.b16 %v7977, %v7976
    %v8153 = vpack.c.b16 %v7979, %v7978
    %v8154 = vpack.c.b16 %v7981, %v7980
    %v8155 = vpack.c.b16 %v7983, %v7982
    %v8156 = vpack.c.b16 %v7985, %v7984
    %v8157 = vpack.c.b16 %v7987, %v7986
    %v8158 = vpack.c.b16 %v7989, %v7988
    %v8159 = vpack.c.b16 %v7991, %v7990
    %v8160 = vpack.c.b16 %v7993, %v7992
    %v8161 = vpack.c.b16 %v7995, %v7994
    %v8162 = vpack.c.b16 %v7997, %v7996
    %v8163 = vpack.c.b16 %v7999, %v7998
    %v8164 = vpack.c.b16 %v8001, %v8000
    %v8165 = vpack.c.b16 %v8003, %v8002
    %v8166 = vpack.c.b16 %v8005, %v8004
    %v8167 = vpack.c.b16 %v8007, %v8006
    %v8168 = vpack.c.b16 %v8009, %v8008
    %v8169 = vpack.c.b16 %v8011, %v8010
    %v8170 = vpack.c.b16 %v8013, %v8012
    %v8171 = vpack.c.b16 %v8015, %v8014
    %v8172 = vpack.c.b16 %v8017, %v8016
    %v8173 = vpack.c.b16 %v8019, %v8018
    %v8174 = vpack.c.b16 %v8021, %v8020
    %v8175 = vpack.c.b16 %v8023, %v8022
    %v8176 = vpack.c.b16 %v8025, %v8024
    %v8177 = vpack.c.b16 %v8027, %v8026
    %v8178 = vpack.c.b16 %v8029, %v8028
    %v8179 = vpack.c.b16 %v8031, %v8030
    %v8180 = vpack.c.b16 %v8033, %v8032
    %v8181 = vpack.c.b16 %v8035, %v8034
    %v8182 = vpack.c.b16 %v8037, %v8036
    %v8183 = vpack.c.b16 %v8039, %v8038
    %v8184 = vpack.c.b16 %v8041, %v8040
    %v8185 = vpack.c.b16 %v8043, %v8042
    %v8186 = vpack.c.b16 %v8045, %v8044
    %v8187 = vpack.c.b16 %v8047, %v8046
    %v8188 = vpack.c.b16 %v8049, %v8048
    %v8189 = vpack.c.b16 %v8051, %v8050
    %v8190 = vpack.c.b16 %v8053, %v8052
    %v8191 = vpack.c.b16 %v8055, %v8054
    %v8192 = vpack.c.b16 %v8057, %v8056
    %v8193 = vpack.c.b16 %v8059, %v8058
    %v8194 = vpack.c.b16 %v8061, %v8060
    %v8195 = vpack.c.b16 %v8063, %v8062
    %v8196 = vpack.c.b16 %v8065, %v8064
    %v8197 = vpack.c.b16 %v8067, %v8066
    %v8198 = vpack.c.b16 %v8069, %v8068
    %v8199 = vpack.c.b16 %v8071, %v8070
    %8328 = vmatprep.subr.bf16.mxu0 0
    %8329 = vmatpush1.bf16.msra.mxu0 %v8079
    %8330 = vmatprep.subr.bf16.mxu0 0
    %8331 = vmatpush1.bf16.msra.mxu0 %v8078
    %8332 = vmatprep.subr.bf16.mxu0 0
    %8333 = vmatpush1.bf16.msra.mxu0 %v8077
    %8334 = vmatprep.subr.bf16.mxu0 0
    %8335 = vmatpush1.bf16.msra.mxu0 %v8076
    %8336 = vmatprep.subr.bf16.mxu0 0
    %8337 = vmatpush1.bf16.msra.mxu0 %v8075
    %8338 = vmatprep.subr.bf16.mxu0 0
    %8339 = vmatpush1.bf16.msra.mxu0 %v8074
    %8340 = vmatprep.subr.bf16.mxu0 0
    %8341 = vmatpush1.bf16.msra.mxu0 %v8073
    %8342 = vmatprep.subr.bf16.mxu0 0
    %8343 = vmatpush1.bf16.msra.mxu0 %v8072
    %8344 = vmatprep.subr.bf16.mxu0 0
    %8345 = vmatpush2.bf16.msra.mxu0 %v8087
    %8346 = vmatprep.subr.bf16.mxu0 0
    %8347 = vmatpush2.bf16.msra.mxu0 %v8086
    %8348 = vmatprep.subr.bf16.mxu0 0
    %8349 = vmatpush2.bf16.msra.mxu0 %v8085
    %8350 = vmatprep.subr.bf16.mxu0 0
    %8351 = vmatpush2.bf16.msra.mxu0 %v8084
    %8352 = vmatprep.subr.bf16.mxu0 0
    %8353 = vmatpush2.bf16.msra.mxu0 %v8083
    %8354 = vmatprep.subr.bf16.mxu0 0
    %8355 = vmatpush2.bf16.msra.mxu0 %v8082
    %8356 = vmatprep.subr.bf16.mxu0 0
    %8357 = vmatpush2.bf16.msra.mxu0 %v8081
    %8358 = vmatprep.subr.bf16.mxu0 0
    %8359 = vmatpush2.bf16.msra.mxu0 %v8080
    %8360 = vmatprep.mubr.bf16.mxu0 %v7541
    %8361 = vmatmul.mubr.bf16.gmra.mxu0 %v7540
    %v8362 = vpop.f32.mrf.mxu0
    %v8363 = vadd.f32 %v7559, %v8362
    %v8364 = vpop.f32.mrf.mxu0
    %v8365 = vpop.f32.mrf.mxu0
    %v8366 = vadd.f32 %v7559, %v8365
    %v8367 = vpop.f32.mrf.mxu0
    %8368 = vdwg.mxu0
    %8369 = vmatprep.subr.bf16.mxu0 0
    %8370 = vmatpush1.bf16.msra.mxu0 %v8095
    %8371 = vmatprep.subr.bf16.mxu0 0
    %8372 = vmatpush1.bf16.msra.mxu0 %v8094
    %8373 = vmatprep.subr.bf16.mxu0 0
    %8374 = vmatpush1.bf16.msra.mxu0 %v8093
    %8375 = vmatprep.subr.bf16.mxu0 0
    %8376 = vmatpush1.bf16.msra.mxu0 %v8092
    %8377 = vmatprep.subr.bf16.mxu0 0
    %8378 = vmatpush1.bf16.msra.mxu0 %v8091
    %8379 = vmatprep.subr.bf16.mxu0 0
    %8380 = vmatpush1.bf16.msra.mxu0 %v8090
    %8381 = vmatprep.subr.bf16.mxu0 0
    %8382 = vmatpush1.bf16.msra.mxu0 %v8089
    %8383 = vmatprep.subr.bf16.mxu0 0
    %8384 = vmatpush1.bf16.msra.mxu0 %v8088
    %8385 = vmatprep.subr.bf16.mxu0 0
    %8386 = vmatpush2.bf16.msra.mxu0 %v8103
    %8387 = vmatprep.subr.bf16.mxu0 0
    %8388 = vmatpush2.bf16.msra.mxu0 %v8102
    %8389 = vmatprep.subr.bf16.mxu0 0
    %8390 = vmatpush2.bf16.msra.mxu0 %v8101
    %8391 = vmatprep.subr.bf16.mxu0 0
    %8392 = vmatpush2.bf16.msra.mxu0 %v8100
    %8393 = vmatprep.subr.bf16.mxu0 0
    %8394 = vmatpush2.bf16.msra.mxu0 %v8099
    %8395 = vmatprep.subr.bf16.mxu0 0
    %8396 = vmatpush2.bf16.msra.mxu0 %v8098
    %8397 = vmatprep.subr.bf16.mxu0 0
    %8398 = vmatpush2.bf16.msra.mxu0 %v8097
    %8399 = vmatprep.subr.bf16.mxu0 0
    %8400 = vmatpush2.bf16.msra.mxu0 %v8096
    %8401 = vmatprep.mubr.bf16.mxu0 %v7543
    %8402 = vmatmul.mubr.bf16.gmra.mxu0 %v7542
    %v8403 = vpop.f32.mrf.mxu0
    %v8404 = vadd.f32 %v8363, %v8403
    %v8405 = vpop.f32.mrf.mxu0
    %v8406 = vpop.f32.mrf.mxu0
    %v8407 = vadd.f32 %v8366, %v8406
    %v8408 = vpop.f32.mrf.mxu0
    %8409 = vdwg.mxu0
    %8410 = vmatprep.subr.bf16.mxu0 0
    %8411 = vmatpush1.bf16.msra.mxu0 %v8111
    %8412 = vmatprep.subr.bf16.mxu0 0
    %8413 = vmatpush1.bf16.msra.mxu0 %v8110
    %8414 = vmatprep.subr.bf16.mxu0 0
    %8415 = vmatpush1.bf16.msra.mxu0 %v8109
    %8416 = vmatprep.subr.bf16.mxu0 0
    %8417 = vmatpush1.bf16.msra.mxu0 %v8108
    %8418 = vmatprep.subr.bf16.mxu0 0
    %8419 = vmatpush1.bf16.msra.mxu0 %v8107
    %8420 = vmatprep.subr.bf16.mxu0 0
    %8421 = vmatpush1.bf16.msra.mxu0 %v8106
    %8422 = vmatprep.subr.bf16.mxu0 0
    %8423 = vmatpush1.bf16.msra.mxu0 %v8105
    %8424 = vmatprep.subr.bf16.mxu0 0
    %8425 = vmatpush1.bf16.msra.mxu0 %v8104
    %8426 = vmatprep.subr.bf16.mxu0 0
    %8427 = vmatpush2.bf16.msra.mxu0 %v8119
    %8428 = vmatprep.subr.bf16.mxu0 0
    %8429 = vmatpush2.bf16.msra.mxu0 %v8118
    %8430 = vmatprep.subr.bf16.mxu0 0
    %8431 = vmatpush2.bf16.msra.mxu0 %v8117
    %8432 = vmatprep.subr.bf16.mxu0 0
    %8433 = vmatpush2.bf16.msra.mxu0 %v8116
    %8434 = vmatprep.subr.bf16.mxu0 0
    %8435 = vmatpush2.bf16.msra.mxu0 %v8115
    %8436 = vmatprep.subr.bf16.mxu0 0
    %8437 = vmatpush2.bf16.msra.mxu0 %v8114
    %8438 = vmatprep.subr.bf16.mxu0 0
    %8439 = vmatpush2.bf16.msra.mxu0 %v8113
    %8440 = vmatprep.subr.bf16.mxu0 0
    %8441 = vmatpush2.bf16.msra.mxu0 %v8112
    %8442 = vmatprep.mubr.bf16.mxu0 %v7545
    %8443 = vmatmul.mubr.bf16.gmra.mxu0 %v7544
    %v8444 = vpop.f32.mrf.mxu0
    %v8445 = vadd.f32 %v8404, %v8444
    %v8446 = vpop.f32.mrf.mxu0
    %v8447 = vpop.f32.mrf.mxu0
    %v8448 = vadd.f32 %v8407, %v8447
    %v8449 = vpop.f32.mrf.mxu0
    %8450 = vdwg.mxu0
    %8451 = vmatprep.subr.bf16.mxu0 0
    %8452 = vmatpush1.bf16.msra.mxu0 %v8127
    %8453 = vmatprep.subr.bf16.mxu0 0
    %8454 = vmatpush1.bf16.msra.mxu0 %v8126
    %8455 = vmatprep.subr.bf16.mxu0 0
    %8456 = vmatpush1.bf16.msra.mxu0 %v8125
    %8457 = vmatprep.subr.bf16.mxu0 0
    %8458 = vmatpush1.bf16.msra.mxu0 %v8124
    %8459 = vmatprep.subr.bf16.mxu0 0
    %8460 = vmatpush1.bf16.msra.mxu0 %v8123
    %8461 = vmatprep.subr.bf16.mxu0 0
    %8462 = vmatpush1.bf16.msra.mxu0 %v8122
    %8463 = vmatprep.subr.bf16.mxu0 0
    %8464 = vmatpush1.bf16.msra.mxu0 %v8121
    %8465 = vmatprep.subr.bf16.mxu0 0
    %8466 = vmatpush1.bf16.msra.mxu0 %v8120
    %8467 = vmatprep.subr.bf16.mxu0 0
    %8468 = vmatpush2.bf16.msra.mxu0 %v8135
    %8469 = vmatprep.subr.bf16.mxu0 0
    %8470 = vmatpush2.bf16.msra.mxu0 %v8134
    %8471 = vmatprep.subr.bf16.mxu0 0
    %8472 = vmatpush2.bf16.msra.mxu0 %v8133
    %8473 = vmatprep.subr.bf16.mxu0 0
    %8474 = vmatpush2.bf16.msra.mxu0 %v8132
    %8475 = vmatprep.subr.bf16.mxu0 0
    %8476 = vmatpush2.bf16.msra.mxu0 %v8131
    %8477 = vmatprep.subr.bf16.mxu0 0
    %8478 = vmatpush2.bf16.msra.mxu0 %v8130
    %8479 = vmatprep.subr.bf16.mxu0 0
    %8480 = vmatpush2.bf16.msra.mxu0 %v8129
    %8481 = vmatprep.subr.bf16.mxu0 0
    %8482 = vmatpush2.bf16.msra.mxu0 %v8128
    %8483 = vmatprep.mubr.bf16.mxu0 %v7547
    %8484 = vmatmul.mubr.bf16.gmra.mxu0 %v7546
    %v8485 = vpop.f32.mrf.mxu0
    %v8486 = vadd.f32 %v8445, %v8485
    %v8487 = vpop.f32.mrf.mxu0
    %v8488 = vpop.f32.mrf.mxu0
    %v8489 = vadd.f32 %v8448, %v8488
    %v8490 = vpop.f32.mrf.mxu0
    %8491 = vdwg.mxu0
    %8492 = vmatprep.subr.bf16.mxu0 0
    %8493 = vmatpush1.bf16.msra.mxu0 %v8143
    %8494 = vmatprep.subr.bf16.mxu0 0
    %8495 = vmatpush1.bf16.msra.mxu0 %v8142
    %8496 = vmatprep.subr.bf16.mxu0 0
    %8497 = vmatpush1.bf16.msra.mxu0 %v8141
    %8498 = vmatprep.subr.bf16.mxu0 0
    %8499 = vmatpush1.bf16.msra.mxu0 %v8140
    %8500 = vmatprep.subr.bf16.mxu0 0
    %8501 = vmatpush1.bf16.msra.mxu0 %v8139
    %8502 = vmatprep.subr.bf16.mxu0 0
    %8503 = vmatpush1.bf16.msra.mxu0 %v8138
    %8504 = vmatprep.subr.bf16.mxu0 0
    %8505 = vmatpush1.bf16.msra.mxu0 %v8137
    %8506 = vmatprep.subr.bf16.mxu0 0
    %8507 = vmatpush1.bf16.msra.mxu0 %v8136
    %8508 = vmatprep.subr.bf16.mxu0 0
    %8509 = vmatpush2.bf16.msra.mxu0 %v8151
    %8510 = vmatprep.subr.bf16.mxu0 0
    %8511 = vmatpush2.bf16.msra.mxu0 %v8150
    %8512 = vmatprep.subr.bf16.mxu0 0
    %8513 = vmatpush2.bf16.msra.mxu0 %v8149
    %8514 = vmatprep.subr.bf16.mxu0 0
    %8515 = vmatpush2.bf16.msra.mxu0 %v8148
    %8516 = vmatprep.subr.bf16.mxu0 0
    %8517 = vmatpush2.bf16.msra.mxu0 %v8147
    %8518 = vmatprep.subr.bf16.mxu0 0
    %8519 = vmatpush2.bf16.msra.mxu0 %v8146
    %8520 = vmatprep.subr.bf16.mxu0 0
    %8521 = vmatpush2.bf16.msra.mxu0 %v8145
    %8522 = vmatprep.subr.bf16.mxu0 0
    %8523 = vmatpush2.bf16.msra.mxu0 %v8144
    %8524 = vmatprep.mubr.bf16.mxu0 %v7549
    %8525 = vmatmul.mubr.bf16.gmra.mxu0 %v7548
    %v8526 = vpop.f32.mrf.mxu0
    %v8527 = vadd.f32 %v8486, %v8526
    %v8528 = vpop.f32.mrf.mxu0
    %v8529 = vpop.f32.mrf.mxu0
    %v8530 = vadd.f32 %v8489, %v8529
    %v8531 = vpop.f32.mrf.mxu0
    %8532 = vdwg.mxu0
    %8533 = vmatprep.subr.bf16.mxu0 0
    %8534 = vmatpush1.bf16.msra.mxu0 %v8159
    %8535 = vmatprep.subr.bf16.mxu0 0
    %8536 = vmatpush1.bf16.msra.mxu0 %v8158
    %8537 = vmatprep.subr.bf16.mxu0 0
    %8538 = vmatpush1.bf16.msra.mxu0 %v8157
    %8539 = vmatprep.subr.bf16.mxu0 0
    %8540 = vmatpush1.bf16.msra.mxu0 %v8156
    %8541 = vmatprep.subr.bf16.mxu0 0
    %8542 = vmatpush1.bf16.msra.mxu0 %v8155
    %8543 = vmatprep.subr.bf16.mxu0 0
    %8544 = vmatpush1.bf16.msra.mxu0 %v8154
    %8545 = vmatprep.subr.bf16.mxu0 0
    %8546 = vmatpush1.bf16.msra.mxu0 %v8153
    %8547 = vmatprep.subr.bf16.mxu0 0
    %8548 = vmatpush1.bf16.msra.mxu0 %v8152
    %8549 = vmatprep.subr.bf16.mxu0 0
    %8550 = vmatpush2.bf16.msra.mxu0 %v8167
    %8551 = vmatprep.subr.bf16.mxu0 0
    %8552 = vmatpush2.bf16.msra.mxu0 %v8166
    %8553 = vmatprep.subr.bf16.mxu0 0
    %8554 = vmatpush2.bf16.msra.mxu0 %v8165
    %8555 = vmatprep.subr.bf16.mxu0 0
    %8556 = vmatpush2.bf16.msra.mxu0 %v8164
    %8557 = vmatprep.subr.bf16.mxu0 0
    %8558 = vmatpush2.bf16.msra.mxu0 %v8163
    %8559 = vmatprep.subr.bf16.mxu0 0
    %8560 = vmatpush2.bf16.msra.mxu0 %v8162
    %8561 = vmatprep.subr.bf16.mxu0 0
    %8562 = vmatpush2.bf16.msra.mxu0 %v8161
    %8563 = vmatprep.subr.bf16.mxu0 0
    %8564 = vmatpush2.bf16.msra.mxu0 %v8160
    %8565 = vmatprep.mubr.bf16.mxu0 %v7551
    %8566 = vmatmul.mubr.bf16.gmra.mxu0 %v7550
    %v8567 = vpop.f32.mrf.mxu0
    %v8568 = vadd.f32 %v8527, %v8567
    %v8569 = vpop.f32.mrf.mxu0
    %v8570 = vpop.f32.mrf.mxu0
    %v8571 = vadd.f32 %v8530, %v8570
    %v8572 = vpop.f32.mrf.mxu0
    %8573 = vdwg.mxu0
    %8574 = vmatprep.subr.bf16.mxu0 0
    %8575 = vmatpush1.bf16.msra.mxu0 %v8175
    %8576 = vmatprep.subr.bf16.mxu0 0
    %8577 = vmatpush1.bf16.msra.mxu0 %v8174
    %8578 = vmatprep.subr.bf16.mxu0 0
    %8579 = vmatpush1.bf16.msra.mxu0 %v8173
    %8580 = vmatprep.subr.bf16.mxu0 0
    %8581 = vmatpush1.bf16.msra.mxu0 %v8172
    %8582 = vmatprep.subr.bf16.mxu0 0
    %8583 = vmatpush1.bf16.msra.mxu0 %v8171
    %8584 = vmatprep.subr.bf16.mxu0 0
    %8585 = vmatpush1.bf16.msra.mxu0 %v8170
    %8586 = vmatprep.subr.bf16.mxu0 0
    %8587 = vmatpush1.bf16.msra.mxu0 %v8169
    %8588 = vmatprep.subr.bf16.mxu0 0
    %8589 = vmatpush1.bf16.msra.mxu0 %v8168
    %8590 = vmatprep.subr.bf16.mxu0 0
    %8591 = vmatpush2.bf16.msra.mxu0 %v8183
    %8592 = vmatprep.subr.bf16.mxu0 0
    %8593 = vmatpush2.bf16.msra.mxu0 %v8182
    %8594 = vmatprep.subr.bf16.mxu0 0
    %8595 = vmatpush2.bf16.msra.mxu0 %v8181
    %8596 = vmatprep.subr.bf16.mxu0 0
    %8597 = vmatpush2.bf16.msra.mxu0 %v8180
    %8598 = vmatprep.subr.bf16.mxu0 0
    %8599 = vmatpush2.bf16.msra.mxu0 %v8179
    %8600 = vmatprep.subr.bf16.mxu0 0
    %8601 = vmatpush2.bf16.msra.mxu0 %v8178
    %8602 = vmatprep.subr.bf16.mxu0 0
    %8603 = vmatpush2.bf16.msra.mxu0 %v8177
    %8604 = vmatprep.subr.bf16.mxu0 0
    %8605 = vmatpush2.bf16.msra.mxu0 %v8176
    %8606 = vmatprep.mubr.bf16.mxu0 %v7553
    %8607 = vmatmul.mubr.bf16.gmra.mxu0 %v7552
    %v8608 = vpop.f32.mrf.mxu0
    %v8609 = vadd.f32 %v8568, %v8608
    %v8610 = vpop.f32.mrf.mxu0
    %v8611 = vpop.f32.mrf.mxu0
    %v8612 = vadd.f32 %v8571, %v8611
    %v8613 = vpop.f32.mrf.mxu0
    %8614 = vdwg.mxu0
    %8615 = vmatprep.subr.bf16.mxu0 0
    %8616 = vmatpush1.bf16.msra.mxu0 %v8191
    %8617 = vmatprep.subr.bf16.mxu0 0
    %8618 = vmatpush1.bf16.msra.mxu0 %v8190
    %8619 = vmatprep.subr.bf16.mxu0 0
    %8620 = vmatpush1.bf16.msra.mxu0 %v8189
    %8621 = vmatprep.subr.bf16.mxu0 0
    %8622 = vmatpush1.bf16.msra.mxu0 %v8188
    %8623 = vmatprep.subr.bf16.mxu0 0
    %8624 = vmatpush1.bf16.msra.mxu0 %v8187
    %8625 = vmatprep.subr.bf16.mxu0 0
    %8626 = vmatpush1.bf16.msra.mxu0 %v8186
    %8627 = vmatprep.subr.bf16.mxu0 0
    %8628 = vmatpush1.bf16.msra.mxu0 %v8185
    %8629 = vmatprep.subr.bf16.mxu0 0
    %8630 = vmatpush1.bf16.msra.mxu0 %v8184
    %8631 = vmatprep.subr.bf16.mxu0 0
    %8632 = vmatpush2.bf16.msra.mxu0 %v8199
    %8633 = vmatprep.subr.bf16.mxu0 0
    %8634 = vmatpush2.bf16.msra.mxu0 %v8198
    %8635 = vmatprep.subr.bf16.mxu0 0
    %8636 = vmatpush2.bf16.msra.mxu0 %v8197
    %8637 = vmatprep.subr.bf16.mxu0 0
    %8638 = vmatpush2.bf16.msra.mxu0 %v8196
    %8639 = vmatprep.subr.bf16.mxu0 0
    %8640 = vmatpush2.bf16.msra.mxu0 %v8195
    %8641 = vmatprep.subr.bf16.mxu0 0
    %8642 = vmatpush2.bf16.msra.mxu0 %v8194
    %8643 = vmatprep.subr.bf16.mxu0 0
    %8644 = vmatpush2.bf16.msra.mxu0 %v8193
    %8645 = vmatprep.subr.bf16.mxu0 0
    %8646 = vmatpush2.bf16.msra.mxu0 %v8192
    %8647 = vmatprep.mubr.bf16.mxu0 %v7555
    %8648 = vmatmul.mubr.bf16.gmra.mxu0 %v7554
    %v8649 = vpop.f32.mrf.mxu0
    %v8650 = vadd.f32 %v8609, %v8649
    %v8651 = vpop.f32.mrf.mxu0
    %v8652 = vpop.f32.mrf.mxu0
    %v8653 = vadd.f32 %v8612, %v8652
    %v8654 = vpop.f32.mrf.mxu0
    %8655 = vdwg.mxu0
    %v8656 = vadd.f32 %v6916, %v8650
    %v8657 = vadd.f32 %v6917, %v8653
    %v8658 = vsel %vm376, %v8656, 0.0
    %8659 = vadd.xlane.f32.xlu0 %v8658
    %v8660 = vpop.xlane.xlu0 %8659
    %v8661 = vsel %vm376, %v8657, 0.0
    %8662 = vadd.xlane.f32.xlu0 %v8661
    %v8663 = vpop.xlane.xlu0 %8662
    %v8664 = vmul.f32 %v8660, %v1123
    %v8665 = vmul.f32 %v8663, %v1123
    %v8666 = vsub.f32 %v8656, %v8664
    %v8667 = vsub.f32 %v8657, %v8665
    %v8668 = vmul.f32 %v8666, %v8666
    %v8669 = vmul.f32 %v8667, %v8667
    %v8670 = vsel %vm376, %v8668, 0.0
    %8671 = vadd.xlane.f32.xlu0 %v8670
    %v8672 = vpop.xlane.xlu0 %8671
    %v8673 = vsel %vm376, %v8669, 0.0
    %8674 = vadd.xlane.f32.xlu0 %v8673
    %v8675 = vpop.xlane.xlu0 %8674
    %v8676 = vmul.f32 %v8672, %v1123
    %v8677 = vmul.f32 %v8675, %v1123
    %v8678 = vadd.f32 %v8676, 1e-05
    %v8679 = vadd.f32 %v8677, 1e-05
    %v8680 = vrsqrt.pop %v8678
    %v8681 = vrsqrt.pop %v8679
    %v8682 = vmul.f32 %v8666, %v8680
    %v8683 = vmul.f32 %v8667, %v8681
    %v8684 = vlaneseq
    %v8685 = vshrl.u32 %v8684, 7
    %v8686 = vsub.s32 4, %v8685
    %v8687 = vrot.slane %v6121, %v8686
    %v8688 = vmul.f32 %v8682, %v8687
    %v8689 = vmul.f32 %v8683, %v8687
    %v8690 = vlaneseq
    %v8691 = vshrl.u32 %v8690, 7
    %v8692 = vsub.s32 5, %v8691
    %v8693 = vrot.slane %v6121, %v8692
    %v8694 = vadd.f32 %v8688, %v8693
    %v8695 = vadd.f32 %v8689, %v8693
    %s8696 = scalar_lea.vmem %s6, 48
    %v8697 = vld [vmem:[%s8696] sm:$0xf]
    %v8698 = vld [vmem:[%s8696 + $0x4] sm:$0xf]
    %v8699 = vld [vmem:[%s8696 + $0x8] sm:$0xf]
    %v8700 = vld [vmem:[%s8696 + $0xc] sm:$0xf]
    %s8701 = scalar_lea.vmem %s7, 3
    %v8702 = vld [vmem:[%s8701] sm:$0x1]
    %s8703 = scalar_lea.vmem %s8, 48
    %v8704 = vld [vmem:[%s8703] sm:$0xf]
    %v8705 = vld [vmem:[%s8703 + $0x4] sm:$0xf]
    %v8706 = vld [vmem:[%s8703 + $0x8] sm:$0xf]
    %v8707 = vld [vmem:[%s8703 + $0xc] sm:$0xf]
    %s8708 = scalar_lea.vmem %s10, 768
    %v8709 = vld [vmem:[%s8708] sm:$0xff]
    %v8710 = vld [vmem:[%s8708 + $0x8] sm:$0xff]
    %v8711 = vld [vmem:[%s8708 + $0x10] sm:$0xff]
    %v8712 = vld [vmem:[%s8708 + $0x18] sm:$0xff]
    %v8713 = vld [vmem:[%s8708 + $0x20] sm:$0xff]
    %v8714 = vld [vmem:[%s8708 + $0x28] sm:$0xff]
    %v8715 = vld [vmem:[%s8708 + $0x30] sm:$0xff]
    %v8716 = vld [vmem:[%s8708 + $0x38] sm:$0xff]
    %v8717 = vld [vmem:[%s8708 + $0x40] sm:$0xff]
    %v8718 = vld [vmem:[%s8708 + $0x48] sm:$0xff]
    %v8719 = vld [vmem:[%s8708 + $0x50] sm:$0xff]
    %v8720 = vld [vmem:[%s8708 + $0x58] sm:$0xff]
    %v8721 = vld [vmem:[%s8708 + $0x60] sm:$0xff]
    %v8722 = vld [vmem:[%s8708 + $0x68] sm:$0xff]
    %v8723 = vld [vmem:[%s8708 + $0x70] sm:$0xff]
    %v8724 = vld [vmem:[%s8708 + $0x78] sm:$0xff]
    %v8725 = vld [vmem:[%s8708 + $0x80] sm:$0xff]
    %v8726 = vld [vmem:[%s8708 + $0x88] sm:$0xff]
    %v8727 = vld [vmem:[%s8708 + $0x90] sm:$0xff]
    %v8728 = vld [vmem:[%s8708 + $0x98] sm:$0xff]
    %v8729 = vld [vmem:[%s8708 + $0xa0] sm:$0xff]
    %v8730 = vld [vmem:[%s8708 + $0xa8] sm:$0xff]
    %v8731 = vld [vmem:[%s8708 + $0xb0] sm:$0xff]
    %v8732 = vld [vmem:[%s8708 + $0xb8] sm:$0xff]
    %v8733 = vld [vmem:[%s8708 + $0xc0] sm:$0xff]
    %v8734 = vld [vmem:[%s8708 + $0xc8] sm:$0xff]
    %v8735 = vld [vmem:[%s8708 + $0xd0] sm:$0xff]
    %v8736 = vld [vmem:[%s8708 + $0xd8] sm:$0xff]
    %v8737 = vld [vmem:[%s8708 + $0xe0] sm:$0xff]
    %v8738 = vld [vmem:[%s8708 + $0xe8] sm:$0xff]
    %v8739 = vld [vmem:[%s8708 + $0xf0] sm:$0xff]
    %v8740 = vld [vmem:[%s8708 + $0xf8] sm:$0xff]
    %s8741 = scalar_lea.vmem %s11, 48
    %v8742 = vld [vmem:[%s8741] sm:$0xff]
    %v8743 = vld [vmem:[%s8741 + $0x8] sm:$0xff]
    %s8744 = scalar_lea.vmem %s12, 3072
    %v8745 = vld [vmem:[%s8744] sm:$0xf]
    %v8746 = vld [vmem:[%s8744 + $0x4] sm:$0xf]
    %v8747 = vld [vmem:[%s8744 + $0x8] sm:$0xf]
    %v8748 = vld [vmem:[%s8744 + $0xc] sm:$0xf]
    %v8749 = vld [vmem:[%s8744 + $0x10] sm:$0xf]
    %v8750 = vld [vmem:[%s8744 + $0x14] sm:$0xf]
    %v8751 = vld [vmem:[%s8744 + $0x18] sm:$0xf]
    %v8752 = vld [vmem:[%s8744 + $0x1c] sm:$0xf]
    %v8753 = vld [vmem:[%s8744 + $0x20] sm:$0xf]
    %v8754 = vld [vmem:[%s8744 + $0x24] sm:$0xf]
    %v8755 = vld [vmem:[%s8744 + $0x28] sm:$0xf]
    %v8756 = vld [vmem:[%s8744 + $0x2c] sm:$0xf]
    %v8757 = vld [vmem:[%s8744 + $0x30] sm:$0xf]
    %v8758 = vld [vmem:[%s8744 + $0x34] sm:$0xf]
    %v8759 = vld [vmem:[%s8744 + $0x38] sm:$0xf]
    %v8760 = vld [vmem:[%s8744 + $0x3c] sm:$0xf]
    %v8761 = vld [vmem:[%s8744 + $0x40] sm:$0xf]
    %v8762 = vld [vmem:[%s8744 + $0x44] sm:$0xf]
    %v8763 = vld [vmem:[%s8744 + $0x48] sm:$0xf]
    %v8764 = vld [vmem:[%s8744 + $0x4c] sm:$0xf]
    %v8765 = vld [vmem:[%s8744 + $0x50] sm:$0xf]
    %v8766 = vld [vmem:[%s8744 + $0x54] sm:$0xf]
    %v8767 = vld [vmem:[%s8744 + $0x58] sm:$0xf]
    %v8768 = vld [vmem:[%s8744 + $0x5c] sm:$0xf]
    %v8769 = vld [vmem:[%s8744 + $0x60] sm:$0xf]
    %v8770 = vld [vmem:[%s8744 + $0x64] sm:$0xf]
    %v8771 = vld [vmem:[%s8744 + $0x68] sm:$0xf]
    %v8772 = vld [vmem:[%s8744 + $0x6c] sm:$0xf]
    %v8773 = vld [vmem:[%s8744 + $0x70] sm:$0xf]
    %v8774 = vld [vmem:[%s8744 + $0x74] sm:$0xf]
    %v8775 = vld [vmem:[%s8744 + $0x78] sm:$0xf]
    %v8776 = vld [vmem:[%s8744 + $0x7c] sm:$0xf]
    %v8777 = vld [vmem:[%s8744 + $0x80] sm:$0xf]
    %v8778 = vld [vmem:[%s8744 + $0x84] sm:$0xf]
    %v8779 = vld [vmem:[%s8744 + $0x88] sm:$0xf]
    %v8780 = vld [vmem:[%s8744 + $0x8c] sm:$0xf]
    %v8781 = vld [vmem:[%s8744 + $0x90] sm:$0xf]
    %v8782 = vld [vmem:[%s8744 + $0x94] sm:$0xf]
    %v8783 = vld [vmem:[%s8744 + $0x98] sm:$0xf]
    %v8784 = vld [vmem:[%s8744 + $0x9c] sm:$0xf]
    %v8785 = vld [vmem:[%s8744 + $0xa0] sm:$0xf]
    %v8786 = vld [vmem:[%s8744 + $0xa4] sm:$0xf]
    %v8787 = vld [vmem:[%s8744 + $0xa8] sm:$0xf]
    %v8788 = vld [vmem:[%s8744 + $0xac] sm:$0xf]
    %v8789 = vld [vmem:[%s8744 + $0xb0] sm:$0xf]
    %v8790 = vld [vmem:[%s8744 + $0xb4] sm:$0xf]
    %v8791 = vld [vmem:[%s8744 + $0xb8] sm:$0xf]
    %v8792 = vld [vmem:[%s8744 + $0xbc] sm:$0xf]
    %v8793 = vld [vmem:[%s8744 + $0xc0] sm:$0xf]
    %v8794 = vld [vmem:[%s8744 + $0xc4] sm:$0xf]
    %v8795 = vld [vmem:[%s8744 + $0xc8] sm:$0xf]
    %v8796 = vld [vmem:[%s8744 + $0xcc] sm:$0xf]
    %v8797 = vld [vmem:[%s8744 + $0xd0] sm:$0xf]
    %v8798 = vld [vmem:[%s8744 + $0xd4] sm:$0xf]
    %v8799 = vld [vmem:[%s8744 + $0xd8] sm:$0xf]
    %v8800 = vld [vmem:[%s8744 + $0xdc] sm:$0xf]
    %v8801 = vld [vmem:[%s8744 + $0xe0] sm:$0xf]
    %v8802 = vld [vmem:[%s8744 + $0xe4] sm:$0xf]
    %v8803 = vld [vmem:[%s8744 + $0xe8] sm:$0xf]
    %v8804 = vld [vmem:[%s8744 + $0xec] sm:$0xf]
    %v8805 = vld [vmem:[%s8744 + $0xf0] sm:$0xf]
    %v8806 = vld [vmem:[%s8744 + $0xf4] sm:$0xf]
    %v8807 = vld [vmem:[%s8744 + $0xf8] sm:$0xf]
    %v8808 = vld [vmem:[%s8744 + $0xfc] sm:$0xf]
    %v8809 = vld [vmem:[%s8744 + $0x100] sm:$0xf]
    %v8810 = vld [vmem:[%s8744 + $0x104] sm:$0xf]
    %v8811 = vld [vmem:[%s8744 + $0x108] sm:$0xf]
    %v8812 = vld [vmem:[%s8744 + $0x10c] sm:$0xf]
    %v8813 = vld [vmem:[%s8744 + $0x110] sm:$0xf]
    %v8814 = vld [vmem:[%s8744 + $0x114] sm:$0xf]
    %v8815 = vld [vmem:[%s8744 + $0x118] sm:$0xf]
    %v8816 = vld [vmem:[%s8744 + $0x11c] sm:$0xf]
    %v8817 = vld [vmem:[%s8744 + $0x120] sm:$0xf]
    %v8818 = vld [vmem:[%s8744 + $0x124] sm:$0xf]
    %v8819 = vld [vmem:[%s8744 + $0x128] sm:$0xf]
    %v8820 = vld [vmem:[%s8744 + $0x12c] sm:$0xf]
    %v8821 = vld [vmem:[%s8744 + $0x130] sm:$0xf]
    %v8822 = vld [vmem:[%s8744 + $0x134] sm:$0xf]
    %v8823 = vld [vmem:[%s8744 + $0x138] sm:$0xf]
    %v8824 = vld [vmem:[%s8744 + $0x13c] sm:$0xf]
    %v8825 = vld [vmem:[%s8744 + $0x140] sm:$0xf]
    %v8826 = vld [vmem:[%s8744 + $0x144] sm:$0xf]
    %v8827 = vld [vmem:[%s8744 + $0x148] sm:$0xf]
    %v8828 = vld [vmem:[%s8744 + $0x14c] sm:$0xf]
    %v8829 = vld [vmem:[%s8744 + $0x150] sm:$0xf]
    %v8830 = vld [vmem:[%s8744 + $0x154] sm:$0xf]
    %v8831 = vld [vmem:[%s8744 + $0x158] sm:$0xf]
    %v8832 = vld [vmem:[%s8744 + $0x15c] sm:$0xf]
    %v8833 = vld [vmem:[%s8744 + $0x160] sm:$0xf]
    %v8834 = vld [vmem:[%s8744 + $0x164] sm:$0xf]
    %v8835 = vld [vmem:[%s8744 + $0x168] sm:$0xf]
    %v8836 = vld [vmem:[%s8744 + $0x16c] sm:$0xf]
    %v8837 = vld [vmem:[%s8744 + $0x170] sm:$0xf]
    %v8838 = vld [vmem:[%s8744 + $0x174] sm:$0xf]
    %v8839 = vld [vmem:[%s8744 + $0x178] sm:$0xf]
    %v8840 = vld [vmem:[%s8744 + $0x17c] sm:$0xf]
    %v8841 = vld [vmem:[%s8744 + $0x180] sm:$0xf]
    %v8842 = vld [vmem:[%s8744 + $0x184] sm:$0xf]
    %v8843 = vld [vmem:[%s8744 + $0x188] sm:$0xf]
    %v8844 = vld [vmem:[%s8744 + $0x18c] sm:$0xf]
    %v8845 = vld [vmem:[%s8744 + $0x190] sm:$0xf]
    %v8846 = vld [vmem:[%s8744 + $0x194] sm:$0xf]
    %v8847 = vld [vmem:[%s8744 + $0x198] sm:$0xf]
    %v8848 = vld [vmem:[%s8744 + $0x19c] sm:$0xf]
    %v8849 = vld [vmem:[%s8744 + $0x1a0] sm:$0xf]
    %v8850 = vld [vmem:[%s8744 + $0x1a4] sm:$0xf]
    %v8851 = vld [vmem:[%s8744 + $0x1a8] sm:$0xf]
    %v8852 = vld [vmem:[%s8744 + $0x1ac] sm:$0xf]
    %v8853 = vld [vmem:[%s8744 + $0x1b0] sm:$0xf]
    %v8854 = vld [vmem:[%s8744 + $0x1b4] sm:$0xf]
    %v8855 = vld [vmem:[%s8744 + $0x1b8] sm:$0xf]
    %v8856 = vld [vmem:[%s8744 + $0x1bc] sm:$0xf]
    %v8857 = vld [vmem:[%s8744 + $0x1c0] sm:$0xf]
    %v8858 = vld [vmem:[%s8744 + $0x1c4] sm:$0xf]
    %v8859 = vld [vmem:[%s8744 + $0x1c8] sm:$0xf]
    %v8860 = vld [vmem:[%s8744 + $0x1cc] sm:$0xf]
    %v8861 = vld [vmem:[%s8744 + $0x1d0] sm:$0xf]
    %v8862 = vld [vmem:[%s8744 + $0x1d4] sm:$0xf]
    %v8863 = vld [vmem:[%s8744 + $0x1d8] sm:$0xf]
    %v8864 = vld [vmem:[%s8744 + $0x1dc] sm:$0xf]
    %v8865 = vld [vmem:[%s8744 + $0x1e0] sm:$0xf]
    %v8866 = vld [vmem:[%s8744 + $0x1e4] sm:$0xf]
    %v8867 = vld [vmem:[%s8744 + $0x1e8] sm:$0xf]
    %v8868 = vld [vmem:[%s8744 + $0x1ec] sm:$0xf]
    %v8869 = vld [vmem:[%s8744 + $0x1f0] sm:$0xf]
    %v8870 = vld [vmem:[%s8744 + $0x1f4] sm:$0xf]
    %v8871 = vld [vmem:[%s8744 + $0x1f8] sm:$0xf]
    %v8872 = vld [vmem:[%s8744 + $0x1fc] sm:$0xf]
    %v8873 = vld [vmem:[%s8744 + $0x200] sm:$0xf]
    %v8874 = vld [vmem:[%s8744 + $0x204] sm:$0xf]
    %v8875 = vld [vmem:[%s8744 + $0x208] sm:$0xf]
    %v8876 = vld [vmem:[%s8744 + $0x20c] sm:$0xf]
    %v8877 = vld [vmem:[%s8744 + $0x210] sm:$0xf]
    %v8878 = vld [vmem:[%s8744 + $0x214] sm:$0xf]
    %v8879 = vld [vmem:[%s8744 + $0x218] sm:$0xf]
    %v8880 = vld [vmem:[%s8744 + $0x21c] sm:$0xf]
    %v8881 = vld [vmem:[%s8744 + $0x220] sm:$0xf]
    %v8882 = vld [vmem:[%s8744 + $0x224] sm:$0xf]
    %v8883 = vld [vmem:[%s8744 + $0x228] sm:$0xf]
    %v8884 = vld [vmem:[%s8744 + $0x22c] sm:$0xf]
    %v8885 = vld [vmem:[%s8744 + $0x230] sm:$0xf]
    %v8886 = vld [vmem:[%s8744 + $0x234] sm:$0xf]
    %v8887 = vld [vmem:[%s8744 + $0x238] sm:$0xf]
    %v8888 = vld [vmem:[%s8744 + $0x23c] sm:$0xf]
    %v8889 = vld [vmem:[%s8744 + $0x240] sm:$0xf]
    %v8890 = vld [vmem:[%s8744 + $0x244] sm:$0xf]
    %v8891 = vld [vmem:[%s8744 + $0x248] sm:$0xf]
    %v8892 = vld [vmem:[%s8744 + $0x24c] sm:$0xf]
    %v8893 = vld [vmem:[%s8744 + $0x250] sm:$0xf]
    %v8894 = vld [vmem:[%s8744 + $0x254] sm:$0xf]
    %v8895 = vld [vmem:[%s8744 + $0x258] sm:$0xf]
    %v8896 = vld [vmem:[%s8744 + $0x25c] sm:$0xf]
    %v8897 = vld [vmem:[%s8744 + $0x260] sm:$0xf]
    %v8898 = vld [vmem:[%s8744 + $0x264] sm:$0xf]
    %v8899 = vld [vmem:[%s8744 + $0x268] sm:$0xf]
    %v8900 = vld [vmem:[%s8744 + $0x26c] sm:$0xf]
    %v8901 = vld [vmem:[%s8744 + $0x270] sm:$0xf]
    %v8902 = vld [vmem:[%s8744 + $0x274] sm:$0xf]
    %v8903 = vld [vmem:[%s8744 + $0x278] sm:$0xf]
    %v8904 = vld [vmem:[%s8744 + $0x27c] sm:$0xf]
    %v8905 = vld [vmem:[%s8744 + $0x280] sm:$0xf]
    %v8906 = vld [vmem:[%s8744 + $0x284] sm:$0xf]
    %v8907 = vld [vmem:[%s8744 + $0x288] sm:$0xf]
    %v8908 = vld [vmem:[%s8744 + $0x28c] sm:$0xf]
    %v8909 = vld [vmem:[%s8744 + $0x290] sm:$0xf]
    %v8910 = vld [vmem:[%s8744 + $0x294] sm:$0xf]
    %v8911 = vld [vmem:[%s8744 + $0x298] sm:$0xf]
    %v8912 = vld [vmem:[%s8744 + $0x29c] sm:$0xf]
    %v8913 = vld [vmem:[%s8744 + $0x2a0] sm:$0xf]
    %v8914 = vld [vmem:[%s8744 + $0x2a4] sm:$0xf]
    %v8915 = vld [vmem:[%s8744 + $0x2a8] sm:$0xf]
    %v8916 = vld [vmem:[%s8744 + $0x2ac] sm:$0xf]
    %v8917 = vld [vmem:[%s8744 + $0x2b0] sm:$0xf]
    %v8918 = vld [vmem:[%s8744 + $0x2b4] sm:$0xf]
    %v8919 = vld [vmem:[%s8744 + $0x2b8] sm:$0xf]
    %v8920 = vld [vmem:[%s8744 + $0x2bc] sm:$0xf]
    %v8921 = vld [vmem:[%s8744 + $0x2c0] sm:$0xf]
    %v8922 = vld [vmem:[%s8744 + $0x2c4] sm:$0xf]
    %v8923 = vld [vmem:[%s8744 + $0x2c8] sm:$0xf]
    %v8924 = vld [vmem:[%s8744 + $0x2cc] sm:$0xf]
    %v8925 = vld [vmem:[%s8744 + $0x2d0] sm:$0xf]
    %v8926 = vld [vmem:[%s8744 + $0x2d4] sm:$0xf]
    %v8927 = vld [vmem:[%s8744 + $0x2d8] sm:$0xf]
    %v8928 = vld [vmem:[%s8744 + $0x2dc] sm:$0xf]
    %v8929 = vld [vmem:[%s8744 + $0x2e0] sm:$0xf]
    %v8930 = vld [vmem:[%s8744 + $0x2e4] sm:$0xf]
    %v8931 = vld [vmem:[%s8744 + $0x2e8] sm:$0xf]
    %v8932 = vld [vmem:[%s8744 + $0x2ec] sm:$0xf]
    %v8933 = vld [vmem:[%s8744 + $0x2f0] sm:$0xf]
    %v8934 = vld [vmem:[%s8744 + $0x2f4] sm:$0xf]
    %v8935 = vld [vmem:[%s8744 + $0x2f8] sm:$0xf]
    %v8936 = vld [vmem:[%s8744 + $0x2fc] sm:$0xf]
    %v8937 = vld [vmem:[%s8744 + $0x300] sm:$0xf]
    %v8938 = vld [vmem:[%s8744 + $0x304] sm:$0xf]
    %v8939 = vld [vmem:[%s8744 + $0x308] sm:$0xf]
    %v8940 = vld [vmem:[%s8744 + $0x30c] sm:$0xf]
    %v8941 = vld [vmem:[%s8744 + $0x310] sm:$0xf]
    %v8942 = vld [vmem:[%s8744 + $0x314] sm:$0xf]
    %v8943 = vld [vmem:[%s8744 + $0x318] sm:$0xf]
    %v8944 = vld [vmem:[%s8744 + $0x31c] sm:$0xf]
    %v8945 = vld [vmem:[%s8744 + $0x320] sm:$0xf]
    %v8946 = vld [vmem:[%s8744 + $0x324] sm:$0xf]
    %v8947 = vld [vmem:[%s8744 + $0x328] sm:$0xf]
    %v8948 = vld [vmem:[%s8744 + $0x32c] sm:$0xf]
    %v8949 = vld [vmem:[%s8744 + $0x330] sm:$0xf]
    %v8950 = vld [vmem:[%s8744 + $0x334] sm:$0xf]
    %v8951 = vld [vmem:[%s8744 + $0x338] sm:$0xf]
    %v8952 = vld [vmem:[%s8744 + $0x33c] sm:$0xf]
    %v8953 = vld [vmem:[%s8744 + $0x340] sm:$0xf]
    %v8954 = vld [vmem:[%s8744 + $0x344] sm:$0xf]
    %v8955 = vld [vmem:[%s8744 + $0x348] sm:$0xf]
    %v8956 = vld [vmem:[%s8744 + $0x34c] sm:$0xf]
    %v8957 = vld [vmem:[%s8744 + $0x350] sm:$0xf]
    %v8958 = vld [vmem:[%s8744 + $0x354] sm:$0xf]
    %v8959 = vld [vmem:[%s8744 + $0x358] sm:$0xf]
    %v8960 = vld [vmem:[%s8744 + $0x35c] sm:$0xf]
    %v8961 = vld [vmem:[%s8744 + $0x360] sm:$0xf]
    %v8962 = vld [vmem:[%s8744 + $0x364] sm:$0xf]
    %v8963 = vld [vmem:[%s8744 + $0x368] sm:$0xf]
    %v8964 = vld [vmem:[%s8744 + $0x36c] sm:$0xf]
    %v8965 = vld [vmem:[%s8744 + $0x370] sm:$0xf]
    %v8966 = vld [vmem:[%s8744 + $0x374] sm:$0xf]
    %v8967 = vld [vmem:[%s8744 + $0x378] sm:$0xf]
    %v8968 = vld [vmem:[%s8744 + $0x37c] sm:$0xf]
    %v8969 = vld [vmem:[%s8744 + $0x380] sm:$0xf]
    %v8970 = vld [vmem:[%s8744 + $0x384] sm:$0xf]
    %v8971 = vld [vmem:[%s8744 + $0x388] sm:$0xf]
    %v8972 = vld [vmem:[%s8744 + $0x38c] sm:$0xf]
    %v8973 = vld [vmem:[%s8744 + $0x390] sm:$0xf]
    %v8974 = vld [vmem:[%s8744 + $0x394] sm:$0xf]
    %v8975 = vld [vmem:[%s8744 + $0x398] sm:$0xf]
    %v8976 = vld [vmem:[%s8744 + $0x39c] sm:$0xf]
    %v8977 = vld [vmem:[%s8744 + $0x3a0] sm:$0xf]
    %v8978 = vld [vmem:[%s8744 + $0x3a4] sm:$0xf]
    %v8979 = vld [vmem:[%s8744 + $0x3a8] sm:$0xf]
    %v8980 = vld [vmem:[%s8744 + $0x3ac] sm:$0xf]
    %v8981 = vld [vmem:[%s8744 + $0x3b0] sm:$0xf]
    %v8982 = vld [vmem:[%s8744 + $0x3b4] sm:$0xf]
    %v8983 = vld [vmem:[%s8744 + $0x3b8] sm:$0xf]
    %v8984 = vld [vmem:[%s8744 + $0x3bc] sm:$0xf]
    %v8985 = vld [vmem:[%s8744 + $0x3c0] sm:$0xf]
    %v8986 = vld [vmem:[%s8744 + $0x3c4] sm:$0xf]
    %v8987 = vld [vmem:[%s8744 + $0x3c8] sm:$0xf]
    %v8988 = vld [vmem:[%s8744 + $0x3cc] sm:$0xf]
    %v8989 = vld [vmem:[%s8744 + $0x3d0] sm:$0xf]
    %v8990 = vld [vmem:[%s8744 + $0x3d4] sm:$0xf]
    %v8991 = vld [vmem:[%s8744 + $0x3d8] sm:$0xf]
    %v8992 = vld [vmem:[%s8744 + $0x3dc] sm:$0xf]
    %v8993 = vld [vmem:[%s8744 + $0x3e0] sm:$0xf]
    %v8994 = vld [vmem:[%s8744 + $0x3e4] sm:$0xf]
    %v8995 = vld [vmem:[%s8744 + $0x3e8] sm:$0xf]
    %v8996 = vld [vmem:[%s8744 + $0x3ec] sm:$0xf]
    %v8997 = vld [vmem:[%s8744 + $0x3f0] sm:$0xf]
    %v8998 = vld [vmem:[%s8744 + $0x3f4] sm:$0xf]
    %v8999 = vld [vmem:[%s8744 + $0x3f8] sm:$0xf]
    %v9000 = vld [vmem:[%s8744 + $0x3fc] sm:$0xf]
    %s9001 = scalar_lea.vmem %s9, 24
    %v9002 = vld [vmem:[%s9001] sm:$0xff]
    %v9003 = vpack.c.bf16 %v8695, %v8694
    %v9005 = vlaneseq
    %v9006 = vshrl.u32 %v9005, 7
    %v9007 = vsub.s32 0, %v9006
    %v9008 = vrot.slane %v8702, %v9007
    %v9014 = vunpack.c.l.b16 %v8697
    %v9015 = vunpack.c.l.b16 %v8698
    %v9016 = vunpack.c.l.b16 %v8699
    %v9017 = vunpack.c.l.b16 %v8700
    %v9018 = vpack.c.b16 %v9015, %v9014
    %v9019 = vpack.c.b16 %v9017, %v9016
    %v9023 = vsel %vm376, %v9003, 0
    %9025 = vmatprep.subr.bf16.mxu0 0
    %9026 = vmatpush1.bf16.msra.mxu0 0
    %9027 = vmatprep.subr.bf16.mxu0 0
    %9028 = vmatpush1.bf16.msra.mxu0 0
    %9029 = vmatprep.subr.bf16.mxu0 0
    %9030 = vmatpush1.bf16.msra.mxu0 0
    %9031 = vmatprep.subr.bf16.mxu0 0
    %9032 = vmatpush1.bf16.msra.mxu0 0
    %9033 = vmatprep.subr.bf16.mxu0 0
    %9034 = vmatpush1.bf16.msra.mxu0 0
    %9035 = vmatprep.subr.bf16.mxu0 0
    %9036 = vmatpush1.bf16.msra.mxu0 0
    %9037 = vmatprep.subr.bf16.mxu0 0
    %9038 = vmatpush1.bf16.msra.mxu0 %v9019
    %9039 = vmatprep.subr.bf16.mxu0 0
    %9040 = vmatpush1.bf16.msra.mxu0 %v9018
    %9041 = vmatprep.subr.bf16.mxu0 0
    %9042 = vmatpush2.bf16.msra.mxu0 0
    %9043 = vmatprep.subr.bf16.mxu0 0
    %9044 = vmatpush2.bf16.msra.mxu0 0
    %9045 = vmatprep.subr.bf16.mxu0 0
    %9046 = vmatpush2.bf16.msra.mxu0 0
    %9047 = vmatprep.subr.bf16.mxu0 0
    %9048 = vmatpush2.bf16.msra.mxu0 0
    %9049 = vmatprep.subr.bf16.mxu0 0
    %9050 = vmatpush2.bf16.msra.mxu0 0
    %9051 = vmatprep.subr.bf16.mxu0 0
    %9052 = vmatpush2.bf16.msra.mxu0 0
    %9053 = vmatprep.subr.bf16.mxu0 0
    %9054 = vmatpush2.bf16.msra.mxu0 0
    %9055 = vmatprep.subr.bf16.mxu0 0
    %9056 = vmatpush2.bf16.msra.mxu0 0
    %9057 = vmatprep.mubr.bf16.mxu0 0
    %9058 = vmatmul.mubr.bf16.gmra.mxu0 %v9023
    %v9059 = vpop.f32.mrf.mxu0
    %v9060 = vadd.f32 %v9008, %v9059
    %v9061 = vpop.f32.mrf.mxu0
    %v9062 = vpop.f32.mrf.mxu0
    %v9063 = vadd.f32 %v9008, %v9062
    %v9064 = vpop.f32.mrf.mxu0
    %9065 = vdwg.mxu0
    %v9066 = vmul.f32 %v9060, 0.5
    %v9067 = vmul.f32 %v9063, 0.5
    %9069 = vrot.lane.b32.xlu0 %v9060, 96
    %v9070 = vpop.permute.xlu0 %9069
    %v9072 = vmul.f32 %v9066, %v9070
    %v9074 = vsel %vm376, %v9072, 0
    %9076 = vmatprep.subr.mxu0 0.0
    %9077 = vmatpush1.msra.mxu0 0.0
    %9078 = vmatprep.subr.mxu0 0.0
    %9079 = vmatpush1.msra.mxu0 0.0
    %9080 = vmatprep.subr.mxu0 0.0
    %9081 = vmatpush1.msra.mxu0 0.0
    %9082 = vmatprep.subr.mxu0 0.0
    %9083 = vmatpush1.msra.mxu0 0.0
    %9084 = vmatprep.subr.mxu0 0.0
    %9085 = vmatpush1.msra.mxu0 0.0
    %9086 = vmatprep.subr.mxu0 0.0
    %9087 = vmatpush1.msra.mxu0 0.0
    %9088 = vmatprep.subr.mxu0 0.0
    %9089 = vmatpush1.msra.mxu0 0.0
    %9090 = vmatprep.subr.mxu0 0.0
    %9091 = vmatpush1.msra.mxu0 0.0
    %9092 = vmatprep.subr.mxu0 0.0
    %9093 = vmatpush1.msra.mxu0 0.0
    %9094 = vmatprep.subr.mxu0 0.0
    %9095 = vmatpush1.msra.mxu0 0.0
    %9096 = vmatprep.subr.mxu0 0.0
    %9097 = vmatpush1.msra.mxu0 0.0
    %9098 = vmatprep.subr.mxu0 0.0
    %9099 = vmatpush1.msra.mxu0 0.0
    %9100 = vmatprep.subr.mxu0 0.0
    %9101 = vmatpush1.msra.mxu0 %v49
    %9102 = vmatprep.subr.mxu0 0.0
    %9103 = vmatpush1.msra.mxu0 %v48
    %9104 = vmatprep.subr.mxu0 0.0
    %9105 = vmatpush1.msra.mxu0 %v47
    %9106 = vmatprep.subr.mxu0 0.0
    %9107 = vmatpush1.msra.mxu0 %v46
    %9108 = vmatprep.subr.mxu0 0.0
    %9109 = vmatpush2.msra.mxu0 0.0
    %9110 = vmatprep.subr.mxu0 0.0
    %9111 = vmatpush2.msra.mxu0 0.0
    %9112 = vmatprep.subr.mxu0 0.0
    %9113 = vmatpush2.msra.mxu0 0.0
    %9114 = vmatprep.subr.mxu0 0.0
    %9115 = vmatpush2.msra.mxu0 0.0
    %9116 = vmatprep.subr.mxu0 0.0
    %9117 = vmatpush2.msra.mxu0 0.0
    %9118 = vmatprep.subr.mxu0 0.0
    %9119 = vmatpush2.msra.mxu0 0.0
    %9120 = vmatprep.subr.mxu0 0.0
    %9121 = vmatpush2.msra.mxu0 0.0
    %9122 = vmatprep.subr.mxu0 0.0
    %9123 = vmatpush2.msra.mxu0 0.0
    %9124 = vmatprep.subr.mxu0 0.0
    %9125 = vmatpush2.msra.mxu0 0.0
    %9126 = vmatprep.subr.mxu0 0.0
    %9127 = vmatpush2.msra.mxu0 0.0
    %9128 = vmatprep.subr.mxu0 0.0
    %9129 = vmatpush2.msra.mxu0 0.0
    %9130 = vmatprep.subr.mxu0 0.0
    %9131 = vmatpush2.msra.mxu0 0.0
    %9132 = vmatprep.subr.mxu0 0.0
    %9133 = vmatpush2.msra.mxu0 0.0
    %9134 = vmatprep.subr.mxu0 0.0
    %9135 = vmatpush2.msra.mxu0 0.0
    %9136 = vmatprep.subr.mxu0 0.0
    %9137 = vmatpush2.msra.mxu0 0.0
    %9138 = vmatprep.subr.mxu0 0.0
    %9139 = vmatpush2.msra.mxu0 0.0
    %9140 = vmatprep.mubr.f32.mxu0 0.0
    %9141 = vmatmul.mubr.f32.gmra.mxu0 %v9074
    %v9142 = vpop.f32.mrf.mxu0
    %v9143 = vadd.f32 0.0, %v9142
    %v9144 = vpop.f32.mrf.mxu0
    %9145 = vdwg.mxu0
    %9147 = vrot.lane.b32.xlu0 %v9063, 96
    %v9148 = vpop.permute.xlu0 %9147
    %v9150 = vmul.f32 %v9066, %v9148
    %v9152 = vsel %vm376, %v9150, 0
    %9154 = vmatprep.subr.mxu0 0.0
    %9155 = vmatpush1.msra.mxu0 0.0
    %9156 = vmatprep.subr.mxu0 0.0
    %9157 = vmatpush1.msra.mxu0 0.0
    %9158 = vmatprep.subr.mxu0 0.0
    %9159 = vmatpush1.msra.mxu0 0.0
    %9160 = vmatprep.subr.mxu0 0.0
    %9161 = vmatpush1.msra.mxu0 0.0
    %9162 = vmatprep.subr.mxu0 0.0
    %9163 = vmatpush1.msra.mxu0 0.0
    %9164 = vmatprep.subr.mxu0 0.0
    %9165 = vmatpush1.msra.mxu0 0.0
    %9166 = vmatprep.subr.mxu0 0.0
    %9167 = vmatpush1.msra.mxu0 0.0
    %9168 = vmatprep.subr.mxu0 0.0
    %9169 = vmatpush1.msra.mxu0 0.0
    %9170 = vmatprep.subr.mxu0 0.0
    %9171 = vmatpush1.msra.mxu0 0.0
    %9172 = vmatprep.subr.mxu0 0.0
    %9173 = vmatpush1.msra.mxu0 0.0
    %9174 = vmatprep.subr.mxu0 0.0
    %9175 = vmatpush1.msra.mxu0 0.0
    %9176 = vmatprep.subr.mxu0 0.0
    %9177 = vmatpush1.msra.mxu0 0.0
    %9178 = vmatprep.subr.mxu0 0.0
    %9179 = vmatpush1.msra.mxu0 %v49
    %9180 = vmatprep.subr.mxu0 0.0
    %9181 = vmatpush1.msra.mxu0 %v48
    %9182 = vmatprep.subr.mxu0 0.0
    %9183 = vmatpush1.msra.mxu0 %v47
    %9184 = vmatprep.subr.mxu0 0.0
    %9185 = vmatpush1.msra.mxu0 %v46
    %9186 = vmatprep.subr.mxu0 0.0
    %9187 = vmatpush2.msra.mxu0 0.0
    %9188 = vmatprep.subr.mxu0 0.0
    %9189 = vmatpush2.msra.mxu0 0.0
    %9190 = vmatprep.subr.mxu0 0.0
    %9191 = vmatpush2.msra.mxu0 0.0
    %9192 = vmatprep.subr.mxu0 0.0
    %9193 = vmatpush2.msra.mxu0 0.0
    %9194 = vmatprep.subr.mxu0 0.0
    %9195 = vmatpush2.msra.mxu0 0.0
    %9196 = vmatprep.subr.mxu0 0.0
    %9197 = vmatpush2.msra.mxu0 0.0
    %9198 = vmatprep.subr.mxu0 0.0
    %9199 = vmatpush2.msra.mxu0 0.0
    %9200 = vmatprep.subr.mxu0 0.0
    %9201 = vmatpush2.msra.mxu0 0.0
    %9202 = vmatprep.subr.mxu0 0.0
    %9203 = vmatpush2.msra.mxu0 0.0
    %9204 = vmatprep.subr.mxu0 0.0
    %9205 = vmatpush2.msra.mxu0 0.0
    %9206 = vmatprep.subr.mxu0 0.0
    %9207 = vmatpush2.msra.mxu0 0.0
    %9208 = vmatprep.subr.mxu0 0.0
    %9209 = vmatpush2.msra.mxu0 0.0
    %9210 = vmatprep.subr.mxu0 0.0
    %9211 = vmatpush2.msra.mxu0 0.0
    %9212 = vmatprep.subr.mxu0 0.0
    %9213 = vmatpush2.msra.mxu0 0.0
    %9214 = vmatprep.subr.mxu0 0.0
    %9215 = vmatpush2.msra.mxu0 0.0
    %9216 = vmatprep.subr.mxu0 0.0
    %9217 = vmatpush2.msra.mxu0 0.0
    %9218 = vmatprep.mubr.f32.mxu0 0.0
    %9219 = vmatmul.mubr.f32.gmra.mxu0 %v9152
    %v9220 = vpop.f32.mrf.mxu0
    %v9221 = vadd.f32 0.0, %v9220
    %v9222 = vpop.f32.mrf.mxu0
    %9223 = vdwg.mxu0
    %v9224 = vmul.f32 %v9067, %v9070
    %v9226 = vsel %vm376, %v9224, 0
    %9228 = vmatprep.subr.mxu0 0.0
    %9229 = vmatpush1.msra.mxu0 0.0
    %9230 = vmatprep.subr.mxu0 0.0
    %9231 = vmatpush1.msra.mxu0 0.0
    %9232 = vmatprep.subr.mxu0 0.0
    %9233 = vmatpush1.msra.mxu0 0.0
    %9234 = vmatprep.subr.mxu0 0.0
    %9235 = vmatpush1.msra.mxu0 0.0
    %9236 = vmatprep.subr.mxu0 0.0
    %9237 = vmatpush1.msra.mxu0 0.0
    %9238 = vmatprep.subr.mxu0 0.0
    %9239 = vmatpush1.msra.mxu0 0.0
    %9240 = vmatprep.subr.mxu0 0.0
    %9241 = vmatpush1.msra.mxu0 0.0
    %9242 = vmatprep.subr.mxu0 0.0
    %9243 = vmatpush1.msra.mxu0 0.0
    %9244 = vmatprep.subr.mxu0 0.0
    %9245 = vmatpush1.msra.mxu0 0.0
    %9246 = vmatprep.subr.mxu0 0.0
    %9247 = vmatpush1.msra.mxu0 0.0
    %9248 = vmatprep.subr.mxu0 0.0
    %9249 = vmatpush1.msra.mxu0 0.0
    %9250 = vmatprep.subr.mxu0 0.0
    %9251 = vmatpush1.msra.mxu0 0.0
    %9252 = vmatprep.subr.mxu0 0.0
    %9253 = vmatpush1.msra.mxu0 %v49
    %9254 = vmatprep.subr.mxu0 0.0
    %9255 = vmatpush1.msra.mxu0 %v48
    %9256 = vmatprep.subr.mxu0 0.0
    %9257 = vmatpush1.msra.mxu0 %v47
    %9258 = vmatprep.subr.mxu0 0.0
    %9259 = vmatpush1.msra.mxu0 %v46
    %9260 = vmatprep.subr.mxu0 0.0
    %9261 = vmatpush2.msra.mxu0 0.0
    %9262 = vmatprep.subr.mxu0 0.0
    %9263 = vmatpush2.msra.mxu0 0.0
    %9264 = vmatprep.subr.mxu0 0.0
    %9265 = vmatpush2.msra.mxu0 0.0
    %9266 = vmatprep.subr.mxu0 0.0
    %9267 = vmatpush2.msra.mxu0 0.0
    %9268 = vmatprep.subr.mxu0 0.0
    %9269 = vmatpush2.msra.mxu0 0.0
    %9270 = vmatprep.subr.mxu0 0.0
    %9271 = vmatpush2.msra.mxu0 0.0
    %9272 = vmatprep.subr.mxu0 0.0
    %9273 = vmatpush2.msra.mxu0 0.0
    %9274 = vmatprep.subr.mxu0 0.0
    %9275 = vmatpush2.msra.mxu0 0.0
    %9276 = vmatprep.subr.mxu0 0.0
    %9277 = vmatpush2.msra.mxu0 0.0
    %9278 = vmatprep.subr.mxu0 0.0
    %9279 = vmatpush2.msra.mxu0 0.0
    %9280 = vmatprep.subr.mxu0 0.0
    %9281 = vmatpush2.msra.mxu0 0.0
    %9282 = vmatprep.subr.mxu0 0.0
    %9283 = vmatpush2.msra.mxu0 0.0
    %9284 = vmatprep.subr.mxu0 0.0
    %9285 = vmatpush2.msra.mxu0 0.0
    %9286 = vmatprep.subr.mxu0 0.0
    %9287 = vmatpush2.msra.mxu0 0.0
    %9288 = vmatprep.subr.mxu0 0.0
    %9289 = vmatpush2.msra.mxu0 0.0
    %9290 = vmatprep.subr.mxu0 0.0
    %9291 = vmatpush2.msra.mxu0 0.0
    %9292 = vmatprep.mubr.f32.mxu0 0.0
    %9293 = vmatmul.mubr.f32.gmra.mxu0 %v9226
    %v9294 = vpop.f32.mrf.mxu0
    %v9295 = vadd.f32 0.0, %v9294
    %v9296 = vpop.f32.mrf.mxu0
    %9297 = vdwg.mxu0
    %v9298 = vmul.f32 %v9067, %v9148
    %v9300 = vsel %vm376, %v9298, 0
    %9302 = vmatprep.subr.mxu0 0.0
    %9303 = vmatpush1.msra.mxu0 0.0
    %9304 = vmatprep.subr.mxu0 0.0
    %9305 = vmatpush1.msra.mxu0 0.0
    %9306 = vmatprep.subr.mxu0 0.0
    %9307 = vmatpush1.msra.mxu0 0.0
    %9308 = vmatprep.subr.mxu0 0.0
    %9309 = vmatpush1.msra.mxu0 0.0
    %9310 = vmatprep.subr.mxu0 0.0
    %9311 = vmatpush1.msra.mxu0 0.0
    %9312 = vmatprep.subr.mxu0 0.0
    %9313 = vmatpush1.msra.mxu0 0.0
    %9314 = vmatprep.subr.mxu0 0.0
    %9315 = vmatpush1.msra.mxu0 0.0
    %9316 = vmatprep.subr.mxu0 0.0
    %9317 = vmatpush1.msra.mxu0 0.0
    %9318 = vmatprep.subr.mxu0 0.0
    %9319 = vmatpush1.msra.mxu0 0.0
    %9320 = vmatprep.subr.mxu0 0.0
    %9321 = vmatpush1.msra.mxu0 0.0
    %9322 = vmatprep.subr.mxu0 0.0
    %9323 = vmatpush1.msra.mxu0 0.0
    %9324 = vmatprep.subr.mxu0 0.0
    %9325 = vmatpush1.msra.mxu0 0.0
    %9326 = vmatprep.subr.mxu0 0.0
    %9327 = vmatpush1.msra.mxu0 %v49
    %9328 = vmatprep.subr.mxu0 0.0
    %9329 = vmatpush1.msra.mxu0 %v48
    %9330 = vmatprep.subr.mxu0 0.0
    %9331 = vmatpush1.msra.mxu0 %v47
    %9332 = vmatprep.subr.mxu0 0.0
    %9333 = vmatpush1.msra.mxu0 %v46
    %9334 = vmatprep.subr.mxu0 0.0
    %9335 = vmatpush2.msra.mxu0 0.0
    %9336 = vmatprep.subr.mxu0 0.0
    %9337 = vmatpush2.msra.mxu0 0.0
    %9338 = vmatprep.subr.mxu0 0.0
    %9339 = vmatpush2.msra.mxu0 0.0
    %9340 = vmatprep.subr.mxu0 0.0
    %9341 = vmatpush2.msra.mxu0 0.0
    %9342 = vmatprep.subr.mxu0 0.0
    %9343 = vmatpush2.msra.mxu0 0.0
    %9344 = vmatprep.subr.mxu0 0.0
    %9345 = vmatpush2.msra.mxu0 0.0
    %9346 = vmatprep.subr.mxu0 0.0
    %9347 = vmatpush2.msra.mxu0 0.0
    %9348 = vmatprep.subr.mxu0 0.0
    %9349 = vmatpush2.msra.mxu0 0.0
    %9350 = vmatprep.subr.mxu0 0.0
    %9351 = vmatpush2.msra.mxu0 0.0
    %9352 = vmatprep.subr.mxu0 0.0
    %9353 = vmatpush2.msra.mxu0 0.0
    %9354 = vmatprep.subr.mxu0 0.0
    %9355 = vmatpush2.msra.mxu0 0.0
    %9356 = vmatprep.subr.mxu0 0.0
    %9357 = vmatpush2.msra.mxu0 0.0
    %9358 = vmatprep.subr.mxu0 0.0
    %9359 = vmatpush2.msra.mxu0 0.0
    %9360 = vmatprep.subr.mxu0 0.0
    %9361 = vmatpush2.msra.mxu0 0.0
    %9362 = vmatprep.subr.mxu0 0.0
    %9363 = vmatpush2.msra.mxu0 0.0
    %9364 = vmatprep.subr.mxu0 0.0
    %9365 = vmatpush2.msra.mxu0 0.0
    %9366 = vmatprep.mubr.f32.mxu0 0.0
    %9367 = vmatmul.mubr.f32.gmra.mxu0 %v9300
    %v9368 = vpop.f32.mrf.mxu0
    %v9369 = vadd.f32 0.0, %v9368
    %v9370 = vpop.f32.mrf.mxu0
    %9371 = vdwg.mxu0
    %v9372 = vmax.f32 %v9143, %v9221
    %v9373 = vsub.f32 %v9143, %v9372
    %v9374 = vmul.f32 %v9373, 1.442695
    %v9375 = vpow.pop %v9374
    %v9376 = vsub.f32 %v9221, %v9372
    %v9377 = vmul.f32 %v9376, 1.442695
    %v9378 = vpow.pop %v9377
    %v9379 = vadd.f32 %v9375, %v9378
    %v9380 = vrcp.pop %v9379
    %v9381 = vmul.f32 %v9375, %v9380
    %v9383 = vsel %vm737, %v9381, 0
    %9385 = vmatprep.subr.mxu0 0.0
    %9386 = vmatpush1.msra.mxu0 0.0
    %9387 = vmatprep.subr.mxu0 0.0
    %9388 = vmatpush1.msra.mxu0 0.0
    %9389 = vmatprep.subr.mxu0 0.0
    %9390 = vmatpush1.msra.mxu0 0.0
    %9391 = vmatprep.subr.mxu0 0.0
    %9392 = vmatpush1.msra.mxu0 0.0
    %9393 = vmatprep.subr.mxu0 0.0
    %9394 = vmatpush1.msra.mxu0 0.0
    %9395 = vmatprep.subr.mxu0 0.0
    %9396 = vmatpush1.msra.mxu0 0.0
    %9397 = vmatprep.subr.mxu0 0.0
    %9398 = vmatpush1.msra.mxu0 0.0
    %9399 = vmatprep.subr.mxu0 0.0
    %9400 = vmatpush1.msra.mxu0 0.0
    %9401 = vmatprep.subr.mxu0 0.0
    %9402 = vmatpush1.msra.mxu0 0.0
    %9403 = vmatprep.subr.mxu0 0.0
    %9404 = vmatpush1.msra.mxu0 0.0
    %9405 = vmatprep.subr.mxu0 0.0
    %9406 = vmatpush1.msra.mxu0 0.0
    %9407 = vmatprep.subr.mxu0 0.0
    %9408 = vmatpush1.msra.mxu0 0.0
    %9409 = vmatprep.subr.mxu0 0.0
    %9410 = vmatpush1.msra.mxu0 0.0
    %9411 = vmatprep.subr.mxu0 0.0
    %9412 = vmatpush1.msra.mxu0 0.0
    %9413 = vmatprep.subr.mxu0 0.0
    %9414 = vmatpush1.msra.mxu0 0.0
    %9415 = vmatprep.subr.mxu0 0.0
    %9416 = vmatpush1.msra.mxu0 %v50
    %9417 = vmatprep.subr.mxu0 0.0
    %9418 = vmatpush2.msra.mxu0 0.0
    %9419 = vmatprep.subr.mxu0 0.0
    %9420 = vmatpush2.msra.mxu0 0.0
    %9421 = vmatprep.subr.mxu0 0.0
    %9422 = vmatpush2.msra.mxu0 0.0
    %9423 = vmatprep.subr.mxu0 0.0
    %9424 = vmatpush2.msra.mxu0 0.0
    %9425 = vmatprep.subr.mxu0 0.0
    %9426 = vmatpush2.msra.mxu0 0.0
    %9427 = vmatprep.subr.mxu0 0.0
    %9428 = vmatpush2.msra.mxu0 0.0
    %9429 = vmatprep.subr.mxu0 0.0
    %9430 = vmatpush2.msra.mxu0 0.0
    %9431 = vmatprep.subr.mxu0 0.0
    %9432 = vmatpush2.msra.mxu0 0.0
    %9433 = vmatprep.subr.mxu0 0.0
    %9434 = vmatpush2.msra.mxu0 0.0
    %9435 = vmatprep.subr.mxu0 0.0
    %9436 = vmatpush2.msra.mxu0 0.0
    %9437 = vmatprep.subr.mxu0 0.0
    %9438 = vmatpush2.msra.mxu0 0.0
    %9439 = vmatprep.subr.mxu0 0.0
    %9440 = vmatpush2.msra.mxu0 0.0
    %9441 = vmatprep.subr.mxu0 0.0
    %9442 = vmatpush2.msra.mxu0 0.0
    %9443 = vmatprep.subr.mxu0 0.0
    %9444 = vmatpush2.msra.mxu0 0.0
    %9445 = vmatprep.subr.mxu0 0.0
    %9446 = vmatpush2.msra.mxu0 0.0
    %9447 = vmatprep.subr.mxu0 0.0
    %9448 = vmatpush2.msra.mxu0 0.0
    %9449 = vmatprep.mubr.f32.mxu0 0.0
    %9450 = vmatmul.mubr.f32.gmra.mxu0 %v9383
    %v9451 = vpop.f32.mrf.mxu0
    %v9452 = vadd.f32 0.0, %v9451
    %v9453 = vpop.f32.mrf.mxu0
    %9454 = vdwg.mxu0
    %9455 = vrot.lane.b32.xlu0 %v9060, 64
    %v9456 = vpop.permute.xlu0 %9455
    %v9458 = vmul.f32 %v9452, %v9456
    %v9459 = vmul.f32 %v9378, %v9380
    %v9461 = vsel %vm737, %v9459, 0
    %9463 = vmatprep.subr.mxu0 0.0
    %9464 = vmatpush1.msra.mxu0 0.0
    %9465 = vmatprep.subr.mxu0 0.0
    %9466 = vmatpush1.msra.mxu0 0.0
    %9467 = vmatprep.subr.mxu0 0.0
    %9468 = vmatpush1.msra.mxu0 0.0
    %9469 = vmatprep.subr.mxu0 0.0
    %9470 = vmatpush1.msra.mxu0 0.0
    %9471 = vmatprep.subr.mxu0 0.0
    %9472 = vmatpush1.msra.mxu0 0.0
    %9473 = vmatprep.subr.mxu0 0.0
    %9474 = vmatpush1.msra.mxu0 0.0
    %9475 = vmatprep.subr.mxu0 0.0
    %9476 = vmatpush1.msra.mxu0 0.0
    %9477 = vmatprep.subr.mxu0 0.0
    %9478 = vmatpush1.msra.mxu0 0.0
    %9479 = vmatprep.subr.mxu0 0.0
    %9480 = vmatpush1.msra.mxu0 0.0
    %9481 = vmatprep.subr.mxu0 0.0
    %9482 = vmatpush1.msra.mxu0 0.0
    %9483 = vmatprep.subr.mxu0 0.0
    %9484 = vmatpush1.msra.mxu0 0.0
    %9485 = vmatprep.subr.mxu0 0.0
    %9486 = vmatpush1.msra.mxu0 0.0
    %9487 = vmatprep.subr.mxu0 0.0
    %9488 = vmatpush1.msra.mxu0 0.0
    %9489 = vmatprep.subr.mxu0 0.0
    %9490 = vmatpush1.msra.mxu0 0.0
    %9491 = vmatprep.subr.mxu0 0.0
    %9492 = vmatpush1.msra.mxu0 0.0
    %9493 = vmatprep.subr.mxu0 0.0
    %9494 = vmatpush1.msra.mxu0 %v50
    %9495 = vmatprep.subr.mxu0 0.0
    %9496 = vmatpush2.msra.mxu0 0.0
    %9497 = vmatprep.subr.mxu0 0.0
    %9498 = vmatpush2.msra.mxu0 0.0
    %9499 = vmatprep.subr.mxu0 0.0
    %9500 = vmatpush2.msra.mxu0 0.0
    %9501 = vmatprep.subr.mxu0 0.0
    %9502 = vmatpush2.msra.mxu0 0.0
    %9503 = vmatprep.subr.mxu0 0.0
    %9504 = vmatpush2.msra.mxu0 0.0
    %9505 = vmatprep.subr.mxu0 0.0
    %9506 = vmatpush2.msra.mxu0 0.0
    %9507 = vmatprep.subr.mxu0 0.0
    %9508 = vmatpush2.msra.mxu0 0.0
    %9509 = vmatprep.subr.mxu0 0.0
    %9510 = vmatpush2.msra.mxu0 0.0
    %9511 = vmatprep.subr.mxu0 0.0
    %9512 = vmatpush2.msra.mxu0 0.0
    %9513 = vmatprep.subr.mxu0 0.0
    %9514 = vmatpush2.msra.mxu0 0.0
    %9515 = vmatprep.subr.mxu0 0.0
    %9516 = vmatpush2.msra.mxu0 0.0
    %9517 = vmatprep.subr.mxu0 0.0
    %9518 = vmatpush2.msra.mxu0 0.0
    %9519 = vmatprep.subr.mxu0 0.0
    %9520 = vmatpush2.msra.mxu0 0.0
    %9521 = vmatprep.subr.mxu0 0.0
    %9522 = vmatpush2.msra.mxu0 0.0
    %9523 = vmatprep.subr.mxu0 0.0
    %9524 = vmatpush2.msra.mxu0 0.0
    %9525 = vmatprep.subr.mxu0 0.0
    %9526 = vmatpush2.msra.mxu0 0.0
    %9527 = vmatprep.mubr.f32.mxu0 0.0
    %9528 = vmatmul.mubr.f32.gmra.mxu0 %v9461
    %v9529 = vpop.f32.mrf.mxu0
    %v9530 = vadd.f32 0.0, %v9529
    %v9531 = vpop.f32.mrf.mxu0
    %9532 = vdwg.mxu0
    %9533 = vrot.lane.b32.xlu0 %v9063, 64
    %v9534 = vpop.permute.xlu0 %9533
    %v9536 = vmul.f32 %v9530, %v9534
    %v9537 = vadd.f32 %v9458, %v9536
    %v9538 = vmax.f32 %v9295, %v9369
    %v9539 = vsub.f32 %v9295, %v9538
    %v9540 = vmul.f32 %v9539, 1.442695
    %v9541 = vpow.pop %v9540
    %v9542 = vsub.f32 %v9369, %v9538
    %v9543 = vmul.f32 %v9542, 1.442695
    %v9544 = vpow.pop %v9543
    %v9545 = vadd.f32 %v9541, %v9544
    %v9546 = vrcp.pop %v9545
    %v9547 = vmul.f32 %v9541, %v9546
    %v9549 = vsel %vm737, %v9547, 0
    %9551 = vmatprep.subr.mxu0 0.0
    %9552 = vmatpush1.msra.mxu0 0.0
    %9553 = vmatprep.subr.mxu0 0.0
    %9554 = vmatpush1.msra.mxu0 0.0
    %9555 = vmatprep.subr.mxu0 0.0
    %9556 = vmatpush1.msra.mxu0 0.0
    %9557 = vmatprep.subr.mxu0 0.0
    %9558 = vmatpush1.msra.mxu0 0.0
    %9559 = vmatprep.subr.mxu0 0.0
    %9560 = vmatpush1.msra.mxu0 0.0
    %9561 = vmatprep.subr.mxu0 0.0
    %9562 = vmatpush1.msra.mxu0 0.0
    %9563 = vmatprep.subr.mxu0 0.0
    %9564 = vmatpush1.msra.mxu0 0.0
    %9565 = vmatprep.subr.mxu0 0.0
    %9566 = vmatpush1.msra.mxu0 0.0
    %9567 = vmatprep.subr.mxu0 0.0
    %9568 = vmatpush1.msra.mxu0 0.0
    %9569 = vmatprep.subr.mxu0 0.0
    %9570 = vmatpush1.msra.mxu0 0.0
    %9571 = vmatprep.subr.mxu0 0.0
    %9572 = vmatpush1.msra.mxu0 0.0
    %9573 = vmatprep.subr.mxu0 0.0
    %9574 = vmatpush1.msra.mxu0 0.0
    %9575 = vmatprep.subr.mxu0 0.0
    %9576 = vmatpush1.msra.mxu0 0.0
    %9577 = vmatprep.subr.mxu0 0.0
    %9578 = vmatpush1.msra.mxu0 0.0
    %9579 = vmatprep.subr.mxu0 0.0
    %9580 = vmatpush1.msra.mxu0 0.0
    %9581 = vmatprep.subr.mxu0 0.0
    %9582 = vmatpush1.msra.mxu0 %v50
    %9583 = vmatprep.subr.mxu0 0.0
    %9584 = vmatpush2.msra.mxu0 0.0
    %9585 = vmatprep.subr.mxu0 0.0
    %9586 = vmatpush2.msra.mxu0 0.0
    %9587 = vmatprep.subr.mxu0 0.0
    %9588 = vmatpush2.msra.mxu0 0.0
    %9589 = vmatprep.subr.mxu0 0.0
    %9590 = vmatpush2.msra.mxu0 0.0
    %9591 = vmatprep.subr.mxu0 0.0
    %9592 = vmatpush2.msra.mxu0 0.0
    %9593 = vmatprep.subr.mxu0 0.0
    %9594 = vmatpush2.msra.mxu0 0.0
    %9595 = vmatprep.subr.mxu0 0.0
    %9596 = vmatpush2.msra.mxu0 0.0
    %9597 = vmatprep.subr.mxu0 0.0
    %9598 = vmatpush2.msra.mxu0 0.0
    %9599 = vmatprep.subr.mxu0 0.0
    %9600 = vmatpush2.msra.mxu0 0.0
    %9601 = vmatprep.subr.mxu0 0.0
    %9602 = vmatpush2.msra.mxu0 0.0
    %9603 = vmatprep.subr.mxu0 0.0
    %9604 = vmatpush2.msra.mxu0 0.0
    %9605 = vmatprep.subr.mxu0 0.0
    %9606 = vmatpush2.msra.mxu0 0.0
    %9607 = vmatprep.subr.mxu0 0.0
    %9608 = vmatpush2.msra.mxu0 0.0
    %9609 = vmatprep.subr.mxu0 0.0
    %9610 = vmatpush2.msra.mxu0 0.0
    %9611 = vmatprep.subr.mxu0 0.0
    %9612 = vmatpush2.msra.mxu0 0.0
    %9613 = vmatprep.subr.mxu0 0.0
    %9614 = vmatpush2.msra.mxu0 0.0
    %9615 = vmatprep.mubr.f32.mxu0 0.0
    %9616 = vmatmul.mubr.f32.gmra.mxu0 %v9549
    %v9617 = vpop.f32.mrf.mxu0
    %v9618 = vadd.f32 0.0, %v9617
    %v9619 = vpop.f32.mrf.mxu0
    %9620 = vdwg.mxu0
    %v9621 = vmul.f32 %v9618, %v9456
    %v9622 = vmul.f32 %v9544, %v9546
    %v9624 = vsel %vm737, %v9622, 0
    %9626 = vmatprep.subr.mxu0 0.0
    %9627 = vmatpush1.msra.mxu0 0.0
    %9628 = vmatprep.subr.mxu0 0.0
    %9629 = vmatpush1.msra.mxu0 0.0
    %9630 = vmatprep.subr.mxu0 0.0
    %9631 = vmatpush1.msra.mxu0 0.0
    %9632 = vmatprep.subr.mxu0 0.0
    %9633 = vmatpush1.msra.mxu0 0.0
    %9634 = vmatprep.subr.mxu0 0.0
    %9635 = vmatpush1.msra.mxu0 0.0
    %9636 = vmatprep.subr.mxu0 0.0
    %9637 = vmatpush1.msra.mxu0 0.0
    %9638 = vmatprep.subr.mxu0 0.0
    %9639 = vmatpush1.msra.mxu0 0.0
    %9640 = vmatprep.subr.mxu0 0.0
    %9641 = vmatpush1.msra.mxu0 0.0
    %9642 = vmatprep.subr.mxu0 0.0
    %9643 = vmatpush1.msra.mxu0 0.0
    %9644 = vmatprep.subr.mxu0 0.0
    %9645 = vmatpush1.msra.mxu0 0.0
    %9646 = vmatprep.subr.mxu0 0.0
    %9647 = vmatpush1.msra.mxu0 0.0
    %9648 = vmatprep.subr.mxu0 0.0
    %9649 = vmatpush1.msra.mxu0 0.0
    %9650 = vmatprep.subr.mxu0 0.0
    %9651 = vmatpush1.msra.mxu0 0.0
    %9652 = vmatprep.subr.mxu0 0.0
    %9653 = vmatpush1.msra.mxu0 0.0
    %9654 = vmatprep.subr.mxu0 0.0
    %9655 = vmatpush1.msra.mxu0 0.0
    %9656 = vmatprep.subr.mxu0 0.0
    %9657 = vmatpush1.msra.mxu0 %v50
    %9658 = vmatprep.subr.mxu0 0.0
    %9659 = vmatpush2.msra.mxu0 0.0
    %9660 = vmatprep.subr.mxu0 0.0
    %9661 = vmatpush2.msra.mxu0 0.0
    %9662 = vmatprep.subr.mxu0 0.0
    %9663 = vmatpush2.msra.mxu0 0.0
    %9664 = vmatprep.subr.mxu0 0.0
    %9665 = vmatpush2.msra.mxu0 0.0
    %9666 = vmatprep.subr.mxu0 0.0
    %9667 = vmatpush2.msra.mxu0 0.0
    %9668 = vmatprep.subr.mxu0 0.0
    %9669 = vmatpush2.msra.mxu0 0.0
    %9670 = vmatprep.subr.mxu0 0.0
    %9671 = vmatpush2.msra.mxu0 0.0
    %9672 = vmatprep.subr.mxu0 0.0
    %9673 = vmatpush2.msra.mxu0 0.0
    %9674 = vmatprep.subr.mxu0 0.0
    %9675 = vmatpush2.msra.mxu0 0.0
    %9676 = vmatprep.subr.mxu0 0.0
    %9677 = vmatpush2.msra.mxu0 0.0
    %9678 = vmatprep.subr.mxu0 0.0
    %9679 = vmatpush2.msra.mxu0 0.0
    %9680 = vmatprep.subr.mxu0 0.0
    %9681 = vmatpush2.msra.mxu0 0.0
    %9682 = vmatprep.subr.mxu0 0.0
    %9683 = vmatpush2.msra.mxu0 0.0
    %9684 = vmatprep.subr.mxu0 0.0
    %9685 = vmatpush2.msra.mxu0 0.0
    %9686 = vmatprep.subr.mxu0 0.0
    %9687 = vmatpush2.msra.mxu0 0.0
    %9688 = vmatprep.subr.mxu0 0.0
    %9689 = vmatpush2.msra.mxu0 0.0
    %9690 = vmatprep.mubr.f32.mxu0 0.0
    %9691 = vmatmul.mubr.f32.gmra.mxu0 %v9624
    %v9692 = vpop.f32.mrf.mxu0
    %v9693 = vadd.f32 0.0, %v9692
    %v9694 = vpop.f32.mrf.mxu0
    %9695 = vdwg.mxu0
    %v9696 = vmul.f32 %v9693, %v9534
    %v9697 = vadd.f32 %v9621, %v9696
    %v9698 = vpack.c.bf16 %v9697, %v9537
    %v9699 = vlaneseq
    %v9700 = vshrl.u32 %v9699, 7
    %v9701 = vsub.s32 0, %v9700
    %v9702 = vrot.slane %v9002, %v9701
    %v9707 = vunpack.c.l.b16 %v8704
    %v9708 = vunpack.c.l.b16 %v8705
    %v9709 = vunpack.c.l.b16 %v8706
    %v9710 = vunpack.c.l.b16 %v8707
    %v9711 = vpack.c.b16 %v9708, %v9707
    %v9712 = vpack.c.b16 %v9710, %v9709
    %v9716 = vsel %vm376, %v9698, 0
    %9718 = vmatprep.subr.bf16.mxu0 0
    %9719 = vmatpush1.bf16.msra.mxu0 0
    %9720 = vmatprep.subr.bf16.mxu0 0
    %9721 = vmatpush1.bf16.msra.mxu0 0
    %9722 = vmatprep.subr.bf16.mxu0 0
    %9723 = vmatpush1.bf16.msra.mxu0 0
    %9724 = vmatprep.subr.bf16.mxu0 0
    %9725 = vmatpush1.bf16.msra.mxu0 0
    %9726 = vmatprep.subr.bf16.mxu0 0
    %9727 = vmatpush1.bf16.msra.mxu0 0
    %9728 = vmatprep.subr.bf16.mxu0 0
    %9729 = vmatpush1.bf16.msra.mxu0 0
    %9730 = vmatprep.subr.bf16.mxu0 0
    %9731 = vmatpush1.bf16.msra.mxu0 %v9712
    %9732 = vmatprep.subr.bf16.mxu0 0
    %9733 = vmatpush1.bf16.msra.mxu0 %v9711
    %9734 = vmatprep.subr.bf16.mxu0 0
    %9735 = vmatpush2.bf16.msra.mxu0 0
    %9736 = vmatprep.subr.bf16.mxu0 0
    %9737 = vmatpush2.bf16.msra.mxu0 0
    %9738 = vmatprep.subr.bf16.mxu0 0
    %9739 = vmatpush2.bf16.msra.mxu0 0
    %9740 = vmatprep.subr.bf16.mxu0 0
    %9741 = vmatpush2.bf16.msra.mxu0 0
    %9742 = vmatprep.subr.bf16.mxu0 0
    %9743 = vmatpush2.bf16.msra.mxu0 0
    %9744 = vmatprep.subr.bf16.mxu0 0
    %9745 = vmatpush2.bf16.msra.mxu0 0
    %9746 = vmatprep.subr.bf16.mxu0 0
    %9747 = vmatpush2.bf16.msra.mxu0 0
    %9748 = vmatprep.subr.bf16.mxu0 0
    %9749 = vmatpush2.bf16.msra.mxu0 0
    %9750 = vmatprep.mubr.bf16.mxu0 0
    %9751 = vmatmul.mubr.bf16.gmra.mxu0 %v9716
    %v9752 = vpop.f32.mrf.mxu0
    %v9753 = vadd.f32 %v9702, %v9752
    %v9754 = vpop.f32.mrf.mxu0
    %v9755 = vpop.f32.mrf.mxu0
    %v9756 = vadd.f32 %v9702, %v9755
    %v9757 = vpop.f32.mrf.mxu0
    %9758 = vdwg.mxu0
    %v9759 = vadd.f32 %v8694, %v9753
    %v9760 = vadd.f32 %v8695, %v9756
    %v9761 = vsel %vm376, %v9759, 0.0
    %9762 = vadd.xlane.f32.xlu0 %v9761
    %v9763 = vpop.xlane.xlu0 %9762
    %v9764 = vsel %vm376, %v9760, 0.0
    %9765 = vadd.xlane.f32.xlu0 %v9764
    %v9766 = vpop.xlane.xlu0 %9765
    %v9767 = vmul.f32 %v9763, %v1123
    %v9768 = vmul.f32 %v9766, %v1123
    %v9769 = vsub.f32 %v9759, %v9767
    %v9770 = vsub.f32 %v9760, %v9768
    %v9771 = vmul.f32 %v9769, %v9769
    %v9772 = vmul.f32 %v9770, %v9770
    %v9773 = vsel %vm376, %v9771, 0.0
    %9774 = vadd.xlane.f32.xlu0 %v9773
    %v9775 = vpop.xlane.xlu0 %9774
    %v9776 = vsel %vm376, %v9772, 0.0
    %9777 = vadd.xlane.f32.xlu0 %v9776
    %v9778 = vpop.xlane.xlu0 %9777
    %v9779 = vmul.f32 %v9775, %v1123
    %v9780 = vmul.f32 %v9778, %v1123
    %v9781 = vadd.f32 %v9779, 1e-05
    %v9782 = vadd.f32 %v9780, 1e-05
    %v9783 = vrsqrt.pop %v9781
    %v9784 = vrsqrt.pop %v9782
    %v9785 = vmul.f32 %v9769, %v9783
    %v9786 = vmul.f32 %v9770, %v9784
    %v9787 = vlaneseq
    %v9788 = vshrl.u32 %v9787, 7
    %v9789 = vsub.s32 1, %v9788
    %v9790 = vrot.slane %v9002, %v9789
    %v9791 = vmul.f32 %v9785, %v9790
    %v9792 = vmul.f32 %v9786, %v9790
    %v9793 = vlaneseq
    %v9794 = vshrl.u32 %v9793, 7
    %v9795 = vsub.s32 2, %v9794
    %v9796 = vrot.slane %v9002, %v9795
    %v9797 = vadd.f32 %v9791, %v9796
    %v9798 = vadd.f32 %v9792, %v9796
    %v9799 = vpack.c.bf16 %v9798, %v9797
    %v9802 = vlaneseq
    %v9803 = vshrl.u32 %v9802, 7
    %v9804 = vsub.s32 0, %v9803
    %v9805 = vrot.slane %v8742, %v9804
    %v9806 = vlaneseq
    %v9807 = vshrl.u32 %v9806, 7
    %v9808 = vsub.s32 1, %v9807
    %v9809 = vrot.slane %v8742, %v9808
    %v9810 = vlaneseq
    %v9811 = vshrl.u32 %v9810, 7
    %v9812 = vsub.s32 2, %v9811
    %v9813 = vrot.slane %v8742, %v9812
    %v9814 = vlaneseq
    %v9815 = vshrl.u32 %v9814, 7
    %v9816 = vsub.s32 3, %v9815
    %v9817 = vrot.slane %v8742, %v9816
    %v9818 = vlaneseq
    %v9819 = vshrl.u32 %v9818, 7
    %v9820 = vsub.s32 4, %v9819
    %v9821 = vrot.slane %v8742, %v9820
    %v9822 = vlaneseq
    %v9823 = vshrl.u32 %v9822, 7
    %v9824 = vsub.s32 5, %v9823
    %v9825 = vrot.slane %v8742, %v9824
    %v9826 = vlaneseq
    %v9827 = vshrl.u32 %v9826, 7
    %v9828 = vsub.s32 6, %v9827
    %v9829 = vrot.slane %v8742, %v9828
    %v9830 = vlaneseq
    %v9831 = vshrl.u32 %v9830, 7
    %v9832 = vsub.s32 7, %v9831
    %v9833 = vrot.slane %v8742, %v9832
    %v9834 = vlaneseq
    %v9835 = vshrl.u32 %v9834, 7
    %v9836 = vsub.s32 0, %v9835
    %v9837 = vrot.slane %v8743, %v9836
    %v9838 = vlaneseq
    %v9839 = vshrl.u32 %v9838, 7
    %v9840 = vsub.s32 1, %v9839
    %v9841 = vrot.slane %v8743, %v9840
    %v9842 = vlaneseq
    %v9843 = vshrl.u32 %v9842, 7
    %v9844 = vsub.s32 2, %v9843
    %v9845 = vrot.slane %v8743, %v9844
    %v9846 = vlaneseq
    %v9847 = vshrl.u32 %v9846, 7
    %v9848 = vsub.s32 3, %v9847
    %v9849 = vrot.slane %v8743, %v9848
    %v9850 = vlaneseq
    %v9851 = vshrl.u32 %v9850, 7
    %v9852 = vsub.s32 4, %v9851
    %v9853 = vrot.slane %v8743, %v9852
    %v9854 = vlaneseq
    %v9855 = vshrl.u32 %v9854, 7
    %v9856 = vsub.s32 5, %v9855
    %v9857 = vrot.slane %v8743, %v9856
    %v9858 = vlaneseq
    %v9859 = vshrl.u32 %v9858, 7
    %v9860 = vsub.s32 6, %v9859
    %v9861 = vrot.slane %v8743, %v9860
    %v9862 = vlaneseq
    %v9863 = vshrl.u32 %v9862, 7
    %v9864 = vsub.s32 7, %v9863
    %v9865 = vrot.slane %v8743, %v9864
    %v9914 = vunpack.c.l.b16 %v8709
    %v9915 = vunpack.c.h.b16 %v8709
    %v9916 = vunpack.c.l.b16 %v8710
    %v9917 = vunpack.c.h.b16 %v8710
    %v9918 = vunpack.c.l.b16 %v8711
    %v9919 = vunpack.c.h.b16 %v8711
    %v9920 = vunpack.c.l.b16 %v8712
    %v9921 = vunpack.c.h.b16 %v8712
    %v9922 = vunpack.c.l.b16 %v8713
    %v9923 = vunpack.c.h.b16 %v8713
    %v9924 = vunpack.c.l.b16 %v8714
    %v9925 = vunpack.c.h.b16 %v8714
    %v9926 = vunpack.c.l.b16 %v8715
    %v9927 = vunpack.c.h.b16 %v8715
    %v9928 = vunpack.c.l.b16 %v8716
    %v9929 = vunpack.c.h.b16 %v8716
    %v9930 = vunpack.c.l.b16 %v8717
    %v9931 = vunpack.c.h.b16 %v8717
    %v9932 = vunpack.c.l.b16 %v8718
    %v9933 = vunpack.c.h.b16 %v8718
    %v9934 = vunpack.c.l.b16 %v8719
    %v9935 = vunpack.c.h.b16 %v8719
    %v9936 = vunpack.c.l.b16 %v8720
    %v9937 = vunpack.c.h.b16 %v8720
    %v9938 = vunpack.c.l.b16 %v8721
    %v9939 = vunpack.c.h.b16 %v8721
    %v9940 = vunpack.c.l.b16 %v8722
    %v9941 = vunpack.c.h.b16 %v8722
    %v9942 = vunpack.c.l.b16 %v8723
    %v9943 = vunpack.c.h.b16 %v8723
    %v9944 = vunpack.c.l.b16 %v8724
    %v9945 = vunpack.c.h.b16 %v8724
    %v9946 = vunpack.c.l.b16 %v8725
    %v9947 = vunpack.c.h.b16 %v8725
    %v9948 = vunpack.c.l.b16 %v8726
    %v9949 = vunpack.c.h.b16 %v8726
    %v9950 = vunpack.c.l.b16 %v8727
    %v9951 = vunpack.c.h.b16 %v8727
    %v9952 = vunpack.c.l.b16 %v8728
    %v9953 = vunpack.c.h.b16 %v8728
    %v9954 = vunpack.c.l.b16 %v8729
    %v9955 = vunpack.c.h.b16 %v8729
    %v9956 = vunpack.c.l.b16 %v8730
    %v9957 = vunpack.c.h.b16 %v8730
    %v9958 = vunpack.c.l.b16 %v8731
    %v9959 = vunpack.c.h.b16 %v8731
    %v9960 = vunpack.c.l.b16 %v8732
    %v9961 = vunpack.c.h.b16 %v8732
    %v9962 = vunpack.c.l.b16 %v8733
    %v9963 = vunpack.c.h.b16 %v8733
    %v9964 = vunpack.c.l.b16 %v8734
    %v9965 = vunpack.c.h.b16 %v8734
    %v9966 = vunpack.c.l.b16 %v8735
    %v9967 = vunpack.c.h.b16 %v8735
    %v9968 = vunpack.c.l.b16 %v8736
    %v9969 = vunpack.c.h.b16 %v8736
    %v9970 = vunpack.c.l.b16 %v8737
    %v9971 = vunpack.c.h.b16 %v8737
    %v9972 = vunpack.c.l.b16 %v8738
    %v9973 = vunpack.c.h.b16 %v8738
    %v9974 = vunpack.c.l.b16 %v8739
    %v9975 = vunpack.c.h.b16 %v8739
    %v9976 = vunpack.c.l.b16 %v8740
    %v9977 = vunpack.c.h.b16 %v8740
    %v9978 = vpack.c.b16 %v9930, %v9914
    %v9979 = vpack.c.b16 %v9931, %v9915
    %v9980 = vpack.c.b16 %v9932, %v9916
    %v9981 = vpack.c.b16 %v9933, %v9917
    %v9982 = vpack.c.b16 %v9934, %v9918
    %v9983 = vpack.c.b16 %v9935, %v9919
    %v9984 = vpack.c.b16 %v9936, %v9920
    %v9985 = vpack.c.b16 %v9937, %v9921
    %v9986 = vpack.c.b16 %v9938, %v9922
    %v9987 = vpack.c.b16 %v9939, %v9923
    %v9988 = vpack.c.b16 %v9940, %v9924
    %v9989 = vpack.c.b16 %v9941, %v9925
    %v9990 = vpack.c.b16 %v9942, %v9926
    %v9991 = vpack.c.b16 %v9943, %v9927
    %v9992 = vpack.c.b16 %v9944, %v9928
    %v9993 = vpack.c.b16 %v9945, %v9929
    %v9994 = vpack.c.b16 %v9962, %v9946
    %v9995 = vpack.c.b16 %v9963, %v9947
    %v9996 = vpack.c.b16 %v9964, %v9948
    %v9997 = vpack.c.b16 %v9965, %v9949
    %v9998 = vpack.c.b16 %v9966, %v9950
    %v9999 = vpack.c.b16 %v9967, %v9951
    %v10000 = vpack.c.b16 %v9968, %v9952
    %v10001 = vpack.c.b16 %v9969, %v9953
    %v10002 = vpack.c.b16 %v9970, %v9954
    %v10003 = vpack.c.b16 %v9971, %v9955
    %v10004 = vpack.c.b16 %v9972, %v9956
    %v10005 = vpack.c.b16 %v9973, %v9957
    %v10006 = vpack.c.b16 %v9974, %v9958
    %v10007 = vpack.c.b16 %v9975, %v9959
    %v10008 = vpack.c.b16 %v9976, %v9960
    %v10009 = vpack.c.b16 %v9977, %v9961
    %v10043 = vsel %vm376, %v9799, 0
    %10045 = vmatprep.subr.bf16.mxu0 0
    %10046 = vmatpush1.bf16.msra.mxu0 0
    %10047 = vmatprep.subr.bf16.mxu0 0
    %10048 = vmatpush1.bf16.msra.mxu0 0
    %10049 = vmatprep.subr.bf16.mxu0 0
    %10050 = vmatpush1.bf16.msra.mxu0 0
    %10051 = vmatprep.subr.bf16.mxu0 0
    %10052 = vmatpush1.bf16.msra.mxu0 0
    %10053 = vmatprep.subr.bf16.mxu0 0
    %10054 = vmatpush1.bf16.msra.mxu0 0
    %10055 = vmatprep.subr.bf16.mxu0 0
    %10056 = vmatpush1.bf16.msra.mxu0 0
    %10057 = vmatprep.subr.bf16.mxu0 %v9995
    %10058 = vmatpush1.bf16.msra.mxu0 %v9994
    %10059 = vmatprep.subr.bf16.mxu0 %v9979
    %10060 = vmatpush1.bf16.msra.mxu0 %v9978
    %10061 = vmatprep.subr.bf16.mxu0 0
    %10062 = vmatpush2.bf16.msra.mxu0 0
    %10063 = vmatprep.subr.bf16.mxu0 0
    %10064 = vmatpush2.bf16.msra.mxu0 0
    %10065 = vmatprep.subr.bf16.mxu0 0
    %10066 = vmatpush2.bf16.msra.mxu0 0
    %10067 = vmatprep.subr.bf16.mxu0 0
    %10068 = vmatpush2.bf16.msra.mxu0 0
    %10069 = vmatprep.subr.bf16.mxu0 0
    %10070 = vmatpush2.bf16.msra.mxu0 0
    %10071 = vmatprep.subr.bf16.mxu0 0
    %10072 = vmatpush2.bf16.msra.mxu0 0
    %10073 = vmatprep.subr.bf16.mxu0 0
    %10074 = vmatpush2.bf16.msra.mxu0 0
    %10075 = vmatprep.subr.bf16.mxu0 0
    %10076 = vmatpush2.bf16.msra.mxu0 0
    %10077 = vmatprep.mubr.bf16.mxu0 0
    %10078 = vmatmul.mubr.bf16.gmra.mxu0 %v10043
    %v10079 = vpop.f32.mrf.mxu0
    %v10080 = vadd.f32 %v9805, %v10079
    %v10081 = vpop.f32.mrf.mxu0
    %v10082 = vadd.f32 %v9809, %v10081
    %v10083 = vpop.f32.mrf.mxu0
    %v10084 = vadd.f32 %v9805, %v10083
    %v10085 = vpop.f32.mrf.mxu0
    %v10086 = vadd.f32 %v9809, %v10085
    %10087 = vdwg.mxu0
    %10088 = vmatprep.subr.bf16.mxu0 0
    %10089 = vmatpush1.bf16.msra.mxu0 0
    %10090 = vmatprep.subr.bf16.mxu0 0
    %10091 = vmatpush1.bf16.msra.mxu0 0
    %10092 = vmatprep.subr.bf16.mxu0 0
    %10093 = vmatpush1.bf16.msra.mxu0 0
    %10094 = vmatprep.subr.bf16.mxu0 0
    %10095 = vmatpush1.bf16.msra.mxu0 0
    %10096 = vmatprep.subr.bf16.mxu0 0
    %10097 = vmatpush1.bf16.msra.mxu0 0
    %10098 = vmatprep.subr.bf16.mxu0 0
    %10099 = vmatpush1.bf16.msra.mxu0 0
    %10100 = vmatprep.subr.bf16.mxu0 %v9997
    %10101 = vmatpush1.bf16.msra.mxu0 %v9996
    %10102 = vmatprep.subr.bf16.mxu0 %v9981
    %10103 = vmatpush1.bf16.msra.mxu0 %v9980
    %10104 = vmatprep.subr.bf16.mxu0 0
    %10105 = vmatpush2.bf16.msra.mxu0 0
    %10106 = vmatprep.subr.bf16.mxu0 0
    %10107 = vmatpush2.bf16.msra.mxu0 0
    %10108 = vmatprep.subr.bf16.mxu0 0
    %10109 = vmatpush2.bf16.msra.mxu0 0
    %10110 = vmatprep.subr.bf16.mxu0 0
    %10111 = vmatpush2.bf16.msra.mxu0 0
    %10112 = vmatprep.subr.bf16.mxu0 0
    %10113 = vmatpush2.bf16.msra.mxu0 0
    %10114 = vmatprep.subr.bf16.mxu0 0
    %10115 = vmatpush2.bf16.msra.mxu0 0
    %10116 = vmatprep.subr.bf16.mxu0 0
    %10117 = vmatpush2.bf16.msra.mxu0 0
    %10118 = vmatprep.subr.bf16.mxu0 0
    %10119 = vmatpush2.bf16.msra.mxu0 0
    %10120 = vmatprep.mubr.bf16.mxu0 0
    %10121 = vmatmul.mubr.bf16.gmra.mxu0 %v10043
    %v10122 = vpop.f32.mrf.mxu0
    %v10123 = vadd.f32 %v9813, %v10122
    %v10124 = vpop.f32.mrf.mxu0
    %v10125 = vadd.f32 %v9817, %v10124
    %v10126 = vpop.f32.mrf.mxu0
    %v10127 = vadd.f32 %v9813, %v10126
    %v10128 = vpop.f32.mrf.mxu0
    %v10129 = vadd.f32 %v9817, %v10128
    %10130 = vdwg.mxu0
    %10131 = vmatprep.subr.bf16.mxu0 0
    %10132 = vmatpush1.bf16.msra.mxu0 0
    %10133 = vmatprep.subr.bf16.mxu0 0
    %10134 = vmatpush1.bf16.msra.mxu0 0
    %10135 = vmatprep.subr.bf16.mxu0 0
    %10136 = vmatpush1.bf16.msra.mxu0 0
    %10137 = vmatprep.subr.bf16.mxu0 0
    %10138 = vmatpush1.bf16.msra.mxu0 0
    %10139 = vmatprep.subr.bf16.mxu0 0
    %10140 = vmatpush1.bf16.msra.mxu0 0
    %10141 = vmatprep.subr.bf16.mxu0 0
    %10142 = vmatpush1.bf16.msra.mxu0 0
    %10143 = vmatprep.subr.bf16.mxu0 %v9999
    %10144 = vmatpush1.bf16.msra.mxu0 %v9998
    %10145 = vmatprep.subr.bf16.mxu0 %v9983
    %10146 = vmatpush1.bf16.msra.mxu0 %v9982
    %10147 = vmatprep.subr.bf16.mxu0 0
    %10148 = vmatpush2.bf16.msra.mxu0 0
    %10149 = vmatprep.subr.bf16.mxu0 0
    %10150 = vmatpush2.bf16.msra.mxu0 0
    %10151 = vmatprep.subr.bf16.mxu0 0
    %10152 = vmatpush2.bf16.msra.mxu0 0
    %10153 = vmatprep.subr.bf16.mxu0 0
    %10154 = vmatpush2.bf16.msra.mxu0 0
    %10155 = vmatprep.subr.bf16.mxu0 0
    %10156 = vmatpush2.bf16.msra.mxu0 0
    %10157 = vmatprep.subr.bf16.mxu0 0
    %10158 = vmatpush2.bf16.msra.mxu0 0
    %10159 = vmatprep.subr.bf16.mxu0 0
    %10160 = vmatpush2.bf16.msra.mxu0 0
    %10161 = vmatprep.subr.bf16.mxu0 0
    %10162 = vmatpush2.bf16.msra.mxu0 0
    %10163 = vmatprep.mubr.bf16.mxu0 0
    %10164 = vmatmul.mubr.bf16.gmra.mxu0 %v10043
    %v10165 = vpop.f32.mrf.mxu0
    %v10166 = vadd.f32 %v9821, %v10165
    %v10167 = vpop.f32.mrf.mxu0
    %v10168 = vadd.f32 %v9825, %v10167
    %v10169 = vpop.f32.mrf.mxu0
    %v10170 = vadd.f32 %v9821, %v10169
    %v10171 = vpop.f32.mrf.mxu0
    %v10172 = vadd.f32 %v9825, %v10171
    %10173 = vdwg.mxu0
    %10174 = vmatprep.subr.bf16.mxu0 0
    %10175 = vmatpush1.bf16.msra.mxu0 0
    %10176 = vmatprep.subr.bf16.mxu0 0
    %10177 = vmatpush1.bf16.msra.mxu0 0
    %10178 = vmatprep.subr.bf16.mxu0 0
    %10179 = vmatpush1.bf16.msra.mxu0 0
    %10180 = vmatprep.subr.bf16.mxu0 0
    %10181 = vmatpush1.bf16.msra.mxu0 0
    %10182 = vmatprep.subr.bf16.mxu0 0
    %10183 = vmatpush1.bf16.msra.mxu0 0
    %10184 = vmatprep.subr.bf16.mxu0 0
    %10185 = vmatpush1.bf16.msra.mxu0 0
    %10186 = vmatprep.subr.bf16.mxu0 %v10001
    %10187 = vmatpush1.bf16.msra.mxu0 %v10000
    %10188 = vmatprep.subr.bf16.mxu0 %v9985
    %10189 = vmatpush1.bf16.msra.mxu0 %v9984
    %10190 = vmatprep.subr.bf16.mxu0 0
    %10191 = vmatpush2.bf16.msra.mxu0 0
    %10192 = vmatprep.subr.bf16.mxu0 0
    %10193 = vmatpush2.bf16.msra.mxu0 0
    %10194 = vmatprep.subr.bf16.mxu0 0
    %10195 = vmatpush2.bf16.msra.mxu0 0
    %10196 = vmatprep.subr.bf16.mxu0 0
    %10197 = vmatpush2.bf16.msra.mxu0 0
    %10198 = vmatprep.subr.bf16.mxu0 0
    %10199 = vmatpush2.bf16.msra.mxu0 0
    %10200 = vmatprep.subr.bf16.mxu0 0
    %10201 = vmatpush2.bf16.msra.mxu0 0
    %10202 = vmatprep.subr.bf16.mxu0 0
    %10203 = vmatpush2.bf16.msra.mxu0 0
    %10204 = vmatprep.subr.bf16.mxu0 0
    %10205 = vmatpush2.bf16.msra.mxu0 0
    %10206 = vmatprep.mubr.bf16.mxu0 0
    %10207 = vmatmul.mubr.bf16.gmra.mxu0 %v10043
    %v10208 = vpop.f32.mrf.mxu0
    %v10209 = vadd.f32 %v9829, %v10208
    %v10210 = vpop.f32.mrf.mxu0
    %v10211 = vadd.f32 %v9833, %v10210
    %v10212 = vpop.f32.mrf.mxu0
    %v10213 = vadd.f32 %v9829, %v10212
    %v10214 = vpop.f32.mrf.mxu0
    %v10215 = vadd.f32 %v9833, %v10214
    %10216 = vdwg.mxu0
    %10217 = vmatprep.subr.bf16.mxu0 0
    %10218 = vmatpush1.bf16.msra.mxu0 0
    %10219 = vmatprep.subr.bf16.mxu0 0
    %10220 = vmatpush1.bf16.msra.mxu0 0
    %10221 = vmatprep.subr.bf16.mxu0 0
    %10222 = vmatpush1.bf16.msra.mxu0 0
    %10223 = vmatprep.subr.bf16.mxu0 0
    %10224 = vmatpush1.bf16.msra.mxu0 0
    %10225 = vmatprep.subr.bf16.mxu0 0
    %10226 = vmatpush1.bf16.msra.mxu0 0
    %10227 = vmatprep.subr.bf16.mxu0 0
    %10228 = vmatpush1.bf16.msra.mxu0 0
    %10229 = vmatprep.subr.bf16.mxu0 %v10003
    %10230 = vmatpush1.bf16.msra.mxu0 %v10002
    %10231 = vmatprep.subr.bf16.mxu0 %v9987
    %10232 = vmatpush1.bf16.msra.mxu0 %v9986
    %10233 = vmatprep.subr.bf16.mxu0 0
    %10234 = vmatpush2.bf16.msra.mxu0 0
    %10235 = vmatprep.subr.bf16.mxu0 0
    %10236 = vmatpush2.bf16.msra.mxu0 0
    %10237 = vmatprep.subr.bf16.mxu0 0
    %10238 = vmatpush2.bf16.msra.mxu0 0
    %10239 = vmatprep.subr.bf16.mxu0 0
    %10240 = vmatpush2.bf16.msra.mxu0 0
    %10241 = vmatprep.subr.bf16.mxu0 0
    %10242 = vmatpush2.bf16.msra.mxu0 0
    %10243 = vmatprep.subr.bf16.mxu0 0
    %10244 = vmatpush2.bf16.msra.mxu0 0
    %10245 = vmatprep.subr.bf16.mxu0 0
    %10246 = vmatpush2.bf16.msra.mxu0 0
    %10247 = vmatprep.subr.bf16.mxu0 0
    %10248 = vmatpush2.bf16.msra.mxu0 0
    %10249 = vmatprep.mubr.bf16.mxu0 0
    %10250 = vmatmul.mubr.bf16.gmra.mxu0 %v10043
    %v10251 = vpop.f32.mrf.mxu0
    %v10252 = vadd.f32 %v9837, %v10251
    %v10253 = vpop.f32.mrf.mxu0
    %v10254 = vadd.f32 %v9841, %v10253
    %v10255 = vpop.f32.mrf.mxu0
    %v10256 = vadd.f32 %v9837, %v10255
    %v10257 = vpop.f32.mrf.mxu0
    %v10258 = vadd.f32 %v9841, %v10257
    %10259 = vdwg.mxu0
    %10260 = vmatprep.subr.bf16.mxu0 0
    %10261 = vmatpush1.bf16.msra.mxu0 0
    %10262 = vmatprep.subr.bf16.mxu0 0
    %10263 = vmatpush1.bf16.msra.mxu0 0
    %10264 = vmatprep.subr.bf16.mxu0 0
    %10265 = vmatpush1.bf16.msra.mxu0 0
    %10266 = vmatprep.subr.bf16.mxu0 0
    %10267 = vmatpush1.bf16.msra.mxu0 0
    %10268 = vmatprep.subr.bf16.mxu0 0
    %10269 = vmatpush1.bf16.msra.mxu0 0
    %10270 = vmatprep.subr.bf16.mxu0 0
    %10271 = vmatpush1.bf16.msra.mxu0 0
    %10272 = vmatprep.subr.bf16.mxu0 %v10005
    %10273 = vmatpush1.bf16.msra.mxu0 %v10004
    %10274 = vmatprep.subr.bf16.mxu0 %v9989
    %10275 = vmatpush1.bf16.msra.mxu0 %v9988
    %10276 = vmatprep.subr.bf16.mxu0 0
    %10277 = vmatpush2.bf16.msra.mxu0 0
    %10278 = vmatprep.subr.bf16.mxu0 0
    %10279 = vmatpush2.bf16.msra.mxu0 0
    %10280 = vmatprep.subr.bf16.mxu0 0
    %10281 = vmatpush2.bf16.msra.mxu0 0
    %10282 = vmatprep.subr.bf16.mxu0 0
    %10283 = vmatpush2.bf16.msra.mxu0 0
    %10284 = vmatprep.subr.bf16.mxu0 0
    %10285 = vmatpush2.bf16.msra.mxu0 0
    %10286 = vmatprep.subr.bf16.mxu0 0
    %10287 = vmatpush2.bf16.msra.mxu0 0
    %10288 = vmatprep.subr.bf16.mxu0 0
    %10289 = vmatpush2.bf16.msra.mxu0 0
    %10290 = vmatprep.subr.bf16.mxu0 0
    %10291 = vmatpush2.bf16.msra.mxu0 0
    %10292 = vmatprep.mubr.bf16.mxu0 0
    %10293 = vmatmul.mubr.bf16.gmra.mxu0 %v10043
    %v10294 = vpop.f32.mrf.mxu0
    %v10295 = vadd.f32 %v9845, %v10294
    %v10296 = vpop.f32.mrf.mxu0
    %v10297 = vadd.f32 %v9849, %v10296
    %v10298 = vpop.f32.mrf.mxu0
    %v10299 = vadd.f32 %v9845, %v10298
    %v10300 = vpop.f32.mrf.mxu0
    %v10301 = vadd.f32 %v9849, %v10300
    %10302 = vdwg.mxu0
    %10303 = vmatprep.subr.bf16.mxu0 0
    %10304 = vmatpush1.bf16.msra.mxu0 0
    %10305 = vmatprep.subr.bf16.mxu0 0
    %10306 = vmatpush1.bf16.msra.mxu0 0
    %10307 = vmatprep.subr.bf16.mxu0 0
    %10308 = vmatpush1.bf16.msra.mxu0 0
    %10309 = vmatprep.subr.bf16.mxu0 0
    %10310 = vmatpush1.bf16.msra.mxu0 0
    %10311 = vmatprep.subr.bf16.mxu0 0
    %10312 = vmatpush1.bf16.msra.mxu0 0
    %10313 = vmatprep.subr.bf16.mxu0 0
    %10314 = vmatpush1.bf16.msra.mxu0 0
    %10315 = vmatprep.subr.bf16.mxu0 %v10007
    %10316 = vmatpush1.bf16.msra.mxu0 %v10006
    %10317 = vmatprep.subr.bf16.mxu0 %v9991
    %10318 = vmatpush1.bf16.msra.mxu0 %v9990
    %10319 = vmatprep.subr.bf16.mxu0 0
    %10320 = vmatpush2.bf16.msra.mxu0 0
    %10321 = vmatprep.subr.bf16.mxu0 0
    %10322 = vmatpush2.bf16.msra.mxu0 0
    %10323 = vmatprep.subr.bf16.mxu0 0
    %10324 = vmatpush2.bf16.msra.mxu0 0
    %10325 = vmatprep.subr.bf16.mxu0 0
    %10326 = vmatpush2.bf16.msra.mxu0 0
    %10327 = vmatprep.subr.bf16.mxu0 0
    %10328 = vmatpush2.bf16.msra.mxu0 0
    %10329 = vmatprep.subr.bf16.mxu0 0
    %10330 = vmatpush2.bf16.msra.mxu0 0
    %10331 = vmatprep.subr.bf16.mxu0 0
    %10332 = vmatpush2.bf16.msra.mxu0 0
    %10333 = vmatprep.subr.bf16.mxu0 0
    %10334 = vmatpush2.bf16.msra.mxu0 0
    %10335 = vmatprep.mubr.bf16.mxu0 0
    %10336 = vmatmul.mubr.bf16.gmra.mxu0 %v10043
    %v10337 = vpop.f32.mrf.mxu0
    %v10338 = vadd.f32 %v9853, %v10337
    %v10339 = vpop.f32.mrf.mxu0
    %v10340 = vadd.f32 %v9857, %v10339
    %v10341 = vpop.f32.mrf.mxu0
    %v10342 = vadd.f32 %v9853, %v10341
    %v10343 = vpop.f32.mrf.mxu0
    %v10344 = vadd.f32 %v9857, %v10343
    %10345 = vdwg.mxu0
    %10346 = vmatprep.subr.bf16.mxu0 0
    %10347 = vmatpush1.bf16.msra.mxu0 0
    %10348 = vmatprep.subr.bf16.mxu0 0
    %10349 = vmatpush1.bf16.msra.mxu0 0
    %10350 = vmatprep.subr.bf16.mxu0 0
    %10351 = vmatpush1.bf16.msra.mxu0 0
    %10352 = vmatprep.subr.bf16.mxu0 0
    %10353 = vmatpush1.bf16.msra.mxu0 0
    %10354 = vmatprep.subr.bf16.mxu0 0
    %10355 = vmatpush1.bf16.msra.mxu0 0
    %10356 = vmatprep.subr.bf16.mxu0 0
    %10357 = vmatpush1.bf16.msra.mxu0 0
    %10358 = vmatprep.subr.bf16.mxu0 %v10009
    %10359 = vmatpush1.bf16.msra.mxu0 %v10008
    %10360 = vmatprep.subr.bf16.mxu0 %v9993
    %10361 = vmatpush1.bf16.msra.mxu0 %v9992
    %10362 = vmatprep.subr.bf16.mxu0 0
    %10363 = vmatpush2.bf16.msra.mxu0 0
    %10364 = vmatprep.subr.bf16.mxu0 0
    %10365 = vmatpush2.bf16.msra.mxu0 0
    %10366 = vmatprep.subr.bf16.mxu0 0
    %10367 = vmatpush2.bf16.msra.mxu0 0
    %10368 = vmatprep.subr.bf16.mxu0 0
    %10369 = vmatpush2.bf16.msra.mxu0 0
    %10370 = vmatprep.subr.bf16.mxu0 0
    %10371 = vmatpush2.bf16.msra.mxu0 0
    %10372 = vmatprep.subr.bf16.mxu0 0
    %10373 = vmatpush2.bf16.msra.mxu0 0
    %10374 = vmatprep.subr.bf16.mxu0 0
    %10375 = vmatpush2.bf16.msra.mxu0 0
    %10376 = vmatprep.subr.bf16.mxu0 0
    %10377 = vmatpush2.bf16.msra.mxu0 0
    %10378 = vmatprep.mubr.bf16.mxu0 0
    %10379 = vmatmul.mubr.bf16.gmra.mxu0 %v10043
    %v10380 = vpop.f32.mrf.mxu0
    %v10381 = vadd.f32 %v9861, %v10380
    %v10382 = vpop.f32.mrf.mxu0
    %v10383 = vadd.f32 %v9865, %v10382
    %v10384 = vpop.f32.mrf.mxu0
    %v10385 = vadd.f32 %v9861, %v10384
    %v10386 = vpop.f32.mrf.mxu0
    %v10387 = vadd.f32 %v9865, %v10386
    %10388 = vdwg.mxu0
    %v10389 = vmax.f32 %v10080, 0.0
    %v10390 = vmax.f32 %v10082, 0.0
    %v10391 = vmax.f32 %v10123, 0.0
    %v10392 = vmax.f32 %v10125, 0.0
    %v10393 = vmax.f32 %v10166, 0.0
    %v10394 = vmax.f32 %v10168, 0.0
    %v10395 = vmax.f32 %v10209, 0.0
    %v10396 = vmax.f32 %v10211, 0.0
    %v10397 = vmax.f32 %v10252, 0.0
    %v10398 = vmax.f32 %v10254, 0.0
    %v10399 = vmax.f32 %v10295, 0.0
    %v10400 = vmax.f32 %v10297, 0.0
    %v10401 = vmax.f32 %v10338, 0.0
    %v10402 = vmax.f32 %v10340, 0.0
    %v10403 = vmax.f32 %v10381, 0.0
    %v10404 = vmax.f32 %v10383, 0.0
    %v10405 = vmax.f32 %v10084, 0.0
    %v10406 = vmax.f32 %v10086, 0.0
    %v10407 = vmax.f32 %v10127, 0.0
    %v10408 = vmax.f32 %v10129, 0.0
    %v10409 = vmax.f32 %v10170, 0.0
    %v10410 = vmax.f32 %v10172, 0.0
    %v10411 = vmax.f32 %v10213, 0.0
    %v10412 = vmax.f32 %v10215, 0.0
    %v10413 = vmax.f32 %v10256, 0.0
    %v10414 = vmax.f32 %v10258, 0.0
    %v10415 = vmax.f32 %v10299, 0.0
    %v10416 = vmax.f32 %v10301, 0.0
    %v10417 = vmax.f32 %v10342, 0.0
    %v10418 = vmax.f32 %v10344, 0.0
    %v10419 = vmax.f32 %v10385, 0.0
    %v10420 = vmax.f32 %v10387, 0.0
    %v10421 = vpack.c.bf16 %v10405, %v10389
    %v10422 = vpack.c.bf16 %v10406, %v10390
    %v10423 = vpack.c.bf16 %v10407, %v10391
    %v10424 = vpack.c.bf16 %v10408, %v10392
    %v10425 = vpack.c.bf16 %v10409, %v10393
    %v10426 = vpack.c.bf16 %v10410, %v10394
    %v10427 = vpack.c.bf16 %v10411, %v10395
    %v10428 = vpack.c.bf16 %v10412, %v10396
    %v10429 = vpack.c.bf16 %v10413, %v10397
    %v10430 = vpack.c.bf16 %v10414, %v10398
    %v10431 = vpack.c.bf16 %v10415, %v10399
    %v10432 = vpack.c.bf16 %v10416, %v10400
    %v10433 = vpack.c.bf16 %v10417, %v10401
    %v10434 = vpack.c.bf16 %v10418, %v10402
    %v10435 = vpack.c.bf16 %v10419, %v10403
    %v10436 = vpack.c.bf16 %v10420, %v10404
    %v10437 = vlaneseq
    %v10438 = vshrl.u32 %v10437, 7
    %v10439 = vsub.s32 3, %v10438
    %v10440 = vrot.slane %v9002, %v10439
    %v10697 = vunpack.c.l.b16 %v8745
    %v10698 = vunpack.c.l.b16 %v8746
    %v10699 = vunpack.c.l.b16 %v8747
    %v10700 = vunpack.c.l.b16 %v8748
    %v10701 = vunpack.c.l.b16 %v8749
    %v10702 = vunpack.c.l.b16 %v8750
    %v10703 = vunpack.c.l.b16 %v8751
    %v10704 = vunpack.c.l.b16 %v8752
    %v10705 = vunpack.c.l.b16 %v8753
    %v10706 = vunpack.c.l.b16 %v8754
    %v10707 = vunpack.c.l.b16 %v8755
    %v10708 = vunpack.c.l.b16 %v8756
    %v10709 = vunpack.c.l.b16 %v8757
    %v10710 = vunpack.c.l.b16 %v8758
    %v10711 = vunpack.c.l.b16 %v8759
    %v10712 = vunpack.c.l.b16 %v8760
    %v10713 = vunpack.c.l.b16 %v8761
    %v10714 = vunpack.c.l.b16 %v8762
    %v10715 = vunpack.c.l.b16 %v8763
    %v10716 = vunpack.c.l.b16 %v8764
    %v10717 = vunpack.c.l.b16 %v8765
    %v10718 = vunpack.c.l.b16 %v8766
    %v10719 = vunpack.c.l.b16 %v8767
    %v10720 = vunpack.c.l.b16 %v8768
    %v10721 = vunpack.c.l.b16 %v8769
    %v10722 = vunpack.c.l.b16 %v8770
    %v10723 = vunpack.c.l.b16 %v8771
    %v10724 = vunpack.c.l.b16 %v8772
    %v10725 = vunpack.c.l.b16 %v8773
    %v10726 = vunpack.c.l.b16 %v8774
    %v10727 = vunpack.c.l.b16 %v8775
    %v10728 = vunpack.c.l.b16 %v8776
    %v10729 = vunpack.c.l.b16 %v8777
    %v10730 = vunpack.c.l.b16 %v8778
    %v10731 = vunpack.c.l.b16 %v8779
    %v10732 = vunpack.c.l.b16 %v8780
    %v10733 = vunpack.c.l.b16 %v8781
    %v10734 = vunpack.c.l.b16 %v8782
    %v10735 = vunpack.c.l.b16 %v8783
    %v10736 = vunpack.c.l.b16 %v8784
    %v10737 = vunpack.c.l.b16 %v8785
    %v10738 = vunpack.c.l.b16 %v8786
    %v10739 = vunpack.c.l.b16 %v8787
    %v10740 = vunpack.c.l.b16 %v8788
    %v10741 = vunpack.c.l.b16 %v8789
    %v10742 = vunpack.c.l.b16 %v8790
    %v10743 = vunpack.c.l.b16 %v8791
    %v10744 = vunpack.c.l.b16 %v8792
    %v10745 = vunpack.c.l.b16 %v8793
    %v10746 = vunpack.c.l.b16 %v8794
    %v10747 = vunpack.c.l.b16 %v8795
    %v10748 = vunpack.c.l.b16 %v8796
    %v10749 = vunpack.c.l.b16 %v8797
    %v10750 = vunpack.c.l.b16 %v8798
    %v10751 = vunpack.c.l.b16 %v8799
    %v10752 = vunpack.c.l.b16 %v8800
    %v10753 = vunpack.c.l.b16 %v8801
    %v10754 = vunpack.c.l.b16 %v8802
    %v10755 = vunpack.c.l.b16 %v8803
    %v10756 = vunpack.c.l.b16 %v8804
    %v10757 = vunpack.c.l.b16 %v8805
    %v10758 = vunpack.c.l.b16 %v8806
    %v10759 = vunpack.c.l.b16 %v8807
    %v10760 = vunpack.c.l.b16 %v8808
    %v10761 = vunpack.c.l.b16 %v8809
    %v10762 = vunpack.c.l.b16 %v8810
    %v10763 = vunpack.c.l.b16 %v8811
    %v10764 = vunpack.c.l.b16 %v8812
    %v10765 = vunpack.c.l.b16 %v8813
    %v10766 = vunpack.c.l.b16 %v8814
    %v10767 = vunpack.c.l.b16 %v8815
    %v10768 = vunpack.c.l.b16 %v8816
    %v10769 = vunpack.c.l.b16 %v8817
    %v10770 = vunpack.c.l.b16 %v8818
    %v10771 = vunpack.c.l.b16 %v8819
    %v10772 = vunpack.c.l.b16 %v8820
    %v10773 = vunpack.c.l.b16 %v8821
    %v10774 = vunpack.c.l.b16 %v8822
    %v10775 = vunpack.c.l.b16 %v8823
    %v10776 = vunpack.c.l.b16 %v8824
    %v10777 = vunpack.c.l.b16 %v8825
    %v10778 = vunpack.c.l.b16 %v8826
    %v10779 = vunpack.c.l.b16 %v8827
    %v10780 = vunpack.c.l.b16 %v8828
    %v10781 = vunpack.c.l.b16 %v8829
    %v10782 = vunpack.c.l.b16 %v8830
    %v10783 = vunpack.c.l.b16 %v8831
    %v10784 = vunpack.c.l.b16 %v8832
    %v10785 = vunpack.c.l.b16 %v8833
    %v10786 = vunpack.c.l.b16 %v8834
    %v10787 = vunpack.c.l.b16 %v8835
    %v10788 = vunpack.c.l.b16 %v8836
    %v10789 = vunpack.c.l.b16 %v8837
    %v10790 = vunpack.c.l.b16 %v8838
    %v10791 = vunpack.c.l.b16 %v8839
    %v10792 = vunpack.c.l.b16 %v8840
    %v10793 = vunpack.c.l.b16 %v8841
    %v10794 = vunpack.c.l.b16 %v8842
    %v10795 = vunpack.c.l.b16 %v8843
    %v10796 = vunpack.c.l.b16 %v8844
    %v10797 = vunpack.c.l.b16 %v8845
    %v10798 = vunpack.c.l.b16 %v8846
    %v10799 = vunpack.c.l.b16 %v8847
    %v10800 = vunpack.c.l.b16 %v8848
    %v10801 = vunpack.c.l.b16 %v8849
    %v10802 = vunpack.c.l.b16 %v8850
    %v10803 = vunpack.c.l.b16 %v8851
    %v10804 = vunpack.c.l.b16 %v8852
    %v10805 = vunpack.c.l.b16 %v8853
    %v10806 = vunpack.c.l.b16 %v8854
    %v10807 = vunpack.c.l.b16 %v8855
    %v10808 = vunpack.c.l.b16 %v8856
    %v10809 = vunpack.c.l.b16 %v8857
    %v10810 = vunpack.c.l.b16 %v8858
    %v10811 = vunpack.c.l.b16 %v8859
    %v10812 = vunpack.c.l.b16 %v8860
    %v10813 = vunpack.c.l.b16 %v8861
    %v10814 = vunpack.c.l.b16 %v8862
    %v10815 = vunpack.c.l.b16 %v8863
    %v10816 = vunpack.c.l.b16 %v8864
    %v10817 = vunpack.c.l.b16 %v8865
    %v10818 = vunpack.c.l.b16 %v8866
    %v10819 = vunpack.c.l.b16 %v8867
    %v10820 = vunpack.c.l.b16 %v8868
    %v10821 = vunpack.c.l.b16 %v8869
    %v10822 = vunpack.c.l.b16 %v8870
    %v10823 = vunpack.c.l.b16 %v8871
    %v10824 = vunpack.c.l.b16 %v8872
    %v10825 = vunpack.c.l.b16 %v8873
    %v10826 = vunpack.c.l.b16 %v8874
    %v10827 = vunpack.c.l.b16 %v8875
    %v10828 = vunpack.c.l.b16 %v8876
    %v10829 = vunpack.c.l.b16 %v8877
    %v10830 = vunpack.c.l.b16 %v8878
    %v10831 = vunpack.c.l.b16 %v8879
    %v10832 = vunpack.c.l.b16 %v8880
    %v10833 = vunpack.c.l.b16 %v8881
    %v10834 = vunpack.c.l.b16 %v8882
    %v10835 = vunpack.c.l.b16 %v8883
    %v10836 = vunpack.c.l.b16 %v8884
    %v10837 = vunpack.c.l.b16 %v8885
    %v10838 = vunpack.c.l.b16 %v8886
    %v10839 = vunpack.c.l.b16 %v8887
    %v10840 = vunpack.c.l.b16 %v8888
    %v10841 = vunpack.c.l.b16 %v8889
    %v10842 = vunpack.c.l.b16 %v8890
    %v10843 = vunpack.c.l.b16 %v8891
    %v10844 = vunpack.c.l.b16 %v8892
    %v10845 = vunpack.c.l.b16 %v8893
    %v10846 = vunpack.c.l.b16 %v8894
    %v10847 = vunpack.c.l.b16 %v8895
    %v10848 = vunpack.c.l.b16 %v8896
    %v10849 = vunpack.c.l.b16 %v8897
    %v10850 = vunpack.c.l.b16 %v8898
    %v10851 = vunpack.c.l.b16 %v8899
    %v10852 = vunpack.c.l.b16 %v8900
    %v10853 = vunpack.c.l.b16 %v8901
    %v10854 = vunpack.c.l.b16 %v8902
    %v10855 = vunpack.c.l.b16 %v8903
    %v10856 = vunpack.c.l.b16 %v8904
    %v10857 = vunpack.c.l.b16 %v8905
    %v10858 = vunpack.c.l.b16 %v8906
    %v10859 = vunpack.c.l.b16 %v8907
    %v10860 = vunpack.c.l.b16 %v8908
    %v10861 = vunpack.c.l.b16 %v8909
    %v10862 = vunpack.c.l.b16 %v8910
    %v10863 = vunpack.c.l.b16 %v8911
    %v10864 = vunpack.c.l.b16 %v8912
    %v10865 = vunpack.c.l.b16 %v8913
    %v10866 = vunpack.c.l.b16 %v8914
    %v10867 = vunpack.c.l.b16 %v8915
    %v10868 = vunpack.c.l.b16 %v8916
    %v10869 = vunpack.c.l.b16 %v8917
    %v10870 = vunpack.c.l.b16 %v8918
    %v10871 = vunpack.c.l.b16 %v8919
    %v10872 = vunpack.c.l.b16 %v8920
    %v10873 = vunpack.c.l.b16 %v8921
    %v10874 = vunpack.c.l.b16 %v8922
    %v10875 = vunpack.c.l.b16 %v8923
    %v10876 = vunpack.c.l.b16 %v8924
    %v10877 = vunpack.c.l.b16 %v8925
    %v10878 = vunpack.c.l.b16 %v8926
    %v10879 = vunpack.c.l.b16 %v8927
    %v10880 = vunpack.c.l.b16 %v8928
    %v10881 = vunpack.c.l.b16 %v8929
    %v10882 = vunpack.c.l.b16 %v8930
    %v10883 = vunpack.c.l.b16 %v8931
    %v10884 = vunpack.c.l.b16 %v8932
    %v10885 = vunpack.c.l.b16 %v8933
    %v10886 = vunpack.c.l.b16 %v8934
    %v10887 = vunpack.c.l.b16 %v8935
    %v10888 = vunpack.c.l.b16 %v8936
    %v10889 = vunpack.c.l.b16 %v8937
    %v10890 = vunpack.c.l.b16 %v8938
    %v10891 = vunpack.c.l.b16 %v8939
    %v10892 = vunpack.c.l.b16 %v8940
    %v10893 = vunpack.c.l.b16 %v8941
    %v10894 = vunpack.c.l.b16 %v8942
    %v10895 = vunpack.c.l.b16 %v8943
    %v10896 = vunpack.c.l.b16 %v8944
    %v10897 = vunpack.c.l.b16 %v8945
    %v10898 = vunpack.c.l.b16 %v8946
    %v10899 = vunpack.c.l.b16 %v8947
    %v10900 = vunpack.c.l.b16 %v8948
    %v10901 = vunpack.c.l.b16 %v8949
    %v10902 = vunpack.c.l.b16 %v8950
    %v10903 = vunpack.c.l.b16 %v8951
    %v10904 = vunpack.c.l.b16 %v8952
    %v10905 = vunpack.c.l.b16 %v8953
    %v10906 = vunpack.c.l.b16 %v8954
    %v10907 = vunpack.c.l.b16 %v8955
    %v10908 = vunpack.c.l.b16 %v8956
    %v10909 = vunpack.c.l.b16 %v8957
    %v10910 = vunpack.c.l.b16 %v8958
    %v10911 = vunpack.c.l.b16 %v8959
    %v10912 = vunpack.c.l.b16 %v8960
    %v10913 = vunpack.c.l.b16 %v8961
    %v10914 = vunpack.c.l.b16 %v8962
    %v10915 = vunpack.c.l.b16 %v8963
    %v10916 = vunpack.c.l.b16 %v8964
    %v10917 = vunpack.c.l.b16 %v8965
    %v10918 = vunpack.c.l.b16 %v8966
    %v10919 = vunpack.c.l.b16 %v8967
    %v10920 = vunpack.c.l.b16 %v8968
    %v10921 = vunpack.c.l.b16 %v8969
    %v10922 = vunpack.c.l.b16 %v8970
    %v10923 = vunpack.c.l.b16 %v8971
    %v10924 = vunpack.c.l.b16 %v8972
    %v10925 = vunpack.c.l.b16 %v8973
    %v10926 = vunpack.c.l.b16 %v8974
    %v10927 = vunpack.c.l.b16 %v8975
    %v10928 = vunpack.c.l.b16 %v8976
    %v10929 = vunpack.c.l.b16 %v8977
    %v10930 = vunpack.c.l.b16 %v8978
    %v10931 = vunpack.c.l.b16 %v8979
    %v10932 = vunpack.c.l.b16 %v8980
    %v10933 = vunpack.c.l.b16 %v8981
    %v10934 = vunpack.c.l.b16 %v8982
    %v10935 = vunpack.c.l.b16 %v8983
    %v10936 = vunpack.c.l.b16 %v8984
    %v10937 = vunpack.c.l.b16 %v8985
    %v10938 = vunpack.c.l.b16 %v8986
    %v10939 = vunpack.c.l.b16 %v8987
    %v10940 = vunpack.c.l.b16 %v8988
    %v10941 = vunpack.c.l.b16 %v8989
    %v10942 = vunpack.c.l.b16 %v8990
    %v10943 = vunpack.c.l.b16 %v8991
    %v10944 = vunpack.c.l.b16 %v8992
    %v10945 = vunpack.c.l.b16 %v8993
    %v10946 = vunpack.c.l.b16 %v8994
    %v10947 = vunpack.c.l.b16 %v8995
    %v10948 = vunpack.c.l.b16 %v8996
    %v10949 = vunpack.c.l.b16 %v8997
    %v10950 = vunpack.c.l.b16 %v8998
    %v10951 = vunpack.c.l.b16 %v8999
    %v10952 = vunpack.c.l.b16 %v9000
    %v10953 = vpack.c.b16 %v10698, %v10697
    %v10954 = vpack.c.b16 %v10700, %v10699
    %v10955 = vpack.c.b16 %v10702, %v10701
    %v10956 = vpack.c.b16 %v10704, %v10703
    %v10957 = vpack.c.b16 %v10706, %v10705
    %v10958 = vpack.c.b16 %v10708, %v10707
    %v10959 = vpack.c.b16 %v10710, %v10709
    %v10960 = vpack.c.b16 %v10712, %v10711
    %v10961 = vpack.c.b16 %v10714, %v10713
    %v10962 = vpack.c.b16 %v10716, %v10715
    %v10963 = vpack.c.b16 %v10718, %v10717
    %v10964 = vpack.c.b16 %v10720, %v10719
    %v10965 = vpack.c.b16 %v10722, %v10721
    %v10966 = vpack.c.b16 %v10724, %v10723
    %v10967 = vpack.c.b16 %v10726, %v10725
    %v10968 = vpack.c.b16 %v10728, %v10727
    %v10969 = vpack.c.b16 %v10730, %v10729
    %v10970 = vpack.c.b16 %v10732, %v10731
    %v10971 = vpack.c.b16 %v10734, %v10733
    %v10972 = vpack.c.b16 %v10736, %v10735
    %v10973 = vpack.c.b16 %v10738, %v10737
    %v10974 = vpack.c.b16 %v10740, %v10739
    %v10975 = vpack.c.b16 %v10742, %v10741
    %v10976 = vpack.c.b16 %v10744, %v10743
    %v10977 = vpack.c.b16 %v10746, %v10745
    %v10978 = vpack.c.b16 %v10748, %v10747
    %v10979 = vpack.c.b16 %v10750, %v10749
    %v10980 = vpack.c.b16 %v10752, %v10751
    %v10981 = vpack.c.b16 %v10754, %v10753
    %v10982 = vpack.c.b16 %v10756, %v10755
    %v10983 = vpack.c.b16 %v10758, %v10757
    %v10984 = vpack.c.b16 %v10760, %v10759
    %v10985 = vpack.c.b16 %v10762, %v10761
    %v10986 = vpack.c.b16 %v10764, %v10763
    %v10987 = vpack.c.b16 %v10766, %v10765
    %v10988 = vpack.c.b16 %v10768, %v10767
    %v10989 = vpack.c.b16 %v10770, %v10769
    %v10990 = vpack.c.b16 %v10772, %v10771
    %v10991 = vpack.c.b16 %v10774, %v10773
    %v10992 = vpack.c.b16 %v10776, %v10775
    %v10993 = vpack.c.b16 %v10778, %v10777
    %v10994 = vpack.c.b16 %v10780, %v10779
    %v10995 = vpack.c.b16 %v10782, %v10781
    %v10996 = vpack.c.b16 %v10784, %v10783
    %v10997 = vpack.c.b16 %v10786, %v10785
    %v10998 = vpack.c.b16 %v10788, %v10787
    %v10999 = vpack.c.b16 %v10790, %v10789
    %v11000 = vpack.c.b16 %v10792, %v10791
    %v11001 = vpack.c.b16 %v10794, %v10793
    %v11002 = vpack.c.b16 %v10796, %v10795
    %v11003 = vpack.c.b16 %v10798, %v10797
    %v11004 = vpack.c.b16 %v10800, %v10799
    %v11005 = vpack.c.b16 %v10802, %v10801
    %v11006 = vpack.c.b16 %v10804, %v10803
    %v11007 = vpack.c.b16 %v10806, %v10805
    %v11008 = vpack.c.b16 %v10808, %v10807
    %v11009 = vpack.c.b16 %v10810, %v10809
    %v11010 = vpack.c.b16 %v10812, %v10811
    %v11011 = vpack.c.b16 %v10814, %v10813
    %v11012 = vpack.c.b16 %v10816, %v10815
    %v11013 = vpack.c.b16 %v10818, %v10817
    %v11014 = vpack.c.b16 %v10820, %v10819
    %v11015 = vpack.c.b16 %v10822, %v10821
    %v11016 = vpack.c.b16 %v10824, %v10823
    %v11017 = vpack.c.b16 %v10826, %v10825
    %v11018 = vpack.c.b16 %v10828, %v10827
    %v11019 = vpack.c.b16 %v10830, %v10829
    %v11020 = vpack.c.b16 %v10832, %v10831
    %v11021 = vpack.c.b16 %v10834, %v10833
    %v11022 = vpack.c.b16 %v10836, %v10835
    %v11023 = vpack.c.b16 %v10838, %v10837
    %v11024 = vpack.c.b16 %v10840, %v10839
    %v11025 = vpack.c.b16 %v10842, %v10841
    %v11026 = vpack.c.b16 %v10844, %v10843
    %v11027 = vpack.c.b16 %v10846, %v10845
    %v11028 = vpack.c.b16 %v10848, %v10847
    %v11029 = vpack.c.b16 %v10850, %v10849
    %v11030 = vpack.c.b16 %v10852, %v10851
    %v11031 = vpack.c.b16 %v10854, %v10853
    %v11032 = vpack.c.b16 %v10856, %v10855
    %v11033 = vpack.c.b16 %v10858, %v10857
    %v11034 = vpack.c.b16 %v10860, %v10859
    %v11035 = vpack.c.b16 %v10862, %v10861
    %v11036 = vpack.c.b16 %v10864, %v10863
    %v11037 = vpack.c.b16 %v10866, %v10865
    %v11038 = vpack.c.b16 %v10868, %v10867
    %v11039 = vpack.c.b16 %v10870, %v10869
    %v11040 = vpack.c.b16 %v10872, %v10871
    %v11041 = vpack.c.b16 %v10874, %v10873
    %v11042 = vpack.c.b16 %v10876, %v10875
    %v11043 = vpack.c.b16 %v10878, %v10877
    %v11044 = vpack.c.b16 %v10880, %v10879
    %v11045 = vpack.c.b16 %v10882, %v10881
    %v11046 = vpack.c.b16 %v10884, %v10883
    %v11047 = vpack.c.b16 %v10886, %v10885
    %v11048 = vpack.c.b16 %v10888, %v10887
    %v11049 = vpack.c.b16 %v10890, %v10889
    %v11050 = vpack.c.b16 %v10892, %v10891
    %v11051 = vpack.c.b16 %v10894, %v10893
    %v11052 = vpack.c.b16 %v10896, %v10895
    %v11053 = vpack.c.b16 %v10898, %v10897
    %v11054 = vpack.c.b16 %v10900, %v10899
    %v11055 = vpack.c.b16 %v10902, %v10901
    %v11056 = vpack.c.b16 %v10904, %v10903
    %v11057 = vpack.c.b16 %v10906, %v10905
    %v11058 = vpack.c.b16 %v10908, %v10907
    %v11059 = vpack.c.b16 %v10910, %v10909
    %v11060 = vpack.c.b16 %v10912, %v10911
    %v11061 = vpack.c.b16 %v10914, %v10913
    %v11062 = vpack.c.b16 %v10916, %v10915
    %v11063 = vpack.c.b16 %v10918, %v10917
    %v11064 = vpack.c.b16 %v10920, %v10919
    %v11065 = vpack.c.b16 %v10922, %v10921
    %v11066 = vpack.c.b16 %v10924, %v10923
    %v11067 = vpack.c.b16 %v10926, %v10925
    %v11068 = vpack.c.b16 %v10928, %v10927
    %v11069 = vpack.c.b16 %v10930, %v10929
    %v11070 = vpack.c.b16 %v10932, %v10931
    %v11071 = vpack.c.b16 %v10934, %v10933
    %v11072 = vpack.c.b16 %v10936, %v10935
    %v11073 = vpack.c.b16 %v10938, %v10937
    %v11074 = vpack.c.b16 %v10940, %v10939
    %v11075 = vpack.c.b16 %v10942, %v10941
    %v11076 = vpack.c.b16 %v10944, %v10943
    %v11077 = vpack.c.b16 %v10946, %v10945
    %v11078 = vpack.c.b16 %v10948, %v10947
    %v11079 = vpack.c.b16 %v10950, %v10949
    %v11080 = vpack.c.b16 %v10952, %v10951
    %11209 = vmatprep.subr.bf16.mxu0 0
    %11210 = vmatpush1.bf16.msra.mxu0 %v10960
    %11211 = vmatprep.subr.bf16.mxu0 0
    %11212 = vmatpush1.bf16.msra.mxu0 %v10959
    %11213 = vmatprep.subr.bf16.mxu0 0
    %11214 = vmatpush1.bf16.msra.mxu0 %v10958
    %11215 = vmatprep.subr.bf16.mxu0 0
    %11216 = vmatpush1.bf16.msra.mxu0 %v10957
    %11217 = vmatprep.subr.bf16.mxu0 0
    %11218 = vmatpush1.bf16.msra.mxu0 %v10956
    %11219 = vmatprep.subr.bf16.mxu0 0
    %11220 = vmatpush1.bf16.msra.mxu0 %v10955
    %11221 = vmatprep.subr.bf16.mxu0 0
    %11222 = vmatpush1.bf16.msra.mxu0 %v10954
    %11223 = vmatprep.subr.bf16.mxu0 0
    %11224 = vmatpush1.bf16.msra.mxu0 %v10953
    %11225 = vmatprep.subr.bf16.mxu0 0
    %11226 = vmatpush2.bf16.msra.mxu0 %v10968
    %11227 = vmatprep.subr.bf16.mxu0 0
    %11228 = vmatpush2.bf16.msra.mxu0 %v10967
    %11229 = vmatprep.subr.bf16.mxu0 0
    %11230 = vmatpush2.bf16.msra.mxu0 %v10966
    %11231 = vmatprep.subr.bf16.mxu0 0
    %11232 = vmatpush2.bf16.msra.mxu0 %v10965
    %11233 = vmatprep.subr.bf16.mxu0 0
    %11234 = vmatpush2.bf16.msra.mxu0 %v10964
    %11235 = vmatprep.subr.bf16.mxu0 0
    %11236 = vmatpush2.bf16.msra.mxu0 %v10963
    %11237 = vmatprep.subr.bf16.mxu0 0
    %11238 = vmatpush2.bf16.msra.mxu0 %v10962
    %11239 = vmatprep.subr.bf16.mxu0 0
    %11240 = vmatpush2.bf16.msra.mxu0 %v10961
    %11241 = vmatprep.mubr.bf16.mxu0 %v10422
    %11242 = vmatmul.mubr.bf16.gmra.mxu0 %v10421
    %v11243 = vpop.f32.mrf.mxu0
    %v11244 = vadd.f32 %v10440, %v11243
    %v11245 = vpop.f32.mrf.mxu0
    %v11246 = vpop.f32.mrf.mxu0
    %v11247 = vadd.f32 %v10440, %v11246
    %v11248 = vpop.f32.mrf.mxu0
    %11249 = vdwg.mxu0
    %11250 = vmatprep.subr.bf16.mxu0 0
    %11251 = vmatpush1.bf16.msra.mxu0 %v10976
    %11252 = vmatprep.subr.bf16.mxu0 0
    %11253 = vmatpush1.bf16.msra.mxu0 %v10975
    %11254 = vmatprep.subr.bf16.mxu0 0
    %11255 = vmatpush1.bf16.msra.mxu0 %v10974
    %11256 = vmatprep.subr.bf16.mxu0 0
    %11257 = vmatpush1.bf16.msra.mxu0 %v10973
    %11258 = vmatprep.subr.bf16.mxu0 0
    %11259 = vmatpush1.bf16.msra.mxu0 %v10972
    %11260 = vmatprep.subr.bf16.mxu0 0
    %11261 = vmatpush1.bf16.msra.mxu0 %v10971
    %11262 = vmatprep.subr.bf16.mxu0 0
    %11263 = vmatpush1.bf16.msra.mxu0 %v10970
    %11264 = vmatprep.subr.bf16.mxu0 0
    %11265 = vmatpush1.bf16.msra.mxu0 %v10969
    %11266 = vmatprep.subr.bf16.mxu0 0
    %11267 = vmatpush2.bf16.msra.mxu0 %v10984
    %11268 = vmatprep.subr.bf16.mxu0 0
    %11269 = vmatpush2.bf16.msra.mxu0 %v10983
    %11270 = vmatprep.subr.bf16.mxu0 0
    %11271 = vmatpush2.bf16.msra.mxu0 %v10982
    %11272 = vmatprep.subr.bf16.mxu0 0
    %11273 = vmatpush2.bf16.msra.mxu0 %v10981
    %11274 = vmatprep.subr.bf16.mxu0 0
    %11275 = vmatpush2.bf16.msra.mxu0 %v10980
    %11276 = vmatprep.subr.bf16.mxu0 0
    %11277 = vmatpush2.bf16.msra.mxu0 %v10979
    %11278 = vmatprep.subr.bf16.mxu0 0
    %11279 = vmatpush2.bf16.msra.mxu0 %v10978
    %11280 = vmatprep.subr.bf16.mxu0 0
    %11281 = vmatpush2.bf16.msra.mxu0 %v10977
    %11282 = vmatprep.mubr.bf16.mxu0 %v10424
    %11283 = vmatmul.mubr.bf16.gmra.mxu0 %v10423
    %v11284 = vpop.f32.mrf.mxu0
    %v11285 = vadd.f32 %v11244, %v11284
    %v11286 = vpop.f32.mrf.mxu0
    %v11287 = vpop.f32.mrf.mxu0
    %v11288 = vadd.f32 %v11247, %v11287
    %v11289 = vpop.f32.mrf.mxu0
    %11290 = vdwg.mxu0
    %11291 = vmatprep.subr.bf16.mxu0 0
    %11292 = vmatpush1.bf16.msra.mxu0 %v10992
    %11293 = vmatprep.subr.bf16.mxu0 0
    %11294 = vmatpush1.bf16.msra.mxu0 %v10991
    %11295 = vmatprep.subr.bf16.mxu0 0
    %11296 = vmatpush1.bf16.msra.mxu0 %v10990
    %11297 = vmatprep.subr.bf16.mxu0 0
    %11298 = vmatpush1.bf16.msra.mxu0 %v10989
    %11299 = vmatprep.subr.bf16.mxu0 0
    %11300 = vmatpush1.bf16.msra.mxu0 %v10988
    %11301 = vmatprep.subr.bf16.mxu0 0
    %11302 = vmatpush1.bf16.msra.mxu0 %v10987
    %11303 = vmatprep.subr.bf16.mxu0 0
    %11304 = vmatpush1.bf16.msra.mxu0 %v10986
    %11305 = vmatprep.subr.bf16.mxu0 0
    %11306 = vmatpush1.bf16.msra.mxu0 %v10985
    %11307 = vmatprep.subr.bf16.mxu0 0
    %11308 = vmatpush2.bf16.msra.mxu0 %v11000
    %11309 = vmatprep.subr.bf16.mxu0 0
    %11310 = vmatpush2.bf16.msra.mxu0 %v10999
    %11311 = vmatprep.subr.bf16.mxu0 0
    %11312 = vmatpush2.bf16.msra.mxu0 %v10998
    %11313 = vmatprep.subr.bf16.mxu0 0
    %11314 = vmatpush2.bf16.msra.mxu0 %v10997
    %11315 = vmatprep.subr.bf16.mxu0 0
    %11316 = vmatpush2.bf16.msra.mxu0 %v10996
    %11317 = vmatprep.subr.bf16.mxu0 0
    %11318 = vmatpush2.bf16.msra.mxu0 %v10995
    %11319 = vmatprep.subr.bf16.mxu0 0
    %11320 = vmatpush2.bf16.msra.mxu0 %v10994
    %11321 = vmatprep.subr.bf16.mxu0 0
    %11322 = vmatpush2.bf16.msra.mxu0 %v10993
    %11323 = vmatprep.mubr.bf16.mxu0 %v10426
    %11324 = vmatmul.mubr.bf16.gmra.mxu0 %v10425
    %v11325 = vpop.f32.mrf.mxu0
    %v11326 = vadd.f32 %v11285, %v11325
    %v11327 = vpop.f32.mrf.mxu0
    %v11328 = vpop.f32.mrf.mxu0
    %v11329 = vadd.f32 %v11288, %v11328
    %v11330 = vpop.f32.mrf.mxu0
    %11331 = vdwg.mxu0
    %11332 = vmatprep.subr.bf16.mxu0 0
    %11333 = vmatpush1.bf16.msra.mxu0 %v11008
    %11334 = vmatprep.subr.bf16.mxu0 0
    %11335 = vmatpush1.bf16.msra.mxu0 %v11007
    %11336 = vmatprep.subr.bf16.mxu0 0
    %11337 = vmatpush1.bf16.msra.mxu0 %v11006
    %11338 = vmatprep.subr.bf16.mxu0 0
    %11339 = vmatpush1.bf16.msra.mxu0 %v11005
    %11340 = vmatprep.subr.bf16.mxu0 0
    %11341 = vmatpush1.bf16.msra.mxu0 %v11004
    %11342 = vmatprep.subr.bf16.mxu0 0
    %11343 = vmatpush1.bf16.msra.mxu0 %v11003
    %11344 = vmatprep.subr.bf16.mxu0 0
    %11345 = vmatpush1.bf16.msra.mxu0 %v11002
    %11346 = vmatprep.subr.bf16.mxu0 0
    %11347 = vmatpush1.bf16.msra.mxu0 %v11001
    %11348 = vmatprep.subr.bf16.mxu0 0
    %11349 = vmatpush2.bf16.msra.mxu0 %v11016
    %11350 = vmatprep.subr.bf16.mxu0 0
    %11351 = vmatpush2.bf16.msra.mxu0 %v11015
    %11352 = vmatprep.subr.bf16.mxu0 0
    %11353 = vmatpush2.bf16.msra.mxu0 %v11014
    %11354 = vmatprep.subr.bf16.mxu0 0
    %11355 = vmatpush2.bf16.msra.mxu0 %v11013
    %11356 = vmatprep.subr.bf16.mxu0 0
    %11357 = vmatpush2.bf16.msra.mxu0 %v11012
    %11358 = vmatprep.subr.bf16.mxu0 0
    %11359 = vmatpush2.bf16.msra.mxu0 %v11011
    %11360 = vmatprep.subr.bf16.mxu0 0
    %11361 = vmatpush2.bf16.msra.mxu0 %v11010
    %11362 = vmatprep.subr.bf16.mxu0 0
    %11363 = vmatpush2.bf16.msra.mxu0 %v11009
    %11364 = vmatprep.mubr.bf16.mxu0 %v10428
    %11365 = vmatmul.mubr.bf16.gmra.mxu0 %v10427
    %v11366 = vpop.f32.mrf.mxu0
    %v11367 = vadd.f32 %v11326, %v11366
    %v11368 = vpop.f32.mrf.mxu0
    %v11369 = vpop.f32.mrf.mxu0
    %v11370 = vadd.f32 %v11329, %v11369
    %v11371 = vpop.f32.mrf.mxu0
    %11372 = vdwg.mxu0
    %11373 = vmatprep.subr.bf16.mxu0 0
    %11374 = vmatpush1.bf16.msra.mxu0 %v11024
    %11375 = vmatprep.subr.bf16.mxu0 0
    %11376 = vmatpush1.bf16.msra.mxu0 %v11023
    %11377 = vmatprep.subr.bf16.mxu0 0
    %11378 = vmatpush1.bf16.msra.mxu0 %v11022
    %11379 = vmatprep.subr.bf16.mxu0 0
    %11380 = vmatpush1.bf16.msra.mxu0 %v11021
    %11381 = vmatprep.subr.bf16.mxu0 0
    %11382 = vmatpush1.bf16.msra.mxu0 %v11020
    %11383 = vmatprep.subr.bf16.mxu0 0
    %11384 = vmatpush1.bf16.msra.mxu0 %v11019
    %11385 = vmatprep.subr.bf16.mxu0 0
    %11386 = vmatpush1.bf16.msra.mxu0 %v11018
    %11387 = vmatprep.subr.bf16.mxu0 0
    %11388 = vmatpush1.bf16.msra.mxu0 %v11017
    %11389 = vmatprep.subr.bf16.mxu0 0
    %11390 = vmatpush2.bf16.msra.mxu0 %v11032
    %11391 = vmatprep.subr.bf16.mxu0 0
    %11392 = vmatpush2.bf16.msra.mxu0 %v11031
    %11393 = vmatprep.subr.bf16.mxu0 0
    %11394 = vmatpush2.bf16.msra.mxu0 %v11030
    %11395 = vmatprep.subr.bf16.mxu0 0
    %11396 = vmatpush2.bf16.msra.mxu0 %v11029
    %11397 = vmatprep.subr.bf16.mxu0 0
    %11398 = vmatpush2.bf16.msra.mxu0 %v11028
    %11399 = vmatprep.subr.bf16.mxu0 0
    %11400 = vmatpush2.bf16.msra.mxu0 %v11027
    %11401 = vmatprep.subr.bf16.mxu0 0
    %11402 = vmatpush2.bf16.msra.mxu0 %v11026
    %11403 = vmatprep.subr.bf16.mxu0 0
    %11404 = vmatpush2.bf16.msra.mxu0 %v11025
    %11405 = vmatprep.mubr.bf16.mxu0 %v10430
    %11406 = vmatmul.mubr.bf16.gmra.mxu0 %v10429
    %v11407 = vpop.f32.mrf.mxu0
    %v11408 = vadd.f32 %v11367, %v11407
    %v11409 = vpop.f32.mrf.mxu0
    %v11410 = vpop.f32.mrf.mxu0
    %v11411 = vadd.f32 %v11370, %v11410
    %v11412 = vpop.f32.mrf.mxu0
    %11413 = vdwg.mxu0
    %11414 = vmatprep.subr.bf16.mxu0 0
    %11415 = vmatpush1.bf16.msra.mxu0 %v11040
    %11416 = vmatprep.subr.bf16.mxu0 0
    %11417 = vmatpush1.bf16.msra.mxu0 %v11039
    %11418 = vmatprep.subr.bf16.mxu0 0
    %11419 = vmatpush1.bf16.msra.mxu0 %v11038
    %11420 = vmatprep.subr.bf16.mxu0 0
    %11421 = vmatpush1.bf16.msra.mxu0 %v11037
    %11422 = vmatprep.subr.bf16.mxu0 0
    %11423 = vmatpush1.bf16.msra.mxu0 %v11036
    %11424 = vmatprep.subr.bf16.mxu0 0
    %11425 = vmatpush1.bf16.msra.mxu0 %v11035
    %11426 = vmatprep.subr.bf16.mxu0 0
    %11427 = vmatpush1.bf16.msra.mxu0 %v11034
    %11428 = vmatprep.subr.bf16.mxu0 0
    %11429 = vmatpush1.bf16.msra.mxu0 %v11033
    %11430 = vmatprep.subr.bf16.mxu0 0
    %11431 = vmatpush2.bf16.msra.mxu0 %v11048
    %11432 = vmatprep.subr.bf16.mxu0 0
    %11433 = vmatpush2.bf16.msra.mxu0 %v11047
    %11434 = vmatprep.subr.bf16.mxu0 0
    %11435 = vmatpush2.bf16.msra.mxu0 %v11046
    %11436 = vmatprep.subr.bf16.mxu0 0
    %11437 = vmatpush2.bf16.msra.mxu0 %v11045
    %11438 = vmatprep.subr.bf16.mxu0 0
    %11439 = vmatpush2.bf16.msra.mxu0 %v11044
    %11440 = vmatprep.subr.bf16.mxu0 0
    %11441 = vmatpush2.bf16.msra.mxu0 %v11043
    %11442 = vmatprep.subr.bf16.mxu0 0
    %11443 = vmatpush2.bf16.msra.mxu0 %v11042
    %11444 = vmatprep.subr.bf16.mxu0 0
    %11445 = vmatpush2.bf16.msra.mxu0 %v11041
    %11446 = vmatprep.mubr.bf16.mxu0 %v10432
    %11447 = vmatmul.mubr.bf16.gmra.mxu0 %v10431
    %v11448 = vpop.f32.mrf.mxu0
    %v11449 = vadd.f32 %v11408, %v11448
    %v11450 = vpop.f32.mrf.mxu0
    %v11451 = vpop.f32.mrf.mxu0
    %v11452 = vadd.f32 %v11411, %v11451
    %v11453 = vpop.f32.mrf.mxu0
    %11454 = vdwg.mxu0
    %11455 = vmatprep.subr.bf16.mxu0 0
    %11456 = vmatpush1.bf16.msra.mxu0 %v11056
    %11457 = vmatprep.subr.bf16.mxu0 0
    %11458 = vmatpush1.bf16.msra.mxu0 %v11055
    %11459 = vmatprep.subr.bf16.mxu0 0
    %11460 = vmatpush1.bf16.msra.mxu0 %v11054
    %11461 = vmatprep.subr.bf16.mxu0 0
    %11462 = vmatpush1.bf16.msra.mxu0 %v11053
    %11463 = vmatprep.subr.bf16.mxu0 0
    %11464 = vmatpush1.bf16.msra.mxu0 %v11052
    %11465 = vmatprep.subr.bf16.mxu0 0
    %11466 = vmatpush1.bf16.msra.mxu0 %v11051
    %11467 = vmatprep.subr.bf16.mxu0 0
    %11468 = vmatpush1.bf16.msra.mxu0 %v11050
    %11469 = vmatprep.subr.bf16.mxu0 0
    %11470 = vmatpush1.bf16.msra.mxu0 %v11049
    %11471 = vmatprep.subr.bf16.mxu0 0
    %11472 = vmatpush2.bf16.msra.mxu0 %v11064
    %11473 = vmatprep.subr.bf16.mxu0 0
    %11474 = vmatpush2.bf16.msra.mxu0 %v11063
    %11475 = vmatprep.subr.bf16.mxu0 0
    %11476 = vmatpush2.bf16.msra.mxu0 %v11062
    %11477 = vmatprep.subr.bf16.mxu0 0
    %11478 = vmatpush2.bf16.msra.mxu0 %v11061
    %11479 = vmatprep.subr.bf16.mxu0 0
    %11480 = vmatpush2.bf16.msra.mxu0 %v11060
    %11481 = vmatprep.subr.bf16.mxu0 0
    %11482 = vmatpush2.bf16.msra.mxu0 %v11059
    %11483 = vmatprep.subr.bf16.mxu0 0
    %11484 = vmatpush2.bf16.msra.mxu0 %v11058
    %11485 = vmatprep.subr.bf16.mxu0 0
    %11486 = vmatpush2.bf16.msra.mxu0 %v11057
    %11487 = vmatprep.mubr.bf16.mxu0 %v10434
    %11488 = vmatmul.mubr.bf16.gmra.mxu0 %v10433
    %v11489 = vpop.f32.mrf.mxu0
    %v11490 = vadd.f32 %v11449, %v11489
    %v11491 = vpop.f32.mrf.mxu0
    %v11492 = vpop.f32.mrf.mxu0
    %v11493 = vadd.f32 %v11452, %v11492
    %v11494 = vpop.f32.mrf.mxu0
    %11495 = vdwg.mxu0
    %11496 = vmatprep.subr.bf16.mxu0 0
    %11497 = vmatpush1.bf16.msra.mxu0 %v11072
    %11498 = vmatprep.subr.bf16.mxu0 0
    %11499 = vmatpush1.bf16.msra.mxu0 %v11071
    %11500 = vmatprep.subr.bf16.mxu0 0
    %11501 = vmatpush1.bf16.msra.mxu0 %v11070
    %11502 = vmatprep.subr.bf16.mxu0 0
    %11503 = vmatpush1.bf16.msra.mxu0 %v11069
    %11504 = vmatprep.subr.bf16.mxu0 0
    %11505 = vmatpush1.bf16.msra.mxu0 %v11068
    %11506 = vmatprep.subr.bf16.mxu0 0
    %11507 = vmatpush1.bf16.msra.mxu0 %v11067
    %11508 = vmatprep.subr.bf16.mxu0 0
    %11509 = vmatpush1.bf16.msra.mxu0 %v11066
    %11510 = vmatprep.subr.bf16.mxu0 0
    %11511 = vmatpush1.bf16.msra.mxu0 %v11065
    %11512 = vmatprep.subr.bf16.mxu0 0
    %11513 = vmatpush2.bf16.msra.mxu0 %v11080
    %11514 = vmatprep.subr.bf16.mxu0 0
    %11515 = vmatpush2.bf16.msra.mxu0 %v11079
    %11516 = vmatprep.subr.bf16.mxu0 0
    %11517 = vmatpush2.bf16.msra.mxu0 %v11078
    %11518 = vmatprep.subr.bf16.mxu0 0
    %11519 = vmatpush2.bf16.msra.mxu0 %v11077
    %11520 = vmatprep.subr.bf16.mxu0 0
    %11521 = vmatpush2.bf16.msra.mxu0 %v11076
    %11522 = vmatprep.subr.bf16.mxu0 0
    %11523 = vmatpush2.bf16.msra.mxu0 %v11075
    %11524 = vmatprep.subr.bf16.mxu0 0
    %11525 = vmatpush2.bf16.msra.mxu0 %v11074
    %11526 = vmatprep.subr.bf16.mxu0 0
    %11527 = vmatpush2.bf16.msra.mxu0 %v11073
    %11528 = vmatprep.mubr.bf16.mxu0 %v10436
    %11529 = vmatmul.mubr.bf16.gmra.mxu0 %v10435
    %v11530 = vpop.f32.mrf.mxu0
    %v11531 = vadd.f32 %v11490, %v11530
    %v11532 = vpop.f32.mrf.mxu0
    %v11533 = vpop.f32.mrf.mxu0
    %v11534 = vadd.f32 %v11493, %v11533
    %v11535 = vpop.f32.mrf.mxu0
    %11536 = vdwg.mxu0
    %v11537 = vadd.f32 %v9797, %v11531
    %v11538 = vadd.f32 %v9798, %v11534
    %v11539 = vsel %vm376, %v11537, 0.0
    %11540 = vadd.xlane.f32.xlu0 %v11539
    %v11541 = vpop.xlane.xlu0 %11540
    %v11542 = vsel %vm376, %v11538, 0.0
    %11543 = vadd.xlane.f32.xlu0 %v11542
    %v11544 = vpop.xlane.xlu0 %11543
    %v11545 = vmul.f32 %v11541, %v1123
    %v11546 = vmul.f32 %v11544, %v1123
    %v11547 = vsub.f32 %v11537, %v11545
    %v11548 = vsub.f32 %v11538, %v11546
    %v11549 = vmul.f32 %v11547, %v11547
    %v11550 = vmul.f32 %v11548, %v11548
    %v11551 = vsel %vm376, %v11549, 0.0
    %11552 = vadd.xlane.f32.xlu0 %v11551
    %v11553 = vpop.xlane.xlu0 %11552
    %v11554 = vsel %vm376, %v11550, 0.0
    %11555 = vadd.xlane.f32.xlu0 %v11554
    %v11556 = vpop.xlane.xlu0 %11555
    %v11557 = vmul.f32 %v11553, %v1123
    %v11558 = vmul.f32 %v11556, %v1123
    %v11559 = vadd.f32 %v11557, 1e-05
    %v11560 = vadd.f32 %v11558, 1e-05
    %v11561 = vrsqrt.pop %v11559
    %v11562 = vrsqrt.pop %v11560
    %v11563 = vmul.f32 %v11547, %v11561
    %v11564 = vmul.f32 %v11548, %v11562
    %v11565 = vlaneseq
    %v11566 = vshrl.u32 %v11565, 7
    %v11567 = vsub.s32 4, %v11566
    %v11568 = vrot.slane %v9002, %v11567
    %v11569 = vmul.f32 %v11563, %v11568
    %v11570 = vmul.f32 %v11564, %v11568
    %v11571 = vlaneseq
    %v11572 = vshrl.u32 %v11571, 7
    %v11573 = vsub.s32 5, %v11572
    %v11574 = vrot.slane %v9002, %v11573
    %v11575 = vadd.f32 %v11569, %v11574
    %v11576 = vadd.f32 %v11570, %v11574
    %v11577 = vlaneseq
    %v11578 = vshrl.u32 %v11577, 7
    %v11579 = vlaneseq
    %v11580 = vand.u32 %v11579, 127
    %v11581 = vmul.u32 %v11578, 8
    %v11582 = vadd.s32 %v11581, 7
    %vm11583 = vcmp.eq.s32.totalorder %v11580, %v11582
    %v11584 = vsel %vm11583, 1, 0
    %v11585 = vcvt.s32.f32 %v11584
    %vm11586 = vcmask 130048
    %v11588 = vsel %vm11586, %v11585, 0
    %11590 = vmatprep.subr.mxu0 0.0
    %11591 = vmatpush1.msra.mxu0 0.0
    %11592 = vmatprep.subr.mxu0 0.0
    %11593 = vmatpush1.msra.mxu0 0.0
    %11594 = vmatprep.subr.mxu0 0.0
    %11595 = vmatpush1.msra.mxu0 0.0
    %11596 = vmatprep.subr.mxu0 0.0
    %11597 = vmatpush1.msra.mxu0 0.0
    %11598 = vmatprep.subr.mxu0 0.0
    %11599 = vmatpush1.msra.mxu0 0.0
    %11600 = vmatprep.subr.mxu0 0.0
    %11601 = vmatpush1.msra.mxu0 0.0
    %11602 = vmatprep.subr.mxu0 0.0
    %11603 = vmatpush1.msra.mxu0 0.0
    %11604 = vmatprep.subr.mxu0 0.0
    %11605 = vmatpush1.msra.mxu0 0.0
    %11606 = vmatprep.subr.mxu0 0.0
    %11607 = vmatpush1.msra.mxu0 0.0
    %11608 = vmatprep.subr.mxu0 0.0
    %11609 = vmatpush1.msra.mxu0 0.0
    %11610 = vmatprep.subr.mxu0 0.0
    %11611 = vmatpush1.msra.mxu0 0.0
    %11612 = vmatprep.subr.mxu0 0.0
    %11613 = vmatpush1.msra.mxu0 0.0
    %11614 = vmatprep.subr.mxu0 0.0
    %11615 = vmatpush1.msra.mxu0 0.0
    %11616 = vmatprep.subr.mxu0 0.0
    %11617 = vmatpush1.msra.mxu0 0.0
    %11618 = vmatprep.subr.mxu0 0.0
    %11619 = vmatpush1.msra.mxu0 %v11576
    %11620 = vmatprep.subr.mxu0 0.0
    %11621 = vmatpush1.msra.mxu0 %v11575
    %11622 = vmatprep.subr.mxu0 0.0
    %11623 = vmatpush2.msra.mxu0 0.0
    %11624 = vmatprep.subr.mxu0 0.0
    %11625 = vmatpush2.msra.mxu0 0.0
    %11626 = vmatprep.subr.mxu0 0.0
    %11627 = vmatpush2.msra.mxu0 0.0
    %11628 = vmatprep.subr.mxu0 0.0
    %11629 = vmatpush2.msra.mxu0 0.0
    %11630 = vmatprep.subr.mxu0 0.0
    %11631 = vmatpush2.msra.mxu0 0.0
    %11632 = vmatprep.subr.mxu0 0.0
    %11633 = vmatpush2.msra.mxu0 0.0
    %11634 = vmatprep.subr.mxu0 0.0
    %11635 = vmatpush2.msra.mxu0 0.0
    %11636 = vmatprep.subr.mxu0 0.0
    %11637 = vmatpush2.msra.mxu0 0.0
    %11638 = vmatprep.subr.mxu0 0.0
    %11639 = vmatpush2.msra.mxu0 0.0
    %11640 = vmatprep.subr.mxu0 0.0
    %11641 = vmatpush2.msra.mxu0 0.0
    %11642 = vmatprep.subr.mxu0 0.0
    %11643 = vmatpush2.msra.mxu0 0.0
    %11644 = vmatprep.subr.mxu0 0.0
    %11645 = vmatpush2.msra.mxu0 0.0
    %11646 = vmatprep.subr.mxu0 0.0
    %11647 = vmatpush2.msra.mxu0 0.0
    %11648 = vmatprep.subr.mxu0 0.0
    %11649 = vmatpush2.msra.mxu0 0.0
    %11650 = vmatprep.subr.mxu0 0.0
    %11651 = vmatpush2.msra.mxu0 0.0
    %11652 = vmatprep.subr.mxu0 0.0
    %11653 = vmatpush2.msra.mxu0 0.0
    %11654 = vmatprep.mubr.f32.mxu0 0.0
    %11655 = vmatmul.mubr.f32.gmra.mxu0 %v11588
    %v11656 = vpop.f32.mrf.mxu0
    %v11657 = vadd.f32 0.0, %v11656
    %v11658 = vpop.f32.mrf.mxu0
    %11659 = vdwg.mxu0
    %v11660 = vld [vmem:[%s4] sm:$0xff]
    %v11661 = vld [vmem:[%s4 + $0x8] sm:$0xff]
    %v11662 = vld [vmem:[%s4 + $0x10] sm:$0xff]
    %v11663 = vld [vmem:[%s4 + $0x18] sm:$0xff]
    %v11664 = vld [vmem:[%s5] sm:$0x1]
    %v11666 = vlaneseq
    %v11667 = vshrl.u32 %v11666, 7
    %v11668 = vsub.s32 0, %v11667
    %v11669 = vrot.slane %v11664, %v11668
    %v11672 = vsel %vm376, %v11657, 0
    %11674 = vmatprep.subr.mxu0 0.0
    %11675 = vmatpush1.msra.mxu0 0.0
    %11676 = vmatprep.subr.mxu0 0.0
    %11677 = vmatpush1.msra.mxu0 0.0
    %11678 = vmatprep.subr.mxu0 0.0
    %11679 = vmatpush1.msra.mxu0 0.0
    %11680 = vmatprep.subr.mxu0 0.0
    %11681 = vmatpush1.msra.mxu0 0.0
    %11682 = vmatprep.subr.mxu0 0.0
    %11683 = vmatpush1.msra.mxu0 0.0
    %11684 = vmatprep.subr.mxu0 0.0
    %11685 = vmatpush1.msra.mxu0 0.0
    %11686 = vmatprep.subr.mxu0 0.0
    %11687 = vmatpush1.msra.mxu0 0.0
    %11688 = vmatprep.subr.mxu0 0.0
    %11689 = vmatpush1.msra.mxu0 0.0
    %11690 = vmatprep.subr.mxu0 0.0
    %11691 = vmatpush1.msra.mxu0 0.0
    %11692 = vmatprep.subr.mxu0 0.0
    %11693 = vmatpush1.msra.mxu0 0.0
    %11694 = vmatprep.subr.mxu0 0.0
    %11695 = vmatpush1.msra.mxu0 0.0
    %11696 = vmatprep.subr.mxu0 0.0
    %11697 = vmatpush1.msra.mxu0 0.0
    %11698 = vmatprep.subr.mxu0 0.0
    %11699 = vmatpush1.msra.mxu0 %v11663
    %11700 = vmatprep.subr.mxu0 0.0
    %11701 = vmatpush1.msra.mxu0 %v11662
    %11702 = vmatprep.subr.mxu0 0.0
    %11703 = vmatpush1.msra.mxu0 %v11661
    %11704 = vmatprep.subr.mxu0 0.0
    %11705 = vmatpush1.msra.mxu0 %v11660
    %11706 = vmatprep.subr.mxu0 0.0
    %11707 = vmatpush2.msra.mxu0 0.0
    %11708 = vmatprep.subr.mxu0 0.0
    %11709 = vmatpush2.msra.mxu0 0.0
    %11710 = vmatprep.subr.mxu0 0.0
    %11711 = vmatpush2.msra.mxu0 0.0
    %11712 = vmatprep.subr.mxu0 0.0
    %11713 = vmatpush2.msra.mxu0 0.0
    %11714 = vmatprep.subr.mxu0 0.0
    %11715 = vmatpush2.msra.mxu0 0.0
    %11716 = vmatprep.subr.mxu0 0.0
    %11717 = vmatpush2.msra.mxu0 0.0
    %11718 = vmatprep.subr.mxu0 0.0
    %11719 = vmatpush2.msra.mxu0 0.0
    %11720 = vmatprep.subr.mxu0 0.0
    %11721 = vmatpush2.msra.mxu0 0.0
    %11722 = vmatprep.subr.mxu0 0.0
    %11723 = vmatpush2.msra.mxu0 0.0
    %11724 = vmatprep.subr.mxu0 0.0
    %11725 = vmatpush2.msra.mxu0 0.0
    %11726 = vmatprep.subr.mxu0 0.0
    %11727 = vmatpush2.msra.mxu0 0.0
    %11728 = vmatprep.subr.mxu0 0.0
    %11729 = vmatpush2.msra.mxu0 0.0
    %11730 = vmatprep.subr.mxu0 0.0
    %11731 = vmatpush2.msra.mxu0 0.0
    %11732 = vmatprep.subr.mxu0 0.0
    %11733 = vmatpush2.msra.mxu0 0.0
    %11734 = vmatprep.subr.mxu0 0.0
    %11735 = vmatpush2.msra.mxu0 0.0
    %11736 = vmatprep.subr.mxu0 0.0
    %11737 = vmatpush2.msra.mxu0 0.0
    %11738 = vmatprep.mubr.f32.mxu0 0.0
    %11739 = vmatmul.mubr.f32.gmra.mxu0 %v11672
    %v11740 = vpop.f32.mrf.mxu0
    %v11741 = vadd.f32 %v11669, %v11740
    %v11742 = vpop.f32.mrf.mxu0
    %11743 = vdwg.mxu0
    %vm11744 = vcmask 33792
    %11745 = vst.msk [vmem:[#allocation2] sm:$0x3] %vm11744, %v11741
    // Predicated region
    $region54: #{video_transformer_forward.1} parent=1 // pred_check
      _
    $region55: #{video_transformer_forward.1} parent=1 // pred_check_branch
      %11747 = sbr.rel (0) target = $region57
    $region56: #{video_transformer_forward.1} parent=1 // pred_region
      %s11749 = ssub.s32 32, 32
      %11750 = vsyncadd [#allocation3], %s11749
      %s11752 = sshll.u32 [#allocation2], 4
      %s11753 = int_to_ptr.vmem [resolvable:$true] %s11752
      %11755 = dma.vmem_to_hbm [thread:$0]  %s11753, 32, %s13, [#allocation3]
    $region57: #{video_transformer_forward.1} parent=1 // pred_fallthru
      _
    // Predicated region
    $region58: #{video_transformer_forward.1} parent=1 // pred_check
      _
    $region59: #{video_transformer_forward.1} parent=1 // pred_check_branch
      %11757 = sbr.rel (0) target = $region61
    $region60: #{video_transformer_forward.1} parent=1 // pred_region
      %11758 = dma.done [#allocation3], 32
    $region61: #{video_transformer_forward.1} parent=1 // pred_fallthru
      _
    %11759 = vsyncpa [#allocation3], 1

</llo_original>
